<compile_context>
chip_gen: v5e
topology: v5e:2x2
jax: 0.10.0
libtpu: 0.0.40
codegen_flags: <defaults>
</compile_context>

<pallas_src>
import jax
import jax.numpy as jnp
import numpy as np
from jax.experimental import pallas as pl
from jax.experimental.pallas import tpu as pltpu

EPS = 1e-5
EXPANSION = 4
LANE = 128
VMEM_LIMIT = 32 * 1024 * 1024  # fits v7x (64 MiB phys) as well as v5e/v6e


# ---------------------------------------------------------------------------
# small helpers
# ---------------------------------------------------------------------------
def _round_up(x, m):
    return ((x + m - 1) // m) * m


def _pick_tile(total, candidates):
    for c in candidates:
        if c <= total and total % c == 0:
            return c
    return total


def _cparams(*sem):
    return pltpu.CompilerParams(dimension_semantics=tuple(sem),
                                vmem_limit_bytes=VMEM_LIMIT)


# ---------------------------------------------------------------------------
# pass 1 kernels: matmul / 3x3x3-conv producing pre-BN y + per-tile stats
# ---------------------------------------------------------------------------
def _mm_stats_kernel(x_ref, w_ref, y_ref, stats_ref):
    """y = x @ w (f32 acc); also emit per-tile (sum, sum_sq) over rows."""
    y = jnp.dot(x_ref[...], w_ref[...], preferred_element_type=jnp.float32)
    y_ref[...] = y
    ssum = jnp.sum(y, axis=0, keepdims=True)          # (1, C)
    ssq = jnp.sum(y * y, axis=0, keepdims=True)       # (1, C)
    stats_ref[...] = jnp.concatenate([ssum, ssq], axis=0)[None]   # (1, 2, C)


def _matmul_with_stats(x, w, tm):
    M, K = x.shape
    C = w.shape[1]
    n_t = M // tm
    y, stats = pl.pallas_call(
        _mm_stats_kernel,
        grid=(n_t,),
        in_specs=[pl.BlockSpec((tm, K), lambda i: (i, 0)),
                  pl.BlockSpec((K, C), lambda i: (0, 0))],
        out_specs=(pl.BlockSpec((tm, C), lambda i: (i, 0)),
                   pl.BlockSpec((1, 2, C), lambda i: (i, 0, 0))),
        out_shape=(jax.ShapeDtypeStruct((M, C), jnp.float32),
                   jax.ShapeDtypeStruct((n_t, 2, C), jnp.float32)),
        compiler_params=_cparams("parallel"),
    )(x, w)
    return y, stats


def _make_conv2_kernel(td, H, W, C, Dp):
    """3x3x3 conv on a depth-block via manual halo DMA + 27-tap reduction."""
    def kernel(xpad_hbm, w_ref, y_ref, stats_ref, halo_ref, sem):
        n = pl.program_id(0)
        db = pl.program_id(1)
        row0 = n * Dp + db * td
        cp = pltpu.make_async_copy(xpad_hbm.at[pl.ds(row0, td + 2)],
                                   halo_ref, sem)
        cp.start()
        cp.wait()

        acc = jnp.zeros((td * H * W, C), jnp.float32)
        for kd in range(3):
            for kh in range(3):
                for kw in range(3):
                    tap = (kd * 3 + kh) * 3 + kw
                    # shifted window of the halo slab (no HBM re-read)
                    patch = halo_ref[kd:kd + td, kh:kh + H, kw:kw + W, :]
                    acc = acc + jnp.dot(patch.reshape(td * H * W, C),
                                        w_ref[tap],
                                        preferred_element_type=jnp.float32)

        y_ref[...] = acc.reshape(td, H, W, C)
        ssum = jnp.sum(acc, axis=0, keepdims=True)
        ssq = jnp.sum(acc * acc, axis=0, keepdims=True)
        stats_ref[...] = jnp.concatenate([ssum, ssq], axis=0)[None]
    return kernel


def _conv2_with_stats(xpad4, w2, N, D, H, W, td):
    """xpad4: [N*(D+2), H+2, W+2, C] spatially padded activation (HBM)."""
    C = xpad4.shape[-1]
    Dp = D + 2
    n_db = D // td
    kernel = _make_conv2_kernel(td, H, W, C, Dp)
    y, stats = pl.pallas_call(
        kernel,
        grid=(N, n_db),
        in_specs=[pl.BlockSpec(memory_space=pl.ANY),                 # manual halo DMA
                  pl.BlockSpec((27, C, C), lambda n, d: (0, 0, 0))],
        out_specs=(pl.BlockSpec((td, H, W, C),
                                lambda n, d: (n * n_db + d, 0, 0, 0)),
                   pl.BlockSpec((1, 2, C),
                                lambda n, d: (n * n_db + d, 0, 0))),
        out_shape=(jax.ShapeDtypeStruct((N * D, H, W, C), jnp.float32),
                   jax.ShapeDtypeStruct((N * n_db, 2, C), jnp.float32)),
        scratch_shapes=[pltpu.VMEM((td + 2, H + 2, W + 2, C), jnp.float32),
                        pltpu.SemaphoreType.DMA],
        compiler_params=_cparams("parallel", "parallel"),
    )(xpad4, w2)
    return y, stats


# ---------------------------------------------------------------------------
# pass 2 kernel: reduce per-tile stats, normalize, affine, (+residual), ReLU
# ---------------------------------------------------------------------------
def _make_bn_kernel(count, with_residual):
    inv_count = 1.0 / float(count)

    def kernel(stats_ref, gamma_ref, beta_ref, y_ref, *rest):
        if with_residual:
            res_ref, o_ref = rest
        else:
            (o_ref,) = rest
        s = jnp.sum(stats_ref[...], axis=0)            # (2, C)
        mean = s[0:1, :] * inv_count                   # (1, C)
        var = s[1:2, :] * inv_count - mean * mean      # biased (train-mode) var
        inv = jax.lax.rsqrt(var + EPS)
        out = (y_ref[...] - mean) * (inv * gamma_ref[...]) + beta_ref[...]
        if with_residual:
            out = out + res_ref[...]
        o_ref[...] = jnp.maximum(out, 0.0)

    return kernel


def _bn_act(stats, gamma, beta, y, residual=None, tm=None):
    M, C = y.shape
    n_t = M // tm
    n_parts = stats.shape[0]
    kernel = _make_bn_kernel(M, residual is not None)

    in_specs = [pl.BlockSpec((n_parts, 2, C), lambda i: (0, 0, 0)),
                pl.BlockSpec((1, C), lambda i: (0, 0)),
                pl.BlockSpec((1, C), lambda i: (0, 0)),
                pl.BlockSpec((tm, C), lambda i: (i, 0))]
    args = [stats, gamma, beta, y]
    if residual is not None:
        in_specs.append(pl.BlockSpec((tm, C), lambda i: (i, 0)))
        args.append(residual)

    return pl.pallas_call(
        kernel,
        grid=(n_t,),
        in_specs=in_specs,
        out_specs=pl.BlockSpec((tm, C), lambda i: (i, 0)),
        out_shape=jax.ShapeDtypeStruct((M, C), jnp.float32),
        compiler_params=_cparams("parallel"),
    )(*args)


# ---------------------------------------------------------------------------
# Bottleneck forward (wrapper = layout glue, all math in Pallas kernels)
# ---------------------------------------------------------------------------
def bottleneck_forward(x_ncdhw, params, stride=1):
    assert stride == 1, "identity residual (downsample=None) requires stride == 1"
    N, Cin, D, H, W = x_ncdhw.shape
    P = params["w1"].shape[1]
    Cout = params["w3"].shape[1]
    assert Cin == Cout, "identity residual requires in_planes == planes * expansion"

    Ck = _round_up(Cin, LANE)          # padded in/out (=residual) channels
    Pp = _round_up(P, LANE)            # padded bottleneck width
    M = N * D * H * W
    tm = _pick_tile(M, (512, 256, 128, 64, 32, 16, 8))
    td = _pick_tile(D, (4, 8, 2, 1))

    # --- layout glue (outside Pallas): NCDHW -> [M, C] channels-last, lane-pad
    x2d = jnp.transpose(x_ncdhw, (0, 2, 3, 4, 1)).reshape(M, Cin)
    x2d = jnp.pad(x2d, ((0, 0), (0, Ck - Cin)))

    # --- lane-pad weights / BN params (zero pads keep the math exact)
    w1p = jnp.pad(params["w1"], ((0, Ck - Cin), (0, Pp - P)))
    w2p = jnp.pad(params["w2"].reshape(27, P, P),
                  ((0, 0), (0, Pp - P), (0, Pp - P)))
    w3p = jnp.pad(params["w3"], ((0, Pp - P), (0, Ck - Cout)))
    g1p = jnp.pad(params["g1"], ((0, 0), (0, Pp - P)), constant_values=1.0)
    b1p = jnp.pad(params["b1"], ((0, 0), (0, Pp - P)))
    g2p = jnp.pad(params["g2"], ((0, 0), (0, Pp - P)), constant_values=1.0)
    b2p = jnp.pad(params["b2"], ((0, 0), (0, Pp - P)))
    g3p = jnp.pad(params["g3"], ((0, 0), (0, Ck - Cout)), constant_values=1.0)
    b3p = jnp.pad(params["b3"], ((0, 0), (0, Ck - Cout)))

    # --- stage 1: conv1x1x1 + BN(train) + ReLU   (two-pass BN, M-tiled)
    y1, st1 = _matmul_with_stats(x2d, w1p, tm)
    out1 = _bn_act(st1, g1p, b1p, y1, tm=tm)

    # --- stage 2: conv3x3x3 (pad=1) + BN + ReLU  (halo DMA + 27-tap reduction)
    xp = jnp.pad(out1.reshape(N, D, H, W, Pp),
                 ((0, 0), (1, 1), (1, 1), (1, 1), (0, 0)))
    xp = xp.reshape(N * (D + 2), H + 2, W + 2, Pp)
    y2, st2 = _conv2_with_stats(xp, w2p, N, D, H, W, td)
    out2 = _bn_act(st2, g2p, b2p, y2.reshape(M, Pp), tm=tm)

    # --- stage 3: conv1x1x1 + BN + residual + ReLU
    y3, st3 = _matmul_with_stats(out2, w3p, tm)
    out3 = _bn_act(st3, g3p, b3p, y3, residual=x2d, tm=tm)

    out = out3[:, :Cout].reshape(N, D, H, W, Cout)
    return jnp.transpose(out, (0, 4, 1, 2, 3))       # back to NCDHW


# ---------------------------------------------------------------------------
# Deterministic parameter init (synthetic, not a checkpoint)
# ---------------------------------------------------------------------------
def init_params(key, in_planes, planes):
    ks = jax.random.split(key, 9)

    def conv_init(k, shape, fan_in):
        bound = 1.0 / np.sqrt(fan_in)
        return jax.random.uniform(k, shape, jnp.float32, -bound, bound)

    return {
        # conv weights stored channels-last for the matmul form
        "w1": conv_init(ks[0], (in_planes, planes), in_planes),            # 1x1x1
        "w2": conv_init(ks[1], (3, 3, 3, planes, planes), 27 * planes),    # 3x3x3 (kd,kh,kw,in,out)
        "w3": conv_init(ks[2], (planes, planes * EXPANSION), planes),      # 1x1x1
        # BN affine params (randomized but deterministic)
        "g1": jax.random.uniform(ks[3], (1, planes), jnp.float32, 0.5, 1.5),
        "b1": jax.random.uniform(ks[4], (1, planes), jnp.float32, -0.5, 0.5),
        "g2": jax.random.uniform(ks[5], (1, planes), jnp.float32, 0.5, 1.5),
        "b2": jax.random.uniform(ks[6], (1, planes), jnp.float32, -0.5, 0.5),
        "g3": jax.random.uniform(ks[7], (1, planes * EXPANSION), jnp.float32, 0.5, 1.5),
        "b3": jax.random.uniform(ks[8], (1, planes * EXPANSION), jnp.float32, -0.5, 0.5),
    }


# ---------------------------------------------------------------------------
# Pure-JAX reference mirroring the PyTorch module (for a correctness check)
# ---------------------------------------------------------------------------
def _conv3d_ref(x, w_oidhw, stride, padding):
    return jax.lax.conv_general_dilated(
        x, w_oidhw, window_strides=(stride,) * 3,
        padding=[(padding, padding)] * 3,
        dimension_numbers=("NCDHW", "OIDHW", "NCDHW"),
        precision=jax.lax.Precision.HIGHEST)


def _bn_train_ref(x, gamma, beta):
    g = gamma.reshape(1, -1, 1, 1, 1)
    b = beta.reshape(1, -1, 1, 1, 1)
    mean = jnp.mean(x, axis=(0, 2, 3, 4), keepdims=True)
    var = jnp.mean(jnp.square(x - mean), axis=(0, 2, 3, 4), keepdims=True)
    return (x - mean) * jax.lax.rsqrt(var + EPS) * g + b


def reference_forward(x, params, stride=1):
    in_planes = params["w1"].shape[0]
    planes = params["w1"].shape[1]
    w1 = params["w1"].T.reshape(planes, in_planes, 1, 1, 1)
    w2 = jnp.transpose(params["w2"], (4, 3, 0, 1, 2))
    w3 = params["w3"].T.reshape(planes * EXPANSION, planes, 1, 1, 1)

    out = jnp.maximum(_bn_train_ref(_conv3d_ref(x, w1, 1, 0), params["g1"], params["b1"]), 0.0)
    out = jnp.maximum(_bn_train_ref(_conv3d_ref(out, w2, stride, 1), params["g2"], params["b2"]), 0.0)
    out = _bn_train_ref(_conv3d_ref(out, w3, 1, 0), params["g3"], params["b3"])
    out = out + x                                            # downsample=None
    return jnp.maximum(out, 0.0)


# ---------------------------------------------------------------------------
if __name__ == "__main__":
    key = jax.random.PRNGKey(0)
    k_x, k_p = jax.random.split(key)

    # small shapes: N=2, planes=4 -> in_planes = 4*planes = 16, spatial 8^3
    N, planes = 2, 4
    in_planes = planes * EXPANSION
    D = H = W = 8

    x = jax.random.normal(k_x, (N, in_planes, D, H, W), jnp.float32)
    params = init_params(k_p, in_planes, planes)

    fwd = jax.jit(bottleneck_forward)
    out = jax.block_until_ready(fwd(x, params))
    ref = jax.block_until_ready(reference_forward(x, params))

    assert out.shape == (N, planes * EXPANSION, D, H, W)
    # Kernel matmuls use default MXU precision (HIGHEST dropped per perf review),
    # reference uses HIGHEST -> allow a modest tolerance.
    np.testing.assert_allclose(np.asarray(out), np.asarray(ref), rtol=2e-2, atol=2e-2)
    print("KERNEL_OK")
</pallas_src>

<mosaic_0001>
module attributes {stable_mosaic.version = 11 : i64} {
  func.func @_mm_stats_kernel(%arg0: i32, %arg1: memref<512x128xf32, #tpu.memory_space<vmem>>, %arg2: memref<128x128xf32, #tpu.memory_space<vmem>>, %arg3: memref<512x128xf32, #tpu.memory_space<vmem>>, %arg4: memref<1x2x128xf32, #tpu.memory_space<vmem>>) attributes {dimension_semantics = [#tpu.dimension_semantics<parallel>], iteration_bounds = array<i64: 2>, scalar_prefetch = 0 : i64, scratch_operands = 0 : i64, tpu.core_type = #tpu.core_type<tc>, window_params = [{transform_indices = @transform_0, window_bounds = array<i64: 512, 128>}, {pipeline_mode = #tpu.pipeline_mode<synchronous>, transform_indices = @transform_1, window_bounds = array<i64: 128, 128>}, {transform_indices = @transform_2, window_bounds = array<i64: 512, 128>}, {transform_indices = @transform_3, window_bounds = array<i64: 1, 2, 128>}]} {
    %c0 = arith.constant 0 : index
    %c0_0 = arith.constant 0 : index
    %0 = vector.load %arg1[%c0, %c0_0] : memref<512x128xf32, #tpu.memory_space<vmem>>, vector<512x128xf32>
    %c0_1 = arith.constant 0 : index
    %c0_2 = arith.constant 0 : index
    %1 = vector.load %arg2[%c0_1, %c0_2] : memref<128x128xf32, #tpu.memory_space<vmem>>, vector<128x128xf32>
    %cst = arith.constant dense<0.000000e+00> : vector<512x128xf32>
    %2 = tpu.matmul %0, %1, %cst {dimension_numbers = #tpu.dot_dimension_numbers<[1], [0], [0], [1], [0, 0, 1, 1], [], []>} : vector<512x128xf32>, vector<128x128xf32>, vector<512x128xf32> -> vector<512x128xf32>
    %c0_3 = arith.constant 0 : index
    %c0_4 = arith.constant 0 : index
    %3 = vector.load %arg3[%c0_3, %c0_4] : memref<512x128xf32, #tpu.memory_space<vmem>>, vector<512x128xf32>
    tpu.vector_store %arg3[%c0_3, %c0_4], %2 {strides = array<i32>} : memref<512x128xf32, #tpu.memory_space<vmem>>, vector<512x128xf32>,
    %cst_5 = arith.constant dense<0.000000e+00> : vector<128xf32>
    %4 = vector.multi_reduction <add>, %2, %cst_5 [0] : vector<512x128xf32> to vector<128xf32>
    %5 = vector.shape_cast %4 : vector<128xf32> to vector<1x128xf32>
    %6 = arith.mulf %2, %2 : vector<512x128xf32>
    %cst_6 = arith.constant dense<0.000000e+00> : vector<128xf32>
    %7 = vector.multi_reduction <add>, %6, %cst_6 [0] : vector<512x128xf32> to vector<128xf32>
    %8 = vector.shape_cast %7 : vector<128xf32> to vector<1x128xf32>
    %9 = tpu.concatenate %5, %8 in 0 : vector<1x128xf32>, vector<1x128xf32> -> vector<2x128xf32>
    %10 = vector.shape_cast %9 : vector<2x128xf32> to vector<1x2x128xf32>
    %c0_7 = arith.constant 0 : index
    %c0_8 = arith.constant 0 : index
    %c0_9 = arith.constant 0 : index
    %11 = vector.load %arg4[%c0_7, %c0_8, %c0_9] : memref<1x2x128xf32, #tpu.memory_space<vmem>>, vector<1x2x128xf32>
    tpu.vector_store %arg4[%c0_7, %c0_8, %c0_9], %10 {strides = array<i32>} : memref<1x2x128xf32, #tpu.memory_space<vmem>>, vector<1x2x128xf32>,
    return
  }
  func.func @transform_0(%arg0: i32) -> (i32, i32) {
    %c0_i32 = arith.constant 0 : i32
    %c0_i32_0 = arith.constant 0 : i32
    return %arg0, %c0_i32 : i32, i32
  }
  func.func @transform_1(%arg0: i32) -> (i32, i32) {
    %c0_i32 = arith.constant 0 : i32
    %c0_i32_0 = arith.constant 0 : i32
    %c0_i32_1 = arith.constant 0 : i32
    return %c0_i32, %c0_i32_0 : i32, i32
  }
  func.func @transform_2(%arg0: i32) -> (i32, i32) {
    %c0_i32 = arith.constant 0 : i32
    %c0_i32_0 = arith.constant 0 : i32
    return %arg0, %c0_i32 : i32, i32
  }
  func.func @transform_3(%arg0: i32) -> (i32, i32, i32) {
    %c0_i32 = arith.constant 0 : i32
    %c0_i32_0 = arith.constant 0 : i32
    %c0_i32_1 = arith.constant 0 : i32
    return %arg0, %c0_i32, %c0_i32_0 : i32, i32, i32
  }
}

module attributes {stable_mosaic.version = 11 : i64} {
  func.func @kernel(%arg0: i32, %arg1: memref<2x2x128xf32, #tpu.memory_space<vmem>>, %arg2: memref<1x128xf32, #tpu.memory_space<vmem>>, %arg3: memref<1x128xf32, #tpu.memory_space<vmem>>, %arg4: memref<512x128xf32, #tpu.memory_space<vmem>>, %arg5: memref<512x128xf32, #tpu.memory_space<vmem>>) attributes {dimension_semantics = [#tpu.dimension_semantics<parallel>], iteration_bounds = array<i64: 2>, scalar_prefetch = 0 : i64, scratch_operands = 0 : i64, tpu.core_type = #tpu.core_type<tc>, window_params = [{pipeline_mode = #tpu.pipeline_mode<synchronous>, transform_indices = @transform_0, window_bounds = array<i64: 2, 2, 128>}, {pipeline_mode = #tpu.pipeline_mode<synchronous>, transform_indices = @transform_1, window_bounds = array<i64: 1, 128>}, {pipeline_mode = #tpu.pipeline_mode<synchronous>, transform_indices = @transform_2, window_bounds = array<i64: 1, 128>}, {transform_indices = @transform_3, window_bounds = array<i64: 512, 128>}, {transform_indices = @transform_4, window_bounds = array<i64: 512, 128>}]} {
    %c0 = arith.constant 0 : index
    %c0_0 = arith.constant 0 : index
    %c0_1 = arith.constant 0 : index
    %0 = vector.load %arg1[%c0, %c0_0, %c0_1] : memref<2x2x128xf32, #tpu.memory_space<vmem>>, vector<2x2x128xf32>
    %cst = arith.constant dense<0.000000e+00> : vector<2x128xf32>
    %1 = vector.multi_reduction <add>, %0, %cst [0] : vector<2x2x128xf32> to vector<2x128xf32>
    %2 = vector.extract_strided_slice %1 {offsets = [0, 0], sizes = [1, 128], strides = [1, 1]} : vector<2x128xf32> to vector<1x128xf32>
    %cst_2 = arith.constant 9.765625E-4 : f32
    %3 = vector.broadcast %cst_2 : f32 to vector<1x128xf32>
    %4 = arith.mulf %2, %3 : vector<1x128xf32>
    %5 = vector.extract_strided_slice %1 {offsets = [1, 0], sizes = [1, 128], strides = [1, 1]} : vector<2x128xf32> to vector<1x128xf32>
    %cst_3 = arith.constant 9.765625E-4 : f32
    %6 = vector.broadcast %cst_3 : f32 to vector<1x128xf32>
    %7 = arith.mulf %5, %6 : vector<1x128xf32>
    %8 = arith.mulf %4, %4 : vector<1x128xf32>
    %9 = arith.subf %7, %8 : vector<1x128xf32>
    %cst_4 = arith.constant 9.99999974E-6 : f32
    %10 = vector.broadcast %cst_4 : f32 to vector<1x128xf32>
    %11 = arith.addf %9, %10 : vector<1x128xf32>
    %12 = math.rsqrt %11 : vector<1x128xf32>
    %c0_5 = arith.constant 0 : index
    %c0_6 = arith.constant 0 : index
    %13 = vector.load %arg4[%c0_5, %c0_6] : memref<512x128xf32, #tpu.memory_space<vmem>>, vector<512x128xf32>
    %14 = vector.broadcast %4 : vector<1x128xf32> to vector<512x128xf32>
    %15 = arith.subf %13, %14 : vector<512x128xf32>
    %c0_7 = arith.constant 0 : index
    %c0_8 = arith.constant 0 : index
    %16 = vector.load %arg2[%c0_7, %c0_8] : memref<1x128xf32, #tpu.memory_space<vmem>>, vector<1x128xf32>
    %17 = arith.mulf %12, %16 : vector<1x128xf32>
    %18 = vector.broadcast %17 : vector<1x128xf32> to vector<512x128xf32>
    %19 = arith.mulf %15, %18 : vector<512x128xf32>
    %c0_9 = arith.constant 0 : index
    %c0_10 = arith.constant 0 : index
    %20 = vector.load %arg3[%c0_9, %c0_10] : memref<1x128xf32, #tpu.memory_space<vmem>>, vector<1x128xf32>
    %21 = vector.broadcast %20 : vector<1x128xf32> to vector<512x128xf32>
    %22 = arith.addf %19, %21 : vector<512x128xf32>
    %cst_11 = arith.constant 0.000000e+00 : f32
    %23 = vector.broadcast %cst_11 : f32 to vector<512x128xf32>
    %24 = arith.maximumf %22, %23 : vector<512x128xf32>
    %c0_12 = arith.constant 0 : index
    %c0_13 = arith.constant 0 : index
    %25 = vector.load %arg5[%c0_12, %c0_13] : memref<512x128xf32, #tpu.memory_space<vmem>>, vector<512x128xf32>
    tpu.vector_store %arg5[%c0_12, %c0_13], %24 {strides = array<i32>} : memref<512x128xf32, #tpu.memory_space<vmem>>, vector<512x128xf32>,
    return
  }
  func.func @transform_0(%arg0: i32) -> (i32, i32, i32) {
    %c0_i32 = arith.constant 0 : i32
    %c0_i32_0 = arith.constant 0 : i32
    %c0_i32_1 = arith.constant 0 : i32
    %c0_i32_2 = arith.constant 0 : i32
    return %c0_i32, %c0_i32_0, %c0_i32_1 : i32, i32, i32
  }
  func.func @transform_1(%arg0: i32) -> (i32, i32) {
    %c0_i32 = arith.constant 0 : i32
    %c0_i32_0 = arith.constant 0 : i32
    %c0_i32_1 = arith.constant 0 : i32
    return %c0_i32, %c0_i32_0 : i32, i32
  }
  func.func @transform_2(%arg0: i32) -> (i32, i32) {
    %c0_i32 = arith.constant 0 : i32
    %c0_i32_0 = arith.constant 0 : i32
    %c0_i32_1 = arith.constant 0 : i32
    return %c0_i32, %c0_i32_0 : i32, i32
  }
  func.func @transform_3(%arg0: i32) -> (i32, i32) {
    %c0_i32 = arith.constant 0 : i32
    %c0_i32_0 = arith.constant 0 : i32
    return %arg0, %c0_i32 : i32, i32
  }
  func.func @transform_4(%arg0: i32) -> (i32, i32) {
    %c0_i32 = arith.constant 0 : i32
    %c0_i32_0 = arith.constant 0 : i32
    return %arg0, %c0_i32 : i32, i32
  }
}

module attributes {stable_mosaic.version = 11 : i64} {
  func.func @kernel(%arg0: i32, %arg1: i32, %arg2: memref<20x10x10x128xf32, #tpu.memory_space<any>>, %arg3: memref<27x128x128xf32, #tpu.memory_space<vmem>>, %arg4: memref<4x8x8x128xf32, #tpu.memory_space<vmem>>, %arg5: memref<1x2x128xf32, #tpu.memory_space<vmem>>, %arg6: memref<6x10x10x128xf32, #tpu.memory_space<vmem>>, %arg7: memref<!tpu.dma_semaphore, #tpu.memory_space<semaphore_mem>>) attributes {dimension_semantics = [#tpu.dimension_semantics<parallel>, #tpu.dimension_semantics<parallel>], iteration_bounds = array<i64: 2, 2>, scalar_prefetch = 0 : i64, scratch_operands = 2 : i64, tpu.core_type = #tpu.core_type<tc>, window_params = [{}, {pipeline_mode = #tpu.pipeline_mode<synchronous>, transform_indices = @transform_1, window_bounds = array<i64: 27, 128, 128>}, {transform_indices = @transform_2, window_bounds = array<i64: 4, 8, 8, 128>}, {transform_indices = @transform_3, window_bounds = array<i64: 1, 2, 128>}]} {
    %c10_i32 = arith.constant 10 : i32
    %0 = arith.muli %arg0, %c10_i32 : i32
    %c4_i32 = arith.constant 4 : i32
    %1 = arith.muli %arg1, %c4_i32 : i32
    %2 = arith.addi %0, %1 : i32
    %c0_i32 = arith.constant 0 : i32
    %c0_i32_0 = arith.constant 0 : i32
    %c0_i32_1 = arith.constant 0 : i32
    %3 = tpu.memref_slice %arg2[%2, %c0_i32, %c0_i32_0, %c0_i32_1] : memref<20x10x10x128xf32, #tpu.memory_space<any>> -> memref<6x10x10x128xf32, #tpu.memory_space<any>>
    tpu.enqueue_dma source(%3 : memref<6x10x10x128xf32, #tpu.memory_space<any>>) target(%arg6 : memref<6x10x10x128xf32, #tpu.memory_space<vmem>>) target_semaphore(%arg7 : memref<!tpu.dma_semaphore, #tpu.memory_space<semaphore_mem>>)
    %c0_i32_2 = arith.constant 0 : i32
    %c0_i32_3 = arith.constant 0 : i32
    %c0_i32_4 = arith.constant 0 : i32
    %4 = tpu.memref_slice %arg2[%2, %c0_i32_2, %c0_i32_3, %c0_i32_4] : memref<20x10x10x128xf32, #tpu.memory_space<any>> -> memref<6x10x10x128xf32, #tpu.memory_space<any>>
    tpu.wait_dma2 semaphore(%arg7 : memref<!tpu.dma_semaphore, #tpu.memory_space<semaphore_mem>>) src(%4 : memref<6x10x10x128xf32, #tpu.memory_space<any>>) dst(%arg6 : memref<6x10x10x128xf32, #tpu.memory_space<vmem>>)
    %cst = arith.constant 0.000000e+00 : f32
    %5 = vector.broadcast %cst : f32 to vector<256x128xf32>
    %c0 = arith.constant 0 : index
    %c0_5 = arith.constant 0 : index
    %c0_6 = arith.constant 0 : index
    %c0_7 = arith.constant 0 : index
    %6 = vector.load %arg6[%c0, %c0_5, %c0_6, %c0_7] : memref<6x10x10x128xf32, #tpu.memory_space<vmem>>, vector<4x8x8x128xf32>
    %7 = vector.shape_cast %6 : vector<4x8x8x128xf32> to vector<256x128xf32>
    %c0_8 = arith.constant 0 : index
    %c0_9 = arith.constant 0 : index
    %c0_10 = arith.constant 0 : index
    %8 = vector.load %arg3[%c0_8, %c0_9, %c0_10] : memref<27x128x128xf32, #tpu.memory_space<vmem>>, vector<1x128x128xf32>
    %9 = vector.shape_cast %8 : vector<1x128x128xf32> to vector<128x128xf32>
    %cst_11 = arith.constant dense<0.000000e+00> : vector<256x128xf32>
    %10 = tpu.matmul %7, %9, %cst_11 {dimension_numbers = #tpu.dot_dimension_numbers<[1], [0], [0], [1], [0, 0, 1, 1], [], []>} : vector<256x128xf32>, vector<128x128xf32>, vector<256x128xf32> -> vector<256x128xf32>
    %11 = arith.addf %5, %10 : vector<256x128xf32>
    %c0_12 = arith.constant 0 : index
    %c0_13 = arith.constant 0 : index
    %c1 = arith.constant 1 : index
    %c0_14 = arith.constant 0 : index
    %12 = vector.load %arg6[%c0_12, %c0_13, %c1, %c0_14] : memref<6x10x10x128xf32, #tpu.memory_space<vmem>>, vector<4x8x8x128xf32>
    %13 = vector.shape_cast %12 : vector<4x8x8x128xf32> to vector<256x128xf32>
    %c1_15 = arith.constant 1 : index
    %c0_16 = arith.constant 0 : index
    %c0_17 = arith.constant 0 : index
    %14 = vector.load %arg3[%c1_15, %c0_16, %c0_17] : memref<27x128x128xf32, #tpu.memory_space<vmem>>, vector<1x128x128xf32>
    %15 = vector.shape_cast %14 : vector<1x128x128xf32> to vector<128x128xf32>
    %cst_18 = arith.constant dense<0.000000e+00> : vector<256x128xf32>
    %16 = tpu.matmul %13, %15, %cst_18 {dimension_numbers = #tpu.dot_dimension_numbers<[1], [0], [0], [1], [0, 0, 1, 1], [], []>} : vector<256x128xf32>, vector<128x128xf32>, vector<256x128xf32> -> vector<256x128xf32>
    %17 = arith.addf %11, %16 : vector<256x128xf32>
    %c0_19 = arith.constant 0 : index
    %c0_20 = arith.constant 0 : index
    %c2 = arith.constant 2 : index
    %c0_21 = arith.constant 0 : index
    %18 = vector.load %arg6[%c0_19, %c0_20, %c2, %c0_21] : memref<6x10x10x128xf32, #tpu.memory_space<vmem>>, vector<4x8x8x128xf32>
    %19 = vector.shape_cast %18 : vector<4x8x8x128xf32> to vector<256x128xf32>
    %c2_22 = arith.constant 2 : index
    %c0_23 = arith.constant 0 : index
    %c0_24 = arith.constant 0 : index
    %20 = vector.load %arg3[%c2_22, %c0_23, %c0_24] : memref<27x128x128xf32, #tpu.memory_space<vmem>>, vector<1x128x128xf32>
    %21 = vector.shape_cast %20 : vector<1x128x128xf32> to vector<128x128xf32>
    %cst_25 = arith.constant dense<0.000000e+00> : vector<256x128xf32>
    %22 = tpu.matmul %19, %21, %cst_25 {dimension_numbers = #tpu.dot_dimension_numbers<[1], [0], [0], [1], [0, 0, 1, 1], [], []>} : vector<256x128xf32>, vector<128x128xf32>, vector<256x128xf32> -> vector<256x128xf32>
    %23 = arith.addf %17, %22 : vector<256x128xf32>
    %c0_26 = arith.constant 0 : index
    %c1_27 = arith.constant 1 : index
    %c0_28 = arith.constant 0 : index
    %c0_29 = arith.constant 0 : index
    %24 = vector.load %arg6[%c0_26, %c1_27, %c0_28, %c0_29] : memref<6x10x10x128xf32, #tpu.memory_space<vmem>>, vector<4x8x8x128xf32>
    %25 = vector.shape_cast %24 : vector<4x8x8x128xf32> to vector<256x128xf32>
    %c3 = arith.constant 3 : index
    %c0_30 = arith.constant 0 : index
    %c0_31 = arith.constant 0 : index
    %26 = vector.load %arg3[%c3, %c0_30, %c0_31] : memref<27x128x128xf32, #tpu.memory_space<vmem>>, vector<1x128x128xf32>
    %27 = vector.shape_cast %26 : vector<1x128x128xf32> to vector<128x128xf32>
    %cst_32 = arith.constant dense<0.000000e+00> : vector<256x128xf32>
    %28 = tpu.matmul %25, %27, %cst_32 {dimension_numbers = #tpu.dot_dimension_numbers<[1], [0], [0], [1], [0, 0, 1, 1], [], []>} : vector<256x128xf32>, vector<128x128xf32>, vector<256x128xf32> -> vector<256x128xf32>
    %29 = arith.addf %23, %28 : vector<256x128xf32>
    %c0_33 = arith.constant 0 : index
    %c1_34 = arith.constant 1 : index
    %c1_35 = arith.constant 1 : index
    %c0_36 = arith.constant 0 : index
    %30 = vector.load %arg6[%c0_33, %c1_34, %c1_35, %c0_36] : memref<6x10x10x128xf32, #tpu.memory_space<vmem>>, vector<4x8x8x128xf32>
    %31 = vector.shape_cast %30 : vector<4x8x8x128xf32> to vector<256x128xf32>
    %c4 = arith.constant 4 : index
    %c0_37 = arith.constant 0 : index
    %c0_38 = arith.constant 0 : index
    %32 = vector.load %arg3[%c4, %c0_37, %c0_38] : memref<27x128x128xf32, #tpu.memory_space<vmem>>, vector<1x128x128xf32>
    %33 = vector.shape_cast %32 : vector<1x128x128xf32> to vector<128x128xf32>
    %cst_39 = arith.constant dense<0.000000e+00> : vector<256x128xf32>
    %34 = tpu.matmul %31, %33, %cst_39 {dimension_numbers = #tpu.dot_dimension_numbers<[1], [0], [0], [1], [0, 0, 1, 1], [], []>} : vector<256x128xf32>, vector<128x128xf32>, vector<256x128xf32> -> vector<256x128xf32>
    %35 = arith.addf %29, %34 : vector<256x128xf32>
    %c0_40 = arith.constant 0 : index
    %c1_41 = arith.constant 1 : index
    %c2_42 = arith.constant 2 : index
    %c0_43 = arith.constant 0 : index
    %36 = vector.load %arg6[%c0_40, %c1_41, %c2_42, %c0_43] : memref<6x10x10x128xf32, #tpu.memory_space<vmem>>, vector<4x8x8x128xf32>
    %37 = vector.shape_cast %36 : vector<4x8x8x128xf32> to vector<256x128xf32>
    %c5 = arith.constant 5 : index
    %c0_44 = arith.constant 0 : index
    %c0_45 = arith.constant 0 : index
    %38 = vector.load %arg3[%c5, %c0_44, %c0_45] : memref<27x128x128xf32, #tpu.memory_space<vmem>>, vector<1x128x128xf32>
    %39 = vector.shape_cast %38 : vector<1x128x128xf32> to vector<128x128xf32>
    %cst_46 = arith.constant dense<0.000000e+00> : vector<256x128xf32>
    %40 = tpu.matmul %37, %39, %cst_46 {dimension_numbers = #tpu.dot_dimension_numbers<[1], [0], [0], [1], [0, 0, 1, 1], [], []>} : vector<256x128xf32>, vector<128x128xf32>, vector<256x128xf32> -> vector<256x128xf32>
    %41 = arith.addf %35, %40 : vector<256x128xf32>
    %c0_47 = arith.constant 0 : index
    %c2_48 = arith.constant 2 : index
    %c0_49 = arith.constant 0 : index
    %c0_50 = arith.constant 0 : index
    %42 = vector.load %arg6[%c0_47, %c2_48, %c0_49, %c0_50] : memref<6x10x10x128xf32, #tpu.memory_space<vmem>>, vector<4x8x8x128xf32>
    %43 = vector.shape_cast %42 : vector<4x8x8x128xf32> to vector<256x128xf32>
    %c6 = arith.constant 6 : index
    %c0_51 = arith.constant 0 : index
    %c0_52 = arith.constant 0 : index
    %44 = vector.load %arg3[%c6, %c0_51, %c0_52] : memref<27x128x128xf32, #tpu.memory_space<vmem>>, vector<1x128x128xf32>
    %45 = vector.shape_cast %44 : vector<1x128x128xf32> to vector<128x128xf32>
    %cst_53 = arith.constant dense<0.000000e+00> : vector<256x128xf32>
    %46 = tpu.matmul %43, %45, %cst_53 {dimension_numbers = #tpu.dot_dimension_numbers<[1], [0], [0], [1], [0, 0, 1, 1], [], []>} : vector<256x128xf32>, vector<128x128xf32>, vector<256x128xf32> -> vector<256x128xf32>
    %47 = arith.addf %41, %46 : vector<256x128xf32>
    %c0_54 = arith.constant 0 : index
    %c2_55 = arith.constant 2 : index
    %c1_56 = arith.constant 1 : index
    %c0_57 = arith.constant 0 : index
    %48 = vector.load %arg6[%c0_54, %c2_55, %c1_56, %c0_57] : memref<6x10x10x128xf32, #tpu.memory_space<vmem>>, vector<4x8x8x128xf32>
    %49 = vector.shape_cast %48 : vector<4x8x8x128xf32> to vector<256x128xf32>
    %c7 = arith.constant 7 : index
    %c0_58 = arith.constant 0 : index
    %c0_59 = arith.constant 0 : index
    %50 = vector.load %arg3[%c7, %c0_58, %c0_59] : memref<27x128x128xf32, #tpu.memory_space<vmem>>, vector<1x128x128xf32>
    %51 = vector.shape_cast %50 : vector<1x128x128xf32> to vector<128x128xf32>
    %cst_60 = arith.constant dense<0.000000e+00> : vector<256x128xf32>
    %52 = tpu.matmul %49, %51, %cst_60 {dimension_numbers = #tpu.dot_dimension_numbers<[1], [0], [0], [1], [0, 0, 1, 1], [], []>} : vector<256x128xf32>, vector<128x128xf32>, vector<256x128xf32> -> vector<256x128xf32>
    %53 = arith.addf %47, %52 : vector<256x128xf32>
    %c0_61 = arith.constant 0 : index
    %c2_62 = arith.constant 2 : index
    %c2_63 = arith.constant 2 : index
    %c0_64 = arith.constant 0 : index
    %54 = vector.load %arg6[%c0_61, %c2_62, %c2_63, %c0_64] : memref<6x10x10x128xf32, #tpu.memory_space<vmem>>, vector<4x8x8x128xf32>
    %55 = vector.shape_cast %54 : vector<4x8x8x128xf32> to vector<256x128xf32>
    %c8 = arith.constant 8 : index
    %c0_65 = arith.constant 0 : index
    %c0_66 = arith.constant 0 : index
    %56 = vector.load %arg3[%c8, %c0_65, %c0_66] : memref<27x128x128xf32, #tpu.memory_space<vmem>>, vector<1x128x128xf32>
    %57 = vector.shape_cast %56 : vector<1x128x128xf32> to vector<128x128xf32>
    %cst_67 = arith.constant dense<0.000000e+00> : vector<256x128xf32>
    %58 = tpu.matmul %55, %57, %cst_67 {dimension_numbers = #tpu.dot_dimension_numbers<[1], [0], [0], [1], [0, 0, 1, 1], [], []>} : vector<256x128xf32>, vector<128x128xf32>, vector<256x128xf32> -> vector<256x128xf32>
    %59 = arith.addf %53, %58 : vector<256x128xf32>
    %c1_68 = arith.constant 1 : index
    %c0_69 = arith.constant 0 : index
    %c0_70 = arith.constant 0 : index
    %c0_71 = arith.constant 0 : index
    %60 = vector.load %arg6[%c1_68, %c0_69, %c0_70, %c0_71] : memref<6x10x10x128xf32, #tpu.memory_space<vmem>>, vector<4x8x8x128xf32>
    %61 = vector.shape_cast %60 : vector<4x8x8x128xf32> to vector<256x128xf32>
    %c9 = arith.constant 9 : index
    %c0_72 = arith.constant 0 : index
    %c0_73 = arith.constant 0 : index
    %62 = vector.load %arg3[%c9, %c0_72, %c0_73] : memref<27x128x128xf32, #tpu.memory_space<vmem>>, vector<1x128x128xf32>
    %63 = vector.shape_cast %62 : vector<1x128x128xf32> to vector<128x128xf32>
    %cst_74 = arith.constant dense<0.000000e+00> : vector<256x128xf32>
    %64 = tpu.matmul %61, %63, %cst_74 {dimension_numbers = #tpu.dot_dimension_numbers<[1], [0], [0], [1], [0, 0, 1, 1], [], []>} : vector<256x128xf32>, vector<128x128xf32>, vector<256x128xf32> -> vector<256x128xf32>
    %65 = arith.addf %59, %64 : vector<256x128xf32>
    %c1_75 = arith.constant 1 : index
    %c0_76 = arith.constant 0 : index
    %c1_77 = arith.constant 1 : index
    %c0_78 = arith.constant 0 : index
    %66 = vector.load %arg6[%c1_75, %c0_76, %c1_77, %c0_78] : memref<6x10x10x128xf32, #tpu.memory_space<vmem>>, vector<4x8x8x128xf32>
    %67 = vector.shape_cast %66 : vector<4x8x8x128xf32> to vector<256x128xf32>
    %c10 = arith.constant 10 : index
    %c0_79 = arith.constant 0 : index
    %c0_80 = arith.constant 0 : index
    %68 = vector.load %arg3[%c10, %c0_79, %c0_80] : memref<27x128x128xf32, #tpu.memory_space<vmem>>, vector<1x128x128xf32>
    %69 = vector.shape_cast %68 : vector<1x128x128xf32> to vector<128x128xf32>
    %cst_81 = arith.constant dense<0.000000e+00> : vector<256x128xf32>
    %70 = tpu.matmul %67, %69, %cst_81 {dimension_numbers = #tpu.dot_dimension_numbers<[1], [0], [0], [1], [0, 0, 1, 1], [], []>} : vector<256x128xf32>, vector<128x128xf32>, vector<256x128xf32> -> vector<256x128xf32>
    %71 = arith.addf %65, %70 : vector<256x128xf32>
    %c1_82 = arith.constant 1 : index
    %c0_83 = arith.constant 0 : index
    %c2_84 = arith.constant 2 : index
    %c0_85 = arith.constant 0 : index
    %72 = vector.load %arg6[%c1_82, %c0_83, %c2_84, %c0_85] : memref<6x10x10x128xf32, #tpu.memory_space<vmem>>, vector<4x8x8x128xf32>
    %73 = vector.shape_cast %72 : vector<4x8x8x128xf32> to vector<256x128xf32>
    %c11 = arith.constant 11 : index
    %c0_86 = arith.constant 0 : index
    %c0_87 = arith.constant 0 : index
    %74 = vector.load %arg3[%c11, %c0_86, %c0_87] : memref<27x128x128xf32, #tpu.memory_space<vmem>>, vector<1x128x128xf32>
    %75 = vector.shape_cast %74 : vector<1x128x128xf32> to vector<128x128xf32>
    %cst_88 = arith.constant dense<0.000000e+00> : vector<256x128xf32>
    %76 = tpu.matmul %73, %75, %cst_88 {dimension_numbers = #tpu.dot_dimension_numbers<[1], [0], [0], [1], [0, 0, 1, 1], [], []>} : vector<256x128xf32>, vector<128x128xf32>, vector<256x128xf32> -> vector<256x128xf32>
    %77 = arith.addf %71, %76 : vector<256x128xf32>
    %c1_89 = arith.constant 1 : index
    %c1_90 = arith.constant 1 : index
    %c0_91 = arith.constant 0 : index
    %c0_92 = arith.constant 0 : index
    %78 = vector.load %arg6[%c1_89, %c1_90, %c0_91, %c0_92] : memref<6x10x10x128xf32, #tpu.memory_space<vmem>>, vector<4x8x8x128xf32>
    %79 = vector.shape_cast %78 : vector<4x8x8x128xf32> to vector<256x128xf32>
    %c12 = arith.constant 12 : index
    %c0_93 = arith.constant 0 : index
    %c0_94 = arith.constant 0 : index
    %80 = vector.load %arg3[%c12, %c0_93, %c0_94] : memref<27x128x128xf32, #tpu.memory_space<vmem>>, vector<1x128x128xf32>
    %81 = vector.shape_cast %80 : vector<1x128x128xf32> to vector<128x128xf32>
    %cst_95 = arith.constant dense<0.000000e+00> : vector<256x128xf32>
    %82 = tpu.matmul %79, %81, %cst_95 {dimension_numbers = #tpu.dot_dimension_numbers<[1], [0], [0], [1], [0, 0, 1, 1], [], []>} : vector<256x128xf32>, vector<128x128xf32>, vector<256x128xf32> -> vector<256x128xf32>
    %83 = arith.addf %77, %82 : vector<256x128xf32>
    %c1_96 = arith.constant 1 : index
    %c1_97 = arith.constant 1 : index
    %c1_98 = arith.constant 1 : index
    %c0_99 = arith.constant 0 : index
    %84 = vector.load %arg6[%c1_96, %c1_97, %c1_98, %c0_99] : memref<6x10x10x128xf32, #tpu.memory_space<vmem>>, vector<4x8x8x128xf32>
    %85 = vector.shape_cast %84 : vector<4x8x8x128xf32> to vector<256x128xf32>
    %c13 = arith.constant 13 : index
    %c0_100 = arith.constant 0 : index
    %c0_101 = arith.constant 0 : index
    %86 = vector.load %arg3[%c13, %c0_100, %c0_101] : memref<27x128x128xf32, #tpu.memory_space<vmem>>, vector<1x128x128xf32>
    %87 = vector.shape_cast %86 : vector<1x128x128xf32> to vector<128x128xf32>
    %cst_102 = arith.constant dense<0.000000e+00> : vector<256x128xf32>
    %88 = tpu.matmul %85, %87, %cst_102 {dimension_numbers = #tpu.dot_dimension_numbers<[1], [0], [0], [1], [0, 0, 1, 1], [], []>} : vector<256x128xf32>, vector<128x128xf32>, vector<256x128xf32> -> vector<256x128xf32>
    %89 = arith.addf %83, %88 : vector<256x128xf32>
    %c1_103 = arith.constant 1 : index
    %c1_104 = arith.constant 1 : index
    %c2_105 = arith.constant 2 : index
    %c0_106 = arith.constant 0 : index
    %90 = vector.load %arg6[%c1_103, %c1_104, %c2_105, %c0_106] : memref<6x10x10x128xf32, #tpu.memory_space<vmem>>, vector<4x8x8x128xf32>
    %91 = vector.shape_cast %90 : vector<4x8x8x128xf32> to vector<256x128xf32>
    %c14 = arith.constant 14 : index
    %c0_107 = arith.constant 0 : index
    %c0_108 = arith.constant 0 : index
    %92 = vector.load %arg3[%c14, %c0_107, %c0_108] : memref<27x128x128xf32, #tpu.memory_space<vmem>>, vector<1x128x128xf32>
    %93 = vector.shape_cast %92 : vector<1x128x128xf32> to vector<128x128xf32>
    %cst_109 = arith.constant dense<0.000000e+00> : vector<256x128xf32>
    %94 = tpu.matmul %91, %93, %cst_109 {dimension_numbers = #tpu.dot_dimension_numbers<[1], [0], [0], [1], [0, 0, 1, 1], [], []>} : vector<256x128xf32>, vector<128x128xf32>, vector<256x128xf32> -> vector<256x128xf32>
    %95 = arith.addf %89, %94 : vector<256x128xf32>
    %c1_110 = arith.constant 1 : index
    %c2_111 = arith.constant 2 : index
    %c0_112 = arith.constant 0 : index
    %c0_113 = arith.constant 0 : index
    %96 = vector.load %arg6[%c1_110, %c2_111, %c0_112, %c0_113] : memref<6x10x10x128xf32, #tpu.memory_space<vmem>>, vector<4x8x8x128xf32>
    %97 = vector.shape_cast %96 : vector<4x8x8x128xf32> to vector<256x128xf32>
    %c15 = arith.constant 15 : index
    %c0_114 = arith.constant 0 : index
    %c0_115 = arith.constant 0 : index
    %98 = vector.load %arg3[%c15, %c0_114, %c0_115] : memref<27x128x128xf32, #tpu.memory_space<vmem>>, vector<1x128x128xf32>
    %99 = vector.shape_cast %98 : vector<1x128x128xf32> to vector<128x128xf32>
    %cst_116 = arith.constant dense<0.000000e+00> : vector<256x128xf32>
    %100 = tpu.matmul %97, %99, %cst_116 {dimension_numbers = #tpu.dot_dimension_numbers<[1], [0], [0], [1], [0, 0, 1, 1], [], []>} : vector<256x128xf32>, vector<128x128xf32>, vector<256x128xf32> -> vector<256x128xf32>
    %101 = arith.addf %95, %100 : vector<256x128xf32>
    %c1_117 = arith.constant 1 : index
    %c2_118 = arith.constant 2 : index
    %c1_119 = arith.constant 1 : index
    %c0_120 = arith.constant 0 : index
    %102 = vector.load %arg6[%c1_117, %c2_118, %c1_119, %c0_120] : memref<6x10x10x128xf32, #tpu.memory_space<vmem>>, vector<4x8x8x128xf32>
    %103 = vector.shape_cast %102 : vector<4x8x8x128xf32> to vector<256x128xf32>
    %c16 = arith.constant 16 : index
    %c0_121 = arith.constant 0 : index
    %c0_122 = arith.constant 0 : index
    %104 = vector.load %arg3[%c16, %c0_121, %c0_122] : memref<27x128x128xf32, #tpu.memory_space<vmem>>, vector<1x128x128xf32>
    %105 = vector.shape_cast %104 : vector<1x128x128xf32> to vector<128x128xf32>
    %cst_123 = arith.constant dense<0.000000e+00> : vector<256x128xf32>
    %106 = tpu.matmul %103, %105, %cst_123 {dimension_numbers = #tpu.dot_dimension_numbers<[1], [0], [0], [1], [0, 0, 1, 1], [], []>} : vector<256x128xf32>, vector<128x128xf32>, vector<256x128xf32> -> vector<256x128xf32>
    %107 = arith.addf %101, %106 : vector<256x128xf32>
    %c1_124 = arith.constant 1 : index
    %c2_125 = arith.constant 2 : index
    %c2_126 = arith.constant 2 : index
    %c0_127 = arith.constant 0 : index
    %108 = vector.load %arg6[%c1_124, %c2_125, %c2_126, %c0_127] : memref<6x10x10x128xf32, #tpu.memory_space<vmem>>, vector<4x8x8x128xf32>
    %109 = vector.shape_cast %108 : vector<4x8x8x128xf32> to vector<256x128xf32>
    %c17 = arith.constant 17 : index
    %c0_128 = arith.constant 0 : index
    %c0_129 = arith.constant 0 : index
    %110 = vector.load %arg3[%c17, %c0_128, %c0_129] : memref<27x128x128xf32, #tpu.memory_space<vmem>>, vector<1x128x128xf32>
    %111 = vector.shape_cast %110 : vector<1x128x128xf32> to vector<128x128xf32>
    %cst_130 = arith.constant dense<0.000000e+00> : vector<256x128xf32>
    %112 = tpu.matmul %109, %111, %cst_130 {dimension_numbers = #tpu.dot_dimension_numbers<[1], [0], [0], [1], [0, 0, 1, 1], [], []>} : vector<256x128xf32>, vector<128x128xf32>, vector<256x128xf32> -> vector<256x128xf32>
    %113 = arith.addf %107, %112 : vector<256x128xf32>
    %c2_131 = arith.constant 2 : index
    %c0_132 = arith.constant 0 : index
    %c0_133 = arith.constant 0 : index
    %c0_134 = arith.constant 0 : index
    %114 = vector.load %arg6[%c2_131, %c0_132, %c0_133, %c0_134] : memref<6x10x10x128xf32, #tpu.memory_space<vmem>>, vector<4x8x8x128xf32>
    %115 = vector.shape_cast %114 : vector<4x8x8x128xf32> to vector<256x128xf32>
    %c18 = arith.constant 18 : index
    %c0_135 = arith.constant 0 : index
    %c0_136 = arith.constant 0 : index
    %116 = vector.load %arg3[%c18, %c0_135, %c0_136] : memref<27x128x128xf32, #tpu.memory_space<vmem>>, vector<1x128x128xf32>
    %117 = vector.shape_cast %116 : vector<1x128x128xf32> to vector<128x128xf32>
    %cst_137 = arith.constant dense<0.000000e+00> : vector<256x128xf32>
    %118 = tpu.matmul %115, %117, %cst_137 {dimension_numbers = #tpu.dot_dimension_numbers<[1], [0], [0], [1], [0, 0, 1, 1], [], []>} : vector<256x128xf32>, vector<128x128xf32>, vector<256x128xf32> -> vector<256x128xf32>
    %119 = arith.addf %113, %118 : vector<256x128xf32>
    %c2_138 = arith.constant 2 : index
    %c0_139 = arith.constant 0 : index
    %c1_140 = arith.constant 1 : index
    %c0_141 = arith.constant 0 : index
    %120 = vector.load %arg6[%c2_138, %c0_139, %c1_140, %c0_141] : memref<6x10x10x128xf32, #tpu.memory_space<vmem>>, vector<4x8x8x128xf32>
    %121 = vector.shape_cast %120 : vector<4x8x8x128xf32> to vector<256x128xf32>
    %c19 = arith.constant 19 : index
    %c0_142 = arith.constant 0 : index
    %c0_143 = arith.constant 0 : index
    %122 = vector.load %arg3[%c19, %c0_142, %c0_143] : memref<27x128x128xf32, #tpu.memory_space<vmem>>, vector<1x128x128xf32>
    %123 = vector.shape_cast %122 : vector<1x128x128xf32> to vector<128x128xf32>
    %cst_144 = arith.constant dense<0.000000e+00> : vector<256x128xf32>
    %124 = tpu.matmul %121, %123, %cst_144 {dimension_numbers = #tpu.dot_dimension_numbers<[1], [0], [0], [1], [0, 0, 1, 1], [], []>} : vector<256x128xf32>, vector<128x128xf32>, vector<256x128xf32> -> vector<256x128xf32>
    %125 = arith.addf %119, %124 : vector<256x128xf32>
    %c2_145 = arith.constant 2 : index
    %c0_146 = arith.constant 0 : index
    %c2_147 = arith.constant 2 : index
    %c0_148 = arith.constant 0 : index
    %126 = vector.load %arg6[%c2_145, %c0_146, %c2_147, %c0_148] : memref<6x10x10x128xf32, #tpu.memory_space<vmem>>, vector<4x8x8x128xf32>
    %127 = vector.shape_cast %126 : vector<4x8x8x128xf32> to vector<256x128xf32>
    %c20 = arith.constant 20 : index
    %c0_149 = arith.constant 0 : index
    %c0_150 = arith.constant 0 : index
    %128 = vector.load %arg3[%c20, %c0_149, %c0_150] : memref<27x128x128xf32, #tpu.memory_space<vmem>>, vector<1x128x128xf32>
    %129 = vector.shape_cast %128 : vector<1x128x128xf32> to vector<128x128xf32>
    %cst_151 = arith.constant dense<0.000000e+00> : vector<256x128xf32>
    %130 = tpu.matmul %127, %129, %cst_151 {dimension_numbers = #tpu.dot_dimension_numbers<[1], [0], [0], [1], [0, 0, 1, 1], [], []>} : vector<256x128xf32>, vector<128x128xf32>, vector<256x128xf32> -> vector<256x128xf32>
    %131 = arith.addf %125, %130 : vector<256x128xf32>
    %c2_152 = arith.constant 2 : index
    %c1_153 = arith.constant 1 : index
    %c0_154 = arith.constant 0 : index
    %c0_155 = arith.constant 0 : index
    %132 = vector.load %arg6[%c2_152, %c1_153, %c0_154, %c0_155] : memref<6x10x10x128xf32, #tpu.memory_space<vmem>>, vector<4x8x8x128xf32>
    %133 = vector.shape_cast %132 : vector<4x8x8x128xf32> to vector<256x128xf32>
    %c21 = arith.constant 21 : index
    %c0_156 = arith.constant 0 : index
    %c0_157 = arith.constant 0 : index
    %134 = vector.load %arg3[%c21, %c0_156, %c0_157] : memref<27x128x128xf32, #tpu.memory_space<vmem>>, vector<1x128x128xf32>
    %135 = vector.shape_cast %134 : vector<1x128x128xf32> to vector<128x128xf32>
    %cst_158 = arith.constant dense<0.000000e+00> : vector<256x128xf32>
    %136 = tpu.matmul %133, %135, %cst_158 {dimension_numbers = #tpu.dot_dimension_numbers<[1], [0], [0], [1], [0, 0, 1, 1], [], []>} : vector<256x128xf32>, vector<128x128xf32>, vector<256x128xf32> -> vector<256x128xf32>
    %137 = arith.addf %131, %136 : vector<256x128xf32>
    %c2_159 = arith.constant 2 : index
    %c1_160 = arith.constant 1 : index
    %c1_161 = arith.constant 1 : index
    %c0_162 = arith.constant 0 : index
    %138 = vector.load %arg6[%c2_159, %c1_160, %c1_161, %c0_162] : memref<6x10x10x128xf32, #tpu.memory_space<vmem>>, vector<4x8x8x128xf32>
    %139 = vector.shape_cast %138 : vector<4x8x8x128xf32> to vector<256x128xf32>
    %c22 = arith.constant 22 : index
    %c0_163 = arith.constant 0 : index
    %c0_164 = arith.constant 0 : index
    %140 = vector.load %arg3[%c22, %c0_163, %c0_164] : memref<27x128x128xf32, #tpu.memory_space<vmem>>, vector<1x128x128xf32>
    %141 = vector.shape_cast %140 : vector<1x128x128xf32> to vector<128x128xf32>
    %cst_165 = arith.constant dense<0.000000e+00> : vector<256x128xf32>
    %142 = tpu.matmul %139, %141, %cst_165 {dimension_numbers = #tpu.dot_dimension_numbers<[1], [0], [0], [1], [0, 0, 1, 1], [], []>} : vector<256x128xf32>, vector<128x128xf32>, vector<256x128xf32> -> vector<256x128xf32>
    %143 = arith.addf %137, %142 : vector<256x128xf32>
    %c2_166 = arith.constant 2 : index
    %c1_167 = arith.constant 1 : index
    %c2_168 = arith.constant 2 : index
    %c0_169 = arith.constant 0 : index
    %144 = vector.load %arg6[%c2_166, %c1_167, %c2_168, %c0_169] : memref<6x10x10x128xf32, #tpu.memory_space<vmem>>, vector<4x8x8x128xf32>
    %145 = vector.shape_cast %144 : vector<4x8x8x128xf32> to vector<256x128xf32>
    %c23 = arith.constant 23 : index
    %c0_170 = arith.constant 0 : index
    %c0_171 = arith.constant 0 : index
    %146 = vector.load %arg3[%c23, %c0_170, %c0_171] : memref<27x128x128xf32, #tpu.memory_space<vmem>>, vector<1x128x128xf32>
    %147 = vector.shape_cast %146 : vector<1x128x128xf32> to vector<128x128xf32>
    %cst_172 = arith.constant dense<0.000000e+00> : vector<256x128xf32>
    %148 = tpu.matmul %145, %147, %cst_172 {dimension_numbers = #tpu.dot_dimension_numbers<[1], [0], [0], [1], [0, 0, 1, 1], [], []>} : vector<256x128xf32>, vector<128x128xf32>, vector<256x128xf32> -> vector<256x128xf32>
    %149 = arith.addf %143, %148 : vector<256x128xf32>
    %c2_173 = arith.constant 2 : index
    %c2_174 = arith.constant 2 : index
    %c0_175 = arith.constant 0 : index
    %c0_176 = arith.constant 0 : index
    %150 = vector.load %arg6[%c2_173, %c2_174, %c0_175, %c0_176] : memref<6x10x10x128xf32, #tpu.memory_space<vmem>>, vector<4x8x8x128xf32>
    %151 = vector.shape_cast %150 : vector<4x8x8x128xf32> to vector<256x128xf32>
    %c24 = arith.constant 24 : index
    %c0_177 = arith.constant 0 : index
    %c0_178 = arith.constant 0 : index
    %152 = vector.load %arg3[%c24, %c0_177, %c0_178] : memref<27x128x128xf32, #tpu.memory_space<vmem>>, vector<1x128x128xf32>
    %153 = vector.shape_cast %152 : vector<1x128x128xf32> to vector<128x128xf32>
    %cst_179 = arith.constant dense<0.000000e+00> : vector<256x128xf32>
    %154 = tpu.matmul %151, %153, %cst_179 {dimension_numbers = #tpu.dot_dimension_numbers<[1], [0], [0], [1], [0, 0, 1, 1], [], []>} : vector<256x128xf32>, vector<128x128xf32>, vector<256x128xf32> -> vector<256x128xf32>
    %155 = arith.addf %149, %154 : vector<256x128xf32>
    %c2_180 = arith.constant 2 : index
    %c2_181 = arith.constant 2 : index
    %c1_182 = arith.constant 1 : index
    %c0_183 = arith.constant 0 : index
    %156 = vector.load %arg6[%c2_180, %c2_181, %c1_182, %c0_183] : memref<6x10x10x128xf32, #tpu.memory_space<vmem>>, vector<4x8x8x128xf32>
    %157 = vector.shape_cast %156 : vector<4x8x8x128xf32> to vector<256x128xf32>
    %c25 = arith.constant 25 : index
    %c0_184 = arith.constant 0 : index
    %c0_185 = arith.constant 0 : index
    %158 = vector.load %arg3[%c25, %c0_184, %c0_185] : memref<27x128x128xf32, #tpu.memory_space<vmem>>, vector<1x128x128xf32>
    %159 = vector.shape_cast %158 : vector<1x128x128xf32> to vector<128x128xf32>
    %cst_186 = arith.constant dense<0.000000e+00> : vector<256x128xf32>
    %160 = tpu.matmul %157, %159, %cst_186 {dimension_numbers = #tpu.dot_dimension_numbers<[1], [0], [0], [1], [0, 0, 1, 1], [], []>} : vector<256x128xf32>, vector<128x128xf32>, vector<256x128xf32> -> vector<256x128xf32>
    %161 = arith.addf %155, %160 : vector<256x128xf32>
    %c2_187 = arith.constant 2 : index
    %c2_188 = arith.constant 2 : index
    %c2_189 = arith.constant 2 : index
    %c0_190 = arith.constant 0 : index
    %162 = vector.load %arg6[%c2_187, %c2_188, %c2_189, %c0_190] : memref<6x10x10x128xf32, #tpu.memory_space<vmem>>, vector<4x8x8x128xf32>
    %163 = vector.shape_cast %162 : vector<4x8x8x128xf32> to vector<256x128xf32>
    %c26 = arith.constant 26 : index
    %c0_191 = arith.constant 0 : index
    %c0_192 = arith.constant 0 : index
    %164 = vector.load %arg3[%c26, %c0_191, %c0_192] : memref<27x128x128xf32, #tpu.memory_space<vmem>>, vector<1x128x128xf32>
    %165 = vector.shape_cast %164 : vector<1x128x128xf32> to vector<128x128xf32>
    %cst_193 = arith.constant dense<0.000000e+00> : vector<256x128xf32>
    %166 = tpu.matmul %163, %165, %cst_193 {dimension_numbers = #tpu.dot_dimension_numbers<[1], [0], [0], [1], [0, 0, 1, 1], [], []>} : vector<256x128xf32>, vector<128x128xf32>, vector<256x128xf32> -> vector<256x128xf32>
    %167 = arith.addf %161, %166 : vector<256x128xf32>
    %168 = vector.shape_cast %167 : vector<256x128xf32> to vector<4x8x8x128xf32>
    %c0_194 = arith.constant 0 : index
    %c0_195 = arith.constant 0 : index
    %c0_196 = arith.constant 0 : index
    %c0_197 = arith.constant 0 : index
    %169 = vector.load %arg4[%c0_194, %c0_195, %c0_196, %c0_197] : memref<4x8x8x128xf32, #tpu.memory_space<vmem>>, vector<4x8x8x128xf32>
    tpu.vector_store %arg4[%c0_194, %c0_195, %c0_196, %c0_197], %168 {strides = array<i32>} : memref<4x8x8x128xf32, #tpu.memory_space<vmem>>, vector<4x8x8x128xf32>,
    %cst_198 = arith.constant dense<0.000000e+00> : vector<128xf32>
    %170 = vector.multi_reduction <add>, %167, %cst_198 [0] : vector<256x128xf32> to vector<128xf32>
    %171 = vector.shape_cast %170 : vector<128xf32> to vector<1x128xf32>
    %172 = arith.mulf %167, %167 : vector<256x128xf32>
    %cst_199 = arith.constant dense<0.000000e+00> : vector<128xf32>
    %173 = vector.multi_reduction <add>, %172, %cst_199 [0] : vector<256x128xf32> to vector<128xf32>
    %174 = vector.shape_cast %173 : vector<128xf32> to vector<1x128xf32>
    %175 = tpu.concatenate %171, %174 in 0 : vector<1x128xf32>, vector<1x128xf32> -> vector<2x128xf32>
    %176 = vector.shape_cast %175 : vector<2x128xf32> to vector<1x2x128xf32>
    %c0_200 = arith.constant 0 : index
    %c0_201 = arith.constant 0 : index
    %c0_202 = arith.constant 0 : index
    %177 = vector.load %arg5[%c0_200, %c0_201, %c0_202] : memref<1x2x128xf32, #tpu.memory_space<vmem>>, vector<1x2x128xf32>
    tpu.vector_store %arg5[%c0_200, %c0_201, %c0_202], %176 {strides = array<i32>} : memref<1x2x128xf32, #tpu.memory_space<vmem>>, vector<1x2x128xf32>,
    return
  }
  func.func @transform_1(%arg0: i32, %arg1: i32) -> (i32, i32, i32) {
    %c0_i32 = arith.constant 0 : i32
    %c0_i32_0 = arith.constant 0 : i32
    %c0_i32_1 = arith.constant 0 : i32
    %c0_i32_2 = arith.constant 0 : i32
    return %c0_i32, %c0_i32_0, %c0_i32_1 : i32, i32, i32
  }
  func.func @transform_2(%arg0: i32, %arg1: i32) -> (i32, i32, i32, i32) {
    %c2_i32 = arith.constant 2 : i32
    %0 = arith.muli %arg0, %c2_i32 : i32
    %1 = arith.addi %0, %arg1 : i32
    %c0_i32 = arith.constant 0 : i32
    %c0_i32_0 = arith.constant 0 : i32
    %c0_i32_1 = arith.constant 0 : i32
    %c0_i32_2 = arith.constant 0 : i32
    return %1, %c0_i32, %c0_i32_0, %c0_i32_1 : i32, i32, i32, i32
  }
  func.func @transform_3(%arg0: i32, %arg1: i32) -> (i32, i32, i32) {
    %c2_i32 = arith.constant 2 : i32
    %0 = arith.muli %arg0, %c2_i32 : i32
    %1 = arith.addi %0, %arg1 : i32
    %c0_i32 = arith.constant 0 : i32
    %c0_i32_0 = arith.constant 0 : i32
    %c0_i32_1 = arith.constant 0 : i32
    return %1, %c0_i32, %c0_i32_0 : i32, i32, i32
  }
}

module attributes {stable_mosaic.version = 11 : i64} {
  func.func @kernel(%arg0: i32, %arg1: memref<4x2x128xf32, #tpu.memory_space<vmem>>, %arg2: memref<1x128xf32, #tpu.memory_space<vmem>>, %arg3: memref<1x128xf32, #tpu.memory_space<vmem>>, %arg4: memref<512x128xf32, #tpu.memory_space<vmem>>, %arg5: memref<512x128xf32, #tpu.memory_space<vmem>>) attributes {dimension_semantics = [#tpu.dimension_semantics<parallel>], iteration_bounds = array<i64: 2>, scalar_prefetch = 0 : i64, scratch_operands = 0 : i64, tpu.core_type = #tpu.core_type<tc>, window_params = [{pipeline_mode = #tpu.pipeline_mode<synchronous>, transform_indices = @transform_0, window_bounds = array<i64: 4, 2, 128>}, {pipeline_mode = #tpu.pipeline_mode<synchronous>, transform_indices = @transform_1, window_bounds = array<i64: 1, 128>}, {pipeline_mode = #tpu.pipeline_mode<synchronous>, transform_indices = @transform_2, window_bounds = array<i64: 1, 128>}, {transform_indices = @transform_3, window_bounds = array<i64: 512, 128>}, {transform_indices = @transform_4, window_bounds = array<i64: 512, 128>}]} {
    %c0 = arith.constant 0 : index
    %c0_0 = arith.constant 0 : index
    %c0_1 = arith.constant 0 : index
    %0 = vector.load %arg1[%c0, %c0_0, %c0_1] : memref<4x2x128xf32, #tpu.memory_space<vmem>>, vector<4x2x128xf32>
    %cst = arith.constant dense<0.000000e+00> : vector<2x128xf32>
    %1 = vector.multi_reduction <add>, %0, %cst [0] : vector<4x2x128xf32> to vector<2x128xf32>
    %2 = vector.extract_strided_slice %1 {offsets = [0, 0], sizes = [1, 128], strides = [1, 1]} : vector<2x128xf32> to vector<1x128xf32>
    %cst_2 = arith.constant 9.765625E-4 : f32
    %3 = vector.broadcast %cst_2 : f32 to vector<1x128xf32>
    %4 = arith.mulf %2, %3 : vector<1x128xf32>
    %5 = vector.extract_strided_slice %1 {offsets = [1, 0], sizes = [1, 128], strides = [1, 1]} : vector<2x128xf32> to vector<1x128xf32>
    %cst_3 = arith.constant 9.765625E-4 : f32
    %6 = vector.broadcast %cst_3 : f32 to vector<1x128xf32>
    %7 = arith.mulf %5, %6 : vector<1x128xf32>
    %8 = arith.mulf %4, %4 : vector<1x128xf32>
    %9 = arith.subf %7, %8 : vector<1x128xf32>
    %cst_4 = arith.constant 9.99999974E-6 : f32
    %10 = vector.broadcast %cst_4 : f32 to vector<1x128xf32>
    %11 = arith.addf %9, %10 : vector<1x128xf32>
    %12 = math.rsqrt %11 : vector<1x128xf32>
    %c0_5 = arith.constant 0 : index
    %c0_6 = arith.constant 0 : index
    %13 = vector.load %arg4[%c0_5, %c0_6] : memref<512x128xf32, #tpu.memory_space<vmem>>, vector<512x128xf32>
    %14 = vector.broadcast %4 : vector<1x128xf32> to vector<512x128xf32>
    %15 = arith.subf %13, %14 : vector<512x128xf32>
    %c0_7 = arith.constant 0 : index
    %c0_8 = arith.constant 0 : index
    %16 = vector.load %arg2[%c0_7, %c0_8] : memref<1x128xf32, #tpu.memory_space<vmem>>, vector<1x128xf32>
    %17 = arith.mulf %12, %16 : vector<1x128xf32>
    %18 = vector.broadcast %17 : vector<1x128xf32> to vector<512x128xf32>
    %19 = arith.mulf %15, %18 : vector<512x128xf32>
    %c0_9 = arith.constant 0 : index
    %c0_10 = arith.constant 0 : index
    %20 = vector.load %arg3[%c0_9, %c0_10] : memref<1x128xf32, #tpu.memory_space<vmem>>, vector<1x128xf32>
    %21 = vector.broadcast %20 : vector<1x128xf32> to vector<512x128xf32>
    %22 = arith.addf %19, %21 : vector<512x128xf32>
    %cst_11 = arith.constant 0.000000e+00 : f32
    %23 = vector.broadcast %cst_11 : f32 to vector<512x128xf32>
    %24 = arith.maximumf %22, %23 : vector<512x128xf32>
    %c0_12 = arith.constant 0 : index
    %c0_13 = arith.constant 0 : index
    %25 = vector.load %arg5[%c0_12, %c0_13] : memref<512x128xf32, #tpu.memory_space<vmem>>, vector<512x128xf32>
    tpu.vector_store %arg5[%c0_12, %c0_13], %24 {strides = array<i32>} : memref<512x128xf32, #tpu.memory_space<vmem>>, vector<512x128xf32>,
    return
  }
  func.func @transform_0(%arg0: i32) -> (i32, i32, i32) {
    %c0_i32 = arith.constant 0 : i32
    %c0_i32_0 = arith.constant 0 : i32
    %c0_i32_1 = arith.constant 0 : i32
    %c0_i32_2 = arith.constant 0 : i32
    return %c0_i32, %c0_i32_0, %c0_i32_1 : i32, i32, i32
  }
  func.func @transform_1(%arg0: i32) -> (i32, i32) {
    %c0_i32 = arith.constant 0 : i32
    %c0_i32_0 = arith.constant 0 : i32
    %c0_i32_1 = arith.constant 0 : i32
    return %c0_i32, %c0_i32_0 : i32, i32
  }
  func.func @transform_2(%arg0: i32) -> (i32, i32) {
    %c0_i32 = arith.constant 0 : i32
    %c0_i32_0 = arith.constant 0 : i32
    %c0_i32_1 = arith.constant 0 : i32
    return %c0_i32, %c0_i32_0 : i32, i32
  }
  func.func @transform_3(%arg0: i32) -> (i32, i32) {
    %c0_i32 = arith.constant 0 : i32
    %c0_i32_0 = arith.constant 0 : i32
    return %arg0, %c0_i32 : i32, i32
  }
  func.func @transform_4(%arg0: i32) -> (i32, i32) {
    %c0_i32 = arith.constant 0 : i32
    %c0_i32_0 = arith.constant 0 : i32
    return %arg0, %c0_i32 : i32, i32
  }
}

module attributes {stable_mosaic.version = 11 : i64} {
  func.func @kernel(%arg0: i32, %arg1: memref<2x2x128xf32, #tpu.memory_space<vmem>>, %arg2: memref<1x128xf32, #tpu.memory_space<vmem>>, %arg3: memref<1x128xf32, #tpu.memory_space<vmem>>, %arg4: memref<512x128xf32, #tpu.memory_space<vmem>>, %arg5: memref<512x128xf32, #tpu.memory_space<vmem>>, %arg6: memref<512x128xf32, #tpu.memory_space<vmem>>) attributes {dimension_semantics = [#tpu.dimension_semantics<parallel>], iteration_bounds = array<i64: 2>, scalar_prefetch = 0 : i64, scratch_operands = 0 : i64, tpu.core_type = #tpu.core_type<tc>, window_params = [{pipeline_mode = #tpu.pipeline_mode<synchronous>, transform_indices = @transform_0, window_bounds = array<i64: 2, 2, 128>}, {pipeline_mode = #tpu.pipeline_mode<synchronous>, transform_indices = @transform_1, window_bounds = array<i64: 1, 128>}, {pipeline_mode = #tpu.pipeline_mode<synchronous>, transform_indices = @transform_2, window_bounds = array<i64: 1, 128>}, {transform_indices = @transform_3, window_bounds = array<i64: 512, 128>}, {transform_indices = @transform_4, window_bounds = array<i64: 512, 128>}, {transform_indices = @transform_5, window_bounds = array<i64: 512, 128>}]} {
    %c0 = arith.constant 0 : index
    %c0_0 = arith.constant 0 : index
    %c0_1 = arith.constant 0 : index
    %0 = vector.load %arg1[%c0, %c0_0, %c0_1] : memref<2x2x128xf32, #tpu.memory_space<vmem>>, vector<2x2x128xf32>
    %cst = arith.constant dense<0.000000e+00> : vector<2x128xf32>
    %1 = vector.multi_reduction <add>, %0, %cst [0] : vector<2x2x128xf32> to vector<2x128xf32>
    %2 = vector.extract_strided_slice %1 {offsets = [0, 0], sizes = [1, 128], strides = [1, 1]} : vector<2x128xf32> to vector<1x128xf32>
    %cst_2 = arith.constant 9.765625E-4 : f32
    %3 = vector.broadcast %cst_2 : f32 to vector<1x128xf32>
    %4 = arith.mulf %2, %3 : vector<1x128xf32>
    %5 = vector.extract_strided_slice %1 {offsets = [1, 0], sizes = [1, 128], strides = [1, 1]} : vector<2x128xf32> to vector<1x128xf32>
    %cst_3 = arith.constant 9.765625E-4 : f32
    %6 = vector.broadcast %cst_3 : f32 to vector<1x128xf32>
    %7 = arith.mulf %5, %6 : vector<1x128xf32>
    %8 = arith.mulf %4, %4 : vector<1x128xf32>
    %9 = arith.subf %7, %8 : vector<1x128xf32>
    %cst_4 = arith.constant 9.99999974E-6 : f32
    %10 = vector.broadcast %cst_4 : f32 to vector<1x128xf32>
    %11 = arith.addf %9, %10 : vector<1x128xf32>
    %12 = math.rsqrt %11 : vector<1x128xf32>
    %c0_5 = arith.constant 0 : index
    %c0_6 = arith.constant 0 : index
    %13 = vector.load %arg4[%c0_5, %c0_6] : memref<512x128xf32, #tpu.memory_space<vmem>>, vector<512x128xf32>
    %14 = vector.broadcast %4 : vector<1x128xf32> to vector<512x128xf32>
    %15 = arith.subf %13, %14 : vector<512x128xf32>
    %c0_7 = arith.constant 0 : index
    %c0_8 = arith.constant 0 : index
    %16 = vector.load %arg2[%c0_7, %c0_8] : memref<1x128xf32, #tpu.memory_space<vmem>>, vector<1x128xf32>
    %17 = arith.mulf %12, %16 : vector<1x128xf32>
    %18 = vector.broadcast %17 : vector<1x128xf32> to vector<512x128xf32>
    %19 = arith.mulf %15, %18 : vector<512x128xf32>
    %c0_9 = arith.constant 0 : index
    %c0_10 = arith.constant 0 : index
    %20 = vector.load %arg3[%c0_9, %c0_10] : memref<1x128xf32, #tpu.memory_space<vmem>>, vector<1x128xf32>
    %21 = vector.broadcast %20 : vector<1x128xf32> to vector<512x128xf32>
    %22 = arith.addf %19, %21 : vector<512x128xf32>
    %c0_11 = arith.constant 0 : index
    %c0_12 = arith.constant 0 : index
    %23 = vector.load %arg5[%c0_11, %c0_12] : memref<512x128xf32, #tpu.memory_space<vmem>>, vector<512x128xf32>
    %24 = arith.addf %22, %23 : vector<512x128xf32>
    %cst_13 = arith.constant 0.000000e+00 : f32
    %25 = vector.broadcast %cst_13 : f32 to vector<512x128xf32>
    %26 = arith.maximumf %24, %25 : vector<512x128xf32>
    %c0_14 = arith.constant 0 : index
    %c0_15 = arith.constant 0 : index
    %27 = vector.load %arg6[%c0_14, %c0_15] : memref<512x128xf32, #tpu.memory_space<vmem>>, vector<512x128xf32>
    tpu.vector_store %arg6[%c0_14, %c0_15], %26 {strides = array<i32>} : memref<512x128xf32, #tpu.memory_space<vmem>>, vector<512x128xf32>,
    return
  }
  func.func @transform_0(%arg0: i32) -> (i32, i32, i32) {
    %c0_i32 = arith.constant 0 : i32
    %c0_i32_0 = arith.constant 0 : i32
    %c0_i32_1 = arith.constant 0 : i32
    %c0_i32_2 = arith.constant 0 : i32
    return %c0_i32, %c0_i32_0, %c0_i32_1 : i32, i32, i32
  }
  func.func @transform_1(%arg0: i32) -> (i32, i32) {
    %c0_i32 = arith.constant 0 : i32
    %c0_i32_0 = arith.constant 0 : i32
    %c0_i32_1 = arith.constant 0 : i32
    return %c0_i32, %c0_i32_0 : i32, i32
  }
  func.func @transform_2(%arg0: i32) -> (i32, i32) {
    %c0_i32 = arith.constant 0 : i32
    %c0_i32_0 = arith.constant 0 : i32
    %c0_i32_1 = arith.constant 0 : i32
    return %c0_i32, %c0_i32_0 : i32, i32
  }
  func.func @transform_3(%arg0: i32) -> (i32, i32) {
    %c0_i32 = arith.constant 0 : i32
    %c0_i32_0 = arith.constant 0 : i32
    return %arg0, %c0_i32 : i32, i32
  }
  func.func @transform_4(%arg0: i32) -> (i32, i32) {
    %c0_i32 = arith.constant 0 : i32
    %c0_i32_0 = arith.constant 0 : i32
    return %arg0, %c0_i32 : i32, i32
  }
  func.func @transform_5(%arg0: i32) -> (i32, i32) {
    %c0_i32 = arith.constant 0 : i32
    %c0_i32_0 = arith.constant 0 : i32
    return %arg0, %c0_i32 : i32, i32
  }
}

</mosaic_0001>

<llo_original>
// kernel: bottleneck_forward.6
$region0: #{bottleneck_forward.6}
  #allocation0 [shape = 'u32[]', space=smem, size = 0x4, offset = 0x4, fixed_abs, tag = 'smem constant byte address 0x4 - core index']
  #allocation1 [shape = 'u32[72,128]{1,0:T(1,128)}', space=vmem, size = 0x9000, scoped, tag = 'internal scratch']
  %s0 = inlined_call_operand.vmem [shape: f32[1024,128], index: 0, kind: input, shape index: {}]
  %s1 = inlined_call_operand.vmem [shape: f32[128,128], index: 1, kind: input, shape index: {}]
  %s2 = inlined_call_operand.vmem [shape: f32[1024,128], index: 2, kind: output, shape index: {0}]
  %s3 = inlined_call_operand.vmem [shape: f32[2,2,128], index: 3, kind: output, shape index: {1}]
  %4 = xla_tuple %s2, %s3
  %s5 = sld [smem:[#allocation0]]
  $region49: #{bottleneck_forward.6} parent=0
    _
  %s7 = ssub.s32 1, %s5
  %s8 = scalar_select 0, %s7, %s5
  loop: start=0, step=1, limit=4
  $region2: #{bottleneck_forward.6} parent=0 // loop_pre_header
    _
  $region3: #{bottleneck_forward.6} parent=0 // loop_header
    %s10 = sphi 0, %s14
    %p11 = scmp.ge.s32.totalorder %s10, 4
    %s20 = sphi 0, %s22
    %s23 = sphi 0, %s20
    %s24 = sphi 0, %s23
    %s40 = sphi 0, %s24
    %s44 = sphi 0, %s44
    %s46 = sphi 0, %s44
    %s47 = sphi 0, %s46
    %s61 = sphi 0, %s47
    %s67 = sphi 0, %s69
    %s70 = sphi 0, %s67
    %s71 = sphi 0, %s70
    %s87 = sphi 0, %s71
    %s93 = sphi 0, %s95
    %s96 = sphi 0, %s93
    %s97 = sphi 0, %s96
    %s113 = sphi 0, %s97
  $region4: #{bottleneck_forward.6} parent=0 // loop_header_branch
    %13 = sbr.rel (%p11) target = $region8
  $region5: #{bottleneck_forward.6} parent=0 // loop_body
    %s15 = ssub.s32 %s10, 1
    %s16 = ssub.s32 %s10, 2
    %s17 = sadd.s32 %s10, 1
    %s18 = ssub.s32 %s10, %s17
    %p19 = scmp.eq.s32.totalorder %s18, 0
    %s21 = sadd.s32 %s20, 1
    %s22 = scalar_select %p19, %s20, %s21
    %p25 = pneg %p19
    %p26 = scmp.eq.s32.totalorder %s10, 1
    %p27 = por %p25, %p26
    %p28 = scmp.ne.s32.totalorder %s20, %s23
    %p29 = scmp.eq.s32.totalorder %s10, 0
    %p30 = por %p28, %p29
    %p31 = scmp.ne.s32.totalorder %s20, %s23
    %p32 = scmp.eq.s32.totalorder %s15, 1
    %p33 = por %p31, %p32
    %p34 = scmp.ne.s32.totalorder %s23, %s24
    %p35 = scmp.eq.s32.totalorder %s15, 0
    %p36 = por %p34, %p35
    %p37 = scmp.ne.s32.totalorder %s23, %s24
    %p38 = scmp.eq.s32.totalorder %s16, 1
    %p39 = por %p37, %p38
    %p41 = scmp.ne.s32.totalorder %s24, %s40
    %p42 = scmp.eq.s32.totalorder %s16, 0
    %p43 = por %p41, %p42
    %s45 = sadd.s32 %s44, 1
    %p48 = scmp.eq.s32.totalorder %s10, 1
    %p49 = scmp.ne.s32.totalorder %s44, %s46
    %p50 = scmp.eq.s32.totalorder %s10, 0
    %p51 = por %p49, %p50
    %p52 = scmp.ne.s32.totalorder %s44, %s46
    %p53 = scmp.eq.s32.totalorder %s15, 1
    %p54 = por %p52, %p53
    %p55 = scmp.ne.s32.totalorder %s46, %s47
    %p56 = scmp.eq.s32.totalorder %s15, 0
    %p57 = por %p55, %p56
    %p58 = scmp.ne.s32.totalorder %s46, %s47
    %p59 = scmp.eq.s32.totalorder %s16, 1
    %p60 = por %p58, %p59
    %p62 = scmp.ne.s32.totalorder %s47, %s61
    %p63 = scmp.eq.s32.totalorder %s16, 0
    %p64 = por %p62, %p63
    %s65 = ssub.s32 %s10, %s17
    %p66 = scmp.eq.s32.totalorder %s65, 0
    %s68 = sadd.s32 %s67, 1
    %s69 = scalar_select %p66, %s67, %s68
    %p72 = pneg %p66
    %p73 = scmp.eq.s32.totalorder %s10, 1
    %p74 = por %p72, %p73
    %p75 = scmp.ne.s32.totalorder %s67, %s70
    %p76 = scmp.eq.s32.totalorder %s10, 0
    %p77 = por %p75, %p76
    %p78 = scmp.ne.s32.totalorder %s67, %s70
    %p79 = scmp.eq.s32.totalorder %s15, 1
    %p80 = por %p78, %p79
    %p81 = scmp.ne.s32.totalorder %s70, %s71
    %p82 = scmp.eq.s32.totalorder %s15, 0
    %p83 = por %p81, %p82
    %p84 = scmp.ne.s32.totalorder %s70, %s71
    %p85 = scmp.eq.s32.totalorder %s16, 1
    %p86 = por %p84, %p85
    %p88 = scmp.ne.s32.totalorder %s71, %s87
    %p89 = scmp.eq.s32.totalorder %s16, 0
    %p90 = por %p88, %p89
    %s91 = ssub.s32 %s10, %s17
    %p92 = scmp.eq.s32.totalorder %s91, 0
    %s94 = sadd.s32 %s93, 1
    %s95 = scalar_select %p92, %s93, %s94
    %p98 = pneg %p92
    %p99 = scmp.eq.s32.totalorder %s10, 1
    %p100 = por %p98, %p99
    %p101 = scmp.ne.s32.totalorder %s93, %s96
    %p102 = scmp.eq.s32.totalorder %s10, 0
    %p103 = por %p101, %p102
    %p104 = scmp.ne.s32.totalorder %s93, %s96
    %p105 = scmp.eq.s32.totalorder %s15, 1
    %p106 = por %p104, %p105
    %p107 = scmp.ne.s32.totalorder %s96, %s97
    %p108 = scmp.eq.s32.totalorder %s15, 0
    %p109 = por %p107, %p108
    %p110 = scmp.ne.s32.totalorder %s96, %s97
    %p111 = scmp.eq.s32.totalorder %s16, 1
    %p112 = por %p110, %p111
    %p114 = scmp.ne.s32.totalorder %s97, %s113
    %p115 = scmp.eq.s32.totalorder %s16, 0
    %p116 = por %p114, %p115
    %p117 = scmp.le.s32.totalorder 1, %s10
    %p118 = scmp.lt.s32.totalorder %s10, 3
    %p119 = pnand %p117, %p118
    %p120 = pneg %p119
    // Predicated region
    $region9: #{bottleneck_forward.6} parent=5 // pred_check
      _
    $region10: #{bottleneck_forward.6} parent=5 // pred_check_branch
      %122 = sbr.rel (%p119) target = $region12
    $region11: #{bottleneck_forward.6} parent=5 // pred_region
      %s123 = ssub.s32 %s10, 1
      // Predicated region
      $region13: #{bottleneck_forward.6} parent=11 // pred_check
        %p124 = pneg %p57
      $region14: #{bottleneck_forward.6} parent=11 // pred_check_branch
        %126 = sbr.rel (%p124) target = $region16
      $region15: #{bottleneck_forward.6} parent=11 // pred_region
        _
      $region16: #{bottleneck_forward.6} parent=11 // pred_fallthru
        _
    $region12: #{bottleneck_forward.6} parent=5 // pred_fallthru
      _
    %p127 = scmp.lt.s32.totalorder %s10, 2
    // Predicated region
    $region17: #{bottleneck_forward.6} parent=5 // pred_check
      %p128 = pneg %p127
    $region18: #{bottleneck_forward.6} parent=5 // pred_check_branch
      %130 = sbr.rel (%p128) target = $region20
    $region19: #{bottleneck_forward.6} parent=5 // pred_region
      // Predicated region
      $region21: #{bottleneck_forward.6} parent=19 // pred_check
        %p131 = pneg %p30
      $region22: #{bottleneck_forward.6} parent=19 // pred_check_branch
        %133 = sbr.rel (%p131) target = $region24
      $region23: #{bottleneck_forward.6} parent=19 // pred_region
        %s134 = smul.u32 64, %s10
        %p135 = scmp.lt.s32.totalorder %s134, 127
        %s136 = scalar_select %p135, %s134, 127
        %s137 = smul.addr %s136, 8
        %s138 = scalar_lea.vmem %s0, %s137
        %s139 = smul.u32 64, %s10
      $region24: #{bottleneck_forward.6} parent=19 // pred_fallthru
        _
    $region20: #{bottleneck_forward.6} parent=5 // pred_fallthru
      _
    %p140 = scmp.le.s32.totalorder 1, %s10
    %p141 = scmp.lt.s32.totalorder %s10, 3
    %p142 = pnand %p140, %p141
    %p143 = pneg %p142
    // Predicated region
    $region25: #{bottleneck_forward.6} parent=5 // pred_check
      _
    $region26: #{bottleneck_forward.6} parent=5 // pred_check_branch
      %145 = sbr.rel (%p142) target = $region28
    $region27: #{bottleneck_forward.6} parent=5 // pred_region
      %s146 = ssub.s32 %s10, 1
      %s147 = smul.u32 64, %s15
      %p148 = scmp.lt.s32.totalorder %s147, 127
      %s149 = scalar_select %p148, %s147, 127
      %s150 = smul.addr %s149, 8
      %s151 = scalar_lea.vmem %s0, %s150
      %p152 = pneg %p36
      %p153 = pneg %p33
      %p154 = pneg %p57
      %p155 = pneg %p54
      %p156 = pneg %p83
      %p157 = pneg %p80
      %s158 = smul.u32 64, %s15
      %p159 = scmp.lt.s32.totalorder %s158, 127
      %s160 = scalar_select %p159, %s158, 127
      %s161 = smul.addr %s160, 8
      %s162 = scalar_lea.vmem %s2, %s161
      %p163 = pneg %p109
      %p164 = pneg %p106
      %p165 = scmp.lt.s32.totalorder %s15, 1
      %s166 = scalar_select %p165, %s15, 1
      %s167 = smul.addr %s166, 2
      %s168 = scalar_lea.vmem %s3, %s167
      %s169 = smul.u32 64, %s15
      %p170 = scmp.lt.s32.totalorder %s169, 127
      %s171 = scalar_select %p170, %s169, 127
      %s172 = smul.addr %s171, 8
      %s173 = scalar_lea.vmem %s0, %s172
      %s174 = smul.u32 64, %s15
      %s175 = smul.u32 64, %s15
      %p176 = scmp.lt.s32.totalorder %s175, 127
      %s177 = scalar_select %p176, %s175, 127
      %s178 = smul.addr %s177, 8
      %s179 = scalar_lea.vmem %s2, %s178
      %s180 = smul.u32 64, %s15
      %p181 = scmp.lt.s32.totalorder %s15, 1
      %s182 = scalar_select %p181, %s15, 1
      %s183 = smul.addr %s182, 2
      %s184 = scalar_lea.vmem %s3, %s183
      %v185 = vld [vmem:[%s173] sm:$0xff]
      %v186 = vld [vmem:[%s173 + $0x8] sm:$0xff]
      %v187 = vld [vmem:[%s173 + $0x10] sm:$0xff]
      %v188 = vld [vmem:[%s173 + $0x18] sm:$0xff]
      %v189 = vld [vmem:[%s173 + $0x20] sm:$0xff]
      %v190 = vld [vmem:[%s173 + $0x28] sm:$0xff]
      %v191 = vld [vmem:[%s173 + $0x30] sm:$0xff]
      %v192 = vld [vmem:[%s173 + $0x38] sm:$0xff]
      %v193 = vld [vmem:[%s173 + $0x40] sm:$0xff]
      %v194 = vld [vmem:[%s173 + $0x48] sm:$0xff]
      %v195 = vld [vmem:[%s173 + $0x50] sm:$0xff]
      %v196 = vld [vmem:[%s173 + $0x58] sm:$0xff]
      %v197 = vld [vmem:[%s173 + $0x60] sm:$0xff]
      %v198 = vld [vmem:[%s173 + $0x68] sm:$0xff]
      %v199 = vld [vmem:[%s173 + $0x70] sm:$0xff]
      %v200 = vld [vmem:[%s173 + $0x78] sm:$0xff]
      %v201 = vld [vmem:[%s173 + $0x80] sm:$0xff]
      %v202 = vld [vmem:[%s173 + $0x88] sm:$0xff]
      %v203 = vld [vmem:[%s173 + $0x90] sm:$0xff]
      %v204 = vld [vmem:[%s173 + $0x98] sm:$0xff]
      %v205 = vld [vmem:[%s173 + $0xa0] sm:$0xff]
      %v206 = vld [vmem:[%s173 + $0xa8] sm:$0xff]
      %v207 = vld [vmem:[%s173 + $0xb0] sm:$0xff]
      %v208 = vld [vmem:[%s173 + $0xb8] sm:$0xff]
      %v209 = vld [vmem:[%s173 + $0xc0] sm:$0xff]
      %v210 = vld [vmem:[%s173 + $0xc8] sm:$0xff]
      %v211 = vld [vmem:[%s173 + $0xd0] sm:$0xff]
      %v212 = vld [vmem:[%s173 + $0xd8] sm:$0xff]
      %v213 = vld [vmem:[%s173 + $0xe0] sm:$0xff]
      %v214 = vld [vmem:[%s173 + $0xe8] sm:$0xff]
      %v215 = vld [vmem:[%s173 + $0xf0] sm:$0xff]
      %v216 = vld [vmem:[%s173 + $0xf8] sm:$0xff]
      %v217 = vld [vmem:[%s173 + $0x100] sm:$0xff]
      %v218 = vld [vmem:[%s173 + $0x108] sm:$0xff]
      %v219 = vld [vmem:[%s173 + $0x110] sm:$0xff]
      %v220 = vld [vmem:[%s173 + $0x118] sm:$0xff]
      %v221 = vld [vmem:[%s173 + $0x120] sm:$0xff]
      %v222 = vld [vmem:[%s173 + $0x128] sm:$0xff]
      %v223 = vld [vmem:[%s173 + $0x130] sm:$0xff]
      %v224 = vld [vmem:[%s173 + $0x138] sm:$0xff]
      %v225 = vld [vmem:[%s173 + $0x140] sm:$0xff]
      %v226 = vld [vmem:[%s173 + $0x148] sm:$0xff]
      %v227 = vld [vmem:[%s173 + $0x150] sm:$0xff]
      %v228 = vld [vmem:[%s173 + $0x158] sm:$0xff]
      %v229 = vld [vmem:[%s173 + $0x160] sm:$0xff]
      %v230 = vld [vmem:[%s173 + $0x168] sm:$0xff]
      %v231 = vld [vmem:[%s173 + $0x170] sm:$0xff]
      %v232 = vld [vmem:[%s173 + $0x178] sm:$0xff]
      %v233 = vld [vmem:[%s173 + $0x180] sm:$0xff]
      %v234 = vld [vmem:[%s173 + $0x188] sm:$0xff]
      %v235 = vld [vmem:[%s173 + $0x190] sm:$0xff]
      %v236 = vld [vmem:[%s173 + $0x198] sm:$0xff]
      %v237 = vld [vmem:[%s173 + $0x1a0] sm:$0xff]
      %v238 = vld [vmem:[%s173 + $0x1a8] sm:$0xff]
      %v239 = vld [vmem:[%s173 + $0x1b0] sm:$0xff]
      %v240 = vld [vmem:[%s173 + $0x1b8] sm:$0xff]
      %v241 = vld [vmem:[%s173 + $0x1c0] sm:$0xff]
      %v242 = vld [vmem:[%s173 + $0x1c8] sm:$0xff]
      %v243 = vld [vmem:[%s173 + $0x1d0] sm:$0xff]
      %v244 = vld [vmem:[%s173 + $0x1d8] sm:$0xff]
      %v245 = vld [vmem:[%s173 + $0x1e0] sm:$0xff]
      %v246 = vld [vmem:[%s173 + $0x1e8] sm:$0xff]
      %v247 = vld [vmem:[%s173 + $0x1f0] sm:$0xff]
      %v248 = vld [vmem:[%s173 + $0x1f8] sm:$0xff]
      %v249 = vld [vmem:[%s1] sm:$0xff]
      %v250 = vld [vmem:[%s1 + $0x8] sm:$0xff]
      %v251 = vld [vmem:[%s1 + $0x10] sm:$0xff]
      %v252 = vld [vmem:[%s1 + $0x18] sm:$0xff]
      %v253 = vld [vmem:[%s1 + $0x20] sm:$0xff]
      %v254 = vld [vmem:[%s1 + $0x28] sm:$0xff]
      %v255 = vld [vmem:[%s1 + $0x30] sm:$0xff]
      %v256 = vld [vmem:[%s1 + $0x38] sm:$0xff]
      %v257 = vld [vmem:[%s1 + $0x40] sm:$0xff]
      %v258 = vld [vmem:[%s1 + $0x48] sm:$0xff]
      %v259 = vld [vmem:[%s1 + $0x50] sm:$0xff]
      %v260 = vld [vmem:[%s1 + $0x58] sm:$0xff]
      %v261 = vld [vmem:[%s1 + $0x60] sm:$0xff]
      %v262 = vld [vmem:[%s1 + $0x68] sm:$0xff]
      %v263 = vld [vmem:[%s1 + $0x70] sm:$0xff]
      %v264 = vld [vmem:[%s1 + $0x78] sm:$0xff]
      %265 = vmatpush.msra.mxu0 %v264
      %266 = vmatpush.msra.mxu0 %v263
      %267 = vmatpush.msra.mxu0 %v262
      %268 = vmatpush.msra.mxu0 %v261
      %269 = vmatpush.msra.mxu0 %v260
      %270 = vmatpush.msra.mxu0 %v259
      %271 = vmatpush.msra.mxu0 %v258
      %272 = vmatpush.msra.mxu0 %v257
      %273 = vmatpush.msra.mxu0 %v256
      %274 = vmatpush.msra.mxu0 %v255
      %275 = vmatpush.msra.mxu0 %v254
      %276 = vmatpush.msra.mxu0 %v253
      %277 = vmatpush.msra.mxu0 %v252
      %278 = vmatpush.msra.mxu0 %v251
      %279 = vmatpush.msra.mxu0 %v250
      %280 = vmatpush.msra.mxu0 %v249
      %281 = vmatmul.f32.gmra.mxu0 %v185
      %v282 = vpop.f32.mrf.mxu0
      %v283 = vadd.f32 0.0, %v282
      %284 = vmatmul.f32.gmra.mxu0 %v186
      %v285 = vpop.f32.mrf.mxu0
      %v286 = vadd.f32 0.0, %v285
      %287 = vmatmul.f32.gmra.mxu0 %v187
      %v288 = vpop.f32.mrf.mxu0
      %v289 = vadd.f32 0.0, %v288
      %290 = vmatmul.f32.gmra.mxu0 %v188
      %v291 = vpop.f32.mrf.mxu0
      %v292 = vadd.f32 0.0, %v291
      %293 = vmatmul.f32.gmra.mxu0 %v189
      %v294 = vpop.f32.mrf.mxu0
      %v295 = vadd.f32 0.0, %v294
      %296 = vmatmul.f32.gmra.mxu0 %v190
      %v297 = vpop.f32.mrf.mxu0
      %v298 = vadd.f32 0.0, %v297
      %299 = vmatmul.f32.gmra.mxu0 %v191
      %v300 = vpop.f32.mrf.mxu0
      %v301 = vadd.f32 0.0, %v300
      %302 = vmatmul.f32.gmra.mxu0 %v192
      %v303 = vpop.f32.mrf.mxu0
      %v304 = vadd.f32 0.0, %v303
      %305 = vmatmul.f32.gmra.mxu0 %v193
      %v306 = vpop.f32.mrf.mxu0
      %v307 = vadd.f32 0.0, %v306
      %308 = vmatmul.f32.gmra.mxu0 %v194
      %v309 = vpop.f32.mrf.mxu0
      %v310 = vadd.f32 0.0, %v309
      %311 = vmatmul.f32.gmra.mxu0 %v195
      %v312 = vpop.f32.mrf.mxu0
      %v313 = vadd.f32 0.0, %v312
      %314 = vmatmul.f32.gmra.mxu0 %v196
      %v315 = vpop.f32.mrf.mxu0
      %v316 = vadd.f32 0.0, %v315
      %317 = vmatmul.f32.gmra.mxu0 %v197
      %v318 = vpop.f32.mrf.mxu0
      %v319 = vadd.f32 0.0, %v318
      %320 = vmatmul.f32.gmra.mxu0 %v198
      %v321 = vpop.f32.mrf.mxu0
      %v322 = vadd.f32 0.0, %v321
      %323 = vmatmul.f32.gmra.mxu0 %v199
      %v324 = vpop.f32.mrf.mxu0
      %v325 = vadd.f32 0.0, %v324
      %326 = vmatmul.f32.gmra.mxu0 %v200
      %v327 = vpop.f32.mrf.mxu0
      %v328 = vadd.f32 0.0, %v327
      %329 = vmatmul.f32.gmra.mxu0 %v201
      %v330 = vpop.f32.mrf.mxu0
      %v331 = vadd.f32 0.0, %v330
      %332 = vmatmul.f32.gmra.mxu0 %v202
      %v333 = vpop.f32.mrf.mxu0
      %v334 = vadd.f32 0.0, %v333
      %335 = vmatmul.f32.gmra.mxu0 %v203
      %v336 = vpop.f32.mrf.mxu0
      %v337 = vadd.f32 0.0, %v336
      %338 = vmatmul.f32.gmra.mxu0 %v204
      %v339 = vpop.f32.mrf.mxu0
      %v340 = vadd.f32 0.0, %v339
      %341 = vmatmul.f32.gmra.mxu0 %v205
      %v342 = vpop.f32.mrf.mxu0
      %v343 = vadd.f32 0.0, %v342
      %344 = vmatmul.f32.gmra.mxu0 %v206
      %v345 = vpop.f32.mrf.mxu0
      %v346 = vadd.f32 0.0, %v345
      %347 = vmatmul.f32.gmra.mxu0 %v207
      %v348 = vpop.f32.mrf.mxu0
      %v349 = vadd.f32 0.0, %v348
      %350 = vmatmul.f32.gmra.mxu0 %v208
      %v351 = vpop.f32.mrf.mxu0
      %v352 = vadd.f32 0.0, %v351
      %353 = vmatmul.f32.gmra.mxu0 %v209
      %v354 = vpop.f32.mrf.mxu0
      %v355 = vadd.f32 0.0, %v354
      %356 = vmatmul.f32.gmra.mxu0 %v210
      %v357 = vpop.f32.mrf.mxu0
      %v358 = vadd.f32 0.0, %v357
      %359 = vmatmul.f32.gmra.mxu0 %v211
      %v360 = vpop.f32.mrf.mxu0
      %v361 = vadd.f32 0.0, %v360
      %362 = vmatmul.f32.gmra.mxu0 %v212
      %v363 = vpop.f32.mrf.mxu0
      %v364 = vadd.f32 0.0, %v363
      %365 = vmatmul.f32.gmra.mxu0 %v213
      %v366 = vpop.f32.mrf.mxu0
      %v367 = vadd.f32 0.0, %v366
      %368 = vmatmul.f32.gmra.mxu0 %v214
      %v369 = vpop.f32.mrf.mxu0
      %v370 = vadd.f32 0.0, %v369
      %371 = vmatmul.f32.gmra.mxu0 %v215
      %v372 = vpop.f32.mrf.mxu0
      %v373 = vadd.f32 0.0, %v372
      %374 = vmatmul.f32.gmra.mxu0 %v216
      %v375 = vpop.f32.mrf.mxu0
      %v376 = vadd.f32 0.0, %v375
      %377 = vmatmul.f32.gmra.mxu0 %v217
      %v378 = vpop.f32.mrf.mxu0
      %v379 = vadd.f32 0.0, %v378
      %380 = vmatmul.f32.gmra.mxu0 %v218
      %v381 = vpop.f32.mrf.mxu0
      %v382 = vadd.f32 0.0, %v381
      %383 = vmatmul.f32.gmra.mxu0 %v219
      %v384 = vpop.f32.mrf.mxu0
      %v385 = vadd.f32 0.0, %v384
      %386 = vmatmul.f32.gmra.mxu0 %v220
      %v387 = vpop.f32.mrf.mxu0
      %v388 = vadd.f32 0.0, %v387
      %389 = vmatmul.f32.gmra.mxu0 %v221
      %v390 = vpop.f32.mrf.mxu0
      %v391 = vadd.f32 0.0, %v390
      %392 = vmatmul.f32.gmra.mxu0 %v222
      %v393 = vpop.f32.mrf.mxu0
      %v394 = vadd.f32 0.0, %v393
      %395 = vmatmul.f32.gmra.mxu0 %v223
      %v396 = vpop.f32.mrf.mxu0
      %v397 = vadd.f32 0.0, %v396
      %398 = vmatmul.f32.gmra.mxu0 %v224
      %v399 = vpop.f32.mrf.mxu0
      %v400 = vadd.f32 0.0, %v399
      %401 = vmatmul.f32.gmra.mxu0 %v225
      %v402 = vpop.f32.mrf.mxu0
      %v403 = vadd.f32 0.0, %v402
      %404 = vmatmul.f32.gmra.mxu0 %v226
      %v405 = vpop.f32.mrf.mxu0
      %v406 = vadd.f32 0.0, %v405
      %407 = vmatmul.f32.gmra.mxu0 %v227
      %v408 = vpop.f32.mrf.mxu0
      %v409 = vadd.f32 0.0, %v408
      %410 = vmatmul.f32.gmra.mxu0 %v228
      %v411 = vpop.f32.mrf.mxu0
      %v412 = vadd.f32 0.0, %v411
      %413 = vmatmul.f32.gmra.mxu0 %v229
      %v414 = vpop.f32.mrf.mxu0
      %v415 = vadd.f32 0.0, %v414
      %416 = vmatmul.f32.gmra.mxu0 %v230
      %v417 = vpop.f32.mrf.mxu0
      %v418 = vadd.f32 0.0, %v417
      %419 = vmatmul.f32.gmra.mxu0 %v231
      %v420 = vpop.f32.mrf.mxu0
      %v421 = vadd.f32 0.0, %v420
      %422 = vmatmul.f32.gmra.mxu0 %v232
      %v423 = vpop.f32.mrf.mxu0
      %v424 = vadd.f32 0.0, %v423
      %425 = vmatmul.f32.gmra.mxu0 %v233
      %v426 = vpop.f32.mrf.mxu0
      %v427 = vadd.f32 0.0, %v426
      %428 = vmatmul.f32.gmra.mxu0 %v234
      %v429 = vpop.f32.mrf.mxu0
      %v430 = vadd.f32 0.0, %v429
      %431 = vmatmul.f32.gmra.mxu0 %v235
      %v432 = vpop.f32.mrf.mxu0
      %v433 = vadd.f32 0.0, %v432
      %434 = vmatmul.f32.gmra.mxu0 %v236
      %v435 = vpop.f32.mrf.mxu0
      %v436 = vadd.f32 0.0, %v435
      %437 = vmatmul.f32.gmra.mxu0 %v237
      %v438 = vpop.f32.mrf.mxu0
      %v439 = vadd.f32 0.0, %v438
      %440 = vmatmul.f32.gmra.mxu0 %v238
      %v441 = vpop.f32.mrf.mxu0
      %v442 = vadd.f32 0.0, %v441
      %443 = vmatmul.f32.gmra.mxu0 %v239
      %v444 = vpop.f32.mrf.mxu0
      %v445 = vadd.f32 0.0, %v444
      %446 = vmatmul.f32.gmra.mxu0 %v240
      %v447 = vpop.f32.mrf.mxu0
      %v448 = vadd.f32 0.0, %v447
      %449 = vmatmul.f32.gmra.mxu0 %v241
      %v450 = vpop.f32.mrf.mxu0
      %v451 = vadd.f32 0.0, %v450
      %452 = vmatmul.f32.gmra.mxu0 %v242
      %v453 = vpop.f32.mrf.mxu0
      %v454 = vadd.f32 0.0, %v453
      %455 = vmatmul.f32.gmra.mxu0 %v243
      %v456 = vpop.f32.mrf.mxu0
      %v457 = vadd.f32 0.0, %v456
      %458 = vmatmul.f32.gmra.mxu0 %v244
      %v459 = vpop.f32.mrf.mxu0
      %v460 = vadd.f32 0.0, %v459
      %461 = vmatmul.f32.gmra.mxu0 %v245
      %v462 = vpop.f32.mrf.mxu0
      %v463 = vadd.f32 0.0, %v462
      %464 = vmatmul.f32.gmra.mxu0 %v246
      %v465 = vpop.f32.mrf.mxu0
      %v466 = vadd.f32 0.0, %v465
      %467 = vmatmul.f32.gmra.mxu0 %v247
      %v468 = vpop.f32.mrf.mxu0
      %v469 = vadd.f32 0.0, %v468
      %470 = vmatmul.f32.gmra.mxu0 %v248
      %v471 = vpop.f32.mrf.mxu0
      %v472 = vadd.f32 0.0, %v471
      %473 = vdwg.mxu0
      %474 = vst [vmem:[%s179] sm:$0xff] %v283
      %475 = vst [vmem:[%s179 + $0x8] sm:$0xff] %v286
      %476 = vst [vmem:[%s179 + $0x10] sm:$0xff] %v289
      %477 = vst [vmem:[%s179 + $0x18] sm:$0xff] %v292
      %478 = vst [vmem:[%s179 + $0x20] sm:$0xff] %v295
      %479 = vst [vmem:[%s179 + $0x28] sm:$0xff] %v298
      %480 = vst [vmem:[%s179 + $0x30] sm:$0xff] %v301
      %481 = vst [vmem:[%s179 + $0x38] sm:$0xff] %v304
      %482 = vst [vmem:[%s179 + $0x40] sm:$0xff] %v307
      %483 = vst [vmem:[%s179 + $0x48] sm:$0xff] %v310
      %484 = vst [vmem:[%s179 + $0x50] sm:$0xff] %v313
      %485 = vst [vmem:[%s179 + $0x58] sm:$0xff] %v316
      %486 = vst [vmem:[%s179 + $0x60] sm:$0xff] %v319
      %487 = vst [vmem:[%s179 + $0x68] sm:$0xff] %v322
      %488 = vst [vmem:[%s179 + $0x70] sm:$0xff] %v325
      %489 = vst [vmem:[%s179 + $0x78] sm:$0xff] %v328
      %490 = vst [vmem:[%s179 + $0x80] sm:$0xff] %v331
      %491 = vst [vmem:[%s179 + $0x88] sm:$0xff] %v334
      %492 = vst [vmem:[%s179 + $0x90] sm:$0xff] %v337
      %493 = vst [vmem:[%s179 + $0x98] sm:$0xff] %v340
      %494 = vst [vmem:[%s179 + $0xa0] sm:$0xff] %v343
      %495 = vst [vmem:[%s179 + $0xa8] sm:$0xff] %v346
      %496 = vst [vmem:[%s179 + $0xb0] sm:$0xff] %v349
      %497 = vst [vmem:[%s179 + $0xb8] sm:$0xff] %v352
      %498 = vst [vmem:[%s179 + $0xc0] sm:$0xff] %v355
      %499 = vst [vmem:[%s179 + $0xc8] sm:$0xff] %v358
      %500 = vst [vmem:[%s179 + $0xd0] sm:$0xff] %v361
      %501 = vst [vmem:[%s179 + $0xd8] sm:$0xff] %v364
      %502 = vst [vmem:[%s179 + $0xe0] sm:$0xff] %v367
      %503 = vst [vmem:[%s179 + $0xe8] sm:$0xff] %v370
      %504 = vst [vmem:[%s179 + $0xf0] sm:$0xff] %v373
      %505 = vst [vmem:[%s179 + $0xf8] sm:$0xff] %v376
      %506 = vst [vmem:[%s179 + $0x100] sm:$0xff] %v379
      %507 = vst [vmem:[%s179 + $0x108] sm:$0xff] %v382
      %508 = vst [vmem:[%s179 + $0x110] sm:$0xff] %v385
      %509 = vst [vmem:[%s179 + $0x118] sm:$0xff] %v388
      %510 = vst [vmem:[%s179 + $0x120] sm:$0xff] %v391
      %511 = vst [vmem:[%s179 + $0x128] sm:$0xff] %v394
      %512 = vst [vmem:[%s179 + $0x130] sm:$0xff] %v397
      %513 = vst [vmem:[%s179 + $0x138] sm:$0xff] %v400
      %514 = vst [vmem:[%s179 + $0x140] sm:$0xff] %v403
      %515 = vst [vmem:[%s179 + $0x148] sm:$0xff] %v406
      %516 = vst [vmem:[%s179 + $0x150] sm:$0xff] %v409
      %517 = vst [vmem:[%s179 + $0x158] sm:$0xff] %v412
      %518 = vst [vmem:[%s179 + $0x160] sm:$0xff] %v415
      %519 = vst [vmem:[%s179 + $0x168] sm:$0xff] %v418
      %520 = vst [vmem:[%s179 + $0x170] sm:$0xff] %v421
      %521 = vst [vmem:[%s179 + $0x178] sm:$0xff] %v424
      %522 = vst [vmem:[%s179 + $0x180] sm:$0xff] %v427
      %523 = vst [vmem:[%s179 + $0x188] sm:$0xff] %v430
      %524 = vst [vmem:[%s179 + $0x190] sm:$0xff] %v433
      %525 = vst [vmem:[%s179 + $0x198] sm:$0xff] %v436
      %526 = vst [vmem:[%s179 + $0x1a0] sm:$0xff] %v439
      %527 = vst [vmem:[%s179 + $0x1a8] sm:$0xff] %v442
      %528 = vst [vmem:[%s179 + $0x1b0] sm:$0xff] %v445
      %529 = vst [vmem:[%s179 + $0x1b8] sm:$0xff] %v448
      %530 = vst [vmem:[%s179 + $0x1c0] sm:$0xff] %v451
      %531 = vst [vmem:[%s179 + $0x1c8] sm:$0xff] %v454
      %532 = vst [vmem:[%s179 + $0x1d0] sm:$0xff] %v457
      %533 = vst [vmem:[%s179 + $0x1d8] sm:$0xff] %v460
      %534 = vst [vmem:[%s179 + $0x1e0] sm:$0xff] %v463
      %535 = vst [vmem:[%s179 + $0x1e8] sm:$0xff] %v466
      %536 = vst [vmem:[%s179 + $0x1f0] sm:$0xff] %v469
      %537 = vst [vmem:[%s179 + $0x1f8] sm:$0xff] %v472
      %v538 = vadd.f32 %v283, %v286
      %v539 = vadd.f32 %v538, %v289
      %v540 = vadd.f32 %v539, %v292
      %v541 = vadd.f32 %v540, %v295
      %v542 = vadd.f32 %v541, %v298
      %v543 = vadd.f32 %v542, %v301
      %v544 = vadd.f32 %v543, %v304
      %v545 = vadd.f32 %v544, %v307
      %v546 = vadd.f32 %v545, %v310
      %v547 = vadd.f32 %v546, %v313
      %v548 = vadd.f32 %v547, %v316
      %v549 = vadd.f32 %v548, %v319
      %v550 = vadd.f32 %v549, %v322
      %v551 = vadd.f32 %v550, %v325
      %v552 = vadd.f32 %v551, %v328
      %v553 = vadd.f32 %v552, %v331
      %v554 = vadd.f32 %v553, %v334
      %v555 = vadd.f32 %v554, %v337
      %v556 = vadd.f32 %v555, %v340
      %v557 = vadd.f32 %v556, %v343
      %v558 = vadd.f32 %v557, %v346
      %v559 = vadd.f32 %v558, %v349
      %v560 = vadd.f32 %v559, %v352
      %v561 = vadd.f32 %v560, %v355
      %v562 = vadd.f32 %v561, %v358
      %v563 = vadd.f32 %v562, %v361
      %v564 = vadd.f32 %v563, %v364
      %v565 = vadd.f32 %v564, %v367
      %v566 = vadd.f32 %v565, %v370
      %v567 = vadd.f32 %v566, %v373
      %v568 = vadd.f32 %v567, %v376
      %v569 = vadd.f32 %v568, %v379
      %v570 = vadd.f32 %v569, %v382
      %v571 = vadd.f32 %v570, %v385
      %v572 = vadd.f32 %v571, %v388
      %v573 = vadd.f32 %v572, %v391
      %v574 = vadd.f32 %v573, %v394
      %v575 = vadd.f32 %v574, %v397
      %v576 = vadd.f32 %v575, %v400
      %v577 = vadd.f32 %v576, %v403
      %v578 = vadd.f32 %v577, %v406
      %v579 = vadd.f32 %v578, %v409
      %v580 = vadd.f32 %v579, %v412
      %v581 = vadd.f32 %v580, %v415
      %v582 = vadd.f32 %v581, %v418
      %v583 = vadd.f32 %v582, %v421
      %v584 = vadd.f32 %v583, %v424
      %v585 = vadd.f32 %v584, %v427
      %v586 = vadd.f32 %v585, %v430
      %v587 = vadd.f32 %v586, %v433
      %v588 = vadd.f32 %v587, %v436
      %v589 = vadd.f32 %v588, %v439
      %v590 = vadd.f32 %v589, %v442
      %v591 = vadd.f32 %v590, %v445
      %v592 = vadd.f32 %v591, %v448
      %v593 = vadd.f32 %v592, %v451
      %v594 = vadd.f32 %v593, %v454
      %v595 = vadd.f32 %v594, %v457
      %v596 = vadd.f32 %v595, %v460
      %v597 = vadd.f32 %v596, %v463
      %v598 = vadd.f32 %v597, %v466
      %v599 = vadd.f32 %v598, %v469
      %v600 = vadd.f32 %v599, %v472
      %v601 = vrot.slane %v600, 4
      %v602 = vadd.f32 %v600, %v601
      %v603 = vrot.slane %v602, 2
      %v604 = vadd.f32 %v602, %v603
      %v605 = vrot.slane %v604, 1
      %v606 = vadd.f32 %v604, %v605
      %v607 = vmul.f32 %v283, %v283
      %v608 = vmul.f32 %v286, %v286
      %v609 = vmul.f32 %v289, %v289
      %v610 = vmul.f32 %v292, %v292
      %v611 = vmul.f32 %v295, %v295
      %v612 = vmul.f32 %v298, %v298
      %v613 = vmul.f32 %v301, %v301
      %v614 = vmul.f32 %v304, %v304
      %v615 = vmul.f32 %v307, %v307
      %v616 = vmul.f32 %v310, %v310
      %v617 = vmul.f32 %v313, %v313
      %v618 = vmul.f32 %v316, %v316
      %v619 = vmul.f32 %v319, %v319
      %v620 = vmul.f32 %v322, %v322
      %v621 = vmul.f32 %v325, %v325
      %v622 = vmul.f32 %v328, %v328
      %v623 = vmul.f32 %v331, %v331
      %v624 = vmul.f32 %v334, %v334
      %v625 = vmul.f32 %v337, %v337
      %v626 = vmul.f32 %v340, %v340
      %v627 = vmul.f32 %v343, %v343
      %v628 = vmul.f32 %v346, %v346
      %v629 = vmul.f32 %v349, %v349
      %v630 = vmul.f32 %v352, %v352
      %v631 = vmul.f32 %v355, %v355
      %v632 = vmul.f32 %v358, %v358
      %v633 = vmul.f32 %v361, %v361
      %v634 = vmul.f32 %v364, %v364
      %v635 = vmul.f32 %v367, %v367
      %v636 = vmul.f32 %v370, %v370
      %v637 = vmul.f32 %v373, %v373
      %v638 = vmul.f32 %v376, %v376
      %v639 = vmul.f32 %v379, %v379
      %v640 = vmul.f32 %v382, %v382
      %v641 = vmul.f32 %v385, %v385
      %v642 = vmul.f32 %v388, %v388
      %v643 = vmul.f32 %v391, %v391
      %v644 = vmul.f32 %v394, %v394
      %v645 = vmul.f32 %v397, %v397
      %v646 = vmul.f32 %v400, %v400
      %v647 = vmul.f32 %v403, %v403
      %v648 = vmul.f32 %v406, %v406
      %v649 = vmul.f32 %v409, %v409
      %v650 = vmul.f32 %v412, %v412
      %v651 = vmul.f32 %v415, %v415
      %v652 = vmul.f32 %v418, %v418
      %v653 = vmul.f32 %v421, %v421
      %v654 = vmul.f32 %v424, %v424
      %v655 = vmul.f32 %v427, %v427
      %v656 = vmul.f32 %v430, %v430
      %v657 = vmul.f32 %v433, %v433
      %v658 = vmul.f32 %v436, %v436
      %v659 = vmul.f32 %v439, %v439
      %v660 = vmul.f32 %v442, %v442
      %v661 = vmul.f32 %v445, %v445
      %v662 = vmul.f32 %v448, %v448
      %v663 = vmul.f32 %v451, %v451
      %v664 = vmul.f32 %v454, %v454
      %v665 = vmul.f32 %v457, %v457
      %v666 = vmul.f32 %v460, %v460
      %v667 = vmul.f32 %v463, %v463
      %v668 = vmul.f32 %v466, %v466
      %v669 = vmul.f32 %v469, %v469
      %v670 = vmul.f32 %v472, %v472
      %v671 = vadd.f32 %v607, %v608
      %v672 = vadd.f32 %v671, %v609
      %v673 = vadd.f32 %v672, %v610
      %v674 = vadd.f32 %v673, %v611
      %v675 = vadd.f32 %v674, %v612
      %v676 = vadd.f32 %v675, %v613
      %v677 = vadd.f32 %v676, %v614
      %v678 = vadd.f32 %v677, %v615
      %v679 = vadd.f32 %v678, %v616
      %v680 = vadd.f32 %v679, %v617
      %v681 = vadd.f32 %v680, %v618
      %v682 = vadd.f32 %v681, %v619
      %v683 = vadd.f32 %v682, %v620
      %v684 = vadd.f32 %v683, %v621
      %v685 = vadd.f32 %v684, %v622
      %v686 = vadd.f32 %v685, %v623
      %v687 = vadd.f32 %v686, %v624
      %v688 = vadd.f32 %v687, %v625
      %v689 = vadd.f32 %v688, %v626
      %v690 = vadd.f32 %v689, %v627
      %v691 = vadd.f32 %v690, %v628
      %v692 = vadd.f32 %v691, %v629
      %v693 = vadd.f32 %v692, %v630
      %v694 = vadd.f32 %v693, %v631
      %v695 = vadd.f32 %v694, %v632
      %v696 = vadd.f32 %v695, %v633
      %v697 = vadd.f32 %v696, %v634
      %v698 = vadd.f32 %v697, %v635
      %v699 = vadd.f32 %v698, %v636
      %v700 = vadd.f32 %v699, %v637
      %v701 = vadd.f32 %v700, %v638
      %v702 = vadd.f32 %v701, %v639
      %v703 = vadd.f32 %v702, %v640
      %v704 = vadd.f32 %v703, %v641
      %v705 = vadd.f32 %v704, %v642
      %v706 = vadd.f32 %v705, %v643
      %v707 = vadd.f32 %v706, %v644
      %v708 = vadd.f32 %v707, %v645
      %v709 = vadd.f32 %v708, %v646
      %v710 = vadd.f32 %v709, %v647
      %v711 = vadd.f32 %v710, %v648
      %v712 = vadd.f32 %v711, %v649
      %v713 = vadd.f32 %v712, %v650
      %v714 = vadd.f32 %v713, %v651
      %v715 = vadd.f32 %v714, %v652
      %v716 = vadd.f32 %v715, %v653
      %v717 = vadd.f32 %v716, %v654
      %v718 = vadd.f32 %v717, %v655
      %v719 = vadd.f32 %v718, %v656
      %v720 = vadd.f32 %v719, %v657
      %v721 = vadd.f32 %v720, %v658
      %v722 = vadd.f32 %v721, %v659
      %v723 = vadd.f32 %v722, %v660
      %v724 = vadd.f32 %v723, %v661
      %v725 = vadd.f32 %v724, %v662
      %v726 = vadd.f32 %v725, %v663
      %v727 = vadd.f32 %v726, %v664
      %v728 = vadd.f32 %v727, %v665
      %v729 = vadd.f32 %v728, %v666
      %v730 = vadd.f32 %v729, %v667
      %v731 = vadd.f32 %v730, %v668
      %v732 = vadd.f32 %v731, %v669
      %v733 = vadd.f32 %v732, %v670
      %v734 = vrot.slane %v733, 4
      %v735 = vadd.f32 %v733, %v734
      %v736 = vrot.slane %v735, 2
      %v737 = vadd.f32 %v735, %v736
      %v738 = vrot.slane %v737, 1
      %v739 = vadd.f32 %v737, %v738
      %vm740 = vcmask 1040384
      %v741 = vsel %vm740, %v606, %v739
      %742 = vst [vmem:[%s184] sm:$0x3] %v741
      %s743 = smul.u32 64, %s15
      %p744 = scmp.lt.s32.totalorder %s743, 127
      %s745 = scalar_select %p744, %s743, 127
      %s746 = smul.addr %s745, 8
      %s747 = scalar_lea.vmem %s2, %s746
      %p748 = scmp.lt.s32.totalorder %s15, 1
      %s749 = scalar_select %p748, %s15, 1
      %s750 = smul.addr %s749, 2
      %s751 = scalar_lea.vmem %s3, %s750
      // Predicated region
      $region29: #{bottleneck_forward.6} parent=27 // pred_check
        %p752 = pneg %p80
      $region30: #{bottleneck_forward.6} parent=27 // pred_check_branch
        %754 = sbr.rel (%p752) target = $region32
      $region31: #{bottleneck_forward.6} parent=27 // pred_region
        %s755 = smul.u32 64, %s15
      $region32: #{bottleneck_forward.6} parent=27 // pred_fallthru
        _
      // Predicated region
      $region33: #{bottleneck_forward.6} parent=27 // pred_check
        %p756 = pneg %p106
      $region34: #{bottleneck_forward.6} parent=27 // pred_check_branch
        %758 = sbr.rel (%p756) target = $region36
      $region35: #{bottleneck_forward.6} parent=27 // pred_region
        _
      $region36: #{bottleneck_forward.6} parent=27 // pred_fallthru
        _
    $region28: #{bottleneck_forward.6} parent=5 // pred_fallthru
      _
    %p759 = scmp.le.s32.totalorder 2, %s10
    // Predicated region
    $region37: #{bottleneck_forward.6} parent=5 // pred_check
      %p760 = pneg %p759
    $region38: #{bottleneck_forward.6} parent=5 // pred_check_branch
      %762 = sbr.rel (%p760) target = $region40
    $region39: #{bottleneck_forward.6} parent=5 // pred_region
      %s763 = ssub.s32 %s10, 2
      // Predicated region
      $region41: #{bottleneck_forward.6} parent=39 // pred_check
        %p764 = pneg %p86
      $region42: #{bottleneck_forward.6} parent=39 // pred_check_branch
        %766 = sbr.rel (%p764) target = $region44
      $region43: #{bottleneck_forward.6} parent=39 // pred_region
        %s767 = smul.u32 64, %s16
        %p768 = scmp.lt.s32.totalorder %s767, 127
        %s769 = scalar_select %p768, %s767, 127
        %s770 = smul.addr %s769, 8
        %s771 = scalar_lea.vmem %s2, %s770
      $region44: #{bottleneck_forward.6} parent=39 // pred_fallthru
        _
      // Predicated region
      $region45: #{bottleneck_forward.6} parent=39 // pred_check
        %p772 = pneg %p112
      $region46: #{bottleneck_forward.6} parent=39 // pred_check_branch
        %774 = sbr.rel (%p772) target = $region48
      $region47: #{bottleneck_forward.6} parent=39 // pred_region
        %p775 = scmp.lt.s32.totalorder %s16, 1
        %s776 = scalar_select %p775, %s16, 1
        %s777 = smul.addr %s776, 2
        %s778 = scalar_lea.vmem %s3, %s777
      $region48: #{bottleneck_forward.6} parent=39 // pred_fallthru
        _
    $region40: #{bottleneck_forward.6} parent=5 // pred_fallthru
      _
  $region6: #{bottleneck_forward.6} parent=0 // loop_footer
    %s14 = sadd.s32 1, %s10
  $region7: #{bottleneck_forward.6} parent=0 // loop_footer_branch
    %9 = sbr.rel target = $region3
  $region8: #{bottleneck_forward.6} parent=0 // loop_exit
    _

// kernel: bottleneck_forward.7
$region0: #{bottleneck_forward.7}
  #allocation0 [shape = 'u32[]', space=smem, size = 0x4, offset = 0x4, fixed_abs, tag = 'smem constant byte address 0x4 - core index']
  #allocation1 [shape = 'u32[72,128]{1,0:T(1,128)}', space=vmem, size = 0x9000, scoped, tag = 'internal scratch']
  %s0 = inlined_call_operand.vmem [shape: f32[2,2,128], index: 0, kind: input, shape index: {}]
  %s1 = inlined_call_operand.vmem [shape: f32[1,128], index: 1, kind: input, shape index: {}]
  %s2 = inlined_call_operand.vmem [shape: f32[1,128], index: 2, kind: input, shape index: {}]
  %s3 = inlined_call_operand.vmem [shape: f32[1024,128], index: 3, kind: input, shape index: {}]
  %s4 = inlined_call_operand.vmem [shape: f32[1024,128], index: 4, kind: output, shape index: {}]
  %s5 = sld [smem:[#allocation0]]
  $region49: #{bottleneck_forward.7} parent=0
    _
  %s7 = ssub.s32 1, %s5
  %s8 = scalar_select 0, %s7, %s5
  loop: start=0, step=1, limit=4
  $region2: #{bottleneck_forward.7} parent=0 // loop_pre_header
    _
  $region3: #{bottleneck_forward.7} parent=0 // loop_header
    %s10 = sphi 0, %s14
    %p11 = scmp.ge.s32.totalorder %s10, 4
    %s18 = sphi 0, %s18
    %s20 = sphi 0, %s18
    %s21 = sphi 0, %s20
    %s35 = sphi 0, %s21
    %s39 = sphi 0, %s39
    %s41 = sphi 0, %s39
    %s42 = sphi 0, %s41
    %s56 = sphi 0, %s42
    %s60 = sphi 0, %s60
    %s62 = sphi 0, %s60
    %s63 = sphi 0, %s62
    %s77 = sphi 0, %s63
    %s83 = sphi 0, %s85
    %s86 = sphi 0, %s83
    %s87 = sphi 0, %s86
    %s103 = sphi 0, %s87
    %s109 = sphi 0, %s111
    %s112 = sphi 0, %s109
    %s113 = sphi 0, %s112
    %s129 = sphi 0, %s113
  $region4: #{bottleneck_forward.7} parent=0 // loop_header_branch
    %13 = sbr.rel (%p11) target = $region8
  $region5: #{bottleneck_forward.7} parent=0 // loop_body
    %s15 = ssub.s32 %s10, 1
    %s16 = ssub.s32 %s10, 2
    %s17 = sadd.s32 %s10, 1
    %s19 = sadd.s32 %s18, 1
    %p22 = scmp.eq.s32.totalorder %s10, 1
    %p23 = scmp.ne.s32.totalorder %s18, %s20
    %p24 = scmp.eq.s32.totalorder %s10, 0
    %p25 = por %p23, %p24
    %p26 = scmp.ne.s32.totalorder %s18, %s20
    %p27 = scmp.eq.s32.totalorder %s15, 1
    %p28 = por %p26, %p27
    %p29 = scmp.ne.s32.totalorder %s20, %s21
    %p30 = scmp.eq.s32.totalorder %s15, 0
    %p31 = por %p29, %p30
    %p32 = scmp.ne.s32.totalorder %s20, %s21
    %p33 = scmp.eq.s32.totalorder %s16, 1
    %p34 = por %p32, %p33
    %p36 = scmp.ne.s32.totalorder %s21, %s35
    %p37 = scmp.eq.s32.totalorder %s16, 0
    %p38 = por %p36, %p37
    %s40 = sadd.s32 %s39, 1
    %p43 = scmp.eq.s32.totalorder %s10, 1
    %p44 = scmp.ne.s32.totalorder %s39, %s41
    %p45 = scmp.eq.s32.totalorder %s10, 0
    %p46 = por %p44, %p45
    %p47 = scmp.ne.s32.totalorder %s39, %s41
    %p48 = scmp.eq.s32.totalorder %s15, 1
    %p49 = por %p47, %p48
    %p50 = scmp.ne.s32.totalorder %s41, %s42
    %p51 = scmp.eq.s32.totalorder %s15, 0
    %p52 = por %p50, %p51
    %p53 = scmp.ne.s32.totalorder %s41, %s42
    %p54 = scmp.eq.s32.totalorder %s16, 1
    %p55 = por %p53, %p54
    %p57 = scmp.ne.s32.totalorder %s42, %s56
    %p58 = scmp.eq.s32.totalorder %s16, 0
    %p59 = por %p57, %p58
    %s61 = sadd.s32 %s60, 1
    %p64 = scmp.eq.s32.totalorder %s10, 1
    %p65 = scmp.ne.s32.totalorder %s60, %s62
    %p66 = scmp.eq.s32.totalorder %s10, 0
    %p67 = por %p65, %p66
    %p68 = scmp.ne.s32.totalorder %s60, %s62
    %p69 = scmp.eq.s32.totalorder %s15, 1
    %p70 = por %p68, %p69
    %p71 = scmp.ne.s32.totalorder %s62, %s63
    %p72 = scmp.eq.s32.totalorder %s15, 0
    %p73 = por %p71, %p72
    %p74 = scmp.ne.s32.totalorder %s62, %s63
    %p75 = scmp.eq.s32.totalorder %s16, 1
    %p76 = por %p74, %p75
    %p78 = scmp.ne.s32.totalorder %s63, %s77
    %p79 = scmp.eq.s32.totalorder %s16, 0
    %p80 = por %p78, %p79
    %s81 = ssub.s32 %s10, %s17
    %p82 = scmp.eq.s32.totalorder %s81, 0
    %s84 = sadd.s32 %s83, 1
    %s85 = scalar_select %p82, %s83, %s84
    %p88 = pneg %p82
    %p89 = scmp.eq.s32.totalorder %s10, 1
    %p90 = por %p88, %p89
    %p91 = scmp.ne.s32.totalorder %s83, %s86
    %p92 = scmp.eq.s32.totalorder %s10, 0
    %p93 = por %p91, %p92
    %p94 = scmp.ne.s32.totalorder %s83, %s86
    %p95 = scmp.eq.s32.totalorder %s15, 1
    %p96 = por %p94, %p95
    %p97 = scmp.ne.s32.totalorder %s86, %s87
    %p98 = scmp.eq.s32.totalorder %s15, 0
    %p99 = por %p97, %p98
    %p100 = scmp.ne.s32.totalorder %s86, %s87
    %p101 = scmp.eq.s32.totalorder %s16, 1
    %p102 = por %p100, %p101
    %p104 = scmp.ne.s32.totalorder %s87, %s103
    %p105 = scmp.eq.s32.totalorder %s16, 0
    %p106 = por %p104, %p105
    %s107 = ssub.s32 %s10, %s17
    %p108 = scmp.eq.s32.totalorder %s107, 0
    %s110 = sadd.s32 %s109, 1
    %s111 = scalar_select %p108, %s109, %s110
    %p114 = pneg %p108
    %p115 = scmp.eq.s32.totalorder %s10, 1
    %p116 = por %p114, %p115
    %p117 = scmp.ne.s32.totalorder %s109, %s112
    %p118 = scmp.eq.s32.totalorder %s10, 0
    %p119 = por %p117, %p118
    %p120 = scmp.ne.s32.totalorder %s109, %s112
    %p121 = scmp.eq.s32.totalorder %s15, 1
    %p122 = por %p120, %p121
    %p123 = scmp.ne.s32.totalorder %s112, %s113
    %p124 = scmp.eq.s32.totalorder %s15, 0
    %p125 = por %p123, %p124
    %p126 = scmp.ne.s32.totalorder %s112, %s113
    %p127 = scmp.eq.s32.totalorder %s16, 1
    %p128 = por %p126, %p127
    %p130 = scmp.ne.s32.totalorder %s113, %s129
    %p131 = scmp.eq.s32.totalorder %s16, 0
    %p132 = por %p130, %p131
    %p133 = scmp.le.s32.totalorder 1, %s10
    %p134 = scmp.lt.s32.totalorder %s10, 3
    %p135 = pnand %p133, %p134
    %p136 = pneg %p135
    // Predicated region
    $region9: #{bottleneck_forward.7} parent=5 // pred_check
      _
    $region10: #{bottleneck_forward.7} parent=5 // pred_check_branch
      %138 = sbr.rel (%p135) target = $region12
    $region11: #{bottleneck_forward.7} parent=5 // pred_region
      %s139 = ssub.s32 %s10, 1
      // Predicated region
      $region13: #{bottleneck_forward.7} parent=11 // pred_check
        %p140 = pneg %p31
      $region14: #{bottleneck_forward.7} parent=11 // pred_check_branch
        %142 = sbr.rel (%p140) target = $region16
      $region15: #{bottleneck_forward.7} parent=11 // pred_region
        _
      $region16: #{bottleneck_forward.7} parent=11 // pred_fallthru
        _
      // Predicated region
      $region17: #{bottleneck_forward.7} parent=11 // pred_check
        %p143 = pneg %p52
      $region18: #{bottleneck_forward.7} parent=11 // pred_check_branch
        %145 = sbr.rel (%p143) target = $region20
      $region19: #{bottleneck_forward.7} parent=11 // pred_region
        _
      $region20: #{bottleneck_forward.7} parent=11 // pred_fallthru
        _
      // Predicated region
      $region21: #{bottleneck_forward.7} parent=11 // pred_check
        %p146 = pneg %p73
      $region22: #{bottleneck_forward.7} parent=11 // pred_check_branch
        %148 = sbr.rel (%p146) target = $region24
      $region23: #{bottleneck_forward.7} parent=11 // pred_region
        _
      $region24: #{bottleneck_forward.7} parent=11 // pred_fallthru
        _
    $region12: #{bottleneck_forward.7} parent=5 // pred_fallthru
      _
    %p149 = scmp.lt.s32.totalorder %s10, 2
    // Predicated region
    $region25: #{bottleneck_forward.7} parent=5 // pred_check
      %p150 = pneg %p149
    $region26: #{bottleneck_forward.7} parent=5 // pred_check_branch
      %152 = sbr.rel (%p150) target = $region28
    $region27: #{bottleneck_forward.7} parent=5 // pred_region
      // Predicated region
      $region29: #{bottleneck_forward.7} parent=27 // pred_check
        %p153 = pneg %p93
      $region30: #{bottleneck_forward.7} parent=27 // pred_check_branch
        %155 = sbr.rel (%p153) target = $region32
      $region31: #{bottleneck_forward.7} parent=27 // pred_region
        %s156 = smul.u32 64, %s10
        %p157 = scmp.lt.s32.totalorder %s156, 127
        %s158 = scalar_select %p157, %s156, 127
        %s159 = smul.addr %s158, 8
        %s160 = scalar_lea.vmem %s3, %s159
        %s161 = smul.u32 64, %s10
      $region32: #{bottleneck_forward.7} parent=27 // pred_fallthru
        _
    $region28: #{bottleneck_forward.7} parent=5 // pred_fallthru
      _
    %p162 = scmp.le.s32.totalorder 1, %s10
    %p163 = scmp.lt.s32.totalorder %s10, 3
    %p164 = pnand %p162, %p163
    %p165 = pneg %p164
    // Predicated region
    $region33: #{bottleneck_forward.7} parent=5 // pred_check
      _
    $region34: #{bottleneck_forward.7} parent=5 // pred_check_branch
      %167 = sbr.rel (%p164) target = $region36
    $region35: #{bottleneck_forward.7} parent=5 // pred_region
      %s168 = ssub.s32 %s10, 1
      %p169 = pneg %p31
      %p170 = pneg %p28
      %p171 = pneg %p52
      %p172 = pneg %p49
      %p173 = pneg %p73
      %p174 = pneg %p70
      %s175 = smul.u32 64, %s15
      %p176 = scmp.lt.s32.totalorder %s175, 127
      %s177 = scalar_select %p176, %s175, 127
      %s178 = smul.addr %s177, 8
      %s179 = scalar_lea.vmem %s3, %s178
      %p180 = pneg %p99
      %p181 = pneg %p96
      %p182 = pneg %p125
      %p183 = pneg %p122
      %s184 = smul.u32 64, %s15
      %p185 = scmp.lt.s32.totalorder %s184, 127
      %s186 = scalar_select %p185, %s184, 127
      %s187 = smul.addr %s186, 8
      %s188 = scalar_lea.vmem %s4, %s187
      %s189 = smul.u32 64, %s15
      %p190 = scmp.lt.s32.totalorder %s189, 127
      %s191 = scalar_select %p190, %s189, 127
      %s192 = smul.addr %s191, 8
      %s193 = scalar_lea.vmem %s3, %s192
      %s194 = smul.u32 64, %s15
      %s195 = smul.u32 64, %s15
      %p196 = scmp.lt.s32.totalorder %s195, 127
      %s197 = scalar_select %p196, %s195, 127
      %s198 = smul.addr %s197, 8
      %s199 = scalar_lea.vmem %s4, %s198
      %s200 = smul.u32 64, %s15
      %v201 = vld [vmem:[%s0] sm:$0x3]
      %v202 = vld [vmem:[%s0 + $0x2] sm:$0x3]
      %vm203 = vcmask 1041408
      %v204 = vsel %vm203, %v201, 0.0
      %v205 = vsel %vm203, %v202, 0.0
      %v206 = vadd.f32 %v204, %v205
      %v207 = vmul.f32 %v206, 0.0009765625
      %v208 = vmul.f32 %v207, %v207
      %v210 = vrot.slane %v208, 7
      %v212 = vsub.f32 %v207, %v210
      %v213 = vadd.f32 %v212, 1e-05
      %v214 = vrsqrt.pop %v213
      %v215 = vmul.f32 %v214, %v213
      %v216 = vmul.f32 %v215, %v214
      %v217 = vmul.f32 0.5, %v216
      %v218 = vsub.f32 1.5, %v217
      %v219 = vmul.f32 %v214, %v218
      %vm220 = vweird.f32 %v213
      %vm221 = vweird.f32 %v214
      %vm222 = vmor %vm220, %vm221
      %v223 = vsel %vm222, %v214, %v219
      %v224 = vld [vmem:[%s193] sm:$0xff]
      %v225 = vld [vmem:[%s193 + $0x8] sm:$0xff]
      %v226 = vld [vmem:[%s193 + $0x10] sm:$0xff]
      %v227 = vld [vmem:[%s193 + $0x18] sm:$0xff]
      %v228 = vld [vmem:[%s193 + $0x20] sm:$0xff]
      %v229 = vld [vmem:[%s193 + $0x28] sm:$0xff]
      %v230 = vld [vmem:[%s193 + $0x30] sm:$0xff]
      %v231 = vld [vmem:[%s193 + $0x38] sm:$0xff]
      %v232 = vld [vmem:[%s193 + $0x40] sm:$0xff]
      %v233 = vld [vmem:[%s193 + $0x48] sm:$0xff]
      %v234 = vld [vmem:[%s193 + $0x50] sm:$0xff]
      %v235 = vld [vmem:[%s193 + $0x58] sm:$0xff]
      %v236 = vld [vmem:[%s193 + $0x60] sm:$0xff]
      %v237 = vld [vmem:[%s193 + $0x68] sm:$0xff]
      %v238 = vld [vmem:[%s193 + $0x70] sm:$0xff]
      %v239 = vld [vmem:[%s193 + $0x78] sm:$0xff]
      %v240 = vld [vmem:[%s193 + $0x80] sm:$0xff]
      %v241 = vld [vmem:[%s193 + $0x88] sm:$0xff]
      %v242 = vld [vmem:[%s193 + $0x90] sm:$0xff]
      %v243 = vld [vmem:[%s193 + $0x98] sm:$0xff]
      %v244 = vld [vmem:[%s193 + $0xa0] sm:$0xff]
      %v245 = vld [vmem:[%s193 + $0xa8] sm:$0xff]
      %v246 = vld [vmem:[%s193 + $0xb0] sm:$0xff]
      %v247 = vld [vmem:[%s193 + $0xb8] sm:$0xff]
      %v248 = vld [vmem:[%s193 + $0xc0] sm:$0xff]
      %v249 = vld [vmem:[%s193 + $0xc8] sm:$0xff]
      %v250 = vld [vmem:[%s193 + $0xd0] sm:$0xff]
      %v251 = vld [vmem:[%s193 + $0xd8] sm:$0xff]
      %v252 = vld [vmem:[%s193 + $0xe0] sm:$0xff]
      %v253 = vld [vmem:[%s193 + $0xe8] sm:$0xff]
      %v254 = vld [vmem:[%s193 + $0xf0] sm:$0xff]
      %v255 = vld [vmem:[%s193 + $0xf8] sm:$0xff]
      %v256 = vld [vmem:[%s193 + $0x100] sm:$0xff]
      %v257 = vld [vmem:[%s193 + $0x108] sm:$0xff]
      %v258 = vld [vmem:[%s193 + $0x110] sm:$0xff]
      %v259 = vld [vmem:[%s193 + $0x118] sm:$0xff]
      %v260 = vld [vmem:[%s193 + $0x120] sm:$0xff]
      %v261 = vld [vmem:[%s193 + $0x128] sm:$0xff]
      %v262 = vld [vmem:[%s193 + $0x130] sm:$0xff]
      %v263 = vld [vmem:[%s193 + $0x138] sm:$0xff]
      %v264 = vld [vmem:[%s193 + $0x140] sm:$0xff]
      %v265 = vld [vmem:[%s193 + $0x148] sm:$0xff]
      %v266 = vld [vmem:[%s193 + $0x150] sm:$0xff]
      %v267 = vld [vmem:[%s193 + $0x158] sm:$0xff]
      %v268 = vld [vmem:[%s193 + $0x160] sm:$0xff]
      %v269 = vld [vmem:[%s193 + $0x168] sm:$0xff]
      %v270 = vld [vmem:[%s193 + $0x170] sm:$0xff]
      %v271 = vld [vmem:[%s193 + $0x178] sm:$0xff]
      %v272 = vld [vmem:[%s193 + $0x180] sm:$0xff]
      %v273 = vld [vmem:[%s193 + $0x188] sm:$0xff]
      %v274 = vld [vmem:[%s193 + $0x190] sm:$0xff]
      %v275 = vld [vmem:[%s193 + $0x198] sm:$0xff]
      %v276 = vld [vmem:[%s193 + $0x1a0] sm:$0xff]
      %v277 = vld [vmem:[%s193 + $0x1a8] sm:$0xff]
      %v278 = vld [vmem:[%s193 + $0x1b0] sm:$0xff]
      %v279 = vld [vmem:[%s193 + $0x1b8] sm:$0xff]
      %v280 = vld [vmem:[%s193 + $0x1c0] sm:$0xff]
      %v281 = vld [vmem:[%s193 + $0x1c8] sm:$0xff]
      %v282 = vld [vmem:[%s193 + $0x1d0] sm:$0xff]
      %v283 = vld [vmem:[%s193 + $0x1d8] sm:$0xff]
      %v284 = vld [vmem:[%s193 + $0x1e0] sm:$0xff]
      %v285 = vld [vmem:[%s193 + $0x1e8] sm:$0xff]
      %v286 = vld [vmem:[%s193 + $0x1f0] sm:$0xff]
      %v287 = vld [vmem:[%s193 + $0x1f8] sm:$0xff]
      %v288 = vperm.slane %v207, 0
      %v289 = vsub.f32 %v224, %v288
      %v290 = vsub.f32 %v225, %v288
      %v291 = vsub.f32 %v226, %v288
      %v292 = vsub.f32 %v227, %v288
      %v293 = vsub.f32 %v228, %v288
      %v294 = vsub.f32 %v229, %v288
      %v295 = vsub.f32 %v230, %v288
      %v296 = vsub.f32 %v231, %v288
      %v297 = vsub.f32 %v232, %v288
      %v298 = vsub.f32 %v233, %v288
      %v299 = vsub.f32 %v234, %v288
      %v300 = vsub.f32 %v235, %v288
      %v301 = vsub.f32 %v236, %v288
      %v302 = vsub.f32 %v237, %v288
      %v303 = vsub.f32 %v238, %v288
      %v304 = vsub.f32 %v239, %v288
      %v305 = vsub.f32 %v240, %v288
      %v306 = vsub.f32 %v241, %v288
      %v307 = vsub.f32 %v242, %v288
      %v308 = vsub.f32 %v243, %v288
      %v309 = vsub.f32 %v244, %v288
      %v310 = vsub.f32 %v245, %v288
      %v311 = vsub.f32 %v246, %v288
      %v312 = vsub.f32 %v247, %v288
      %v313 = vsub.f32 %v248, %v288
      %v314 = vsub.f32 %v249, %v288
      %v315 = vsub.f32 %v250, %v288
      %v316 = vsub.f32 %v251, %v288
      %v317 = vsub.f32 %v252, %v288
      %v318 = vsub.f32 %v253, %v288
      %v319 = vsub.f32 %v254, %v288
      %v320 = vsub.f32 %v255, %v288
      %v321 = vsub.f32 %v256, %v288
      %v322 = vsub.f32 %v257, %v288
      %v323 = vsub.f32 %v258, %v288
      %v324 = vsub.f32 %v259, %v288
      %v325 = vsub.f32 %v260, %v288
      %v326 = vsub.f32 %v261, %v288
      %v327 = vsub.f32 %v262, %v288
      %v328 = vsub.f32 %v263, %v288
      %v329 = vsub.f32 %v264, %v288
      %v330 = vsub.f32 %v265, %v288
      %v331 = vsub.f32 %v266, %v288
      %v332 = vsub.f32 %v267, %v288
      %v333 = vsub.f32 %v268, %v288
      %v334 = vsub.f32 %v269, %v288
      %v335 = vsub.f32 %v270, %v288
      %v336 = vsub.f32 %v271, %v288
      %v337 = vsub.f32 %v272, %v288
      %v338 = vsub.f32 %v273, %v288
      %v339 = vsub.f32 %v274, %v288
      %v340 = vsub.f32 %v275, %v288
      %v341 = vsub.f32 %v276, %v288
      %v342 = vsub.f32 %v277, %v288
      %v343 = vsub.f32 %v278, %v288
      %v344 = vsub.f32 %v279, %v288
      %v345 = vsub.f32 %v280, %v288
      %v346 = vsub.f32 %v281, %v288
      %v347 = vsub.f32 %v282, %v288
      %v348 = vsub.f32 %v283, %v288
      %v349 = vsub.f32 %v284, %v288
      %v350 = vsub.f32 %v285, %v288
      %v351 = vsub.f32 %v286, %v288
      %v352 = vsub.f32 %v287, %v288
      %v353 = vld [vmem:[%s1] sm:$0x1]
      %v355 = vperm.slane %v353, 0
      %v357 = vmul.f32 %v223, %v355
      %v358 = vperm.slane %v357, 1
      %v359 = vmul.f32 %v289, %v358
      %v360 = vmul.f32 %v290, %v358
      %v361 = vmul.f32 %v291, %v358
      %v362 = vmul.f32 %v292, %v358
      %v363 = vmul.f32 %v293, %v358
      %v364 = vmul.f32 %v294, %v358
      %v365 = vmul.f32 %v295, %v358
      %v366 = vmul.f32 %v296, %v358
      %v367 = vmul.f32 %v297, %v358
      %v368 = vmul.f32 %v298, %v358
      %v369 = vmul.f32 %v299, %v358
      %v370 = vmul.f32 %v300, %v358
      %v371 = vmul.f32 %v301, %v358
      %v372 = vmul.f32 %v302, %v358
      %v373 = vmul.f32 %v303, %v358
      %v374 = vmul.f32 %v304, %v358
      %v375 = vmul.f32 %v305, %v358
      %v376 = vmul.f32 %v306, %v358
      %v377 = vmul.f32 %v307, %v358
      %v378 = vmul.f32 %v308, %v358
      %v379 = vmul.f32 %v309, %v358
      %v380 = vmul.f32 %v310, %v358
      %v381 = vmul.f32 %v311, %v358
      %v382 = vmul.f32 %v312, %v358
      %v383 = vmul.f32 %v313, %v358
      %v384 = vmul.f32 %v314, %v358
      %v385 = vmul.f32 %v315, %v358
      %v386 = vmul.f32 %v316, %v358
      %v387 = vmul.f32 %v317, %v358
      %v388 = vmul.f32 %v318, %v358
      %v389 = vmul.f32 %v319, %v358
      %v390 = vmul.f32 %v320, %v358
      %v391 = vmul.f32 %v321, %v358
      %v392 = vmul.f32 %v322, %v358
      %v393 = vmul.f32 %v323, %v358
      %v394 = vmul.f32 %v324, %v358
      %v395 = vmul.f32 %v325, %v358
      %v396 = vmul.f32 %v326, %v358
      %v397 = vmul.f32 %v327, %v358
      %v398 = vmul.f32 %v328, %v358
      %v399 = vmul.f32 %v329, %v358
      %v400 = vmul.f32 %v330, %v358
      %v401 = vmul.f32 %v331, %v358
      %v402 = vmul.f32 %v332, %v358
      %v403 = vmul.f32 %v333, %v358
      %v404 = vmul.f32 %v334, %v358
      %v405 = vmul.f32 %v335, %v358
      %v406 = vmul.f32 %v336, %v358
      %v407 = vmul.f32 %v337, %v358
      %v408 = vmul.f32 %v338, %v358
      %v409 = vmul.f32 %v339, %v358
      %v410 = vmul.f32 %v340, %v358
      %v411 = vmul.f32 %v341, %v358
      %v412 = vmul.f32 %v342, %v358
      %v413 = vmul.f32 %v343, %v358
      %v414 = vmul.f32 %v344, %v358
      %v415 = vmul.f32 %v345, %v358
      %v416 = vmul.f32 %v346, %v358
      %v417 = vmul.f32 %v347, %v358
      %v418 = vmul.f32 %v348, %v358
      %v419 = vmul.f32 %v349, %v358
      %v420 = vmul.f32 %v350, %v358
      %v421 = vmul.f32 %v351, %v358
      %v422 = vmul.f32 %v352, %v358
      %v423 = vld [vmem:[%s2] sm:$0x1]
      %v425 = vperm.slane %v423, 0
      %v427 = vadd.f32 %v359, %v425
      %v428 = vadd.f32 %v360, %v425
      %v429 = vadd.f32 %v361, %v425
      %v430 = vadd.f32 %v362, %v425
      %v431 = vadd.f32 %v363, %v425
      %v432 = vadd.f32 %v364, %v425
      %v433 = vadd.f32 %v365, %v425
      %v434 = vadd.f32 %v366, %v425
      %v435 = vadd.f32 %v367, %v425
      %v436 = vadd.f32 %v368, %v425
      %v437 = vadd.f32 %v369, %v425
      %v438 = vadd.f32 %v370, %v425
      %v439 = vadd.f32 %v371, %v425
      %v440 = vadd.f32 %v372, %v425
      %v441 = vadd.f32 %v373, %v425
      %v442 = vadd.f32 %v374, %v425
      %v443 = vadd.f32 %v375, %v425
      %v444 = vadd.f32 %v376, %v425
      %v445 = vadd.f32 %v377, %v425
      %v446 = vadd.f32 %v378, %v425
      %v447 = vadd.f32 %v379, %v425
      %v448 = vadd.f32 %v380, %v425
      %v449 = vadd.f32 %v381, %v425
      %v450 = vadd.f32 %v382, %v425
      %v451 = vadd.f32 %v383, %v425
      %v452 = vadd.f32 %v384, %v425
      %v453 = vadd.f32 %v385, %v425
      %v454 = vadd.f32 %v386, %v425
      %v455 = vadd.f32 %v387, %v425
      %v456 = vadd.f32 %v388, %v425
      %v457 = vadd.f32 %v389, %v425
      %v458 = vadd.f32 %v390, %v425
      %v459 = vadd.f32 %v391, %v425
      %v460 = vadd.f32 %v392, %v425
      %v461 = vadd.f32 %v393, %v425
      %v462 = vadd.f32 %v394, %v425
      %v463 = vadd.f32 %v395, %v425
      %v464 = vadd.f32 %v396, %v425
      %v465 = vadd.f32 %v397, %v425
      %v466 = vadd.f32 %v398, %v425
      %v467 = vadd.f32 %v399, %v425
      %v468 = vadd.f32 %v400, %v425
      %v469 = vadd.f32 %v401, %v425
      %v470 = vadd.f32 %v402, %v425
      %v471 = vadd.f32 %v403, %v425
      %v472 = vadd.f32 %v404, %v425
      %v473 = vadd.f32 %v405, %v425
      %v474 = vadd.f32 %v406, %v425
      %v475 = vadd.f32 %v407, %v425
      %v476 = vadd.f32 %v408, %v425
      %v477 = vadd.f32 %v409, %v425
      %v478 = vadd.f32 %v410, %v425
      %v479 = vadd.f32 %v411, %v425
      %v480 = vadd.f32 %v412, %v425
      %v481 = vadd.f32 %v413, %v425
      %v482 = vadd.f32 %v414, %v425
      %v483 = vadd.f32 %v415, %v425
      %v484 = vadd.f32 %v416, %v425
      %v485 = vadd.f32 %v417, %v425
      %v486 = vadd.f32 %v418, %v425
      %v487 = vadd.f32 %v419, %v425
      %v488 = vadd.f32 %v420, %v425
      %v489 = vadd.f32 %v421, %v425
      %v490 = vadd.f32 %v422, %v425
      %v491 = vmax.f32 %v427, 0.0
      %v492 = vmax.f32 %v428, 0.0
      %v493 = vmax.f32 %v429, 0.0
      %v494 = vmax.f32 %v430, 0.0
      %v495 = vmax.f32 %v431, 0.0
      %v496 = vmax.f32 %v432, 0.0
      %v497 = vmax.f32 %v433, 0.0
      %v498 = vmax.f32 %v434, 0.0
      %v499 = vmax.f32 %v435, 0.0
      %v500 = vmax.f32 %v436, 0.0
      %v501 = vmax.f32 %v437, 0.0
      %v502 = vmax.f32 %v438, 0.0
      %v503 = vmax.f32 %v439, 0.0
      %v504 = vmax.f32 %v440, 0.0
      %v505 = vmax.f32 %v441, 0.0
      %v506 = vmax.f32 %v442, 0.0
      %v507 = vmax.f32 %v443, 0.0
      %v508 = vmax.f32 %v444, 0.0
      %v509 = vmax.f32 %v445, 0.0
      %v510 = vmax.f32 %v446, 0.0
      %v511 = vmax.f32 %v447, 0.0
      %v512 = vmax.f32 %v448, 0.0
      %v513 = vmax.f32 %v449, 0.0
      %v514 = vmax.f32 %v450, 0.0
      %v515 = vmax.f32 %v451, 0.0
      %v516 = vmax.f32 %v452, 0.0
      %v517 = vmax.f32 %v453, 0.0
      %v518 = vmax.f32 %v454, 0.0
      %v519 = vmax.f32 %v455, 0.0
      %v520 = vmax.f32 %v456, 0.0
      %v521 = vmax.f32 %v457, 0.0
      %v522 = vmax.f32 %v458, 0.0
      %v523 = vmax.f32 %v459, 0.0
      %v524 = vmax.f32 %v460, 0.0
      %v525 = vmax.f32 %v461, 0.0
      %v526 = vmax.f32 %v462, 0.0
      %v527 = vmax.f32 %v463, 0.0
      %v528 = vmax.f32 %v464, 0.0
      %v529 = vmax.f32 %v465, 0.0
      %v530 = vmax.f32 %v466, 0.0
      %v531 = vmax.f32 %v467, 0.0
      %v532 = vmax.f32 %v468, 0.0
      %v533 = vmax.f32 %v469, 0.0
      %v534 = vmax.f32 %v470, 0.0
      %v535 = vmax.f32 %v471, 0.0
      %v536 = vmax.f32 %v472, 0.0
      %v537 = vmax.f32 %v473, 0.0
      %v538 = vmax.f32 %v474, 0.0
      %v539 = vmax.f32 %v475, 0.0
      %v540 = vmax.f32 %v476, 0.0
      %v541 = vmax.f32 %v477, 0.0
      %v542 = vmax.f32 %v478, 0.0
      %v543 = vmax.f32 %v479, 0.0
      %v544 = vmax.f32 %v480, 0.0
      %v545 = vmax.f32 %v481, 0.0
      %v546 = vmax.f32 %v482, 0.0
      %v547 = vmax.f32 %v483, 0.0
      %v548 = vmax.f32 %v484, 0.0
      %v549 = vmax.f32 %v485, 0.0
      %v550 = vmax.f32 %v486, 0.0
      %v551 = vmax.f32 %v487, 0.0
      %v552 = vmax.f32 %v488, 0.0
      %v553 = vmax.f32 %v489, 0.0
      %v554 = vmax.f32 %v490, 0.0
      %555 = vst [vmem:[%s199] sm:$0xff] %v491
      %556 = vst [vmem:[%s199 + $0x8] sm:$0xff] %v492
      %557 = vst [vmem:[%s199 + $0x10] sm:$0xff] %v493
      %558 = vst [vmem:[%s199 + $0x18] sm:$0xff] %v494
      %559 = vst [vmem:[%s199 + $0x20] sm:$0xff] %v495
      %560 = vst [vmem:[%s199 + $0x28] sm:$0xff] %v496
      %561 = vst [vmem:[%s199 + $0x30] sm:$0xff] %v497
      %562 = vst [vmem:[%s199 + $0x38] sm:$0xff] %v498
      %563 = vst [vmem:[%s199 + $0x40] sm:$0xff] %v499
      %564 = vst [vmem:[%s199 + $0x48] sm:$0xff] %v500
      %565 = vst [vmem:[%s199 + $0x50] sm:$0xff] %v501
      %566 = vst [vmem:[%s199 + $0x58] sm:$0xff] %v502
      %567 = vst [vmem:[%s199 + $0x60] sm:$0xff] %v503
      %568 = vst [vmem:[%s199 + $0x68] sm:$0xff] %v504
      %569 = vst [vmem:[%s199 + $0x70] sm:$0xff] %v505
      %570 = vst [vmem:[%s199 + $0x78] sm:$0xff] %v506
      %571 = vst [vmem:[%s199 + $0x80] sm:$0xff] %v507
      %572 = vst [vmem:[%s199 + $0x88] sm:$0xff] %v508
      %573 = vst [vmem:[%s199 + $0x90] sm:$0xff] %v509
      %574 = vst [vmem:[%s199 + $0x98] sm:$0xff] %v510
      %575 = vst [vmem:[%s199 + $0xa0] sm:$0xff] %v511
      %576 = vst [vmem:[%s199 + $0xa8] sm:$0xff] %v512
      %577 = vst [vmem:[%s199 + $0xb0] sm:$0xff] %v513
      %578 = vst [vmem:[%s199 + $0xb8] sm:$0xff] %v514
      %579 = vst [vmem:[%s199 + $0xc0] sm:$0xff] %v515
      %580 = vst [vmem:[%s199 + $0xc8] sm:$0xff] %v516
      %581 = vst [vmem:[%s199 + $0xd0] sm:$0xff] %v517
      %582 = vst [vmem:[%s199 + $0xd8] sm:$0xff] %v518
      %583 = vst [vmem:[%s199 + $0xe0] sm:$0xff] %v519
      %584 = vst [vmem:[%s199 + $0xe8] sm:$0xff] %v520
      %585 = vst [vmem:[%s199 + $0xf0] sm:$0xff] %v521
      %586 = vst [vmem:[%s199 + $0xf8] sm:$0xff] %v522
      %587 = vst [vmem:[%s199 + $0x100] sm:$0xff] %v523
      %588 = vst [vmem:[%s199 + $0x108] sm:$0xff] %v524
      %589 = vst [vmem:[%s199 + $0x110] sm:$0xff] %v525
      %590 = vst [vmem:[%s199 + $0x118] sm:$0xff] %v526
      %591 = vst [vmem:[%s199 + $0x120] sm:$0xff] %v527
      %592 = vst [vmem:[%s199 + $0x128] sm:$0xff] %v528
      %593 = vst [vmem:[%s199 + $0x130] sm:$0xff] %v529
      %594 = vst [vmem:[%s199 + $0x138] sm:$0xff] %v530
      %595 = vst [vmem:[%s199 + $0x140] sm:$0xff] %v531
      %596 = vst [vmem:[%s199 + $0x148] sm:$0xff] %v532
      %597 = vst [vmem:[%s199 + $0x150] sm:$0xff] %v533
      %598 = vst [vmem:[%s199 + $0x158] sm:$0xff] %v534
      %599 = vst [vmem:[%s199 + $0x160] sm:$0xff] %v535
      %600 = vst [vmem:[%s199 + $0x168] sm:$0xff] %v536
      %601 = vst [vmem:[%s199 + $0x170] sm:$0xff] %v537
      %602 = vst [vmem:[%s199 + $0x178] sm:$0xff] %v538
      %603 = vst [vmem:[%s199 + $0x180] sm:$0xff] %v539
      %604 = vst [vmem:[%s199 + $0x188] sm:$0xff] %v540
      %605 = vst [vmem:[%s199 + $0x190] sm:$0xff] %v541
      %606 = vst [vmem:[%s199 + $0x198] sm:$0xff] %v542
      %607 = vst [vmem:[%s199 + $0x1a0] sm:$0xff] %v543
      %608 = vst [vmem:[%s199 + $0x1a8] sm:$0xff] %v544
      %609 = vst [vmem:[%s199 + $0x1b0] sm:$0xff] %v545
      %610 = vst [vmem:[%s199 + $0x1b8] sm:$0xff] %v546
      %611 = vst [vmem:[%s199 + $0x1c0] sm:$0xff] %v547
      %612 = vst [vmem:[%s199 + $0x1c8] sm:$0xff] %v548
      %613 = vst [vmem:[%s199 + $0x1d0] sm:$0xff] %v549
      %614 = vst [vmem:[%s199 + $0x1d8] sm:$0xff] %v550
      %615 = vst [vmem:[%s199 + $0x1e0] sm:$0xff] %v551
      %616 = vst [vmem:[%s199 + $0x1e8] sm:$0xff] %v552
      %617 = vst [vmem:[%s199 + $0x1f0] sm:$0xff] %v553
      %618 = vst [vmem:[%s199 + $0x1f8] sm:$0xff] %v554
      %s619 = smul.u32 64, %s15
      %p620 = scmp.lt.s32.totalorder %s619, 127
      %s621 = scalar_select %p620, %s619, 127
      %s622 = smul.addr %s621, 8
      %s623 = scalar_lea.vmem %s4, %s622
      // Predicated region
      $region37: #{bottleneck_forward.7} parent=35 // pred_check
        %p624 = pneg %p122
      $region38: #{bottleneck_forward.7} parent=35 // pred_check_branch
        %626 = sbr.rel (%p624) target = $region40
      $region39: #{bottleneck_forward.7} parent=35 // pred_region
        %s627 = smul.u32 64, %s15
      $region40: #{bottleneck_forward.7} parent=35 // pred_fallthru
        _
    $region36: #{bottleneck_forward.7} parent=5 // pred_fallthru
      _
    %p628 = scmp.le.s32.totalorder 2, %s10
    // Predicated region
    $region41: #{bottleneck_forward.7} parent=5 // pred_check
      %p629 = pneg %p628
    $region42: #{bottleneck_forward.7} parent=5 // pred_check_branch
      %631 = sbr.rel (%p629) target = $region44
    $region43: #{bottleneck_forward.7} parent=5 // pred_region
      %s632 = ssub.s32 %s10, 2
      // Predicated region
      $region45: #{bottleneck_forward.7} parent=43 // pred_check
        %p633 = pneg %p128
      $region46: #{bottleneck_forward.7} parent=43 // pred_check_branch
        %635 = sbr.rel (%p633) target = $region48
      $region47: #{bottleneck_forward.7} parent=43 // pred_region
        %s636 = smul.u32 64, %s16
        %p637 = scmp.lt.s32.totalorder %s636, 127
        %s638 = scalar_select %p637, %s636, 127
        %s639 = smul.addr %s638, 8
        %s640 = scalar_lea.vmem %s4, %s639
      $region48: #{bottleneck_forward.7} parent=43 // pred_fallthru
        _
    $region44: #{bottleneck_forward.7} parent=5 // pred_fallthru
      _
  $region6: #{bottleneck_forward.7} parent=0 // loop_footer
    %s14 = sadd.s32 1, %s10
  $region7: #{bottleneck_forward.7} parent=0 // loop_footer_branch
    %9 = sbr.rel target = $region3
  $region8: #{bottleneck_forward.7} parent=0 // loop_exit
    _

// kernel: bottleneck_forward.9
$region0: #{bottleneck_forward.9}
  #allocation0 [shape = 'u32[]', space=smem, size = 0x4, offset = 0x4, fixed_abs, tag = 'smem constant byte address 0x4 - core index']
  #allocation1 [shape = 'u32[72,128]{1,0:T(1,128)}', space=vmem, size = 0x9000, scoped, tag = 'internal scratch']
  %s0 = inlined_call_operand.vmem [shape: f32[4,2,128], index: 0, kind: input, shape index: {}]
  %s1 = inlined_call_operand.vmem [shape: f32[1,128], index: 1, kind: input, shape index: {}]
  %s2 = inlined_call_operand.vmem [shape: f32[1,128], index: 2, kind: input, shape index: {}]
  %s3 = inlined_call_operand.vmem [shape: f32[1024,128], index: 3, kind: input, shape index: {}]
  %s4 = inlined_call_operand.vmem [shape: f32[1024,128], index: 4, kind: output, shape index: {}]
  %s5 = sld [smem:[#allocation0]]
  $region49: #{bottleneck_forward.9} parent=0
    _
  %s7 = ssub.s32 1, %s5
  %s8 = scalar_select 0, %s7, %s5
  loop: start=0, step=1, limit=4
  $region2: #{bottleneck_forward.9} parent=0 // loop_pre_header
    _
  $region3: #{bottleneck_forward.9} parent=0 // loop_header
    %s10 = sphi 0, %s14
    %p11 = scmp.ge.s32.totalorder %s10, 4
    %s18 = sphi 0, %s18
    %s20 = sphi 0, %s18
    %s21 = sphi 0, %s20
    %s35 = sphi 0, %s21
    %s39 = sphi 0, %s39
    %s41 = sphi 0, %s39
    %s42 = sphi 0, %s41
    %s56 = sphi 0, %s42
    %s60 = sphi 0, %s60
    %s62 = sphi 0, %s60
    %s63 = sphi 0, %s62
    %s77 = sphi 0, %s63
    %s83 = sphi 0, %s85
    %s86 = sphi 0, %s83
    %s87 = sphi 0, %s86
    %s103 = sphi 0, %s87
    %s109 = sphi 0, %s111
    %s112 = sphi 0, %s109
    %s113 = sphi 0, %s112
    %s129 = sphi 0, %s113
  $region4: #{bottleneck_forward.9} parent=0 // loop_header_branch
    %13 = sbr.rel (%p11) target = $region8
  $region5: #{bottleneck_forward.9} parent=0 // loop_body
    %s15 = ssub.s32 %s10, 1
    %s16 = ssub.s32 %s10, 2
    %s17 = sadd.s32 %s10, 1
    %s19 = sadd.s32 %s18, 1
    %p22 = scmp.eq.s32.totalorder %s10, 1
    %p23 = scmp.ne.s32.totalorder %s18, %s20
    %p24 = scmp.eq.s32.totalorder %s10, 0
    %p25 = por %p23, %p24
    %p26 = scmp.ne.s32.totalorder %s18, %s20
    %p27 = scmp.eq.s32.totalorder %s15, 1
    %p28 = por %p26, %p27
    %p29 = scmp.ne.s32.totalorder %s20, %s21
    %p30 = scmp.eq.s32.totalorder %s15, 0
    %p31 = por %p29, %p30
    %p32 = scmp.ne.s32.totalorder %s20, %s21
    %p33 = scmp.eq.s32.totalorder %s16, 1
    %p34 = por %p32, %p33
    %p36 = scmp.ne.s32.totalorder %s21, %s35
    %p37 = scmp.eq.s32.totalorder %s16, 0
    %p38 = por %p36, %p37
    %s40 = sadd.s32 %s39, 1
    %p43 = scmp.eq.s32.totalorder %s10, 1
    %p44 = scmp.ne.s32.totalorder %s39, %s41
    %p45 = scmp.eq.s32.totalorder %s10, 0
    %p46 = por %p44, %p45
    %p47 = scmp.ne.s32.totalorder %s39, %s41
    %p48 = scmp.eq.s32.totalorder %s15, 1
    %p49 = por %p47, %p48
    %p50 = scmp.ne.s32.totalorder %s41, %s42
    %p51 = scmp.eq.s32.totalorder %s15, 0
    %p52 = por %p50, %p51
    %p53 = scmp.ne.s32.totalorder %s41, %s42
    %p54 = scmp.eq.s32.totalorder %s16, 1
    %p55 = por %p53, %p54
    %p57 = scmp.ne.s32.totalorder %s42, %s56
    %p58 = scmp.eq.s32.totalorder %s16, 0
    %p59 = por %p57, %p58
    %s61 = sadd.s32 %s60, 1
    %p64 = scmp.eq.s32.totalorder %s10, 1
    %p65 = scmp.ne.s32.totalorder %s60, %s62
    %p66 = scmp.eq.s32.totalorder %s10, 0
    %p67 = por %p65, %p66
    %p68 = scmp.ne.s32.totalorder %s60, %s62
    %p69 = scmp.eq.s32.totalorder %s15, 1
    %p70 = por %p68, %p69
    %p71 = scmp.ne.s32.totalorder %s62, %s63
    %p72 = scmp.eq.s32.totalorder %s15, 0
    %p73 = por %p71, %p72
    %p74 = scmp.ne.s32.totalorder %s62, %s63
    %p75 = scmp.eq.s32.totalorder %s16, 1
    %p76 = por %p74, %p75
    %p78 = scmp.ne.s32.totalorder %s63, %s77
    %p79 = scmp.eq.s32.totalorder %s16, 0
    %p80 = por %p78, %p79
    %s81 = ssub.s32 %s10, %s17
    %p82 = scmp.eq.s32.totalorder %s81, 0
    %s84 = sadd.s32 %s83, 1
    %s85 = scalar_select %p82, %s83, %s84
    %p88 = pneg %p82
    %p89 = scmp.eq.s32.totalorder %s10, 1
    %p90 = por %p88, %p89
    %p91 = scmp.ne.s32.totalorder %s83, %s86
    %p92 = scmp.eq.s32.totalorder %s10, 0
    %p93 = por %p91, %p92
    %p94 = scmp.ne.s32.totalorder %s83, %s86
    %p95 = scmp.eq.s32.totalorder %s15, 1
    %p96 = por %p94, %p95
    %p97 = scmp.ne.s32.totalorder %s86, %s87
    %p98 = scmp.eq.s32.totalorder %s15, 0
    %p99 = por %p97, %p98
    %p100 = scmp.ne.s32.totalorder %s86, %s87
    %p101 = scmp.eq.s32.totalorder %s16, 1
    %p102 = por %p100, %p101
    %p104 = scmp.ne.s32.totalorder %s87, %s103
    %p105 = scmp.eq.s32.totalorder %s16, 0
    %p106 = por %p104, %p105
    %s107 = ssub.s32 %s10, %s17
    %p108 = scmp.eq.s32.totalorder %s107, 0
    %s110 = sadd.s32 %s109, 1
    %s111 = scalar_select %p108, %s109, %s110
    %p114 = pneg %p108
    %p115 = scmp.eq.s32.totalorder %s10, 1
    %p116 = por %p114, %p115
    %p117 = scmp.ne.s32.totalorder %s109, %s112
    %p118 = scmp.eq.s32.totalorder %s10, 0
    %p119 = por %p117, %p118
    %p120 = scmp.ne.s32.totalorder %s109, %s112
    %p121 = scmp.eq.s32.totalorder %s15, 1
    %p122 = por %p120, %p121
    %p123 = scmp.ne.s32.totalorder %s112, %s113
    %p124 = scmp.eq.s32.totalorder %s15, 0
    %p125 = por %p123, %p124
    %p126 = scmp.ne.s32.totalorder %s112, %s113
    %p127 = scmp.eq.s32.totalorder %s16, 1
    %p128 = por %p126, %p127
    %p130 = scmp.ne.s32.totalorder %s113, %s129
    %p131 = scmp.eq.s32.totalorder %s16, 0
    %p132 = por %p130, %p131
    %p133 = scmp.le.s32.totalorder 1, %s10
    %p134 = scmp.lt.s32.totalorder %s10, 3
    %p135 = pnand %p133, %p134
    %p136 = pneg %p135
    // Predicated region
    $region9: #{bottleneck_forward.9} parent=5 // pred_check
      _
    $region10: #{bottleneck_forward.9} parent=5 // pred_check_branch
      %138 = sbr.rel (%p135) target = $region12
    $region11: #{bottleneck_forward.9} parent=5 // pred_region
      %s139 = ssub.s32 %s10, 1
      // Predicated region
      $region13: #{bottleneck_forward.9} parent=11 // pred_check
        %p140 = pneg %p31
      $region14: #{bottleneck_forward.9} parent=11 // pred_check_branch
        %142 = sbr.rel (%p140) target = $region16
      $region15: #{bottleneck_forward.9} parent=11 // pred_region
        _
      $region16: #{bottleneck_forward.9} parent=11 // pred_fallthru
        _
      // Predicated region
      $region17: #{bottleneck_forward.9} parent=11 // pred_check
        %p143 = pneg %p52
      $region18: #{bottleneck_forward.9} parent=11 // pred_check_branch
        %145 = sbr.rel (%p143) target = $region20
      $region19: #{bottleneck_forward.9} parent=11 // pred_region
        _
      $region20: #{bottleneck_forward.9} parent=11 // pred_fallthru
        _
      // Predicated region
      $region21: #{bottleneck_forward.9} parent=11 // pred_check
        %p146 = pneg %p73
      $region22: #{bottleneck_forward.9} parent=11 // pred_check_branch
        %148 = sbr.rel (%p146) target = $region24
      $region23: #{bottleneck_forward.9} parent=11 // pred_region
        _
      $region24: #{bottleneck_forward.9} parent=11 // pred_fallthru
        _
    $region12: #{bottleneck_forward.9} parent=5 // pred_fallthru
      _
    %p149 = scmp.lt.s32.totalorder %s10, 2
    // Predicated region
    $region25: #{bottleneck_forward.9} parent=5 // pred_check
      %p150 = pneg %p149
    $region26: #{bottleneck_forward.9} parent=5 // pred_check_branch
      %152 = sbr.rel (%p150) target = $region28
    $region27: #{bottleneck_forward.9} parent=5 // pred_region
      // Predicated region
      $region29: #{bottleneck_forward.9} parent=27 // pred_check
        %p153 = pneg %p93
      $region30: #{bottleneck_forward.9} parent=27 // pred_check_branch
        %155 = sbr.rel (%p153) target = $region32
      $region31: #{bottleneck_forward.9} parent=27 // pred_region
        %s156 = smul.u32 64, %s10
        %p157 = scmp.lt.s32.totalorder %s156, 127
        %s158 = scalar_select %p157, %s156, 127
        %s159 = smul.addr %s158, 8
        %s160 = scalar_lea.vmem %s3, %s159
        %s161 = smul.u32 64, %s10
      $region32: #{bottleneck_forward.9} parent=27 // pred_fallthru
        _
    $region28: #{bottleneck_forward.9} parent=5 // pred_fallthru
      _
    %p162 = scmp.le.s32.totalorder 1, %s10
    %p163 = scmp.lt.s32.totalorder %s10, 3
    %p164 = pnand %p162, %p163
    %p165 = pneg %p164
    // Predicated region
    $region33: #{bottleneck_forward.9} parent=5 // pred_check
      _
    $region34: #{bottleneck_forward.9} parent=5 // pred_check_branch
      %167 = sbr.rel (%p164) target = $region36
    $region35: #{bottleneck_forward.9} parent=5 // pred_region
      %s168 = ssub.s32 %s10, 1
      %p169 = pneg %p31
      %p170 = pneg %p28
      %p171 = pneg %p52
      %p172 = pneg %p49
      %p173 = pneg %p73
      %p174 = pneg %p70
      %s175 = smul.u32 64, %s15
      %p176 = scmp.lt.s32.totalorder %s175, 127
      %s177 = scalar_select %p176, %s175, 127
      %s178 = smul.addr %s177, 8
      %s179 = scalar_lea.vmem %s3, %s178
      %p180 = pneg %p99
      %p181 = pneg %p96
      %p182 = pneg %p125
      %p183 = pneg %p122
      %s184 = smul.u32 64, %s15
      %p185 = scmp.lt.s32.totalorder %s184, 127
      %s186 = scalar_select %p185, %s184, 127
      %s187 = smul.addr %s186, 8
      %s188 = scalar_lea.vmem %s4, %s187
      %s189 = smul.u32 64, %s15
      %p190 = scmp.lt.s32.totalorder %s189, 127
      %s191 = scalar_select %p190, %s189, 127
      %s192 = smul.addr %s191, 8
      %s193 = scalar_lea.vmem %s3, %s192
      %s194 = smul.u32 64, %s15
      %s195 = smul.u32 64, %s15
      %p196 = scmp.lt.s32.totalorder %s195, 127
      %s197 = scalar_select %p196, %s195, 127
      %s198 = smul.addr %s197, 8
      %s199 = scalar_lea.vmem %s4, %s198
      %s200 = smul.u32 64, %s15
      %v201 = vld [vmem:[%s0] sm:$0x3]
      %v202 = vld [vmem:[%s0 + $0x2] sm:$0x3]
      %v203 = vld [vmem:[%s0 + $0x4] sm:$0x3]
      %v204 = vld [vmem:[%s0 + $0x6] sm:$0x3]
      %vm205 = vcmask 1041408
      %v206 = vsel %vm205, %v201, 0.0
      %v207 = vsel %vm205, %v202, 0.0
      %v208 = vadd.f32 %v206, %v207
      %v209 = vsel %vm205, %v203, 0.0
      %v210 = vadd.f32 %v208, %v209
      %v211 = vsel %vm205, %v204, 0.0
      %v212 = vadd.f32 %v210, %v211
      %v213 = vmul.f32 %v212, 0.0009765625
      %v214 = vmul.f32 %v213, %v213
      %v216 = vrot.slane %v214, 7
      %v218 = vsub.f32 %v213, %v216
      %v219 = vadd.f32 %v218, 1e-05
      %v220 = vrsqrt.pop %v219
      %v221 = vmul.f32 %v220, %v219
      %v222 = vmul.f32 %v221, %v220
      %v223 = vmul.f32 0.5, %v222
      %v224 = vsub.f32 1.5, %v223
      %v225 = vmul.f32 %v220, %v224
      %vm226 = vweird.f32 %v219
      %vm227 = vweird.f32 %v220
      %vm228 = vmor %vm226, %vm227
      %v229 = vsel %vm228, %v220, %v225
      %v230 = vld [vmem:[%s193] sm:$0xff]
      %v231 = vld [vmem:[%s193 + $0x8] sm:$0xff]
      %v232 = vld [vmem:[%s193 + $0x10] sm:$0xff]
      %v233 = vld [vmem:[%s193 + $0x18] sm:$0xff]
      %v234 = vld [vmem:[%s193 + $0x20] sm:$0xff]
      %v235 = vld [vmem:[%s193 + $0x28] sm:$0xff]
      %v236 = vld [vmem:[%s193 + $0x30] sm:$0xff]
      %v237 = vld [vmem:[%s193 + $0x38] sm:$0xff]
      %v238 = vld [vmem:[%s193 + $0x40] sm:$0xff]
      %v239 = vld [vmem:[%s193 + $0x48] sm:$0xff]
      %v240 = vld [vmem:[%s193 + $0x50] sm:$0xff]
      %v241 = vld [vmem:[%s193 + $0x58] sm:$0xff]
      %v242 = vld [vmem:[%s193 + $0x60] sm:$0xff]
      %v243 = vld [vmem:[%s193 + $0x68] sm:$0xff]
      %v244 = vld [vmem:[%s193 + $0x70] sm:$0xff]
      %v245 = vld [vmem:[%s193 + $0x78] sm:$0xff]
      %v246 = vld [vmem:[%s193 + $0x80] sm:$0xff]
      %v247 = vld [vmem:[%s193 + $0x88] sm:$0xff]
      %v248 = vld [vmem:[%s193 + $0x90] sm:$0xff]
      %v249 = vld [vmem:[%s193 + $0x98] sm:$0xff]
      %v250 = vld [vmem:[%s193 + $0xa0] sm:$0xff]
      %v251 = vld [vmem:[%s193 + $0xa8] sm:$0xff]
      %v252 = vld [vmem:[%s193 + $0xb0] sm:$0xff]
      %v253 = vld [vmem:[%s193 + $0xb8] sm:$0xff]
      %v254 = vld [vmem:[%s193 + $0xc0] sm:$0xff]
      %v255 = vld [vmem:[%s193 + $0xc8] sm:$0xff]
      %v256 = vld [vmem:[%s193 + $0xd0] sm:$0xff]
      %v257 = vld [vmem:[%s193 + $0xd8] sm:$0xff]
      %v258 = vld [vmem:[%s193 + $0xe0] sm:$0xff]
      %v259 = vld [vmem:[%s193 + $0xe8] sm:$0xff]
      %v260 = vld [vmem:[%s193 + $0xf0] sm:$0xff]
      %v261 = vld [vmem:[%s193 + $0xf8] sm:$0xff]
      %v262 = vld [vmem:[%s193 + $0x100] sm:$0xff]
      %v263 = vld [vmem:[%s193 + $0x108] sm:$0xff]
      %v264 = vld [vmem:[%s193 + $0x110] sm:$0xff]
      %v265 = vld [vmem:[%s193 + $0x118] sm:$0xff]
      %v266 = vld [vmem:[%s193 + $0x120] sm:$0xff]
      %v267 = vld [vmem:[%s193 + $0x128] sm:$0xff]
      %v268 = vld [vmem:[%s193 + $0x130] sm:$0xff]
      %v269 = vld [vmem:[%s193 + $0x138] sm:$0xff]
      %v270 = vld [vmem:[%s193 + $0x140] sm:$0xff]
      %v271 = vld [vmem:[%s193 + $0x148] sm:$0xff]
      %v272 = vld [vmem:[%s193 + $0x150] sm:$0xff]
      %v273 = vld [vmem:[%s193 + $0x158] sm:$0xff]
      %v274 = vld [vmem:[%s193 + $0x160] sm:$0xff]
      %v275 = vld [vmem:[%s193 + $0x168] sm:$0xff]
      %v276 = vld [vmem:[%s193 + $0x170] sm:$0xff]
      %v277 = vld [vmem:[%s193 + $0x178] sm:$0xff]
      %v278 = vld [vmem:[%s193 + $0x180] sm:$0xff]
      %v279 = vld [vmem:[%s193 + $0x188] sm:$0xff]
      %v280 = vld [vmem:[%s193 + $0x190] sm:$0xff]
      %v281 = vld [vmem:[%s193 + $0x198] sm:$0xff]
      %v282 = vld [vmem:[%s193 + $0x1a0] sm:$0xff]
      %v283 = vld [vmem:[%s193 + $0x1a8] sm:$0xff]
      %v284 = vld [vmem:[%s193 + $0x1b0] sm:$0xff]
      %v285 = vld [vmem:[%s193 + $0x1b8] sm:$0xff]
      %v286 = vld [vmem:[%s193 + $0x1c0] sm:$0xff]
      %v287 = vld [vmem:[%s193 + $0x1c8] sm:$0xff]
      %v288 = vld [vmem:[%s193 + $0x1d0] sm:$0xff]
      %v289 = vld [vmem:[%s193 + $0x1d8] sm:$0xff]
      %v290 = vld [vmem:[%s193 + $0x1e0] sm:$0xff]
      %v291 = vld [vmem:[%s193 + $0x1e8] sm:$0xff]
      %v292 = vld [vmem:[%s193 + $0x1f0] sm:$0xff]
      %v293 = vld [vmem:[%s193 + $0x1f8] sm:$0xff]
      %v294 = vperm.slane %v213, 0
      %v295 = vsub.f32 %v230, %v294
      %v296 = vsub.f32 %v231, %v294
      %v297 = vsub.f32 %v232, %v294
      %v298 = vsub.f32 %v233, %v294
      %v299 = vsub.f32 %v234, %v294
      %v300 = vsub.f32 %v235, %v294
      %v301 = vsub.f32 %v236, %v294
      %v302 = vsub.f32 %v237, %v294
      %v303 = vsub.f32 %v238, %v294
      %v304 = vsub.f32 %v239, %v294
      %v305 = vsub.f32 %v240, %v294
      %v306 = vsub.f32 %v241, %v294
      %v307 = vsub.f32 %v242, %v294
      %v308 = vsub.f32 %v243, %v294
      %v309 = vsub.f32 %v244, %v294
      %v310 = vsub.f32 %v245, %v294
      %v311 = vsub.f32 %v246, %v294
      %v312 = vsub.f32 %v247, %v294
      %v313 = vsub.f32 %v248, %v294
      %v314 = vsub.f32 %v249, %v294
      %v315 = vsub.f32 %v250, %v294
      %v316 = vsub.f32 %v251, %v294
      %v317 = vsub.f32 %v252, %v294
      %v318 = vsub.f32 %v253, %v294
      %v319 = vsub.f32 %v254, %v294
      %v320 = vsub.f32 %v255, %v294
      %v321 = vsub.f32 %v256, %v294
      %v322 = vsub.f32 %v257, %v294
      %v323 = vsub.f32 %v258, %v294
      %v324 = vsub.f32 %v259, %v294
      %v325 = vsub.f32 %v260, %v294
      %v326 = vsub.f32 %v261, %v294
      %v327 = vsub.f32 %v262, %v294
      %v328 = vsub.f32 %v263, %v294
      %v329 = vsub.f32 %v264, %v294
      %v330 = vsub.f32 %v265, %v294
      %v331 = vsub.f32 %v266, %v294
      %v332 = vsub.f32 %v267, %v294
      %v333 = vsub.f32 %v268, %v294
      %v334 = vsub.f32 %v269, %v294
      %v335 = vsub.f32 %v270, %v294
      %v336 = vsub.f32 %v271, %v294
      %v337 = vsub.f32 %v272, %v294
      %v338 = vsub.f32 %v273, %v294
      %v339 = vsub.f32 %v274, %v294
      %v340 = vsub.f32 %v275, %v294
      %v341 = vsub.f32 %v276, %v294
      %v342 = vsub.f32 %v277, %v294
      %v343 = vsub.f32 %v278, %v294
      %v344 = vsub.f32 %v279, %v294
      %v345 = vsub.f32 %v280, %v294
      %v346 = vsub.f32 %v281, %v294
      %v347 = vsub.f32 %v282, %v294
      %v348 = vsub.f32 %v283, %v294
      %v349 = vsub.f32 %v284, %v294
      %v350 = vsub.f32 %v285, %v294
      %v351 = vsub.f32 %v286, %v294
      %v352 = vsub.f32 %v287, %v294
      %v353 = vsub.f32 %v288, %v294
      %v354 = vsub.f32 %v289, %v294
      %v355 = vsub.f32 %v290, %v294
      %v356 = vsub.f32 %v291, %v294
      %v357 = vsub.f32 %v292, %v294
      %v358 = vsub.f32 %v293, %v294
      %v359 = vld [vmem:[%s1] sm:$0x1]
      %v361 = vperm.slane %v359, 0
      %v363 = vmul.f32 %v229, %v361
      %v364 = vperm.slane %v363, 1
      %v365 = vmul.f32 %v295, %v364
      %v366 = vmul.f32 %v296, %v364
      %v367 = vmul.f32 %v297, %v364
      %v368 = vmul.f32 %v298, %v364
      %v369 = vmul.f32 %v299, %v364
      %v370 = vmul.f32 %v300, %v364
      %v371 = vmul.f32 %v301, %v364
      %v372 = vmul.f32 %v302, %v364
      %v373 = vmul.f32 %v303, %v364
      %v374 = vmul.f32 %v304, %v364
      %v375 = vmul.f32 %v305, %v364
      %v376 = vmul.f32 %v306, %v364
      %v377 = vmul.f32 %v307, %v364
      %v378 = vmul.f32 %v308, %v364
      %v379 = vmul.f32 %v309, %v364
      %v380 = vmul.f32 %v310, %v364
      %v381 = vmul.f32 %v311, %v364
      %v382 = vmul.f32 %v312, %v364
      %v383 = vmul.f32 %v313, %v364
      %v384 = vmul.f32 %v314, %v364
      %v385 = vmul.f32 %v315, %v364
      %v386 = vmul.f32 %v316, %v364
      %v387 = vmul.f32 %v317, %v364
      %v388 = vmul.f32 %v318, %v364
      %v389 = vmul.f32 %v319, %v364
      %v390 = vmul.f32 %v320, %v364
      %v391 = vmul.f32 %v321, %v364
      %v392 = vmul.f32 %v322, %v364
      %v393 = vmul.f32 %v323, %v364
      %v394 = vmul.f32 %v324, %v364
      %v395 = vmul.f32 %v325, %v364
      %v396 = vmul.f32 %v326, %v364
      %v397 = vmul.f32 %v327, %v364
      %v398 = vmul.f32 %v328, %v364
      %v399 = vmul.f32 %v329, %v364
      %v400 = vmul.f32 %v330, %v364
      %v401 = vmul.f32 %v331, %v364
      %v402 = vmul.f32 %v332, %v364
      %v403 = vmul.f32 %v333, %v364
      %v404 = vmul.f32 %v334, %v364
      %v405 = vmul.f32 %v335, %v364
      %v406 = vmul.f32 %v336, %v364
      %v407 = vmul.f32 %v337, %v364
      %v408 = vmul.f32 %v338, %v364
      %v409 = vmul.f32 %v339, %v364
      %v410 = vmul.f32 %v340, %v364
      %v411 = vmul.f32 %v341, %v364
      %v412 = vmul.f32 %v342, %v364
      %v413 = vmul.f32 %v343, %v364
      %v414 = vmul.f32 %v344, %v364
      %v415 = vmul.f32 %v345, %v364
      %v416 = vmul.f32 %v346, %v364
      %v417 = vmul.f32 %v347, %v364
      %v418 = vmul.f32 %v348, %v364
      %v419 = vmul.f32 %v349, %v364
      %v420 = vmul.f32 %v350, %v364
      %v421 = vmul.f32 %v351, %v364
      %v422 = vmul.f32 %v352, %v364
      %v423 = vmul.f32 %v353, %v364
      %v424 = vmul.f32 %v354, %v364
      %v425 = vmul.f32 %v355, %v364
      %v426 = vmul.f32 %v356, %v364
      %v427 = vmul.f32 %v357, %v364
      %v428 = vmul.f32 %v358, %v364
      %v429 = vld [vmem:[%s2] sm:$0x1]
      %v431 = vperm.slane %v429, 0
      %v433 = vadd.f32 %v365, %v431
      %v434 = vadd.f32 %v366, %v431
      %v435 = vadd.f32 %v367, %v431
      %v436 = vadd.f32 %v368, %v431
      %v437 = vadd.f32 %v369, %v431
      %v438 = vadd.f32 %v370, %v431
      %v439 = vadd.f32 %v371, %v431
      %v440 = vadd.f32 %v372, %v431
      %v441 = vadd.f32 %v373, %v431
      %v442 = vadd.f32 %v374, %v431
      %v443 = vadd.f32 %v375, %v431
      %v444 = vadd.f32 %v376, %v431
      %v445 = vadd.f32 %v377, %v431
      %v446 = vadd.f32 %v378, %v431
      %v447 = vadd.f32 %v379, %v431
      %v448 = vadd.f32 %v380, %v431
      %v449 = vadd.f32 %v381, %v431
      %v450 = vadd.f32 %v382, %v431
      %v451 = vadd.f32 %v383, %v431
      %v452 = vadd.f32 %v384, %v431
      %v453 = vadd.f32 %v385, %v431
      %v454 = vadd.f32 %v386, %v431
      %v455 = vadd.f32 %v387, %v431
      %v456 = vadd.f32 %v388, %v431
      %v457 = vadd.f32 %v389, %v431
      %v458 = vadd.f32 %v390, %v431
      %v459 = vadd.f32 %v391, %v431
      %v460 = vadd.f32 %v392, %v431
      %v461 = vadd.f32 %v393, %v431
      %v462 = vadd.f32 %v394, %v431
      %v463 = vadd.f32 %v395, %v431
      %v464 = vadd.f32 %v396, %v431
      %v465 = vadd.f32 %v397, %v431
      %v466 = vadd.f32 %v398, %v431
      %v467 = vadd.f32 %v399, %v431
      %v468 = vadd.f32 %v400, %v431
      %v469 = vadd.f32 %v401, %v431
      %v470 = vadd.f32 %v402, %v431
      %v471 = vadd.f32 %v403, %v431
      %v472 = vadd.f32 %v404, %v431
      %v473 = vadd.f32 %v405, %v431
      %v474 = vadd.f32 %v406, %v431
      %v475 = vadd.f32 %v407, %v431
      %v476 = vadd.f32 %v408, %v431
      %v477 = vadd.f32 %v409, %v431
      %v478 = vadd.f32 %v410, %v431
      %v479 = vadd.f32 %v411, %v431
      %v480 = vadd.f32 %v412, %v431
      %v481 = vadd.f32 %v413, %v431
      %v482 = vadd.f32 %v414, %v431
      %v483 = vadd.f32 %v415, %v431
      %v484 = vadd.f32 %v416, %v431
      %v485 = vadd.f32 %v417, %v431
      %v486 = vadd.f32 %v418, %v431
      %v487 = vadd.f32 %v419, %v431
      %v488 = vadd.f32 %v420, %v431
      %v489 = vadd.f32 %v421, %v431
      %v490 = vadd.f32 %v422, %v431
      %v491 = vadd.f32 %v423, %v431
      %v492 = vadd.f32 %v424, %v431
      %v493 = vadd.f32 %v425, %v431
      %v494 = vadd.f32 %v426, %v431
      %v495 = vadd.f32 %v427, %v431
      %v496 = vadd.f32 %v428, %v431
      %v497 = vmax.f32 %v433, 0.0
      %v498 = vmax.f32 %v434, 0.0
      %v499 = vmax.f32 %v435, 0.0
      %v500 = vmax.f32 %v436, 0.0
      %v501 = vmax.f32 %v437, 0.0
      %v502 = vmax.f32 %v438, 0.0
      %v503 = vmax.f32 %v439, 0.0
      %v504 = vmax.f32 %v440, 0.0
      %v505 = vmax.f32 %v441, 0.0
      %v506 = vmax.f32 %v442, 0.0
      %v507 = vmax.f32 %v443, 0.0
      %v508 = vmax.f32 %v444, 0.0
      %v509 = vmax.f32 %v445, 0.0
      %v510 = vmax.f32 %v446, 0.0
      %v511 = vmax.f32 %v447, 0.0
      %v512 = vmax.f32 %v448, 0.0
      %v513 = vmax.f32 %v449, 0.0
      %v514 = vmax.f32 %v450, 0.0
      %v515 = vmax.f32 %v451, 0.0
      %v516 = vmax.f32 %v452, 0.0
      %v517 = vmax.f32 %v453, 0.0
      %v518 = vmax.f32 %v454, 0.0
      %v519 = vmax.f32 %v455, 0.0
      %v520 = vmax.f32 %v456, 0.0
      %v521 = vmax.f32 %v457, 0.0
      %v522 = vmax.f32 %v458, 0.0
      %v523 = vmax.f32 %v459, 0.0
      %v524 = vmax.f32 %v460, 0.0
      %v525 = vmax.f32 %v461, 0.0
      %v526 = vmax.f32 %v462, 0.0
      %v527 = vmax.f32 %v463, 0.0
      %v528 = vmax.f32 %v464, 0.0
      %v529 = vmax.f32 %v465, 0.0
      %v530 = vmax.f32 %v466, 0.0
      %v531 = vmax.f32 %v467, 0.0
      %v532 = vmax.f32 %v468, 0.0
      %v533 = vmax.f32 %v469, 0.0
      %v534 = vmax.f32 %v470, 0.0
      %v535 = vmax.f32 %v471, 0.0
      %v536 = vmax.f32 %v472, 0.0
      %v537 = vmax.f32 %v473, 0.0
      %v538 = vmax.f32 %v474, 0.0
      %v539 = vmax.f32 %v475, 0.0
      %v540 = vmax.f32 %v476, 0.0
      %v541 = vmax.f32 %v477, 0.0
      %v542 = vmax.f32 %v478, 0.0
      %v543 = vmax.f32 %v479, 0.0
      %v544 = vmax.f32 %v480, 0.0
      %v545 = vmax.f32 %v481, 0.0
      %v546 = vmax.f32 %v482, 0.0
      %v547 = vmax.f32 %v483, 0.0
      %v548 = vmax.f32 %v484, 0.0
      %v549 = vmax.f32 %v485, 0.0
      %v550 = vmax.f32 %v486, 0.0
      %v551 = vmax.f32 %v487, 0.0
      %v552 = vmax.f32 %v488, 0.0
      %v553 = vmax.f32 %v489, 0.0
      %v554 = vmax.f32 %v490, 0.0
      %v555 = vmax.f32 %v491, 0.0
      %v556 = vmax.f32 %v492, 0.0
      %v557 = vmax.f32 %v493, 0.0
      %v558 = vmax.f32 %v494, 0.0
      %v559 = vmax.f32 %v495, 0.0
      %v560 = vmax.f32 %v496, 0.0
      %561 = vst [vmem:[%s199] sm:$0xff] %v497
      %562 = vst [vmem:[%s199 + $0x8] sm:$0xff] %v498
      %563 = vst [vmem:[%s199 + $0x10] sm:$0xff] %v499
      %564 = vst [vmem:[%s199 + $0x18] sm:$0xff] %v500
      %565 = vst [vmem:[%s199 + $0x20] sm:$0xff] %v501
      %566 = vst [vmem:[%s199 + $0x28] sm:$0xff] %v502
      %567 = vst [vmem:[%s199 + $0x30] sm:$0xff] %v503
      %568 = vst [vmem:[%s199 + $0x38] sm:$0xff] %v504
      %569 = vst [vmem:[%s199 + $0x40] sm:$0xff] %v505
      %570 = vst [vmem:[%s199 + $0x48] sm:$0xff] %v506
      %571 = vst [vmem:[%s199 + $0x50] sm:$0xff] %v507
      %572 = vst [vmem:[%s199 + $0x58] sm:$0xff] %v508
      %573 = vst [vmem:[%s199 + $0x60] sm:$0xff] %v509
      %574 = vst [vmem:[%s199 + $0x68] sm:$0xff] %v510
      %575 = vst [vmem:[%s199 + $0x70] sm:$0xff] %v511
      %576 = vst [vmem:[%s199 + $0x78] sm:$0xff] %v512
      %577 = vst [vmem:[%s199 + $0x80] sm:$0xff] %v513
      %578 = vst [vmem:[%s199 + $0x88] sm:$0xff] %v514
      %579 = vst [vmem:[%s199 + $0x90] sm:$0xff] %v515
      %580 = vst [vmem:[%s199 + $0x98] sm:$0xff] %v516
      %581 = vst [vmem:[%s199 + $0xa0] sm:$0xff] %v517
      %582 = vst [vmem:[%s199 + $0xa8] sm:$0xff] %v518
      %583 = vst [vmem:[%s199 + $0xb0] sm:$0xff] %v519
      %584 = vst [vmem:[%s199 + $0xb8] sm:$0xff] %v520
      %585 = vst [vmem:[%s199 + $0xc0] sm:$0xff] %v521
      %586 = vst [vmem:[%s199 + $0xc8] sm:$0xff] %v522
      %587 = vst [vmem:[%s199 + $0xd0] sm:$0xff] %v523
      %588 = vst [vmem:[%s199 + $0xd8] sm:$0xff] %v524
      %589 = vst [vmem:[%s199 + $0xe0] sm:$0xff] %v525
      %590 = vst [vmem:[%s199 + $0xe8] sm:$0xff] %v526
      %591 = vst [vmem:[%s199 + $0xf0] sm:$0xff] %v527
      %592 = vst [vmem:[%s199 + $0xf8] sm:$0xff] %v528
      %593 = vst [vmem:[%s199 + $0x100] sm:$0xff] %v529
      %594 = vst [vmem:[%s199 + $0x108] sm:$0xff] %v530
      %595 = vst [vmem:[%s199 + $0x110] sm:$0xff] %v531
      %596 = vst [vmem:[%s199 + $0x118] sm:$0xff] %v532
      %597 = vst [vmem:[%s199 + $0x120] sm:$0xff] %v533
      %598 = vst [vmem:[%s199 + $0x128] sm:$0xff] %v534
      %599 = vst [vmem:[%s199 + $0x130] sm:$0xff] %v535
      %600 = vst [vmem:[%s199 + $0x138] sm:$0xff] %v536
      %601 = vst [vmem:[%s199 + $0x140] sm:$0xff] %v537
      %602 = vst [vmem:[%s199 + $0x148] sm:$0xff] %v538
      %603 = vst [vmem:[%s199 + $0x150] sm:$0xff] %v539
      %604 = vst [vmem:[%s199 + $0x158] sm:$0xff] %v540
      %605 = vst [vmem:[%s199 + $0x160] sm:$0xff] %v541
      %606 = vst [vmem:[%s199 + $0x168] sm:$0xff] %v542
      %607 = vst [vmem:[%s199 + $0x170] sm:$0xff] %v543
      %608 = vst [vmem:[%s199 + $0x178] sm:$0xff] %v544
      %609 = vst [vmem:[%s199 + $0x180] sm:$0xff] %v545
      %610 = vst [vmem:[%s199 + $0x188] sm:$0xff] %v546
      %611 = vst [vmem:[%s199 + $0x190] sm:$0xff] %v547
      %612 = vst [vmem:[%s199 + $0x198] sm:$0xff] %v548
      %613 = vst [vmem:[%s199 + $0x1a0] sm:$0xff] %v549
      %614 = vst [vmem:[%s199 + $0x1a8] sm:$0xff] %v550
      %615 = vst [vmem:[%s199 + $0x1b0] sm:$0xff] %v551
      %616 = vst [vmem:[%s199 + $0x1b8] sm:$0xff] %v552
      %617 = vst [vmem:[%s199 + $0x1c0] sm:$0xff] %v553
      %618 = vst [vmem:[%s199 + $0x1c8] sm:$0xff] %v554
      %619 = vst [vmem:[%s199 + $0x1d0] sm:$0xff] %v555
      %620 = vst [vmem:[%s199 + $0x1d8] sm:$0xff] %v556
      %621 = vst [vmem:[%s199 + $0x1e0] sm:$0xff] %v557
      %622 = vst [vmem:[%s199 + $0x1e8] sm:$0xff] %v558
      %623 = vst [vmem:[%s199 + $0x1f0] sm:$0xff] %v559
      %624 = vst [vmem:[%s199 + $0x1f8] sm:$0xff] %v560
      %s625 = smul.u32 64, %s15
      %p626 = scmp.lt.s32.totalorder %s625, 127
      %s627 = scalar_select %p626, %s625, 127
      %s628 = smul.addr %s627, 8
      %s629 = scalar_lea.vmem %s4, %s628
      // Predicated region
      $region37: #{bottleneck_forward.9} parent=35 // pred_check
        %p630 = pneg %p122
      $region38: #{bottleneck_forward.9} parent=35 // pred_check_branch
        %632 = sbr.rel (%p630) target = $region40
      $region39: #{bottleneck_forward.9} parent=35 // pred_region
        %s633 = smul.u32 64, %s15
      $region40: #{bottleneck_forward.9} parent=35 // pred_fallthru
        _
    $region36: #{bottleneck_forward.9} parent=5 // pred_fallthru
      _
    %p634 = scmp.le.s32.totalorder 2, %s10
    // Predicated region
    $region41: #{bottleneck_forward.9} parent=5 // pred_check
      %p635 = pneg %p634
    $region42: #{bottleneck_forward.9} parent=5 // pred_check_branch
      %637 = sbr.rel (%p635) target = $region44
    $region43: #{bottleneck_forward.9} parent=5 // pred_region
      %s638 = ssub.s32 %s10, 2
      // Predicated region
      $region45: #{bottleneck_forward.9} parent=43 // pred_check
        %p639 = pneg %p128
      $region46: #{bottleneck_forward.9} parent=43 // pred_check_branch
        %641 = sbr.rel (%p639) target = $region48
      $region47: #{bottleneck_forward.9} parent=43 // pred_region
        %s642 = smul.u32 64, %s16
        %p643 = scmp.lt.s32.totalorder %s642, 127
        %s644 = scalar_select %p643, %s642, 127
        %s645 = smul.addr %s644, 8
        %s646 = scalar_lea.vmem %s4, %s645
      $region48: #{bottleneck_forward.9} parent=43 // pred_fallthru
        _
    $region44: #{bottleneck_forward.9} parent=5 // pred_fallthru
      _
  $region6: #{bottleneck_forward.9} parent=0 // loop_footer
    %s14 = sadd.s32 1, %s10
  $region7: #{bottleneck_forward.9} parent=0 // loop_footer_branch
    %9 = sbr.rel target = $region3
  $region8: #{bottleneck_forward.9} parent=0 // loop_exit
    _

// kernel: bottleneck_forward.11
$region0: #{bottleneck_forward.11}
  #allocation0 [shape = 'u32[]', space=smem, size = 0x4, offset = 0x4, fixed_abs, tag = 'smem constant byte address 0x4 - core index']
  #allocation1 [shape = 'u32[72,128]{1,0:T(1,128)}', space=vmem, size = 0x9000, scoped, tag = 'internal scratch']
  %s0 = inlined_call_operand.vmem [shape: f32[2,2,128], index: 0, kind: input, shape index: {}]
  %s1 = inlined_call_operand.vmem [shape: f32[1,128], index: 1, kind: input, shape index: {}]
  %s2 = inlined_call_operand.vmem [shape: f32[1,128], index: 2, kind: input, shape index: {}]
  %s3 = inlined_call_operand.vmem [shape: f32[1024,128], index: 3, kind: input, shape index: {}]
  %s4 = inlined_call_operand.vmem [shape: f32[1024,128], index: 4, kind: input, shape index: {}]
  %s5 = inlined_call_operand.hbm [shape: f32[1024,128], index: 5, kind: output, shape index: {}]
  %s6 = sld [smem:[#allocation0]]
  $region53: #{bottleneck_forward.11} parent=0
    _
  %s8 = ssub.s32 1, %s6
  %s9 = scalar_select 0, %s8, %s6
  $region1: #{bottleneck_forward.11} parent=0
    #allocation2 [shape = 'u8[524288]{0}', space=vmem, size = 0x80000, scoped, tag = 'output window, operand 0']
    #allocation3 [shape = 's32[2]{0}', space=sflag, size = 0x8, scoped, tag = 'scoped memory for bottleneck_forward.11']
    %10 = vsyncpa [#allocation3], 0
    %s11 = scalar_lea.sflag [#allocation3], 1
    %12 = vsyncpa %s11, 0
    loop: start=0, step=1, limit=4
    $region2: #{bottleneck_forward.11} parent=1 // loop_pre_header
      _
    $region3: #{bottleneck_forward.11} parent=1 // loop_header
      %s14 = sphi 0, %s18
      %p15 = scmp.ge.s32.totalorder %s14, 4
      %s22 = sphi 0, %s22
      %s24 = sphi 0, %s22
      %s25 = sphi 0, %s24
      %s39 = sphi 0, %s25
      %s43 = sphi 0, %s43
      %s45 = sphi 0, %s43
      %s46 = sphi 0, %s45
      %s60 = sphi 0, %s46
      %s64 = sphi 0, %s64
      %s66 = sphi 0, %s64
      %s67 = sphi 0, %s66
      %s81 = sphi 0, %s67
      %s87 = sphi 0, %s89
      %s90 = sphi 0, %s87
      %s91 = sphi 0, %s90
      %s107 = sphi 0, %s91
      %s113 = sphi 0, %s115
      %s116 = sphi 0, %s113
      %s117 = sphi 0, %s116
      %s133 = sphi 0, %s117
      %s139 = sphi 0, %s141
      %s142 = sphi 0, %s139
      %s143 = sphi 0, %s142
      %s159 = sphi 0, %s143
    $region4: #{bottleneck_forward.11} parent=1 // loop_header_branch
      %17 = sbr.rel (%p15) target = $region8
    $region5: #{bottleneck_forward.11} parent=1 // loop_body
      %s19 = ssub.s32 %s14, 1
      %s20 = ssub.s32 %s14, 2
      %s21 = sadd.s32 %s14, 1
      %s23 = sadd.s32 %s22, 1
      %p26 = scmp.eq.s32.totalorder %s14, 1
      %p27 = scmp.ne.s32.totalorder %s22, %s24
      %p28 = scmp.eq.s32.totalorder %s14, 0
      %p29 = por %p27, %p28
      %p30 = scmp.ne.s32.totalorder %s22, %s24
      %p31 = scmp.eq.s32.totalorder %s19, 1
      %p32 = por %p30, %p31
      %p33 = scmp.ne.s32.totalorder %s24, %s25
      %p34 = scmp.eq.s32.totalorder %s19, 0
      %p35 = por %p33, %p34
      %p36 = scmp.ne.s32.totalorder %s24, %s25
      %p37 = scmp.eq.s32.totalorder %s20, 1
      %p38 = por %p36, %p37
      %p40 = scmp.ne.s32.totalorder %s25, %s39
      %p41 = scmp.eq.s32.totalorder %s20, 0
      %p42 = por %p40, %p41
      %s44 = sadd.s32 %s43, 1
      %p47 = scmp.eq.s32.totalorder %s14, 1
      %p48 = scmp.ne.s32.totalorder %s43, %s45
      %p49 = scmp.eq.s32.totalorder %s14, 0
      %p50 = por %p48, %p49
      %p51 = scmp.ne.s32.totalorder %s43, %s45
      %p52 = scmp.eq.s32.totalorder %s19, 1
      %p53 = por %p51, %p52
      %p54 = scmp.ne.s32.totalorder %s45, %s46
      %p55 = scmp.eq.s32.totalorder %s19, 0
      %p56 = por %p54, %p55
      %p57 = scmp.ne.s32.totalorder %s45, %s46
      %p58 = scmp.eq.s32.totalorder %s20, 1
      %p59 = por %p57, %p58
      %p61 = scmp.ne.s32.totalorder %s46, %s60
      %p62 = scmp.eq.s32.totalorder %s20, 0
      %p63 = por %p61, %p62
      %s65 = sadd.s32 %s64, 1
      %p68 = scmp.eq.s32.totalorder %s14, 1
      %p69 = scmp.ne.s32.totalorder %s64, %s66
      %p70 = scmp.eq.s32.totalorder %s14, 0
      %p71 = por %p69, %p70
      %p72 = scmp.ne.s32.totalorder %s64, %s66
      %p73 = scmp.eq.s32.totalorder %s19, 1
      %p74 = por %p72, %p73
      %p75 = scmp.ne.s32.totalorder %s66, %s67
      %p76 = scmp.eq.s32.totalorder %s19, 0
      %p77 = por %p75, %p76
      %p78 = scmp.ne.s32.totalorder %s66, %s67
      %p79 = scmp.eq.s32.totalorder %s20, 1
      %p80 = por %p78, %p79
      %p82 = scmp.ne.s32.totalorder %s67, %s81
      %p83 = scmp.eq.s32.totalorder %s20, 0
      %p84 = por %p82, %p83
      %s85 = ssub.s32 %s14, %s21
      %p86 = scmp.eq.s32.totalorder %s85, 0
      %s88 = sadd.s32 %s87, 1
      %s89 = scalar_select %p86, %s87, %s88
      %p92 = pneg %p86
      %p93 = scmp.eq.s32.totalorder %s14, 1
      %p94 = por %p92, %p93
      %p95 = scmp.ne.s32.totalorder %s87, %s90
      %p96 = scmp.eq.s32.totalorder %s14, 0
      %p97 = por %p95, %p96
      %p98 = scmp.ne.s32.totalorder %s87, %s90
      %p99 = scmp.eq.s32.totalorder %s19, 1
      %p100 = por %p98, %p99
      %p101 = scmp.ne.s32.totalorder %s90, %s91
      %p102 = scmp.eq.s32.totalorder %s19, 0
      %p103 = por %p101, %p102
      %p104 = scmp.ne.s32.totalorder %s90, %s91
      %p105 = scmp.eq.s32.totalorder %s20, 1
      %p106 = por %p104, %p105
      %p108 = scmp.ne.s32.totalorder %s91, %s107
      %p109 = scmp.eq.s32.totalorder %s20, 0
      %p110 = por %p108, %p109
      %s111 = ssub.s32 %s14, %s21
      %p112 = scmp.eq.s32.totalorder %s111, 0
      %s114 = sadd.s32 %s113, 1
      %s115 = scalar_select %p112, %s113, %s114
      %p118 = pneg %p112
      %p119 = scmp.eq.s32.totalorder %s14, 1
      %p120 = por %p118, %p119
      %p121 = scmp.ne.s32.totalorder %s113, %s116
      %p122 = scmp.eq.s32.totalorder %s14, 0
      %p123 = por %p121, %p122
      %p124 = scmp.ne.s32.totalorder %s113, %s116
      %p125 = scmp.eq.s32.totalorder %s19, 1
      %p126 = por %p124, %p125
      %p127 = scmp.ne.s32.totalorder %s116, %s117
      %p128 = scmp.eq.s32.totalorder %s19, 0
      %p129 = por %p127, %p128
      %p130 = scmp.ne.s32.totalorder %s116, %s117
      %p131 = scmp.eq.s32.totalorder %s20, 1
      %p132 = por %p130, %p131
      %p134 = scmp.ne.s32.totalorder %s117, %s133
      %p135 = scmp.eq.s32.totalorder %s20, 0
      %p136 = por %p134, %p135
      %s137 = ssub.s32 %s14, %s21
      %p138 = scmp.eq.s32.totalorder %s137, 0
      %s140 = sadd.s32 %s139, 1
      %s141 = scalar_select %p138, %s139, %s140
      %p144 = pneg %p138
      %p145 = scmp.eq.s32.totalorder %s14, 1
      %p146 = por %p144, %p145
      %p147 = scmp.ne.s32.totalorder %s139, %s142
      %p148 = scmp.eq.s32.totalorder %s14, 0
      %p149 = por %p147, %p148
      %p150 = scmp.ne.s32.totalorder %s139, %s142
      %p151 = scmp.eq.s32.totalorder %s19, 1
      %p152 = por %p150, %p151
      %p153 = scmp.ne.s32.totalorder %s142, %s143
      %p154 = scmp.eq.s32.totalorder %s19, 0
      %p155 = por %p153, %p154
      %p156 = scmp.ne.s32.totalorder %s142, %s143
      %p157 = scmp.eq.s32.totalorder %s20, 1
      %p158 = por %p156, %p157
      %p160 = scmp.ne.s32.totalorder %s143, %s159
      %p161 = scmp.eq.s32.totalorder %s20, 0
      %p162 = por %p160, %p161
      %p163 = scmp.le.s32.totalorder 1, %s14
      %p164 = scmp.lt.s32.totalorder %s14, 3
      %p165 = pnand %p163, %p164
      %p166 = pneg %p165
      // Predicated region
      $region9: #{bottleneck_forward.11} parent=5 // pred_check
        _
      $region10: #{bottleneck_forward.11} parent=5 // pred_check_branch
        %168 = sbr.rel (%p165) target = $region12
      $region11: #{bottleneck_forward.11} parent=5 // pred_region
        %s169 = ssub.s32 %s14, 1
        // Predicated region
        $region13: #{bottleneck_forward.11} parent=11 // pred_check
          %p170 = pneg %p35
        $region14: #{bottleneck_forward.11} parent=11 // pred_check_branch
          %172 = sbr.rel (%p170) target = $region16
        $region15: #{bottleneck_forward.11} parent=11 // pred_region
          _
        $region16: #{bottleneck_forward.11} parent=11 // pred_fallthru
          _
        // Predicated region
        $region17: #{bottleneck_forward.11} parent=11 // pred_check
          %p173 = pneg %p56
        $region18: #{bottleneck_forward.11} parent=11 // pred_check_branch
          %175 = sbr.rel (%p173) target = $region20
        $region19: #{bottleneck_forward.11} parent=11 // pred_region
          _
        $region20: #{bottleneck_forward.11} parent=11 // pred_fallthru
          _
        // Predicated region
        $region21: #{bottleneck_forward.11} parent=11 // pred_check
          %p176 = pneg %p77
        $region22: #{bottleneck_forward.11} parent=11 // pred_check_branch
          %178 = sbr.rel (%p176) target = $region24
        $region23: #{bottleneck_forward.11} parent=11 // pred_region
          _
        $region24: #{bottleneck_forward.11} parent=11 // pred_fallthru
          _
      $region12: #{bottleneck_forward.11} parent=5 // pred_fallthru
        _
      %p179 = scmp.lt.s32.totalorder %s14, 2
      // Predicated region
      $region25: #{bottleneck_forward.11} parent=5 // pred_check
        %p180 = pneg %p179
      $region26: #{bottleneck_forward.11} parent=5 // pred_check_branch
        %182 = sbr.rel (%p180) target = $region28
      $region27: #{bottleneck_forward.11} parent=5 // pred_region
        // Predicated region
        $region29: #{bottleneck_forward.11} parent=27 // pred_check
          %p183 = pneg %p97
        $region30: #{bottleneck_forward.11} parent=27 // pred_check_branch
          %185 = sbr.rel (%p183) target = $region32
        $region31: #{bottleneck_forward.11} parent=27 // pred_region
          %s186 = smul.u32 64, %s14
          %p187 = scmp.lt.s32.totalorder %s186, 127
          %s188 = scalar_select %p187, %s186, 127
          %s189 = smul.addr %s188, 8
          %s190 = scalar_lea.vmem %s3, %s189
          %s191 = smul.u32 64, %s14
        $region32: #{bottleneck_forward.11} parent=27 // pred_fallthru
          _
        // Predicated region
        $region33: #{bottleneck_forward.11} parent=27 // pred_check
          %p192 = pneg %p123
        $region34: #{bottleneck_forward.11} parent=27 // pred_check_branch
          %194 = sbr.rel (%p192) target = $region36
        $region35: #{bottleneck_forward.11} parent=27 // pred_region
          %s195 = smul.u32 64, %s14
          %p196 = scmp.lt.s32.totalorder %s195, 127
          %s197 = scalar_select %p196, %s195, 127
          %s198 = smul.addr %s197, 8
          %s199 = scalar_lea.vmem %s4, %s198
          %s200 = smul.u32 64, %s14
        $region36: #{bottleneck_forward.11} parent=27 // pred_fallthru
          _
      $region28: #{bottleneck_forward.11} parent=5 // pred_fallthru
        _
      %p201 = scmp.le.s32.totalorder 1, %s14
      %p202 = scmp.lt.s32.totalorder %s14, 3
      %p203 = pnand %p201, %p202
      %p204 = pneg %p203
      // Predicated region
      $region37: #{bottleneck_forward.11} parent=5 // pred_check
        _
      $region38: #{bottleneck_forward.11} parent=5 // pred_check_branch
        %206 = sbr.rel (%p203) target = $region40
      $region39: #{bottleneck_forward.11} parent=5 // pred_region
        %s207 = ssub.s32 %s14, 1
        %p208 = pneg %p35
        %p209 = pneg %p32
        %p210 = pneg %p56
        %p211 = pneg %p53
        %p212 = pneg %p77
        %p213 = pneg %p74
        %s214 = smul.u32 64, %s19
        %p215 = scmp.lt.s32.totalorder %s214, 127
        %s216 = scalar_select %p215, %s214, 127
        %s217 = smul.addr %s216, 8
        %s218 = scalar_lea.vmem %s3, %s217
        %p219 = pneg %p103
        %p220 = pneg %p100
        %s221 = smul.u32 64, %s19
        %p222 = scmp.lt.s32.totalorder %s221, 127
        %s223 = scalar_select %p222, %s221, 127
        %s224 = smul.addr %s223, 8
        %s225 = scalar_lea.vmem %s4, %s224
        %p226 = pneg %p129
        %p227 = pneg %p126
        %p228 = pneg %p155
        %p229 = pneg %p152
        %s230 = sand.u32 %s142, 1
        %s231 = scalar_lea.sflag [#allocation3], %s230
        %s232 = sand.u32 %s142, 1
        %s233 = smul.addr %s232, 512
        %s234 = scalar_lea.vmem [#allocation2], %s233
        %s235 = smul.u32 64, %s19
        %p236 = scmp.lt.s32.totalorder %s235, 127
        %s237 = scalar_select %p236, %s235, 127
        %s238 = smul.addr %s237, 8
        %s239 = scalar_lea.vmem %s3, %s238
        %s240 = smul.u32 64, %s19
        %s241 = smul.u32 64, %s19
        %p242 = scmp.lt.s32.totalorder %s241, 127
        %s243 = scalar_select %p242, %s241, 127
        %s244 = smul.addr %s243, 8
        %s245 = scalar_lea.vmem %s4, %s244
        %s246 = smul.u32 64, %s19
        %s247 = smul.u32 64, %s19
        %v248 = vld [vmem:[%s0] sm:$0x3]
        %v249 = vld [vmem:[%s0 + $0x2] sm:$0x3]
        %vm250 = vcmask 1041408
        %v251 = vsel %vm250, %v248, 0.0
        %v252 = vsel %vm250, %v249, 0.0
        %v253 = vadd.f32 %v251, %v252
        %v254 = vmul.f32 %v253, 0.0009765625
        %v255 = vmul.f32 %v254, %v254
        %v257 = vrot.slane %v255, 7
        %v259 = vsub.f32 %v254, %v257
        %v260 = vadd.f32 %v259, 1e-05
        %v261 = vrsqrt.pop %v260
        %v262 = vmul.f32 %v261, %v260
        %v263 = vmul.f32 %v262, %v261
        %v264 = vmul.f32 0.5, %v263
        %v265 = vsub.f32 1.5, %v264
        %v266 = vmul.f32 %v261, %v265
        %vm267 = vweird.f32 %v260
        %vm268 = vweird.f32 %v261
        %vm269 = vmor %vm267, %vm268
        %v270 = vsel %vm269, %v261, %v266
        %v271 = vld [vmem:[%s239] sm:$0xff]
        %v272 = vld [vmem:[%s239 + $0x8] sm:$0xff]
        %v273 = vld [vmem:[%s239 + $0x10] sm:$0xff]
        %v274 = vld [vmem:[%s239 + $0x18] sm:$0xff]
        %v275 = vld [vmem:[%s239 + $0x20] sm:$0xff]
        %v276 = vld [vmem:[%s239 + $0x28] sm:$0xff]
        %v277 = vld [vmem:[%s239 + $0x30] sm:$0xff]
        %v278 = vld [vmem:[%s239 + $0x38] sm:$0xff]
        %v279 = vld [vmem:[%s239 + $0x40] sm:$0xff]
        %v280 = vld [vmem:[%s239 + $0x48] sm:$0xff]
        %v281 = vld [vmem:[%s239 + $0x50] sm:$0xff]
        %v282 = vld [vmem:[%s239 + $0x58] sm:$0xff]
        %v283 = vld [vmem:[%s239 + $0x60] sm:$0xff]
        %v284 = vld [vmem:[%s239 + $0x68] sm:$0xff]
        %v285 = vld [vmem:[%s239 + $0x70] sm:$0xff]
        %v286 = vld [vmem:[%s239 + $0x78] sm:$0xff]
        %v287 = vld [vmem:[%s239 + $0x80] sm:$0xff]
        %v288 = vld [vmem:[%s239 + $0x88] sm:$0xff]
        %v289 = vld [vmem:[%s239 + $0x90] sm:$0xff]
        %v290 = vld [vmem:[%s239 + $0x98] sm:$0xff]
        %v291 = vld [vmem:[%s239 + $0xa0] sm:$0xff]
        %v292 = vld [vmem:[%s239 + $0xa8] sm:$0xff]
        %v293 = vld [vmem:[%s239 + $0xb0] sm:$0xff]
        %v294 = vld [vmem:[%s239 + $0xb8] sm:$0xff]
        %v295 = vld [vmem:[%s239 + $0xc0] sm:$0xff]
        %v296 = vld [vmem:[%s239 + $0xc8] sm:$0xff]
        %v297 = vld [vmem:[%s239 + $0xd0] sm:$0xff]
        %v298 = vld [vmem:[%s239 + $0xd8] sm:$0xff]
        %v299 = vld [vmem:[%s239 + $0xe0] sm:$0xff]
        %v300 = vld [vmem:[%s239 + $0xe8] sm:$0xff]
        %v301 = vld [vmem:[%s239 + $0xf0] sm:$0xff]
        %v302 = vld [vmem:[%s239 + $0xf8] sm:$0xff]
        %v303 = vld [vmem:[%s239 + $0x100] sm:$0xff]
        %v304 = vld [vmem:[%s239 + $0x108] sm:$0xff]
        %v305 = vld [vmem:[%s239 + $0x110] sm:$0xff]
        %v306 = vld [vmem:[%s239 + $0x118] sm:$0xff]
        %v307 = vld [vmem:[%s239 + $0x120] sm:$0xff]
        %v308 = vld [vmem:[%s239 + $0x128] sm:$0xff]
        %v309 = vld [vmem:[%s239 + $0x130] sm:$0xff]
        %v310 = vld [vmem:[%s239 + $0x138] sm:$0xff]
        %v311 = vld [vmem:[%s239 + $0x140] sm:$0xff]
        %v312 = vld [vmem:[%s239 + $0x148] sm:$0xff]
        %v313 = vld [vmem:[%s239 + $0x150] sm:$0xff]
        %v314 = vld [vmem:[%s239 + $0x158] sm:$0xff]
        %v315 = vld [vmem:[%s239 + $0x160] sm:$0xff]
        %v316 = vld [vmem:[%s239 + $0x168] sm:$0xff]
        %v317 = vld [vmem:[%s239 + $0x170] sm:$0xff]
        %v318 = vld [vmem:[%s239 + $0x178] sm:$0xff]
        %v319 = vld [vmem:[%s239 + $0x180] sm:$0xff]
        %v320 = vld [vmem:[%s239 + $0x188] sm:$0xff]
        %v321 = vld [vmem:[%s239 + $0x190] sm:$0xff]
        %v322 = vld [vmem:[%s239 + $0x198] sm:$0xff]
        %v323 = vld [vmem:[%s239 + $0x1a0] sm:$0xff]
        %v324 = vld [vmem:[%s239 + $0x1a8] sm:$0xff]
        %v325 = vld [vmem:[%s239 + $0x1b0] sm:$0xff]
        %v326 = vld [vmem:[%s239 + $0x1b8] sm:$0xff]
        %v327 = vld [vmem:[%s239 + $0x1c0] sm:$0xff]
        %v328 = vld [vmem:[%s239 + $0x1c8] sm:$0xff]
        %v329 = vld [vmem:[%s239 + $0x1d0] sm:$0xff]
        %v330 = vld [vmem:[%s239 + $0x1d8] sm:$0xff]
        %v331 = vld [vmem:[%s239 + $0x1e0] sm:$0xff]
        %v332 = vld [vmem:[%s239 + $0x1e8] sm:$0xff]
        %v333 = vld [vmem:[%s239 + $0x1f0] sm:$0xff]
        %v334 = vld [vmem:[%s239 + $0x1f8] sm:$0xff]
        %v335 = vperm.slane %v254, 0
        %v336 = vsub.f32 %v271, %v335
        %v337 = vsub.f32 %v272, %v335
        %v338 = vsub.f32 %v273, %v335
        %v339 = vsub.f32 %v274, %v335
        %v340 = vsub.f32 %v275, %v335
        %v341 = vsub.f32 %v276, %v335
        %v342 = vsub.f32 %v277, %v335
        %v343 = vsub.f32 %v278, %v335
        %v344 = vsub.f32 %v279, %v335
        %v345 = vsub.f32 %v280, %v335
        %v346 = vsub.f32 %v281, %v335
        %v347 = vsub.f32 %v282, %v335
        %v348 = vsub.f32 %v283, %v335
        %v349 = vsub.f32 %v284, %v335
        %v350 = vsub.f32 %v285, %v335
        %v351 = vsub.f32 %v286, %v335
        %v352 = vsub.f32 %v287, %v335
        %v353 = vsub.f32 %v288, %v335
        %v354 = vsub.f32 %v289, %v335
        %v355 = vsub.f32 %v290, %v335
        %v356 = vsub.f32 %v291, %v335
        %v357 = vsub.f32 %v292, %v335
        %v358 = vsub.f32 %v293, %v335
        %v359 = vsub.f32 %v294, %v335
        %v360 = vsub.f32 %v295, %v335
        %v361 = vsub.f32 %v296, %v335
        %v362 = vsub.f32 %v297, %v335
        %v363 = vsub.f32 %v298, %v335
        %v364 = vsub.f32 %v299, %v335
        %v365 = vsub.f32 %v300, %v335
        %v366 = vsub.f32 %v301, %v335
        %v367 = vsub.f32 %v302, %v335
        %v368 = vsub.f32 %v303, %v335
        %v369 = vsub.f32 %v304, %v335
        %v370 = vsub.f32 %v305, %v335
        %v371 = vsub.f32 %v306, %v335
        %v372 = vsub.f32 %v307, %v335
        %v373 = vsub.f32 %v308, %v335
        %v374 = vsub.f32 %v309, %v335
        %v375 = vsub.f32 %v310, %v335
        %v376 = vsub.f32 %v311, %v335
        %v377 = vsub.f32 %v312, %v335
        %v378 = vsub.f32 %v313, %v335
        %v379 = vsub.f32 %v314, %v335
        %v380 = vsub.f32 %v315, %v335
        %v381 = vsub.f32 %v316, %v335
        %v382 = vsub.f32 %v317, %v335
        %v383 = vsub.f32 %v318, %v335
        %v384 = vsub.f32 %v319, %v335
        %v385 = vsub.f32 %v320, %v335
        %v386 = vsub.f32 %v321, %v335
        %v387 = vsub.f32 %v322, %v335
        %v388 = vsub.f32 %v323, %v335
        %v389 = vsub.f32 %v324, %v335
        %v390 = vsub.f32 %v325, %v335
        %v391 = vsub.f32 %v326, %v335
        %v392 = vsub.f32 %v327, %v335
        %v393 = vsub.f32 %v328, %v335
        %v394 = vsub.f32 %v329, %v335
        %v395 = vsub.f32 %v330, %v335
        %v396 = vsub.f32 %v331, %v335
        %v397 = vsub.f32 %v332, %v335
        %v398 = vsub.f32 %v333, %v335
        %v399 = vsub.f32 %v334, %v335
        %v400 = vld [vmem:[%s1] sm:$0x1]
        %v402 = vperm.slane %v400, 0
        %v404 = vmul.f32 %v270, %v402
        %v405 = vperm.slane %v404, 1
        %v406 = vmul.f32 %v336, %v405
        %v407 = vmul.f32 %v337, %v405
        %v408 = vmul.f32 %v338, %v405
        %v409 = vmul.f32 %v339, %v405
        %v410 = vmul.f32 %v340, %v405
        %v411 = vmul.f32 %v341, %v405
        %v412 = vmul.f32 %v342, %v405
        %v413 = vmul.f32 %v343, %v405
        %v414 = vmul.f32 %v344, %v405
        %v415 = vmul.f32 %v345, %v405
        %v416 = vmul.f32 %v346, %v405
        %v417 = vmul.f32 %v347, %v405
        %v418 = vmul.f32 %v348, %v405
        %v419 = vmul.f32 %v349, %v405
        %v420 = vmul.f32 %v350, %v405
        %v421 = vmul.f32 %v351, %v405
        %v422 = vmul.f32 %v352, %v405
        %v423 = vmul.f32 %v353, %v405
        %v424 = vmul.f32 %v354, %v405
        %v425 = vmul.f32 %v355, %v405
        %v426 = vmul.f32 %v356, %v405
        %v427 = vmul.f32 %v357, %v405
        %v428 = vmul.f32 %v358, %v405
        %v429 = vmul.f32 %v359, %v405
        %v430 = vmul.f32 %v360, %v405
        %v431 = vmul.f32 %v361, %v405
        %v432 = vmul.f32 %v362, %v405
        %v433 = vmul.f32 %v363, %v405
        %v434 = vmul.f32 %v364, %v405
        %v435 = vmul.f32 %v365, %v405
        %v436 = vmul.f32 %v366, %v405
        %v437 = vmul.f32 %v367, %v405
        %v438 = vmul.f32 %v368, %v405
        %v439 = vmul.f32 %v369, %v405
        %v440 = vmul.f32 %v370, %v405
        %v441 = vmul.f32 %v371, %v405
        %v442 = vmul.f32 %v372, %v405
        %v443 = vmul.f32 %v373, %v405
        %v444 = vmul.f32 %v374, %v405
        %v445 = vmul.f32 %v375, %v405
        %v446 = vmul.f32 %v376, %v405
        %v447 = vmul.f32 %v377, %v405
        %v448 = vmul.f32 %v378, %v405
        %v449 = vmul.f32 %v379, %v405
        %v450 = vmul.f32 %v380, %v405
        %v451 = vmul.f32 %v381, %v405
        %v452 = vmul.f32 %v382, %v405
        %v453 = vmul.f32 %v383, %v405
        %v454 = vmul.f32 %v384, %v405
        %v455 = vmul.f32 %v385, %v405
        %v456 = vmul.f32 %v386, %v405
        %v457 = vmul.f32 %v387, %v405
        %v458 = vmul.f32 %v388, %v405
        %v459 = vmul.f32 %v389, %v405
        %v460 = vmul.f32 %v390, %v405
        %v461 = vmul.f32 %v391, %v405
        %v462 = vmul.f32 %v392, %v405
        %v463 = vmul.f32 %v393, %v405
        %v464 = vmul.f32 %v394, %v405
        %v465 = vmul.f32 %v395, %v405
        %v466 = vmul.f32 %v396, %v405
        %v467 = vmul.f32 %v397, %v405
        %v468 = vmul.f32 %v398, %v405
        %v469 = vmul.f32 %v399, %v405
        %v470 = vld [vmem:[%s2] sm:$0x1]
        %v472 = vperm.slane %v470, 0
        %v474 = vadd.f32 %v406, %v472
        %v475 = vadd.f32 %v407, %v472
        %v476 = vadd.f32 %v408, %v472
        %v477 = vadd.f32 %v409, %v472
        %v478 = vadd.f32 %v410, %v472
        %v479 = vadd.f32 %v411, %v472
        %v480 = vadd.f32 %v412, %v472
        %v481 = vadd.f32 %v413, %v472
        %v482 = vadd.f32 %v414, %v472
        %v483 = vadd.f32 %v415, %v472
        %v484 = vadd.f32 %v416, %v472
        %v485 = vadd.f32 %v417, %v472
        %v486 = vadd.f32 %v418, %v472
        %v487 = vadd.f32 %v419, %v472
        %v488 = vadd.f32 %v420, %v472
        %v489 = vadd.f32 %v421, %v472
        %v490 = vadd.f32 %v422, %v472
        %v491 = vadd.f32 %v423, %v472
        %v492 = vadd.f32 %v424, %v472
        %v493 = vadd.f32 %v425, %v472
        %v494 = vadd.f32 %v426, %v472
        %v495 = vadd.f32 %v427, %v472
        %v496 = vadd.f32 %v428, %v472
        %v497 = vadd.f32 %v429, %v472
        %v498 = vadd.f32 %v430, %v472
        %v499 = vadd.f32 %v431, %v472
        %v500 = vadd.f32 %v432, %v472
        %v501 = vadd.f32 %v433, %v472
        %v502 = vadd.f32 %v434, %v472
        %v503 = vadd.f32 %v435, %v472
        %v504 = vadd.f32 %v436, %v472
        %v505 = vadd.f32 %v437, %v472
        %v506 = vadd.f32 %v438, %v472
        %v507 = vadd.f32 %v439, %v472
        %v508 = vadd.f32 %v440, %v472
        %v509 = vadd.f32 %v441, %v472
        %v510 = vadd.f32 %v442, %v472
        %v511 = vadd.f32 %v443, %v472
        %v512 = vadd.f32 %v444, %v472
        %v513 = vadd.f32 %v445, %v472
        %v514 = vadd.f32 %v446, %v472
        %v515 = vadd.f32 %v447, %v472
        %v516 = vadd.f32 %v448, %v472
        %v517 = vadd.f32 %v449, %v472
        %v518 = vadd.f32 %v450, %v472
        %v519 = vadd.f32 %v451, %v472
        %v520 = vadd.f32 %v452, %v472
        %v521 = vadd.f32 %v453, %v472
        %v522 = vadd.f32 %v454, %v472
        %v523 = vadd.f32 %v455, %v472
        %v524 = vadd.f32 %v456, %v472
        %v525 = vadd.f32 %v457, %v472
        %v526 = vadd.f32 %v458, %v472
        %v527 = vadd.f32 %v459, %v472
        %v528 = vadd.f32 %v460, %v472
        %v529 = vadd.f32 %v461, %v472
        %v530 = vadd.f32 %v462, %v472
        %v531 = vadd.f32 %v463, %v472
        %v532 = vadd.f32 %v464, %v472
        %v533 = vadd.f32 %v465, %v472
        %v534 = vadd.f32 %v466, %v472
        %v535 = vadd.f32 %v467, %v472
        %v536 = vadd.f32 %v468, %v472
        %v537 = vadd.f32 %v469, %v472
        %v538 = vld [vmem:[%s245] sm:$0xff]
        %v539 = vld [vmem:[%s245 + $0x8] sm:$0xff]
        %v540 = vld [vmem:[%s245 + $0x10] sm:$0xff]
        %v541 = vld [vmem:[%s245 + $0x18] sm:$0xff]
        %v542 = vld [vmem:[%s245 + $0x20] sm:$0xff]
        %v543 = vld [vmem:[%s245 + $0x28] sm:$0xff]
        %v544 = vld [vmem:[%s245 + $0x30] sm:$0xff]
        %v545 = vld [vmem:[%s245 + $0x38] sm:$0xff]
        %v546 = vld [vmem:[%s245 + $0x40] sm:$0xff]
        %v547 = vld [vmem:[%s245 + $0x48] sm:$0xff]
        %v548 = vld [vmem:[%s245 + $0x50] sm:$0xff]
        %v549 = vld [vmem:[%s245 + $0x58] sm:$0xff]
        %v550 = vld [vmem:[%s245 + $0x60] sm:$0xff]
        %v551 = vld [vmem:[%s245 + $0x68] sm:$0xff]
        %v552 = vld [vmem:[%s245 + $0x70] sm:$0xff]
        %v553 = vld [vmem:[%s245 + $0x78] sm:$0xff]
        %v554 = vld [vmem:[%s245 + $0x80] sm:$0xff]
        %v555 = vld [vmem:[%s245 + $0x88] sm:$0xff]
        %v556 = vld [vmem:[%s245 + $0x90] sm:$0xff]
        %v557 = vld [vmem:[%s245 + $0x98] sm:$0xff]
        %v558 = vld [vmem:[%s245 + $0xa0] sm:$0xff]
        %v559 = vld [vmem:[%s245 + $0xa8] sm:$0xff]
        %v560 = vld [vmem:[%s245 + $0xb0] sm:$0xff]
        %v561 = vld [vmem:[%s245 + $0xb8] sm:$0xff]
        %v562 = vld [vmem:[%s245 + $0xc0] sm:$0xff]
        %v563 = vld [vmem:[%s245 + $0xc8] sm:$0xff]
        %v564 = vld [vmem:[%s245 + $0xd0] sm:$0xff]
        %v565 = vld [vmem:[%s245 + $0xd8] sm:$0xff]
        %v566 = vld [vmem:[%s245 + $0xe0] sm:$0xff]
        %v567 = vld [vmem:[%s245 + $0xe8] sm:$0xff]
        %v568 = vld [vmem:[%s245 + $0xf0] sm:$0xff]
        %v569 = vld [vmem:[%s245 + $0xf8] sm:$0xff]
        %v570 = vld [vmem:[%s245 + $0x100] sm:$0xff]
        %v571 = vld [vmem:[%s245 + $0x108] sm:$0xff]
        %v572 = vld [vmem:[%s245 + $0x110] sm:$0xff]
        %v573 = vld [vmem:[%s245 + $0x118] sm:$0xff]
        %v574 = vld [vmem:[%s245 + $0x120] sm:$0xff]
        %v575 = vld [vmem:[%s245 + $0x128] sm:$0xff]
        %v576 = vld [vmem:[%s245 + $0x130] sm:$0xff]
        %v577 = vld [vmem:[%s245 + $0x138] sm:$0xff]
        %v578 = vld [vmem:[%s245 + $0x140] sm:$0xff]
        %v579 = vld [vmem:[%s245 + $0x148] sm:$0xff]
        %v580 = vld [vmem:[%s245 + $0x150] sm:$0xff]
        %v581 = vld [vmem:[%s245 + $0x158] sm:$0xff]
        %v582 = vld [vmem:[%s245 + $0x160] sm:$0xff]
        %v583 = vld [vmem:[%s245 + $0x168] sm:$0xff]
        %v584 = vld [vmem:[%s245 + $0x170] sm:$0xff]
        %v585 = vld [vmem:[%s245 + $0x178] sm:$0xff]
        %v586 = vld [vmem:[%s245 + $0x180] sm:$0xff]
        %v587 = vld [vmem:[%s245 + $0x188] sm:$0xff]
        %v588 = vld [vmem:[%s245 + $0x190] sm:$0xff]
        %v589 = vld [vmem:[%s245 + $0x198] sm:$0xff]
        %v590 = vld [vmem:[%s245 + $0x1a0] sm:$0xff]
        %v591 = vld [vmem:[%s245 + $0x1a8] sm:$0xff]
        %v592 = vld [vmem:[%s245 + $0x1b0] sm:$0xff]
        %v593 = vld [vmem:[%s245 + $0x1b8] sm:$0xff]
        %v594 = vld [vmem:[%s245 + $0x1c0] sm:$0xff]
        %v595 = vld [vmem:[%s245 + $0x1c8] sm:$0xff]
        %v596 = vld [vmem:[%s245 + $0x1d0] sm:$0xff]
        %v597 = vld [vmem:[%s245 + $0x1d8] sm:$0xff]
        %v598 = vld [vmem:[%s245 + $0x1e0] sm:$0xff]
        %v599 = vld [vmem:[%s245 + $0x1e8] sm:$0xff]
        %v600 = vld [vmem:[%s245 + $0x1f0] sm:$0xff]
        %v601 = vld [vmem:[%s245 + $0x1f8] sm:$0xff]
        %v602 = vadd.f32 %v474, %v538
        %v603 = vadd.f32 %v475, %v539
        %v604 = vadd.f32 %v476, %v540
        %v605 = vadd.f32 %v477, %v541
        %v606 = vadd.f32 %v478, %v542
        %v607 = vadd.f32 %v479, %v543
        %v608 = vadd.f32 %v480, %v544
        %v609 = vadd.f32 %v481, %v545
        %v610 = vadd.f32 %v482, %v546
        %v611 = vadd.f32 %v483, %v547
        %v612 = vadd.f32 %v484, %v548
        %v613 = vadd.f32 %v485, %v549
        %v614 = vadd.f32 %v486, %v550
        %v615 = vadd.f32 %v487, %v551
        %v616 = vadd.f32 %v488, %v552
        %v617 = vadd.f32 %v489, %v553
        %v618 = vadd.f32 %v490, %v554
        %v619 = vadd.f32 %v491, %v555
        %v620 = vadd.f32 %v492, %v556
        %v621 = vadd.f32 %v493, %v557
        %v622 = vadd.f32 %v494, %v558
        %v623 = vadd.f32 %v495, %v559
        %v624 = vadd.f32 %v496, %v560
        %v625 = vadd.f32 %v497, %v561
        %v626 = vadd.f32 %v498, %v562
        %v627 = vadd.f32 %v499, %v563
        %v628 = vadd.f32 %v500, %v564
        %v629 = vadd.f32 %v501, %v565
        %v630 = vadd.f32 %v502, %v566
        %v631 = vadd.f32 %v503, %v567
        %v632 = vadd.f32 %v504, %v568
        %v633 = vadd.f32 %v505, %v569
        %v634 = vadd.f32 %v506, %v570
        %v635 = vadd.f32 %v507, %v571
        %v636 = vadd.f32 %v508, %v572
        %v637 = vadd.f32 %v509, %v573
        %v638 = vadd.f32 %v510, %v574
        %v639 = vadd.f32 %v511, %v575
        %v640 = vadd.f32 %v512, %v576
        %v641 = vadd.f32 %v513, %v577
        %v642 = vadd.f32 %v514, %v578
        %v643 = vadd.f32 %v515, %v579
        %v644 = vadd.f32 %v516, %v580
        %v645 = vadd.f32 %v517, %v581
        %v646 = vadd.f32 %v518, %v582
        %v647 = vadd.f32 %v519, %v583
        %v648 = vadd.f32 %v520, %v584
        %v649 = vadd.f32 %v521, %v585
        %v650 = vadd.f32 %v522, %v586
        %v651 = vadd.f32 %v523, %v587
        %v652 = vadd.f32 %v524, %v588
        %v653 = vadd.f32 %v525, %v589
        %v654 = vadd.f32 %v526, %v590
        %v655 = vadd.f32 %v527, %v591
        %v656 = vadd.f32 %v528, %v592
        %v657 = vadd.f32 %v529, %v593
        %v658 = vadd.f32 %v530, %v594
        %v659 = vadd.f32 %v531, %v595
        %v660 = vadd.f32 %v532, %v596
        %v661 = vadd.f32 %v533, %v597
        %v662 = vadd.f32 %v534, %v598
        %v663 = vadd.f32 %v535, %v599
        %v664 = vadd.f32 %v536, %v600
        %v665 = vadd.f32 %v537, %v601
        %v666 = vmax.f32 %v602, 0.0
        %v667 = vmax.f32 %v603, 0.0
        %v668 = vmax.f32 %v604, 0.0
        %v669 = vmax.f32 %v605, 0.0
        %v670 = vmax.f32 %v606, 0.0
        %v671 = vmax.f32 %v607, 0.0
        %v672 = vmax.f32 %v608, 0.0
        %v673 = vmax.f32 %v609, 0.0
        %v674 = vmax.f32 %v610, 0.0
        %v675 = vmax.f32 %v611, 0.0
        %v676 = vmax.f32 %v612, 0.0
        %v677 = vmax.f32 %v613, 0.0
        %v678 = vmax.f32 %v614, 0.0
        %v679 = vmax.f32 %v615, 0.0
        %v680 = vmax.f32 %v616, 0.0
        %v681 = vmax.f32 %v617, 0.0
        %v682 = vmax.f32 %v618, 0.0
        %v683 = vmax.f32 %v619, 0.0
        %v684 = vmax.f32 %v620, 0.0
        %v685 = vmax.f32 %v621, 0.0
        %v686 = vmax.f32 %v622, 0.0
        %v687 = vmax.f32 %v623, 0.0
        %v688 = vmax.f32 %v624, 0.0
        %v689 = vmax.f32 %v625, 0.0
        %v690 = vmax.f32 %v626, 0.0
        %v691 = vmax.f32 %v627, 0.0
        %v692 = vmax.f32 %v628, 0.0
        %v693 = vmax.f32 %v629, 0.0
        %v694 = vmax.f32 %v630, 0.0
        %v695 = vmax.f32 %v631, 0.0
        %v696 = vmax.f32 %v632, 0.0
        %v697 = vmax.f32 %v633, 0.0
        %v698 = vmax.f32 %v634, 0.0
        %v699 = vmax.f32 %v635, 0.0
        %v700 = vmax.f32 %v636, 0.0
        %v701 = vmax.f32 %v637, 0.0
        %v702 = vmax.f32 %v638, 0.0
        %v703 = vmax.f32 %v639, 0.0
        %v704 = vmax.f32 %v640, 0.0
        %v705 = vmax.f32 %v641, 0.0
        %v706 = vmax.f32 %v642, 0.0
        %v707 = vmax.f32 %v643, 0.0
        %v708 = vmax.f32 %v644, 0.0
        %v709 = vmax.f32 %v645, 0.0
        %v710 = vmax.f32 %v646, 0.0
        %v711 = vmax.f32 %v647, 0.0
        %v712 = vmax.f32 %v648, 0.0
        %v713 = vmax.f32 %v649, 0.0
        %v714 = vmax.f32 %v650, 0.0
        %v715 = vmax.f32 %v651, 0.0
        %v716 = vmax.f32 %v652, 0.0
        %v717 = vmax.f32 %v653, 0.0
        %v718 = vmax.f32 %v654, 0.0
        %v719 = vmax.f32 %v655, 0.0
        %v720 = vmax.f32 %v656, 0.0
        %v721 = vmax.f32 %v657, 0.0
        %v722 = vmax.f32 %v658, 0.0
        %v723 = vmax.f32 %v659, 0.0
        %v724 = vmax.f32 %v660, 0.0
        %v725 = vmax.f32 %v661, 0.0
        %v726 = vmax.f32 %v662, 0.0
        %v727 = vmax.f32 %v663, 0.0
        %v728 = vmax.f32 %v664, 0.0
        %v729 = vmax.f32 %v665, 0.0
        %730 = vst [vmem:[%s234] sm:$0xff] %v666
        %731 = vst [vmem:[%s234 + $0x8] sm:$0xff] %v667
        %732 = vst [vmem:[%s234 + $0x10] sm:$0xff] %v668
        %733 = vst [vmem:[%s234 + $0x18] sm:$0xff] %v669
        %734 = vst [vmem:[%s234 + $0x20] sm:$0xff] %v670
        %735 = vst [vmem:[%s234 + $0x28] sm:$0xff] %v671
        %736 = vst [vmem:[%s234 + $0x30] sm:$0xff] %v672
        %737 = vst [vmem:[%s234 + $0x38] sm:$0xff] %v673
        %738 = vst [vmem:[%s234 + $0x40] sm:$0xff] %v674
        %739 = vst [vmem:[%s234 + $0x48] sm:$0xff] %v675
        %740 = vst [vmem:[%s234 + $0x50] sm:$0xff] %v676
        %741 = vst [vmem:[%s234 + $0x58] sm:$0xff] %v677
        %742 = vst [vmem:[%s234 + $0x60] sm:$0xff] %v678
        %743 = vst [vmem:[%s234 + $0x68] sm:$0xff] %v679
        %744 = vst [vmem:[%s234 + $0x70] sm:$0xff] %v680
        %745 = vst [vmem:[%s234 + $0x78] sm:$0xff] %v681
        %746 = vst [vmem:[%s234 + $0x80] sm:$0xff] %v682
        %747 = vst [vmem:[%s234 + $0x88] sm:$0xff] %v683
        %748 = vst [vmem:[%s234 + $0x90] sm:$0xff] %v684
        %749 = vst [vmem:[%s234 + $0x98] sm:$0xff] %v685
        %750 = vst [vmem:[%s234 + $0xa0] sm:$0xff] %v686
        %751 = vst [vmem:[%s234 + $0xa8] sm:$0xff] %v687
        %752 = vst [vmem:[%s234 + $0xb0] sm:$0xff] %v688
        %753 = vst [vmem:[%s234 + $0xb8] sm:$0xff] %v689
        %754 = vst [vmem:[%s234 + $0xc0] sm:$0xff] %v690
        %755 = vst [vmem:[%s234 + $0xc8] sm:$0xff] %v691
        %756 = vst [vmem:[%s234 + $0xd0] sm:$0xff] %v692
        %757 = vst [vmem:[%s234 + $0xd8] sm:$0xff] %v693
        %758 = vst [vmem:[%s234 + $0xe0] sm:$0xff] %v694
        %759 = vst [vmem:[%s234 + $0xe8] sm:$0xff] %v695
        %760 = vst [vmem:[%s234 + $0xf0] sm:$0xff] %v696
        %761 = vst [vmem:[%s234 + $0xf8] sm:$0xff] %v697
        %762 = vst [vmem:[%s234 + $0x100] sm:$0xff] %v698
        %763 = vst [vmem:[%s234 + $0x108] sm:$0xff] %v699
        %764 = vst [vmem:[%s234 + $0x110] sm:$0xff] %v700
        %765 = vst [vmem:[%s234 + $0x118] sm:$0xff] %v701
        %766 = vst [vmem:[%s234 + $0x120] sm:$0xff] %v702
        %767 = vst [vmem:[%s234 + $0x128] sm:$0xff] %v703
        %768 = vst [vmem:[%s234 + $0x130] sm:$0xff] %v704
        %769 = vst [vmem:[%s234 + $0x138] sm:$0xff] %v705
        %770 = vst [vmem:[%s234 + $0x140] sm:$0xff] %v706
        %771 = vst [vmem:[%s234 + $0x148] sm:$0xff] %v707
        %772 = vst [vmem:[%s234 + $0x150] sm:$0xff] %v708
        %773 = vst [vmem:[%s234 + $0x158] sm:$0xff] %v709
        %774 = vst [vmem:[%s234 + $0x160] sm:$0xff] %v710
        %775 = vst [vmem:[%s234 + $0x168] sm:$0xff] %v711
        %776 = vst [vmem:[%s234 + $0x170] sm:$0xff] %v712
        %777 = vst [vmem:[%s234 + $0x178] sm:$0xff] %v713
        %778 = vst [vmem:[%s234 + $0x180] sm:$0xff] %v714
        %779 = vst [vmem:[%s234 + $0x188] sm:$0xff] %v715
        %780 = vst [vmem:[%s234 + $0x190] sm:$0xff] %v716
        %781 = vst [vmem:[%s234 + $0x198] sm:$0xff] %v717
        %782 = vst [vmem:[%s234 + $0x1a0] sm:$0xff] %v718
        %783 = vst [vmem:[%s234 + $0x1a8] sm:$0xff] %v719
        %784 = vst [vmem:[%s234 + $0x1b0] sm:$0xff] %v720
        %785 = vst [vmem:[%s234 + $0x1b8] sm:$0xff] %v721
        %786 = vst [vmem:[%s234 + $0x1c0] sm:$0xff] %v722
        %787 = vst [vmem:[%s234 + $0x1c8] sm:$0xff] %v723
        %788 = vst [vmem:[%s234 + $0x1d0] sm:$0xff] %v724
        %789 = vst [vmem:[%s234 + $0x1d8] sm:$0xff] %v725
        %790 = vst [vmem:[%s234 + $0x1e0] sm:$0xff] %v726
        %791 = vst [vmem:[%s234 + $0x1e8] sm:$0xff] %v727
        %792 = vst [vmem:[%s234 + $0x1f0] sm:$0xff] %v728
        %793 = vst [vmem:[%s234 + $0x1f8] sm:$0xff] %v729
        %s794 = sand.u32 %s142, 1
        %s795 = scalar_lea.sflag [#allocation3], %s794
        %s796 = sand.u32 %s142, 1
        %s797 = smul.addr %s796, 512
        %s798 = scalar_lea.vmem [#allocation2], %s797
        // Predicated region
        $region41: #{bottleneck_forward.11} parent=39 // pred_check
          %p799 = pneg %p152
        $region42: #{bottleneck_forward.11} parent=39 // pred_check_branch
          %801 = sbr.rel (%p799) target = $region44
        $region43: #{bottleneck_forward.11} parent=39 // pred_region
          %s802 = smul.u32 64, %s19
          %804 = vsyncadd %s795, 0
          %s805 = smul.addr %s802, 8
          %s806 = scalar_lea.hbm %s5, %s805
          %s807 = sshll.u32 %s798, 4
          %s808 = int_to_ptr.vmem [resolvable:$true] %s807
          %s809 = sshll.u32 %s806, 4
          %s810 = int_to_ptr.hbm [resolvable:$true] %s809
          %815 = dma.vmem_to_hbm [thread:$0]  %s808, 8192, %s810, %s795, 128, 128, 8
        $region44: #{bottleneck_forward.11} parent=39 // pred_fallthru
          _
      $region40: #{bottleneck_forward.11} parent=5 // pred_fallthru
        _
      %p816 = scmp.le.s32.totalorder 2, %s14
      // Predicated region
      $region45: #{bottleneck_forward.11} parent=5 // pred_check
        %p817 = pneg %p816
      $region46: #{bottleneck_forward.11} parent=5 // pred_check_branch
        %819 = sbr.rel (%p817) target = $region48
      $region47: #{bottleneck_forward.11} parent=5 // pred_region
        %s820 = ssub.s32 %s14, 2
        // Predicated region
        $region49: #{bottleneck_forward.11} parent=47 // pred_check
          %p821 = pneg %p158
        $region50: #{bottleneck_forward.11} parent=47 // pred_check_branch
          %823 = sbr.rel (%p821) target = $region52
        $region51: #{bottleneck_forward.11} parent=47 // pred_region
          %s824 = sand.u32 %s143, 1
          %s825 = scalar_lea.sflag [#allocation3], %s824
          %s826 = sand.u32 %s143, 1
          %s827 = smul.addr %s826, 512
          %s828 = scalar_lea.vmem [#allocation2], %s827
          %830 = dma.done %s825, 8192
        $region52: #{bottleneck_forward.11} parent=47 // pred_fallthru
          _
      $region48: #{bottleneck_forward.11} parent=5 // pred_fallthru
        _
    $region6: #{bottleneck_forward.11} parent=1 // loop_footer
      %s18 = sadd.s32 1, %s14
    $region7: #{bottleneck_forward.11} parent=1 // loop_footer_branch
      %13 = sbr.rel target = $region3
    $region8: #{bottleneck_forward.11} parent=1 // loop_exit
      _
    %831 = vsyncpa [#allocation3], 1
    %s832 = scalar_lea.sflag [#allocation3], 1
    %833 = vsyncpa %s832, 1

// kernel: bottleneck_forward.8
$region0: #{bottleneck_forward.8}
  #allocation0 [shape = 'u32[]', space=smem, size = 0x4, offset = 0x4, fixed_abs, tag = 'smem constant byte address 0x4 - core index']
  #allocation1 [shape = 'u32[72,128]{1,0:T(1,128)}', space=vmem, size = 0x9000, scoped, tag = 'internal scratch']
  #allocation2 [shape = 'f32[6,10,10,128]{3,2,1,0:T(8,128)}', space=vmem, size = 0x78000, scoped, tag = 'scratch operand']
  #allocation3 [shape = 's32[1]{0}', space=sflag, size = 0x4, scoped, tag = 'scratch operand']
  #allocation4 [shape = 's32[]', space=sflag, size = 0x4, offset = 0, fixed_abs, tag = 'sflag constant byte address 0x0 - dummy sync flag']
  %s0 = inlined_call_operand.vmem [shape: f32[20,10,10,128], index: 0, kind: input, shape index: {}]
  %s1 = inlined_call_operand.vmem [shape: f32[27,128,128], index: 1, kind: input, shape index: {}]
  %s2 = inlined_call_operand.vmem [shape: f32[16,8,8,128], index: 2, kind: output, shape index: {0}]
  %s3 = inlined_call_operand.vmem [shape: f32[4,2,128], index: 3, kind: output, shape index: {1}]
  %4 = xla_tuple %s2, %s3
  %s5 = sld [smem:[#allocation0]]
  $region67: #{bottleneck_forward.8} parent=0
    _
  %s7 = ssub.s32 1, %s5
  %s8 = scalar_select 0, %s7, %s5
  loop: start=0, step=1, limit=6
  $region2: #{bottleneck_forward.8} parent=0 // loop_pre_header
    _
  $region3: #{bottleneck_forward.8} parent=0 // loop_header
    %s10 = sphi 0, %s14
    %p11 = scmp.ge.s32.totalorder %s10, 6
    %s17 = sphi 0, %s29
    %s18 = sphi 0, %s25
    %s19 = sphi 0, %s17
    %s20 = sphi 0, %s18
    %s21 = sphi 0, %s19
    %s22 = sphi 0, %s20
    %s30 = sphi 0, %s30
    %s32 = sphi 0, %s30
    %s33 = sphi 0, %s32
    %s47 = sphi 0, %s33
    %s57 = sphi 0, %s59
    %s60 = sphi 0, %s57
    %s61 = sphi 0, %s60
    %s77 = sphi 0, %s61
    %s87 = sphi 0, %s89
    %s90 = sphi 0, %s87
    %s91 = sphi 0, %s90
    %s107 = sphi 0, %s91
  $region4: #{bottleneck_forward.8} parent=0 // loop_header_branch
    %13 = sbr.rel (%p11) target = $region8
  $region5: #{bottleneck_forward.8} parent=0 // loop_body
    %s15 = ssub.s32 %s10, 1
    %s16 = ssub.s32 %s10, 2
    %s23 = sadd.s32 1, %s18
    %p24 = scmp.ge.s32.totalorder %s23, 2
    %s25 = scalar_select %p24, 0, %s23
    %s26 = sadd.s32 1, %s17
    %s27 = scalar_select %p24, %s26, %s17
    %p28 = scmp.ge.s32.totalorder %s27, 2
    %s29 = scalar_select %p28, 0, %s27
    %s31 = sadd.s32 %s30, 1
    %p34 = scmp.eq.s32.totalorder %s10, 3
    %p35 = scmp.ne.s32.totalorder %s30, %s32
    %p36 = scmp.eq.s32.totalorder %s10, 0
    %p37 = por %p35, %p36
    %p38 = scmp.ne.s32.totalorder %s30, %s32
    %p39 = scmp.eq.s32.totalorder %s15, 3
    %p40 = por %p38, %p39
    %p41 = scmp.ne.s32.totalorder %s32, %s33
    %p42 = scmp.eq.s32.totalorder %s15, 0
    %p43 = por %p41, %p42
    %p44 = scmp.ne.s32.totalorder %s32, %s33
    %p45 = scmp.eq.s32.totalorder %s16, 3
    %p46 = por %p44, %p45
    %p48 = scmp.ne.s32.totalorder %s33, %s47
    %p49 = scmp.eq.s32.totalorder %s16, 0
    %p50 = por %p48, %p49
    %s51 = smul.u32 %s17, 2
    %s52 = sadd.s32 %s51, %s18
    %s53 = smul.u32 %s29, 2
    %s54 = sadd.s32 %s53, %s25
    %s55 = ssub.s32 %s52, %s54
    %p56 = scmp.eq.s32.totalorder %s55, 0
    %s58 = sadd.s32 %s57, 1
    %s59 = scalar_select %p56, %s57, %s58
    %p62 = pneg %p56
    %p63 = scmp.eq.s32.totalorder %s10, 3
    %p64 = por %p62, %p63
    %p65 = scmp.ne.s32.totalorder %s57, %s60
    %p66 = scmp.eq.s32.totalorder %s10, 0
    %p67 = por %p65, %p66
    %p68 = scmp.ne.s32.totalorder %s57, %s60
    %p69 = scmp.eq.s32.totalorder %s15, 3
    %p70 = por %p68, %p69
    %p71 = scmp.ne.s32.totalorder %s60, %s61
    %p72 = scmp.eq.s32.totalorder %s15, 0
    %p73 = por %p71, %p72
    %p74 = scmp.ne.s32.totalorder %s60, %s61
    %p75 = scmp.eq.s32.totalorder %s16, 3
    %p76 = por %p74, %p75
    %p78 = scmp.ne.s32.totalorder %s61, %s77
    %p79 = scmp.eq.s32.totalorder %s16, 0
    %p80 = por %p78, %p79
    %s81 = smul.u32 %s17, 2
    %s82 = sadd.s32 %s81, %s18
    %s83 = smul.u32 %s29, 2
    %s84 = sadd.s32 %s83, %s25
    %s85 = ssub.s32 %s82, %s84
    %p86 = scmp.eq.s32.totalorder %s85, 0
    %s88 = sadd.s32 %s87, 1
    %s89 = scalar_select %p86, %s87, %s88
    %p92 = pneg %p86
    %p93 = scmp.eq.s32.totalorder %s10, 3
    %p94 = por %p92, %p93
    %p95 = scmp.ne.s32.totalorder %s87, %s90
    %p96 = scmp.eq.s32.totalorder %s10, 0
    %p97 = por %p95, %p96
    %p98 = scmp.ne.s32.totalorder %s87, %s90
    %p99 = scmp.eq.s32.totalorder %s15, 3
    %p100 = por %p98, %p99
    %p101 = scmp.ne.s32.totalorder %s90, %s91
    %p102 = scmp.eq.s32.totalorder %s15, 0
    %p103 = por %p101, %p102
    %p104 = scmp.ne.s32.totalorder %s90, %s91
    %p105 = scmp.eq.s32.totalorder %s16, 3
    %p106 = por %p104, %p105
    %p108 = scmp.ne.s32.totalorder %s91, %s107
    %p109 = scmp.eq.s32.totalorder %s16, 0
    %p110 = por %p108, %p109
    %p111 = scmp.le.s32.totalorder 1, %s10
    %p112 = scmp.lt.s32.totalorder %s10, 5
    %p113 = pnand %p111, %p112
    %p114 = pneg %p113
    // Predicated region
    $region9: #{bottleneck_forward.8} parent=5 // pred_check
      _
    $region10: #{bottleneck_forward.8} parent=5 // pred_check_branch
      %116 = sbr.rel (%p113) target = $region12
    $region11: #{bottleneck_forward.8} parent=5 // pred_region
      %s117 = ssub.s32 %s10, 1
      // Predicated region
      $region13: #{bottleneck_forward.8} parent=11 // pred_check
        %p118 = pneg %p43
      $region14: #{bottleneck_forward.8} parent=11 // pred_check_branch
        %120 = sbr.rel (%p118) target = $region16
      $region15: #{bottleneck_forward.8} parent=11 // pred_region
        _
      $region16: #{bottleneck_forward.8} parent=11 // pred_fallthru
        _
    $region12: #{bottleneck_forward.8} parent=5 // pred_fallthru
      _
    %p121 = scmp.lt.s32.totalorder %s10, 4
    // Predicated region
    $region17: #{bottleneck_forward.8} parent=5 // pred_check
      %p122 = pneg %p121
    $region18: #{bottleneck_forward.8} parent=5 // pred_check_branch
      %124 = sbr.rel (%p122) target = $region20
    $region19: #{bottleneck_forward.8} parent=5 // pred_region
      _
    $region20: #{bottleneck_forward.8} parent=5 // pred_fallthru
      _
    %p125 = scmp.le.s32.totalorder 1, %s10
    %p126 = scmp.lt.s32.totalorder %s10, 5
    %p127 = pnand %p125, %p126
    %p128 = pneg %p127
    // Predicated region
    $region21: #{bottleneck_forward.8} parent=5 // pred_check
      _
    $region22: #{bottleneck_forward.8} parent=5 // pred_check_branch
      %130 = sbr.rel (%p127) target = $region24
    $region23: #{bottleneck_forward.8} parent=5 // pred_region
      %s131 = ssub.s32 %s10, 1
      %p132 = pneg %p43
      %p133 = pneg %p40
      %p134 = pneg %p73
      %p135 = pneg %p70
      %s136 = smul.u32 %s19, 2
      %s137 = sadd.s32 %s136, %s20
      %s138 = smul.u32 4, %s137
      %p139 = scmp.lt.s32.totalorder %s138, 15
      %s140 = scalar_select %p139, %s138, 15
      %s141 = smul.addr %s140, 8
      %s142 = smul.addr %s141, 8
      %s143 = scalar_lea.vmem %s2, %s142
      %p144 = pneg %p103
      %p145 = pneg %p100
      %s146 = smul.u32 %s19, 2
      %s147 = sadd.s32 %s146, %s20
      %p148 = scmp.lt.s32.totalorder %s147, 3
      %s149 = scalar_select %p148, %s147, 3
      %s150 = smul.addr %s149, 2
      %s151 = scalar_lea.vmem %s3, %s150
      %s152 = smul.u32 %s19, 2
      %s153 = sadd.s32 %s152, %s20
      %s154 = smul.u32 4, %s153
      %p155 = scmp.lt.s32.totalorder %s154, 15
      %s156 = scalar_select %p155, %s154, 15
      %s157 = smul.addr %s156, 8
      %s158 = smul.addr %s157, 8
      %s159 = scalar_lea.vmem %s2, %s158
      %s160 = smul.u32 %s19, 2
      %s161 = sadd.s32 %s160, %s20
      %s162 = smul.u32 4, %s161
      %s163 = smul.u32 %s19, 2
      %s164 = sadd.s32 %s163, %s20
      %p165 = scmp.lt.s32.totalorder %s164, 3
      %s166 = scalar_select %p165, %s164, 3
      %s167 = smul.addr %s166, 2
      %s168 = scalar_lea.vmem %s3, %s167
      %s169 = smul.u32 %s19, 2
      %s170 = sadd.s32 %s169, %s20
      %s171 = smul.u32 %s19, 10
      %s172 = smul.u32 %s20, 4
      %s173 = sadd.s32 %s171, %s172
      %s174 = smul.u32 %s173, 160
      %s175 = scalar_lea.vmem %s0, %s174
      // Predicated region
      $region25: #{bottleneck_forward.8} parent=23 // pred_check
        _
      $region26: #{bottleneck_forward.8} parent=23 // pred_check_branch
        %177 = sbr.rel (0) target = $region28
      $region27: #{bottleneck_forward.8} parent=23 // pred_region
        %s178 = scalar_lea.vmem %s175, 8
        %s179 = scalar_lea.vmem [#allocation2], 8
        loop: start=0, step=1, limit=1
        $region29: #{bottleneck_forward.8} parent=27 // loop_pre_header
          _
        $region30: #{bottleneck_forward.8} parent=27 // loop_header
          %s181 = sphi 0, %s185
          %p182 = scmp.ge.s32.totalorder %s181, 1
          %s186 = sphi %s175, %s175
          %s187 = sphi [#allocation2], [#allocation2]
        $region31: #{bottleneck_forward.8} parent=27 // loop_header_branch
          %184 = sbr.rel (%p182) target = $region35
        $region32: #{bottleneck_forward.8} parent=27 // loop_body
          %v188 = vld [vmem:[%s186] sm:$0xff]
          %189 = vst [vmem:[%s187] sm:$0xff] %v188
          %v190 = vld [vmem:[%s186 + $0x10] sm:$0xff]
          %191 = vst [vmem:[%s187 + $0x10] sm:$0xff] %v190
          %v192 = vld [vmem:[%s186 + $0x20] sm:$0xff]
          %193 = vst [vmem:[%s187 + $0x20] sm:$0xff] %v192
          %v194 = vld [vmem:[%s186 + $0x30] sm:$0xff]
          %195 = vst [vmem:[%s187 + $0x30] sm:$0xff] %v194
          %v196 = vld [vmem:[%s186 + $0x40] sm:$0xff]
          %197 = vst [vmem:[%s187 + $0x40] sm:$0xff] %v196
          %v198 = vld [vmem:[%s186 + $0x50] sm:$0xff]
          %199 = vst [vmem:[%s187 + $0x50] sm:$0xff] %v198
          %v200 = vld [vmem:[%s186 + $0x60] sm:$0xff]
          %201 = vst [vmem:[%s187 + $0x60] sm:$0xff] %v200
          %v202 = vld [vmem:[%s186 + $0x70] sm:$0xff]
          %203 = vst [vmem:[%s187 + $0x70] sm:$0xff] %v202
          %v204 = vld [vmem:[%s186 + $0x80] sm:$0xff]
          %205 = vst [vmem:[%s187 + $0x80] sm:$0xff] %v204
          %v206 = vld [vmem:[%s186 + $0x90] sm:$0xff]
          %207 = vst [vmem:[%s187 + $0x90] sm:$0xff] %v206
          %v208 = vld [vmem:[%s186 + $0xa0] sm:$0xff]
          %209 = vst [vmem:[%s187 + $0xa0] sm:$0xff] %v208
          %v210 = vld [vmem:[%s186 + $0xb0] sm:$0xff]
          %211 = vst [vmem:[%s187 + $0xb0] sm:$0xff] %v210
          %v212 = vld [vmem:[%s186 + $0xc0] sm:$0xff]
          %213 = vst [vmem:[%s187 + $0xc0] sm:$0xff] %v212
          %v214 = vld [vmem:[%s186 + $0xd0] sm:$0xff]
          %215 = vst [vmem:[%s187 + $0xd0] sm:$0xff] %v214
          %v216 = vld [vmem:[%s186 + $0xe0] sm:$0xff]
          %217 = vst [vmem:[%s187 + $0xe0] sm:$0xff] %v216
          %v218 = vld [vmem:[%s186 + $0xf0] sm:$0xff]
          %219 = vst [vmem:[%s187 + $0xf0] sm:$0xff] %v218
          %v220 = vld [vmem:[%s186 + $0x100] sm:$0xff]
          %221 = vst [vmem:[%s187 + $0x100] sm:$0xff] %v220
          %v222 = vld [vmem:[%s186 + $0x110] sm:$0xff]
          %223 = vst [vmem:[%s187 + $0x110] sm:$0xff] %v222
          %v224 = vld [vmem:[%s186 + $0x120] sm:$0xff]
          %225 = vst [vmem:[%s187 + $0x120] sm:$0xff] %v224
          %v226 = vld [vmem:[%s186 + $0x130] sm:$0xff]
          %227 = vst [vmem:[%s187 + $0x130] sm:$0xff] %v226
          %v228 = vld [vmem:[%s186 + $0x140] sm:$0xff]
          %229 = vst [vmem:[%s187 + $0x140] sm:$0xff] %v228
          %v230 = vld [vmem:[%s186 + $0x150] sm:$0xff]
          %231 = vst [vmem:[%s187 + $0x150] sm:$0xff] %v230
          %v232 = vld [vmem:[%s186 + $0x160] sm:$0xff]
          %233 = vst [vmem:[%s187 + $0x160] sm:$0xff] %v232
          %v234 = vld [vmem:[%s186 + $0x170] sm:$0xff]
          %235 = vst [vmem:[%s187 + $0x170] sm:$0xff] %v234
          %v236 = vld [vmem:[%s186 + $0x180] sm:$0xff]
          %237 = vst [vmem:[%s187 + $0x180] sm:$0xff] %v236
          %v238 = vld [vmem:[%s186 + $0x190] sm:$0xff]
          %239 = vst [vmem:[%s187 + $0x190] sm:$0xff] %v238
          %v240 = vld [vmem:[%s186 + $0x1a0] sm:$0xff]
          %241 = vst [vmem:[%s187 + $0x1a0] sm:$0xff] %v240
          %v242 = vld [vmem:[%s186 + $0x1b0] sm:$0xff]
          %243 = vst [vmem:[%s187 + $0x1b0] sm:$0xff] %v242
          %v244 = vld [vmem:[%s186 + $0x1c0] sm:$0xff]
          %245 = vst [vmem:[%s187 + $0x1c0] sm:$0xff] %v244
          %v246 = vld [vmem:[%s186 + $0x1d0] sm:$0xff]
          %247 = vst [vmem:[%s187 + $0x1d0] sm:$0xff] %v246
          %v248 = vld [vmem:[%s186 + $0x1e0] sm:$0xff]
          %249 = vst [vmem:[%s187 + $0x1e0] sm:$0xff] %v248
          %v250 = vld [vmem:[%s186 + $0x1f0] sm:$0xff]
          %251 = vst [vmem:[%s187 + $0x1f0] sm:$0xff] %v250
          %v252 = vld [vmem:[%s186 + $0x200] sm:$0xff]
          %253 = vst [vmem:[%s187 + $0x200] sm:$0xff] %v252
          %v254 = vld [vmem:[%s186 + $0x210] sm:$0xff]
          %255 = vst [vmem:[%s187 + $0x210] sm:$0xff] %v254
          %v256 = vld [vmem:[%s186 + $0x220] sm:$0xff]
          %257 = vst [vmem:[%s187 + $0x220] sm:$0xff] %v256
          %v258 = vld [vmem:[%s186 + $0x230] sm:$0xff]
          %259 = vst [vmem:[%s187 + $0x230] sm:$0xff] %v258
          %v260 = vld [vmem:[%s186 + $0x240] sm:$0xff]
          %261 = vst [vmem:[%s187 + $0x240] sm:$0xff] %v260
          %v262 = vld [vmem:[%s186 + $0x250] sm:$0xff]
          %263 = vst [vmem:[%s187 + $0x250] sm:$0xff] %v262
          %v264 = vld [vmem:[%s186 + $0x260] sm:$0xff]
          %265 = vst [vmem:[%s187 + $0x260] sm:$0xff] %v264
          %v266 = vld [vmem:[%s186 + $0x270] sm:$0xff]
          %267 = vst [vmem:[%s187 + $0x270] sm:$0xff] %v266
          %v268 = vld [vmem:[%s186 + $0x280] sm:$0xff]
          %269 = vst [vmem:[%s187 + $0x280] sm:$0xff] %v268
          %v270 = vld [vmem:[%s186 + $0x290] sm:$0xff]
          %271 = vst [vmem:[%s187 + $0x290] sm:$0xff] %v270
          %v272 = vld [vmem:[%s186 + $0x2a0] sm:$0xff]
          %273 = vst [vmem:[%s187 + $0x2a0] sm:$0xff] %v272
          %v274 = vld [vmem:[%s186 + $0x2b0] sm:$0xff]
          %275 = vst [vmem:[%s187 + $0x2b0] sm:$0xff] %v274
          %v276 = vld [vmem:[%s186 + $0x2c0] sm:$0xff]
          %277 = vst [vmem:[%s187 + $0x2c0] sm:$0xff] %v276
          %v278 = vld [vmem:[%s186 + $0x2d0] sm:$0xff]
          %279 = vst [vmem:[%s187 + $0x2d0] sm:$0xff] %v278
          %v280 = vld [vmem:[%s186 + $0x2e0] sm:$0xff]
          %281 = vst [vmem:[%s187 + $0x2e0] sm:$0xff] %v280
          %v282 = vld [vmem:[%s186 + $0x2f0] sm:$0xff]
          %283 = vst [vmem:[%s187 + $0x2f0] sm:$0xff] %v282
          %v284 = vld [vmem:[%s186 + $0x300] sm:$0xff]
          %285 = vst [vmem:[%s187 + $0x300] sm:$0xff] %v284
          %v286 = vld [vmem:[%s186 + $0x310] sm:$0xff]
          %287 = vst [vmem:[%s187 + $0x310] sm:$0xff] %v286
          %v288 = vld [vmem:[%s186 + $0x320] sm:$0xff]
          %289 = vst [vmem:[%s187 + $0x320] sm:$0xff] %v288
          %v290 = vld [vmem:[%s186 + $0x330] sm:$0xff]
          %291 = vst [vmem:[%s187 + $0x330] sm:$0xff] %v290
          %v292 = vld [vmem:[%s186 + $0x340] sm:$0xff]
          %293 = vst [vmem:[%s187 + $0x340] sm:$0xff] %v292
          %v294 = vld [vmem:[%s186 + $0x350] sm:$0xff]
          %295 = vst [vmem:[%s187 + $0x350] sm:$0xff] %v294
          %v296 = vld [vmem:[%s186 + $0x360] sm:$0xff]
          %297 = vst [vmem:[%s187 + $0x360] sm:$0xff] %v296
          %v298 = vld [vmem:[%s186 + $0x370] sm:$0xff]
          %299 = vst [vmem:[%s187 + $0x370] sm:$0xff] %v298
          %v300 = vld [vmem:[%s186 + $0x380] sm:$0xff]
          %301 = vst [vmem:[%s187 + $0x380] sm:$0xff] %v300
          %v302 = vld [vmem:[%s186 + $0x390] sm:$0xff]
          %303 = vst [vmem:[%s187 + $0x390] sm:$0xff] %v302
          %v304 = vld [vmem:[%s186 + $0x3a0] sm:$0xff]
          %305 = vst [vmem:[%s187 + $0x3a0] sm:$0xff] %v304
          %v306 = vld [vmem:[%s186 + $0x3b0] sm:$0xff]
          %307 = vst [vmem:[%s187 + $0x3b0] sm:$0xff] %v306
        $region33: #{bottleneck_forward.8} parent=27 // loop_footer
          %s185 = sadd.s32 1, %s181
        $region34: #{bottleneck_forward.8} parent=27 // loop_footer_branch
          %180 = sbr.rel target = $region30
        $region35: #{bottleneck_forward.8} parent=27 // loop_exit
          _
        %s309 = ssub.s32 4, 1
        loop: start=0, step=1, limit=1
        $region36: #{bottleneck_forward.8} parent=27 // loop_pre_header
          _
        $region37: #{bottleneck_forward.8} parent=27 // loop_header
          %s311 = sphi 0, %s315
          %p312 = scmp.ge.s32.totalorder %s311, 1
          %s316 = sphi %s178, %s178
          %s317 = sphi %s179, %s179
        $region38: #{bottleneck_forward.8} parent=27 // loop_header_branch
          %314 = sbr.rel (%p312) target = $region42
        $region39: #{bottleneck_forward.8} parent=27 // loop_body
          %v318 = vld [vmem:[%s316] sm:%s309]
          %319 = vst [vmem:[%s317] sm:%s309] %v318
          %v320 = vld [vmem:[%s316 + $0x10] sm:%s309]
          %321 = vst [vmem:[%s317 + $0x10] sm:%s309] %v320
          %v322 = vld [vmem:[%s316 + $0x20] sm:%s309]
          %323 = vst [vmem:[%s317 + $0x20] sm:%s309] %v322
          %v324 = vld [vmem:[%s316 + $0x30] sm:%s309]
          %325 = vst [vmem:[%s317 + $0x30] sm:%s309] %v324
          %v326 = vld [vmem:[%s316 + $0x40] sm:%s309]
          %327 = vst [vmem:[%s317 + $0x40] sm:%s309] %v326
          %v328 = vld [vmem:[%s316 + $0x50] sm:%s309]
          %329 = vst [vmem:[%s317 + $0x50] sm:%s309] %v328
          %v330 = vld [vmem:[%s316 + $0x60] sm:%s309]
          %331 = vst [vmem:[%s317 + $0x60] sm:%s309] %v330
          %v332 = vld [vmem:[%s316 + $0x70] sm:%s309]
          %333 = vst [vmem:[%s317 + $0x70] sm:%s309] %v332
          %v334 = vld [vmem:[%s316 + $0x80] sm:%s309]
          %335 = vst [vmem:[%s317 + $0x80] sm:%s309] %v334
          %v336 = vld [vmem:[%s316 + $0x90] sm:%s309]
          %337 = vst [vmem:[%s317 + $0x90] sm:%s309] %v336
          %v338 = vld [vmem:[%s316 + $0xa0] sm:%s309]
          %339 = vst [vmem:[%s317 + $0xa0] sm:%s309] %v338
          %v340 = vld [vmem:[%s316 + $0xb0] sm:%s309]
          %341 = vst [vmem:[%s317 + $0xb0] sm:%s309] %v340
          %v342 = vld [vmem:[%s316 + $0xc0] sm:%s309]
          %343 = vst [vmem:[%s317 + $0xc0] sm:%s309] %v342
          %v344 = vld [vmem:[%s316 + $0xd0] sm:%s309]
          %345 = vst [vmem:[%s317 + $0xd0] sm:%s309] %v344
          %v346 = vld [vmem:[%s316 + $0xe0] sm:%s309]
          %347 = vst [vmem:[%s317 + $0xe0] sm:%s309] %v346
          %v348 = vld [vmem:[%s316 + $0xf0] sm:%s309]
          %349 = vst [vmem:[%s317 + $0xf0] sm:%s309] %v348
          %v350 = vld [vmem:[%s316 + $0x100] sm:%s309]
          %351 = vst [vmem:[%s317 + $0x100] sm:%s309] %v350
          %v352 = vld [vmem:[%s316 + $0x110] sm:%s309]
          %353 = vst [vmem:[%s317 + $0x110] sm:%s309] %v352
          %v354 = vld [vmem:[%s316 + $0x120] sm:%s309]
          %355 = vst [vmem:[%s317 + $0x120] sm:%s309] %v354
          %v356 = vld [vmem:[%s316 + $0x130] sm:%s309]
          %357 = vst [vmem:[%s317 + $0x130] sm:%s309] %v356
          %v358 = vld [vmem:[%s316 + $0x140] sm:%s309]
          %359 = vst [vmem:[%s317 + $0x140] sm:%s309] %v358
          %v360 = vld [vmem:[%s316 + $0x150] sm:%s309]
          %361 = vst [vmem:[%s317 + $0x150] sm:%s309] %v360
          %v362 = vld [vmem:[%s316 + $0x160] sm:%s309]
          %363 = vst [vmem:[%s317 + $0x160] sm:%s309] %v362
          %v364 = vld [vmem:[%s316 + $0x170] sm:%s309]
          %365 = vst [vmem:[%s317 + $0x170] sm:%s309] %v364
          %v366 = vld [vmem:[%s316 + $0x180] sm:%s309]
          %367 = vst [vmem:[%s317 + $0x180] sm:%s309] %v366
          %v368 = vld [vmem:[%s316 + $0x190] sm:%s309]
          %369 = vst [vmem:[%s317 + $0x190] sm:%s309] %v368
          %v370 = vld [vmem:[%s316 + $0x1a0] sm:%s309]
          %371 = vst [vmem:[%s317 + $0x1a0] sm:%s309] %v370
          %v372 = vld [vmem:[%s316 + $0x1b0] sm:%s309]
          %373 = vst [vmem:[%s317 + $0x1b0] sm:%s309] %v372
          %v374 = vld [vmem:[%s316 + $0x1c0] sm:%s309]
          %375 = vst [vmem:[%s317 + $0x1c0] sm:%s309] %v374
          %v376 = vld [vmem:[%s316 + $0x1d0] sm:%s309]
          %377 = vst [vmem:[%s317 + $0x1d0] sm:%s309] %v376
          %v378 = vld [vmem:[%s316 + $0x1e0] sm:%s309]
          %379 = vst [vmem:[%s317 + $0x1e0] sm:%s309] %v378
          %v380 = vld [vmem:[%s316 + $0x1f0] sm:%s309]
          %381 = vst [vmem:[%s317 + $0x1f0] sm:%s309] %v380
          %v382 = vld [vmem:[%s316 + $0x200] sm:%s309]
          %383 = vst [vmem:[%s317 + $0x200] sm:%s309] %v382
          %v384 = vld [vmem:[%s316 + $0x210] sm:%s309]
          %385 = vst [vmem:[%s317 + $0x210] sm:%s309] %v384
          %v386 = vld [vmem:[%s316 + $0x220] sm:%s309]
          %387 = vst [vmem:[%s317 + $0x220] sm:%s309] %v386
          %v388 = vld [vmem:[%s316 + $0x230] sm:%s309]
          %389 = vst [vmem:[%s317 + $0x230] sm:%s309] %v388
          %v390 = vld [vmem:[%s316 + $0x240] sm:%s309]
          %391 = vst [vmem:[%s317 + $0x240] sm:%s309] %v390
          %v392 = vld [vmem:[%s316 + $0x250] sm:%s309]
          %393 = vst [vmem:[%s317 + $0x250] sm:%s309] %v392
          %v394 = vld [vmem:[%s316 + $0x260] sm:%s309]
          %395 = vst [vmem:[%s317 + $0x260] sm:%s309] %v394
          %v396 = vld [vmem:[%s316 + $0x270] sm:%s309]
          %397 = vst [vmem:[%s317 + $0x270] sm:%s309] %v396
          %v398 = vld [vmem:[%s316 + $0x280] sm:%s309]
          %399 = vst [vmem:[%s317 + $0x280] sm:%s309] %v398
          %v400 = vld [vmem:[%s316 + $0x290] sm:%s309]
          %401 = vst [vmem:[%s317 + $0x290] sm:%s309] %v400
          %v402 = vld [vmem:[%s316 + $0x2a0] sm:%s309]
          %403 = vst [vmem:[%s317 + $0x2a0] sm:%s309] %v402
          %v404 = vld [vmem:[%s316 + $0x2b0] sm:%s309]
          %405 = vst [vmem:[%s317 + $0x2b0] sm:%s309] %v404
          %v406 = vld [vmem:[%s316 + $0x2c0] sm:%s309]
          %407 = vst [vmem:[%s317 + $0x2c0] sm:%s309] %v406
          %v408 = vld [vmem:[%s316 + $0x2d0] sm:%s309]
          %409 = vst [vmem:[%s317 + $0x2d0] sm:%s309] %v408
          %v410 = vld [vmem:[%s316 + $0x2e0] sm:%s309]
          %411 = vst [vmem:[%s317 + $0x2e0] sm:%s309] %v410
          %v412 = vld [vmem:[%s316 + $0x2f0] sm:%s309]
          %413 = vst [vmem:[%s317 + $0x2f0] sm:%s309] %v412
          %v414 = vld [vmem:[%s316 + $0x300] sm:%s309]
          %415 = vst [vmem:[%s317 + $0x300] sm:%s309] %v414
          %v416 = vld [vmem:[%s316 + $0x310] sm:%s309]
          %417 = vst [vmem:[%s317 + $0x310] sm:%s309] %v416
          %v418 = vld [vmem:[%s316 + $0x320] sm:%s309]
          %419 = vst [vmem:[%s317 + $0x320] sm:%s309] %v418
          %v420 = vld [vmem:[%s316 + $0x330] sm:%s309]
          %421 = vst [vmem:[%s317 + $0x330] sm:%s309] %v420
          %v422 = vld [vmem:[%s316 + $0x340] sm:%s309]
          %423 = vst [vmem:[%s317 + $0x340] sm:%s309] %v422
          %v424 = vld [vmem:[%s316 + $0x350] sm:%s309]
          %425 = vst [vmem:[%s317 + $0x350] sm:%s309] %v424
          %v426 = vld [vmem:[%s316 + $0x360] sm:%s309]
          %427 = vst [vmem:[%s317 + $0x360] sm:%s309] %v426
          %v428 = vld [vmem:[%s316 + $0x370] sm:%s309]
          %429 = vst [vmem:[%s317 + $0x370] sm:%s309] %v428
          %v430 = vld [vmem:[%s316 + $0x380] sm:%s309]
          %431 = vst [vmem:[%s317 + $0x380] sm:%s309] %v430
          %v432 = vld [vmem:[%s316 + $0x390] sm:%s309]
          %433 = vst [vmem:[%s317 + $0x390] sm:%s309] %v432
          %v434 = vld [vmem:[%s316 + $0x3a0] sm:%s309]
          %435 = vst [vmem:[%s317 + $0x3a0] sm:%s309] %v434
          %v436 = vld [vmem:[%s316 + $0x3b0] sm:%s309]
          %437 = vst [vmem:[%s317 + $0x3b0] sm:%s309] %v436
        $region40: #{bottleneck_forward.8} parent=27 // loop_footer
          %s315 = sadd.s32 1, %s311
        $region41: #{bottleneck_forward.8} parent=27 // loop_footer_branch
          %310 = sbr.rel target = $region37
        $region42: #{bottleneck_forward.8} parent=27 // loop_exit
          _
      $region28: #{bottleneck_forward.8} parent=23 // pred_fallthru
        _
      // Predicated region
      $region43: #{bottleneck_forward.8} parent=23 // pred_check
        _
      $region44: #{bottleneck_forward.8} parent=23 // pred_check_branch
        %440 = sbr.rel (0) target = $region46
      $region45: #{bottleneck_forward.8} parent=23 // pred_region
        %441 = vsyncadd [#allocation3], 9600
      $region46: #{bottleneck_forward.8} parent=23 // pred_fallthru
        _
      %s442 = smul.u32 6, 10
      %s443 = smul.u32 %s442, 10
      %s444 = smul.u32 %s443, 1
      %s445 = sshll.u32 %s444, 4
      %446 = dma.done [#allocation3], %s445
      %v447 = vld [vmem:[#allocation2] sm:$0xff]
      %v448 = vld [vmem:[#allocation2 + $0x10] sm:$0xff]
      %v449 = vld [vmem:[#allocation2 + $0x20] sm:$0xff]
      %v450 = vld [vmem:[#allocation2 + $0x30] sm:$0xff]
      %v451 = vld [vmem:[#allocation2 + $0x40] sm:$0xff]
      %v452 = vld [vmem:[#allocation2 + $0x50] sm:$0xff]
      %v453 = vld [vmem:[#allocation2 + $0x60] sm:$0xff]
      %v454 = vld [vmem:[#allocation2 + $0x70] sm:$0xff]
      %v455 = vld [vmem:[#allocation2 + $0xa0] sm:$0xff]
      %v456 = vld [vmem:[#allocation2 + $0xb0] sm:$0xff]
      %v457 = vld [vmem:[#allocation2 + $0xc0] sm:$0xff]
      %v458 = vld [vmem:[#allocation2 + $0xd0] sm:$0xff]
      %v459 = vld [vmem:[#allocation2 + $0xe0] sm:$0xff]
      %v460 = vld [vmem:[#allocation2 + $0xf0] sm:$0xff]
      %v461 = vld [vmem:[#allocation2 + $0x100] sm:$0xff]
      %v462 = vld [vmem:[#allocation2 + $0x110] sm:$0xff]
      %v463 = vld [vmem:[#allocation2 + $0x140] sm:$0xff]
      %v464 = vld [vmem:[#allocation2 + $0x150] sm:$0xff]
      %v465 = vld [vmem:[#allocation2 + $0x160] sm:$0xff]
      %v466 = vld [vmem:[#allocation2 + $0x170] sm:$0xff]
      %v467 = vld [vmem:[#allocation2 + $0x180] sm:$0xff]
      %v468 = vld [vmem:[#allocation2 + $0x190] sm:$0xff]
      %v469 = vld [vmem:[#allocation2 + $0x1a0] sm:$0xff]
      %v470 = vld [vmem:[#allocation2 + $0x1b0] sm:$0xff]
      %v471 = vld [vmem:[#allocation2 + $0x1e0] sm:$0xff]
      %v472 = vld [vmem:[#allocation2 + $0x1f0] sm:$0xff]
      %v473 = vld [vmem:[#allocation2 + $0x200] sm:$0xff]
      %v474 = vld [vmem:[#allocation2 + $0x210] sm:$0xff]
      %v475 = vld [vmem:[#allocation2 + $0x220] sm:$0xff]
      %v476 = vld [vmem:[#allocation2 + $0x230] sm:$0xff]
      %v477 = vld [vmem:[#allocation2 + $0x240] sm:$0xff]
      %v478 = vld [vmem:[#allocation2 + $0x250] sm:$0xff]
      %v479 = vld [vmem:[%s1] sm:$0xff]
      %v480 = vld [vmem:[%s1 + $0x8] sm:$0xff]
      %v481 = vld [vmem:[%s1 + $0x10] sm:$0xff]
      %v482 = vld [vmem:[%s1 + $0x18] sm:$0xff]
      %v483 = vld [vmem:[%s1 + $0x20] sm:$0xff]
      %v484 = vld [vmem:[%s1 + $0x28] sm:$0xff]
      %v485 = vld [vmem:[%s1 + $0x30] sm:$0xff]
      %v486 = vld [vmem:[%s1 + $0x38] sm:$0xff]
      %v487 = vld [vmem:[%s1 + $0x40] sm:$0xff]
      %v488 = vld [vmem:[%s1 + $0x48] sm:$0xff]
      %v489 = vld [vmem:[%s1 + $0x50] sm:$0xff]
      %v490 = vld [vmem:[%s1 + $0x58] sm:$0xff]
      %v491 = vld [vmem:[%s1 + $0x60] sm:$0xff]
      %v492 = vld [vmem:[%s1 + $0x68] sm:$0xff]
      %v493 = vld [vmem:[%s1 + $0x70] sm:$0xff]
      %v494 = vld [vmem:[%s1 + $0x78] sm:$0xff]
      %v495 = vld [vmem:[#allocation2 + $0x1] sm:$0xff]
      %v496 = vld [vmem:[#allocation2 + $0x11] sm:$0xff]
      %v497 = vld [vmem:[#allocation2 + $0x21] sm:$0xff]
      %v498 = vld [vmem:[#allocation2 + $0x31] sm:$0xff]
      %v499 = vld [vmem:[#allocation2 + $0x41] sm:$0xff]
      %v500 = vld [vmem:[#allocation2 + $0x51] sm:$0xff]
      %v501 = vld [vmem:[#allocation2 + $0x61] sm:$0xff]
      %v502 = vld [vmem:[#allocation2 + $0x71] sm:$0xff]
      %v503 = vld [vmem:[#allocation2 + $0xa1] sm:$0xff]
      %v504 = vld [vmem:[#allocation2 + $0xb1] sm:$0xff]
      %v505 = vld [vmem:[#allocation2 + $0xc1] sm:$0xff]
      %v506 = vld [vmem:[#allocation2 + $0xd1] sm:$0xff]
      %v507 = vld [vmem:[#allocation2 + $0xe1] sm:$0xff]
      %v508 = vld [vmem:[#allocation2 + $0xf1] sm:$0xff]
      %v509 = vld [vmem:[#allocation2 + $0x101] sm:$0xff]
      %v510 = vld [vmem:[#allocation2 + $0x111] sm:$0xff]
      %v511 = vld [vmem:[#allocation2 + $0x141] sm:$0xff]
      %v512 = vld [vmem:[#allocation2 + $0x151] sm:$0xff]
      %v513 = vld [vmem:[#allocation2 + $0x161] sm:$0xff]
      %v514 = vld [vmem:[#allocation2 + $0x171] sm:$0xff]
      %v515 = vld [vmem:[#allocation2 + $0x181] sm:$0xff]
      %v516 = vld [vmem:[#allocation2 + $0x191] sm:$0xff]
      %v517 = vld [vmem:[#allocation2 + $0x1a1] sm:$0xff]
      %v518 = vld [vmem:[#allocation2 + $0x1b1] sm:$0xff]
      %v519 = vld [vmem:[#allocation2 + $0x1e1] sm:$0xff]
      %v520 = vld [vmem:[#allocation2 + $0x1f1] sm:$0xff]
      %v521 = vld [vmem:[#allocation2 + $0x201] sm:$0xff]
      %v522 = vld [vmem:[#allocation2 + $0x211] sm:$0xff]
      %v523 = vld [vmem:[#allocation2 + $0x221] sm:$0xff]
      %v524 = vld [vmem:[#allocation2 + $0x231] sm:$0xff]
      %v525 = vld [vmem:[#allocation2 + $0x241] sm:$0xff]
      %v526 = vld [vmem:[#allocation2 + $0x251] sm:$0xff]
      %s527 = scalar_lea.vmem %s1, 128
      %v528 = vld [vmem:[%s527] sm:$0xff]
      %v529 = vld [vmem:[%s527 + $0x8] sm:$0xff]
      %v530 = vld [vmem:[%s527 + $0x10] sm:$0xff]
      %v531 = vld [vmem:[%s527 + $0x18] sm:$0xff]
      %v532 = vld [vmem:[%s527 + $0x20] sm:$0xff]
      %v533 = vld [vmem:[%s527 + $0x28] sm:$0xff]
      %v534 = vld [vmem:[%s527 + $0x30] sm:$0xff]
      %v535 = vld [vmem:[%s527 + $0x38] sm:$0xff]
      %v536 = vld [vmem:[%s527 + $0x40] sm:$0xff]
      %v537 = vld [vmem:[%s527 + $0x48] sm:$0xff]
      %v538 = vld [vmem:[%s527 + $0x50] sm:$0xff]
      %v539 = vld [vmem:[%s527 + $0x58] sm:$0xff]
      %v540 = vld [vmem:[%s527 + $0x60] sm:$0xff]
      %v541 = vld [vmem:[%s527 + $0x68] sm:$0xff]
      %v542 = vld [vmem:[%s527 + $0x70] sm:$0xff]
      %v543 = vld [vmem:[%s527 + $0x78] sm:$0xff]
      %544 = vmatpush.msra.mxu0 %v543
      %545 = vmatpush.msra.mxu0 %v542
      %546 = vmatpush.msra.mxu0 %v541
      %547 = vmatpush.msra.mxu0 %v540
      %548 = vmatpush.msra.mxu0 %v539
      %549 = vmatpush.msra.mxu0 %v538
      %550 = vmatpush.msra.mxu0 %v537
      %551 = vmatpush.msra.mxu0 %v536
      %552 = vmatpush.msra.mxu0 %v535
      %553 = vmatpush.msra.mxu0 %v534
      %554 = vmatpush.msra.mxu0 %v533
      %555 = vmatpush.msra.mxu0 %v532
      %556 = vmatpush.msra.mxu0 %v531
      %557 = vmatpush.msra.mxu0 %v530
      %558 = vmatpush.msra.mxu0 %v529
      %559 = vmatpush.msra.mxu0 %v528
      %560 = vmatmul.f32.gmra.mxu0 %v495
      %v561 = vpop.f32.mrf.mxu0
      %v562 = vadd.f32 0.0, %v561
      %563 = vmatmul.f32.gmra.mxu0 %v496
      %v564 = vpop.f32.mrf.mxu0
      %v565 = vadd.f32 0.0, %v564
      %566 = vmatmul.f32.gmra.mxu0 %v497
      %v567 = vpop.f32.mrf.mxu0
      %v568 = vadd.f32 0.0, %v567
      %569 = vmatmul.f32.gmra.mxu0 %v498
      %v570 = vpop.f32.mrf.mxu0
      %v571 = vadd.f32 0.0, %v570
      %572 = vmatmul.f32.gmra.mxu0 %v499
      %v573 = vpop.f32.mrf.mxu0
      %v574 = vadd.f32 0.0, %v573
      %575 = vmatmul.f32.gmra.mxu0 %v500
      %v576 = vpop.f32.mrf.mxu0
      %v577 = vadd.f32 0.0, %v576
      %578 = vmatmul.f32.gmra.mxu0 %v501
      %v579 = vpop.f32.mrf.mxu0
      %v580 = vadd.f32 0.0, %v579
      %581 = vmatmul.f32.gmra.mxu0 %v502
      %v582 = vpop.f32.mrf.mxu0
      %v583 = vadd.f32 0.0, %v582
      %584 = vmatmul.f32.gmra.mxu0 %v503
      %v585 = vpop.f32.mrf.mxu0
      %v586 = vadd.f32 0.0, %v585
      %587 = vmatmul.f32.gmra.mxu0 %v504
      %v588 = vpop.f32.mrf.mxu0
      %v589 = vadd.f32 0.0, %v588
      %590 = vmatmul.f32.gmra.mxu0 %v505
      %v591 = vpop.f32.mrf.mxu0
      %v592 = vadd.f32 0.0, %v591
      %593 = vmatmul.f32.gmra.mxu0 %v506
      %v594 = vpop.f32.mrf.mxu0
      %v595 = vadd.f32 0.0, %v594
      %596 = vmatmul.f32.gmra.mxu0 %v507
      %v597 = vpop.f32.mrf.mxu0
      %v598 = vadd.f32 0.0, %v597
      %599 = vmatmul.f32.gmra.mxu0 %v508
      %v600 = vpop.f32.mrf.mxu0
      %v601 = vadd.f32 0.0, %v600
      %602 = vmatmul.f32.gmra.mxu0 %v509
      %v603 = vpop.f32.mrf.mxu0
      %v604 = vadd.f32 0.0, %v603
      %605 = vmatmul.f32.gmra.mxu0 %v510
      %v606 = vpop.f32.mrf.mxu0
      %v607 = vadd.f32 0.0, %v606
      %608 = vmatmul.f32.gmra.mxu0 %v511
      %v609 = vpop.f32.mrf.mxu0
      %v610 = vadd.f32 0.0, %v609
      %611 = vmatmul.f32.gmra.mxu0 %v512
      %v612 = vpop.f32.mrf.mxu0
      %v613 = vadd.f32 0.0, %v612
      %614 = vmatmul.f32.gmra.mxu0 %v513
      %v615 = vpop.f32.mrf.mxu0
      %v616 = vadd.f32 0.0, %v615
      %617 = vmatmul.f32.gmra.mxu0 %v514
      %v618 = vpop.f32.mrf.mxu0
      %v619 = vadd.f32 0.0, %v618
      %620 = vmatmul.f32.gmra.mxu0 %v515
      %v621 = vpop.f32.mrf.mxu0
      %v622 = vadd.f32 0.0, %v621
      %623 = vmatmul.f32.gmra.mxu0 %v516
      %v624 = vpop.f32.mrf.mxu0
      %v625 = vadd.f32 0.0, %v624
      %626 = vmatmul.f32.gmra.mxu0 %v517
      %v627 = vpop.f32.mrf.mxu0
      %v628 = vadd.f32 0.0, %v627
      %629 = vmatmul.f32.gmra.mxu0 %v518
      %v630 = vpop.f32.mrf.mxu0
      %v631 = vadd.f32 0.0, %v630
      %632 = vmatmul.f32.gmra.mxu0 %v519
      %v633 = vpop.f32.mrf.mxu0
      %v634 = vadd.f32 0.0, %v633
      %635 = vmatmul.f32.gmra.mxu0 %v520
      %v636 = vpop.f32.mrf.mxu0
      %v637 = vadd.f32 0.0, %v636
      %638 = vmatmul.f32.gmra.mxu0 %v521
      %v639 = vpop.f32.mrf.mxu0
      %v640 = vadd.f32 0.0, %v639
      %641 = vmatmul.f32.gmra.mxu0 %v522
      %v642 = vpop.f32.mrf.mxu0
      %v643 = vadd.f32 0.0, %v642
      %644 = vmatmul.f32.gmra.mxu0 %v523
      %v645 = vpop.f32.mrf.mxu0
      %v646 = vadd.f32 0.0, %v645
      %647 = vmatmul.f32.gmra.mxu0 %v524
      %v648 = vpop.f32.mrf.mxu0
      %v649 = vadd.f32 0.0, %v648
      %650 = vmatmul.f32.gmra.mxu0 %v525
      %v651 = vpop.f32.mrf.mxu0
      %v652 = vadd.f32 0.0, %v651
      %653 = vmatmul.f32.gmra.mxu0 %v526
      %v654 = vpop.f32.mrf.mxu0
      %v655 = vadd.f32 0.0, %v654
      %656 = vdwg.mxu0
      %657 = vmatpush.msra.mxu0 %v494
      %658 = vmatpush.msra.mxu0 %v493
      %659 = vmatpush.msra.mxu0 %v492
      %660 = vmatpush.msra.mxu0 %v491
      %661 = vmatpush.msra.mxu0 %v490
      %662 = vmatpush.msra.mxu0 %v489
      %663 = vmatpush.msra.mxu0 %v488
      %664 = vmatpush.msra.mxu0 %v487
      %665 = vmatpush.msra.mxu0 %v486
      %666 = vmatpush.msra.mxu0 %v485
      %667 = vmatpush.msra.mxu0 %v484
      %668 = vmatpush.msra.mxu0 %v483
      %669 = vmatpush.msra.mxu0 %v482
      %670 = vmatpush.msra.mxu0 %v481
      %671 = vmatpush.msra.mxu0 %v480
      %672 = vmatpush.msra.mxu0 %v479
      %673 = vmatmul.f32.gmra.mxu0 %v447
      %v674 = vpop.f32.mrf.mxu0
      %v675 = vadd.f32 %v562, %v674
      %676 = vmatmul.f32.gmra.mxu0 %v448
      %v677 = vpop.f32.mrf.mxu0
      %v678 = vadd.f32 %v565, %v677
      %679 = vmatmul.f32.gmra.mxu0 %v449
      %v680 = vpop.f32.mrf.mxu0
      %v681 = vadd.f32 %v568, %v680
      %682 = vmatmul.f32.gmra.mxu0 %v450
      %v683 = vpop.f32.mrf.mxu0
      %v684 = vadd.f32 %v571, %v683
      %685 = vmatmul.f32.gmra.mxu0 %v451
      %v686 = vpop.f32.mrf.mxu0
      %v687 = vadd.f32 %v574, %v686
      %688 = vmatmul.f32.gmra.mxu0 %v452
      %v689 = vpop.f32.mrf.mxu0
      %v690 = vadd.f32 %v577, %v689
      %691 = vmatmul.f32.gmra.mxu0 %v453
      %v692 = vpop.f32.mrf.mxu0
      %v693 = vadd.f32 %v580, %v692
      %694 = vmatmul.f32.gmra.mxu0 %v454
      %v695 = vpop.f32.mrf.mxu0
      %v696 = vadd.f32 %v583, %v695
      %697 = vmatmul.f32.gmra.mxu0 %v455
      %v698 = vpop.f32.mrf.mxu0
      %v699 = vadd.f32 %v586, %v698
      %700 = vmatmul.f32.gmra.mxu0 %v456
      %v701 = vpop.f32.mrf.mxu0
      %v702 = vadd.f32 %v589, %v701
      %703 = vmatmul.f32.gmra.mxu0 %v457
      %v704 = vpop.f32.mrf.mxu0
      %v705 = vadd.f32 %v592, %v704
      %706 = vmatmul.f32.gmra.mxu0 %v458
      %v707 = vpop.f32.mrf.mxu0
      %v708 = vadd.f32 %v595, %v707
      %709 = vmatmul.f32.gmra.mxu0 %v459
      %v710 = vpop.f32.mrf.mxu0
      %v711 = vadd.f32 %v598, %v710
      %712 = vmatmul.f32.gmra.mxu0 %v460
      %v713 = vpop.f32.mrf.mxu0
      %v714 = vadd.f32 %v601, %v713
      %715 = vmatmul.f32.gmra.mxu0 %v461
      %v716 = vpop.f32.mrf.mxu0
      %v717 = vadd.f32 %v604, %v716
      %718 = vmatmul.f32.gmra.mxu0 %v462
      %v719 = vpop.f32.mrf.mxu0
      %v720 = vadd.f32 %v607, %v719
      %721 = vmatmul.f32.gmra.mxu0 %v463
      %v722 = vpop.f32.mrf.mxu0
      %v723 = vadd.f32 %v610, %v722
      %724 = vmatmul.f32.gmra.mxu0 %v464
      %v725 = vpop.f32.mrf.mxu0
      %v726 = vadd.f32 %v613, %v725
      %727 = vmatmul.f32.gmra.mxu0 %v465
      %v728 = vpop.f32.mrf.mxu0
      %v729 = vadd.f32 %v616, %v728
      %730 = vmatmul.f32.gmra.mxu0 %v466
      %v731 = vpop.f32.mrf.mxu0
      %v732 = vadd.f32 %v619, %v731
      %733 = vmatmul.f32.gmra.mxu0 %v467
      %v734 = vpop.f32.mrf.mxu0
      %v735 = vadd.f32 %v622, %v734
      %736 = vmatmul.f32.gmra.mxu0 %v468
      %v737 = vpop.f32.mrf.mxu0
      %v738 = vadd.f32 %v625, %v737
      %739 = vmatmul.f32.gmra.mxu0 %v469
      %v740 = vpop.f32.mrf.mxu0
      %v741 = vadd.f32 %v628, %v740
      %742 = vmatmul.f32.gmra.mxu0 %v470
      %v743 = vpop.f32.mrf.mxu0
      %v744 = vadd.f32 %v631, %v743
      %745 = vmatmul.f32.gmra.mxu0 %v471
      %v746 = vpop.f32.mrf.mxu0
      %v747 = vadd.f32 %v634, %v746
      %748 = vmatmul.f32.gmra.mxu0 %v472
      %v749 = vpop.f32.mrf.mxu0
      %v750 = vadd.f32 %v637, %v749
      %751 = vmatmul.f32.gmra.mxu0 %v473
      %v752 = vpop.f32.mrf.mxu0
      %v753 = vadd.f32 %v640, %v752
      %754 = vmatmul.f32.gmra.mxu0 %v474
      %v755 = vpop.f32.mrf.mxu0
      %v756 = vadd.f32 %v643, %v755
      %757 = vmatmul.f32.gmra.mxu0 %v475
      %v758 = vpop.f32.mrf.mxu0
      %v759 = vadd.f32 %v646, %v758
      %760 = vmatmul.f32.gmra.mxu0 %v476
      %v761 = vpop.f32.mrf.mxu0
      %v762 = vadd.f32 %v649, %v761
      %763 = vmatmul.f32.gmra.mxu0 %v477
      %v764 = vpop.f32.mrf.mxu0
      %v765 = vadd.f32 %v652, %v764
      %766 = vmatmul.f32.gmra.mxu0 %v478
      %v767 = vpop.f32.mrf.mxu0
      %v768 = vadd.f32 %v655, %v767
      %769 = vdwg.mxu0
      %v770 = vld [vmem:[#allocation2 + $0x2] sm:$0xff]
      %v771 = vld [vmem:[#allocation2 + $0x12] sm:$0xff]
      %v772 = vld [vmem:[#allocation2 + $0x22] sm:$0xff]
      %v773 = vld [vmem:[#allocation2 + $0x32] sm:$0xff]
      %v774 = vld [vmem:[#allocation2 + $0x42] sm:$0xff]
      %v775 = vld [vmem:[#allocation2 + $0x52] sm:$0xff]
      %v776 = vld [vmem:[#allocation2 + $0x62] sm:$0xff]
      %v777 = vld [vmem:[#allocation2 + $0x72] sm:$0xff]
      %v778 = vld [vmem:[#allocation2 + $0xa2] sm:$0xff]
      %v779 = vld [vmem:[#allocation2 + $0xb2] sm:$0xff]
      %v780 = vld [vmem:[#allocation2 + $0xc2] sm:$0xff]
      %v781 = vld [vmem:[#allocation2 + $0xd2] sm:$0xff]
      %v782 = vld [vmem:[#allocation2 + $0xe2] sm:$0xff]
      %v783 = vld [vmem:[#allocation2 + $0xf2] sm:$0xff]
      %v784 = vld [vmem:[#allocation2 + $0x102] sm:$0xff]
      %v785 = vld [vmem:[#allocation2 + $0x112] sm:$0xff]
      %v786 = vld [vmem:[#allocation2 + $0x142] sm:$0xff]
      %v787 = vld [vmem:[#allocation2 + $0x152] sm:$0xff]
      %v788 = vld [vmem:[#allocation2 + $0x162] sm:$0xff]
      %v789 = vld [vmem:[#allocation2 + $0x172] sm:$0xff]
      %v790 = vld [vmem:[#allocation2 + $0x182] sm:$0xff]
      %v791 = vld [vmem:[#allocation2 + $0x192] sm:$0xff]
      %v792 = vld [vmem:[#allocation2 + $0x1a2] sm:$0xff]
      %v793 = vld [vmem:[#allocation2 + $0x1b2] sm:$0xff]
      %v794 = vld [vmem:[#allocation2 + $0x1e2] sm:$0xff]
      %v795 = vld [vmem:[#allocation2 + $0x1f2] sm:$0xff]
      %v796 = vld [vmem:[#allocation2 + $0x202] sm:$0xff]
      %v797 = vld [vmem:[#allocation2 + $0x212] sm:$0xff]
      %v798 = vld [vmem:[#allocation2 + $0x222] sm:$0xff]
      %v799 = vld [vmem:[#allocation2 + $0x232] sm:$0xff]
      %v800 = vld [vmem:[#allocation2 + $0x242] sm:$0xff]
      %v801 = vld [vmem:[#allocation2 + $0x252] sm:$0xff]
      %s802 = scalar_lea.vmem %s1, 256
      %v803 = vld [vmem:[%s802] sm:$0xff]
      %v804 = vld [vmem:[%s802 + $0x8] sm:$0xff]
      %v805 = vld [vmem:[%s802 + $0x10] sm:$0xff]
      %v806 = vld [vmem:[%s802 + $0x18] sm:$0xff]
      %v807 = vld [vmem:[%s802 + $0x20] sm:$0xff]
      %v808 = vld [vmem:[%s802 + $0x28] sm:$0xff]
      %v809 = vld [vmem:[%s802 + $0x30] sm:$0xff]
      %v810 = vld [vmem:[%s802 + $0x38] sm:$0xff]
      %v811 = vld [vmem:[%s802 + $0x40] sm:$0xff]
      %v812 = vld [vmem:[%s802 + $0x48] sm:$0xff]
      %v813 = vld [vmem:[%s802 + $0x50] sm:$0xff]
      %v814 = vld [vmem:[%s802 + $0x58] sm:$0xff]
      %v815 = vld [vmem:[%s802 + $0x60] sm:$0xff]
      %v816 = vld [vmem:[%s802 + $0x68] sm:$0xff]
      %v817 = vld [vmem:[%s802 + $0x70] sm:$0xff]
      %v818 = vld [vmem:[%s802 + $0x78] sm:$0xff]
      %819 = vmatpush.msra.mxu0 %v818
      %820 = vmatpush.msra.mxu0 %v817
      %821 = vmatpush.msra.mxu0 %v816
      %822 = vmatpush.msra.mxu0 %v815
      %823 = vmatpush.msra.mxu0 %v814
      %824 = vmatpush.msra.mxu0 %v813
      %825 = vmatpush.msra.mxu0 %v812
      %826 = vmatpush.msra.mxu0 %v811
      %827 = vmatpush.msra.mxu0 %v810
      %828 = vmatpush.msra.mxu0 %v809
      %829 = vmatpush.msra.mxu0 %v808
      %830 = vmatpush.msra.mxu0 %v807
      %831 = vmatpush.msra.mxu0 %v806
      %832 = vmatpush.msra.mxu0 %v805
      %833 = vmatpush.msra.mxu0 %v804
      %834 = vmatpush.msra.mxu0 %v803
      %835 = vmatmul.f32.gmra.mxu0 %v770
      %v836 = vpop.f32.mrf.mxu0
      %v837 = vadd.f32 0.0, %v836
      %838 = vmatmul.f32.gmra.mxu0 %v771
      %v839 = vpop.f32.mrf.mxu0
      %v840 = vadd.f32 0.0, %v839
      %841 = vmatmul.f32.gmra.mxu0 %v772
      %v842 = vpop.f32.mrf.mxu0
      %v843 = vadd.f32 0.0, %v842
      %844 = vmatmul.f32.gmra.mxu0 %v773
      %v845 = vpop.f32.mrf.mxu0
      %v846 = vadd.f32 0.0, %v845
      %847 = vmatmul.f32.gmra.mxu0 %v774
      %v848 = vpop.f32.mrf.mxu0
      %v849 = vadd.f32 0.0, %v848
      %850 = vmatmul.f32.gmra.mxu0 %v775
      %v851 = vpop.f32.mrf.mxu0
      %v852 = vadd.f32 0.0, %v851
      %853 = vmatmul.f32.gmra.mxu0 %v776
      %v854 = vpop.f32.mrf.mxu0
      %v855 = vadd.f32 0.0, %v854
      %856 = vmatmul.f32.gmra.mxu0 %v777
      %v857 = vpop.f32.mrf.mxu0
      %v858 = vadd.f32 0.0, %v857
      %859 = vmatmul.f32.gmra.mxu0 %v778
      %v860 = vpop.f32.mrf.mxu0
      %v861 = vadd.f32 0.0, %v860
      %862 = vmatmul.f32.gmra.mxu0 %v779
      %v863 = vpop.f32.mrf.mxu0
      %v864 = vadd.f32 0.0, %v863
      %865 = vmatmul.f32.gmra.mxu0 %v780
      %v866 = vpop.f32.mrf.mxu0
      %v867 = vadd.f32 0.0, %v866
      %868 = vmatmul.f32.gmra.mxu0 %v781
      %v869 = vpop.f32.mrf.mxu0
      %v870 = vadd.f32 0.0, %v869
      %871 = vmatmul.f32.gmra.mxu0 %v782
      %v872 = vpop.f32.mrf.mxu0
      %v873 = vadd.f32 0.0, %v872
      %874 = vmatmul.f32.gmra.mxu0 %v783
      %v875 = vpop.f32.mrf.mxu0
      %v876 = vadd.f32 0.0, %v875
      %877 = vmatmul.f32.gmra.mxu0 %v784
      %v878 = vpop.f32.mrf.mxu0
      %v879 = vadd.f32 0.0, %v878
      %880 = vmatmul.f32.gmra.mxu0 %v785
      %v881 = vpop.f32.mrf.mxu0
      %v882 = vadd.f32 0.0, %v881
      %883 = vmatmul.f32.gmra.mxu0 %v786
      %v884 = vpop.f32.mrf.mxu0
      %v885 = vadd.f32 0.0, %v884
      %886 = vmatmul.f32.gmra.mxu0 %v787
      %v887 = vpop.f32.mrf.mxu0
      %v888 = vadd.f32 0.0, %v887
      %889 = vmatmul.f32.gmra.mxu0 %v788
      %v890 = vpop.f32.mrf.mxu0
      %v891 = vadd.f32 0.0, %v890
      %892 = vmatmul.f32.gmra.mxu0 %v789
      %v893 = vpop.f32.mrf.mxu0
      %v894 = vadd.f32 0.0, %v893
      %895 = vmatmul.f32.gmra.mxu0 %v790
      %v896 = vpop.f32.mrf.mxu0
      %v897 = vadd.f32 0.0, %v896
      %898 = vmatmul.f32.gmra.mxu0 %v791
      %v899 = vpop.f32.mrf.mxu0
      %v900 = vadd.f32 0.0, %v899
      %901 = vmatmul.f32.gmra.mxu0 %v792
      %v902 = vpop.f32.mrf.mxu0
      %v903 = vadd.f32 0.0, %v902
      %904 = vmatmul.f32.gmra.mxu0 %v793
      %v905 = vpop.f32.mrf.mxu0
      %v906 = vadd.f32 0.0, %v905
      %907 = vmatmul.f32.gmra.mxu0 %v794
      %v908 = vpop.f32.mrf.mxu0
      %v909 = vadd.f32 0.0, %v908
      %910 = vmatmul.f32.gmra.mxu0 %v795
      %v911 = vpop.f32.mrf.mxu0
      %v912 = vadd.f32 0.0, %v911
      %913 = vmatmul.f32.gmra.mxu0 %v796
      %v914 = vpop.f32.mrf.mxu0
      %v915 = vadd.f32 0.0, %v914
      %916 = vmatmul.f32.gmra.mxu0 %v797
      %v917 = vpop.f32.mrf.mxu0
      %v918 = vadd.f32 0.0, %v917
      %919 = vmatmul.f32.gmra.mxu0 %v798
      %v920 = vpop.f32.mrf.mxu0
      %v921 = vadd.f32 0.0, %v920
      %922 = vmatmul.f32.gmra.mxu0 %v799
      %v923 = vpop.f32.mrf.mxu0
      %v924 = vadd.f32 0.0, %v923
      %925 = vmatmul.f32.gmra.mxu0 %v800
      %v926 = vpop.f32.mrf.mxu0
      %v927 = vadd.f32 0.0, %v926
      %928 = vmatmul.f32.gmra.mxu0 %v801
      %v929 = vpop.f32.mrf.mxu0
      %v930 = vadd.f32 0.0, %v929
      %931 = vdwg.mxu0
      %v932 = vadd.f32 %v675, %v837
      %v933 = vadd.f32 %v678, %v840
      %v934 = vadd.f32 %v681, %v843
      %v935 = vadd.f32 %v684, %v846
      %v936 = vadd.f32 %v687, %v849
      %v937 = vadd.f32 %v690, %v852
      %v938 = vadd.f32 %v693, %v855
      %v939 = vadd.f32 %v696, %v858
      %v940 = vadd.f32 %v699, %v861
      %v941 = vadd.f32 %v702, %v864
      %v942 = vadd.f32 %v705, %v867
      %v943 = vadd.f32 %v708, %v870
      %v944 = vadd.f32 %v711, %v873
      %v945 = vadd.f32 %v714, %v876
      %v946 = vadd.f32 %v717, %v879
      %v947 = vadd.f32 %v720, %v882
      %v948 = vadd.f32 %v723, %v885
      %v949 = vadd.f32 %v726, %v888
      %v950 = vadd.f32 %v729, %v891
      %v951 = vadd.f32 %v732, %v894
      %v952 = vadd.f32 %v735, %v897
      %v953 = vadd.f32 %v738, %v900
      %v954 = vadd.f32 %v741, %v903
      %v955 = vadd.f32 %v744, %v906
      %v956 = vadd.f32 %v747, %v909
      %v957 = vadd.f32 %v750, %v912
      %v958 = vadd.f32 %v753, %v915
      %v959 = vadd.f32 %v756, %v918
      %v960 = vadd.f32 %v759, %v921
      %v961 = vadd.f32 %v762, %v924
      %v962 = vadd.f32 %v765, %v927
      %v963 = vadd.f32 %v768, %v930
      %s964 = scalar_lea.vmem [#allocation2], 16
      %v965 = vld [vmem:[%s964] sm:$0xff]
      %v966 = vld [vmem:[%s964 + $0x10] sm:$0xff]
      %v967 = vld [vmem:[%s964 + $0x20] sm:$0xff]
      %v968 = vld [vmem:[%s964 + $0x30] sm:$0xff]
      %v969 = vld [vmem:[%s964 + $0x40] sm:$0xff]
      %v970 = vld [vmem:[%s964 + $0x50] sm:$0xff]
      %v971 = vld [vmem:[%s964 + $0x60] sm:$0xff]
      %v972 = vld [vmem:[%s964 + $0x70] sm:$0xff]
      %v973 = vld [vmem:[%s964 + $0xa0] sm:$0xff]
      %v974 = vld [vmem:[%s964 + $0xb0] sm:$0xff]
      %v975 = vld [vmem:[%s964 + $0xc0] sm:$0xff]
      %v976 = vld [vmem:[%s964 + $0xd0] sm:$0xff]
      %v977 = vld [vmem:[%s964 + $0xe0] sm:$0xff]
      %v978 = vld [vmem:[%s964 + $0xf0] sm:$0xff]
      %v979 = vld [vmem:[%s964 + $0x100] sm:$0xff]
      %v980 = vld [vmem:[%s964 + $0x110] sm:$0xff]
      %v981 = vld [vmem:[%s964 + $0x140] sm:$0xff]
      %v982 = vld [vmem:[%s964 + $0x150] sm:$0xff]
      %v983 = vld [vmem:[%s964 + $0x160] sm:$0xff]
      %v984 = vld [vmem:[%s964 + $0x170] sm:$0xff]
      %v985 = vld [vmem:[%s964 + $0x180] sm:$0xff]
      %v986 = vld [vmem:[%s964 + $0x190] sm:$0xff]
      %v987 = vld [vmem:[%s964 + $0x1a0] sm:$0xff]
      %v988 = vld [vmem:[%s964 + $0x1b0] sm:$0xff]
      %v989 = vld [vmem:[%s964 + $0x1e0] sm:$0xff]
      %v990 = vld [vmem:[%s964 + $0x1f0] sm:$0xff]
      %v991 = vld [vmem:[%s964 + $0x200] sm:$0xff]
      %v992 = vld [vmem:[%s964 + $0x210] sm:$0xff]
      %v993 = vld [vmem:[%s964 + $0x220] sm:$0xff]
      %v994 = vld [vmem:[%s964 + $0x230] sm:$0xff]
      %v995 = vld [vmem:[%s964 + $0x240] sm:$0xff]
      %v996 = vld [vmem:[%s964 + $0x250] sm:$0xff]
      %s997 = scalar_lea.vmem %s1, 384
      %v998 = vld [vmem:[%s997] sm:$0xff]
      %v999 = vld [vmem:[%s997 + $0x8] sm:$0xff]
      %v1000 = vld [vmem:[%s997 + $0x10] sm:$0xff]
      %v1001 = vld [vmem:[%s997 + $0x18] sm:$0xff]
      %v1002 = vld [vmem:[%s997 + $0x20] sm:$0xff]
      %v1003 = vld [vmem:[%s997 + $0x28] sm:$0xff]
      %v1004 = vld [vmem:[%s997 + $0x30] sm:$0xff]
      %v1005 = vld [vmem:[%s997 + $0x38] sm:$0xff]
      %v1006 = vld [vmem:[%s997 + $0x40] sm:$0xff]
      %v1007 = vld [vmem:[%s997 + $0x48] sm:$0xff]
      %v1008 = vld [vmem:[%s997 + $0x50] sm:$0xff]
      %v1009 = vld [vmem:[%s997 + $0x58] sm:$0xff]
      %v1010 = vld [vmem:[%s997 + $0x60] sm:$0xff]
      %v1011 = vld [vmem:[%s997 + $0x68] sm:$0xff]
      %v1012 = vld [vmem:[%s997 + $0x70] sm:$0xff]
      %v1013 = vld [vmem:[%s997 + $0x78] sm:$0xff]
      %1014 = vmatpush.msra.mxu0 %v1013
      %1015 = vmatpush.msra.mxu0 %v1012
      %1016 = vmatpush.msra.mxu0 %v1011
      %1017 = vmatpush.msra.mxu0 %v1010
      %1018 = vmatpush.msra.mxu0 %v1009
      %1019 = vmatpush.msra.mxu0 %v1008
      %1020 = vmatpush.msra.mxu0 %v1007
      %1021 = vmatpush.msra.mxu0 %v1006
      %1022 = vmatpush.msra.mxu0 %v1005
      %1023 = vmatpush.msra.mxu0 %v1004
      %1024 = vmatpush.msra.mxu0 %v1003
      %1025 = vmatpush.msra.mxu0 %v1002
      %1026 = vmatpush.msra.mxu0 %v1001
      %1027 = vmatpush.msra.mxu0 %v1000
      %1028 = vmatpush.msra.mxu0 %v999
      %1029 = vmatpush.msra.mxu0 %v998
      %1030 = vmatmul.f32.gmra.mxu0 %v965
      %v1031 = vpop.f32.mrf.mxu0
      %v1032 = vadd.f32 0.0, %v1031
      %1033 = vmatmul.f32.gmra.mxu0 %v966
      %v1034 = vpop.f32.mrf.mxu0
      %v1035 = vadd.f32 0.0, %v1034
      %1036 = vmatmul.f32.gmra.mxu0 %v967
      %v1037 = vpop.f32.mrf.mxu0
      %v1038 = vadd.f32 0.0, %v1037
      %1039 = vmatmul.f32.gmra.mxu0 %v968
      %v1040 = vpop.f32.mrf.mxu0
      %v1041 = vadd.f32 0.0, %v1040
      %1042 = vmatmul.f32.gmra.mxu0 %v969
      %v1043 = vpop.f32.mrf.mxu0
      %v1044 = vadd.f32 0.0, %v1043
      %1045 = vmatmul.f32.gmra.mxu0 %v970
      %v1046 = vpop.f32.mrf.mxu0
      %v1047 = vadd.f32 0.0, %v1046
      %1048 = vmatmul.f32.gmra.mxu0 %v971
      %v1049 = vpop.f32.mrf.mxu0
      %v1050 = vadd.f32 0.0, %v1049
      %1051 = vmatmul.f32.gmra.mxu0 %v972
      %v1052 = vpop.f32.mrf.mxu0
      %v1053 = vadd.f32 0.0, %v1052
      %1054 = vmatmul.f32.gmra.mxu0 %v973
      %v1055 = vpop.f32.mrf.mxu0
      %v1056 = vadd.f32 0.0, %v1055
      %1057 = vmatmul.f32.gmra.mxu0 %v974
      %v1058 = vpop.f32.mrf.mxu0
      %v1059 = vadd.f32 0.0, %v1058
      %1060 = vmatmul.f32.gmra.mxu0 %v975
      %v1061 = vpop.f32.mrf.mxu0
      %v1062 = vadd.f32 0.0, %v1061
      %1063 = vmatmul.f32.gmra.mxu0 %v976
      %v1064 = vpop.f32.mrf.mxu0
      %v1065 = vadd.f32 0.0, %v1064
      %1066 = vmatmul.f32.gmra.mxu0 %v977
      %v1067 = vpop.f32.mrf.mxu0
      %v1068 = vadd.f32 0.0, %v1067
      %1069 = vmatmul.f32.gmra.mxu0 %v978
      %v1070 = vpop.f32.mrf.mxu0
      %v1071 = vadd.f32 0.0, %v1070
      %1072 = vmatmul.f32.gmra.mxu0 %v979
      %v1073 = vpop.f32.mrf.mxu0
      %v1074 = vadd.f32 0.0, %v1073
      %1075 = vmatmul.f32.gmra.mxu0 %v980
      %v1076 = vpop.f32.mrf.mxu0
      %v1077 = vadd.f32 0.0, %v1076
      %1078 = vmatmul.f32.gmra.mxu0 %v981
      %v1079 = vpop.f32.mrf.mxu0
      %v1080 = vadd.f32 0.0, %v1079
      %1081 = vmatmul.f32.gmra.mxu0 %v982
      %v1082 = vpop.f32.mrf.mxu0
      %v1083 = vadd.f32 0.0, %v1082
      %1084 = vmatmul.f32.gmra.mxu0 %v983
      %v1085 = vpop.f32.mrf.mxu0
      %v1086 = vadd.f32 0.0, %v1085
      %1087 = vmatmul.f32.gmra.mxu0 %v984
      %v1088 = vpop.f32.mrf.mxu0
      %v1089 = vadd.f32 0.0, %v1088
      %1090 = vmatmul.f32.gmra.mxu0 %v985
      %v1091 = vpop.f32.mrf.mxu0
      %v1092 = vadd.f32 0.0, %v1091
      %1093 = vmatmul.f32.gmra.mxu0 %v986
      %v1094 = vpop.f32.mrf.mxu0
      %v1095 = vadd.f32 0.0, %v1094
      %1096 = vmatmul.f32.gmra.mxu0 %v987
      %v1097 = vpop.f32.mrf.mxu0
      %v1098 = vadd.f32 0.0, %v1097
      %1099 = vmatmul.f32.gmra.mxu0 %v988
      %v1100 = vpop.f32.mrf.mxu0
      %v1101 = vadd.f32 0.0, %v1100
      %1102 = vmatmul.f32.gmra.mxu0 %v989
      %v1103 = vpop.f32.mrf.mxu0
      %v1104 = vadd.f32 0.0, %v1103
      %1105 = vmatmul.f32.gmra.mxu0 %v990
      %v1106 = vpop.f32.mrf.mxu0
      %v1107 = vadd.f32 0.0, %v1106
      %1108 = vmatmul.f32.gmra.mxu0 %v991
      %v1109 = vpop.f32.mrf.mxu0
      %v1110 = vadd.f32 0.0, %v1109
      %1111 = vmatmul.f32.gmra.mxu0 %v992
      %v1112 = vpop.f32.mrf.mxu0
      %v1113 = vadd.f32 0.0, %v1112
      %1114 = vmatmul.f32.gmra.mxu0 %v993
      %v1115 = vpop.f32.mrf.mxu0
      %v1116 = vadd.f32 0.0, %v1115
      %1117 = vmatmul.f32.gmra.mxu0 %v994
      %v1118 = vpop.f32.mrf.mxu0
      %v1119 = vadd.f32 0.0, %v1118
      %1120 = vmatmul.f32.gmra.mxu0 %v995
      %v1121 = vpop.f32.mrf.mxu0
      %v1122 = vadd.f32 0.0, %v1121
      %1123 = vmatmul.f32.gmra.mxu0 %v996
      %v1124 = vpop.f32.mrf.mxu0
      %v1125 = vadd.f32 0.0, %v1124
      %1126 = vdwg.mxu0
      %v1127 = vadd.f32 %v932, %v1032
      %v1128 = vadd.f32 %v933, %v1035
      %v1129 = vadd.f32 %v934, %v1038
      %v1130 = vadd.f32 %v935, %v1041
      %v1131 = vadd.f32 %v936, %v1044
      %v1132 = vadd.f32 %v937, %v1047
      %v1133 = vadd.f32 %v938, %v1050
      %v1134 = vadd.f32 %v939, %v1053
      %v1135 = vadd.f32 %v940, %v1056
      %v1136 = vadd.f32 %v941, %v1059
      %v1137 = vadd.f32 %v942, %v1062
      %v1138 = vadd.f32 %v943, %v1065
      %v1139 = vadd.f32 %v944, %v1068
      %v1140 = vadd.f32 %v945, %v1071
      %v1141 = vadd.f32 %v946, %v1074
      %v1142 = vadd.f32 %v947, %v1077
      %v1143 = vadd.f32 %v948, %v1080
      %v1144 = vadd.f32 %v949, %v1083
      %v1145 = vadd.f32 %v950, %v1086
      %v1146 = vadd.f32 %v951, %v1089
      %v1147 = vadd.f32 %v952, %v1092
      %v1148 = vadd.f32 %v953, %v1095
      %v1149 = vadd.f32 %v954, %v1098
      %v1150 = vadd.f32 %v955, %v1101
      %v1151 = vadd.f32 %v956, %v1104
      %v1152 = vadd.f32 %v957, %v1107
      %v1153 = vadd.f32 %v958, %v1110
      %v1154 = vadd.f32 %v959, %v1113
      %v1155 = vadd.f32 %v960, %v1116
      %v1156 = vadd.f32 %v961, %v1119
      %v1157 = vadd.f32 %v962, %v1122
      %v1158 = vadd.f32 %v963, %v1125
      %v1159 = vld [vmem:[%s964 + $0x1] sm:$0xff]
      %v1160 = vld [vmem:[%s964 + $0x11] sm:$0xff]
      %v1161 = vld [vmem:[%s964 + $0x21] sm:$0xff]
      %v1162 = vld [vmem:[%s964 + $0x31] sm:$0xff]
      %v1163 = vld [vmem:[%s964 + $0x41] sm:$0xff]
      %v1164 = vld [vmem:[%s964 + $0x51] sm:$0xff]
      %v1165 = vld [vmem:[%s964 + $0x61] sm:$0xff]
      %v1166 = vld [vmem:[%s964 + $0x71] sm:$0xff]
      %v1167 = vld [vmem:[%s964 + $0xa1] sm:$0xff]
      %v1168 = vld [vmem:[%s964 + $0xb1] sm:$0xff]
      %v1169 = vld [vmem:[%s964 + $0xc1] sm:$0xff]
      %v1170 = vld [vmem:[%s964 + $0xd1] sm:$0xff]
      %v1171 = vld [vmem:[%s964 + $0xe1] sm:$0xff]
      %v1172 = vld [vmem:[%s964 + $0xf1] sm:$0xff]
      %v1173 = vld [vmem:[%s964 + $0x101] sm:$0xff]
      %v1174 = vld [vmem:[%s964 + $0x111] sm:$0xff]
      %v1175 = vld [vmem:[%s964 + $0x141] sm:$0xff]
      %v1176 = vld [vmem:[%s964 + $0x151] sm:$0xff]
      %v1177 = vld [vmem:[%s964 + $0x161] sm:$0xff]
      %v1178 = vld [vmem:[%s964 + $0x171] sm:$0xff]
      %v1179 = vld [vmem:[%s964 + $0x181] sm:$0xff]
      %v1180 = vld [vmem:[%s964 + $0x191] sm:$0xff]
      %v1181 = vld [vmem:[%s964 + $0x1a1] sm:$0xff]
      %v1182 = vld [vmem:[%s964 + $0x1b1] sm:$0xff]
      %v1183 = vld [vmem:[%s964 + $0x1e1] sm:$0xff]
      %v1184 = vld [vmem:[%s964 + $0x1f1] sm:$0xff]
      %v1185 = vld [vmem:[%s964 + $0x201] sm:$0xff]
      %v1186 = vld [vmem:[%s964 + $0x211] sm:$0xff]
      %v1187 = vld [vmem:[%s964 + $0x221] sm:$0xff]
      %v1188 = vld [vmem:[%s964 + $0x231] sm:$0xff]
      %v1189 = vld [vmem:[%s964 + $0x241] sm:$0xff]
      %v1190 = vld [vmem:[%s964 + $0x251] sm:$0xff]
      %s1191 = scalar_lea.vmem %s1, 512
      %v1192 = vld [vmem:[%s1191] sm:$0xff]
      %v1193 = vld [vmem:[%s1191 + $0x8] sm:$0xff]
      %v1194 = vld [vmem:[%s1191 + $0x10] sm:$0xff]
      %v1195 = vld [vmem:[%s1191 + $0x18] sm:$0xff]
      %v1196 = vld [vmem:[%s1191 + $0x20] sm:$0xff]
      %v1197 = vld [vmem:[%s1191 + $0x28] sm:$0xff]
      %v1198 = vld [vmem:[%s1191 + $0x30] sm:$0xff]
      %v1199 = vld [vmem:[%s1191 + $0x38] sm:$0xff]
      %v1200 = vld [vmem:[%s1191 + $0x40] sm:$0xff]
      %v1201 = vld [vmem:[%s1191 + $0x48] sm:$0xff]
      %v1202 = vld [vmem:[%s1191 + $0x50] sm:$0xff]
      %v1203 = vld [vmem:[%s1191 + $0x58] sm:$0xff]
      %v1204 = vld [vmem:[%s1191 + $0x60] sm:$0xff]
      %v1205 = vld [vmem:[%s1191 + $0x68] sm:$0xff]
      %v1206 = vld [vmem:[%s1191 + $0x70] sm:$0xff]
      %v1207 = vld [vmem:[%s1191 + $0x78] sm:$0xff]
      %1208 = vmatpush.msra.mxu0 %v1207
      %1209 = vmatpush.msra.mxu0 %v1206
      %1210 = vmatpush.msra.mxu0 %v1205
      %1211 = vmatpush.msra.mxu0 %v1204
      %1212 = vmatpush.msra.mxu0 %v1203
      %1213 = vmatpush.msra.mxu0 %v1202
      %1214 = vmatpush.msra.mxu0 %v1201
      %1215 = vmatpush.msra.mxu0 %v1200
      %1216 = vmatpush.msra.mxu0 %v1199
      %1217 = vmatpush.msra.mxu0 %v1198
      %1218 = vmatpush.msra.mxu0 %v1197
      %1219 = vmatpush.msra.mxu0 %v1196
      %1220 = vmatpush.msra.mxu0 %v1195
      %1221 = vmatpush.msra.mxu0 %v1194
      %1222 = vmatpush.msra.mxu0 %v1193
      %1223 = vmatpush.msra.mxu0 %v1192
      %1224 = vmatmul.f32.gmra.mxu0 %v1159
      %v1225 = vpop.f32.mrf.mxu0
      %v1226 = vadd.f32 0.0, %v1225
      %1227 = vmatmul.f32.gmra.mxu0 %v1160
      %v1228 = vpop.f32.mrf.mxu0
      %v1229 = vadd.f32 0.0, %v1228
      %1230 = vmatmul.f32.gmra.mxu0 %v1161
      %v1231 = vpop.f32.mrf.mxu0
      %v1232 = vadd.f32 0.0, %v1231
      %1233 = vmatmul.f32.gmra.mxu0 %v1162
      %v1234 = vpop.f32.mrf.mxu0
      %v1235 = vadd.f32 0.0, %v1234
      %1236 = vmatmul.f32.gmra.mxu0 %v1163
      %v1237 = vpop.f32.mrf.mxu0
      %v1238 = vadd.f32 0.0, %v1237
      %1239 = vmatmul.f32.gmra.mxu0 %v1164
      %v1240 = vpop.f32.mrf.mxu0
      %v1241 = vadd.f32 0.0, %v1240
      %1242 = vmatmul.f32.gmra.mxu0 %v1165
      %v1243 = vpop.f32.mrf.mxu0
      %v1244 = vadd.f32 0.0, %v1243
      %1245 = vmatmul.f32.gmra.mxu0 %v1166
      %v1246 = vpop.f32.mrf.mxu0
      %v1247 = vadd.f32 0.0, %v1246
      %1248 = vmatmul.f32.gmra.mxu0 %v1167
      %v1249 = vpop.f32.mrf.mxu0
      %v1250 = vadd.f32 0.0, %v1249
      %1251 = vmatmul.f32.gmra.mxu0 %v1168
      %v1252 = vpop.f32.mrf.mxu0
      %v1253 = vadd.f32 0.0, %v1252
      %1254 = vmatmul.f32.gmra.mxu0 %v1169
      %v1255 = vpop.f32.mrf.mxu0
      %v1256 = vadd.f32 0.0, %v1255
      %1257 = vmatmul.f32.gmra.mxu0 %v1170
      %v1258 = vpop.f32.mrf.mxu0
      %v1259 = vadd.f32 0.0, %v1258
      %1260 = vmatmul.f32.gmra.mxu0 %v1171
      %v1261 = vpop.f32.mrf.mxu0
      %v1262 = vadd.f32 0.0, %v1261
      %1263 = vmatmul.f32.gmra.mxu0 %v1172
      %v1264 = vpop.f32.mrf.mxu0
      %v1265 = vadd.f32 0.0, %v1264
      %1266 = vmatmul.f32.gmra.mxu0 %v1173
      %v1267 = vpop.f32.mrf.mxu0
      %v1268 = vadd.f32 0.0, %v1267
      %1269 = vmatmul.f32.gmra.mxu0 %v1174
      %v1270 = vpop.f32.mrf.mxu0
      %v1271 = vadd.f32 0.0, %v1270
      %1272 = vmatmul.f32.gmra.mxu0 %v1175
      %v1273 = vpop.f32.mrf.mxu0
      %v1274 = vadd.f32 0.0, %v1273
      %1275 = vmatmul.f32.gmra.mxu0 %v1176
      %v1276 = vpop.f32.mrf.mxu0
      %v1277 = vadd.f32 0.0, %v1276
      %1278 = vmatmul.f32.gmra.mxu0 %v1177
      %v1279 = vpop.f32.mrf.mxu0
      %v1280 = vadd.f32 0.0, %v1279
      %1281 = vmatmul.f32.gmra.mxu0 %v1178
      %v1282 = vpop.f32.mrf.mxu0
      %v1283 = vadd.f32 0.0, %v1282
      %1284 = vmatmul.f32.gmra.mxu0 %v1179
      %v1285 = vpop.f32.mrf.mxu0
      %v1286 = vadd.f32 0.0, %v1285
      %1287 = vmatmul.f32.gmra.mxu0 %v1180
      %v1288 = vpop.f32.mrf.mxu0
      %v1289 = vadd.f32 0.0, %v1288
      %1290 = vmatmul.f32.gmra.mxu0 %v1181
      %v1291 = vpop.f32.mrf.mxu0
      %v1292 = vadd.f32 0.0, %v1291
      %1293 = vmatmul.f32.gmra.mxu0 %v1182
      %v1294 = vpop.f32.mrf.mxu0
      %v1295 = vadd.f32 0.0, %v1294
      %1296 = vmatmul.f32.gmra.mxu0 %v1183
      %v1297 = vpop.f32.mrf.mxu0
      %v1298 = vadd.f32 0.0, %v1297
      %1299 = vmatmul.f32.gmra.mxu0 %v1184
      %v1300 = vpop.f32.mrf.mxu0
      %v1301 = vadd.f32 0.0, %v1300
      %1302 = vmatmul.f32.gmra.mxu0 %v1185
      %v1303 = vpop.f32.mrf.mxu0
      %v1304 = vadd.f32 0.0, %v1303
      %1305 = vmatmul.f32.gmra.mxu0 %v1186
      %v1306 = vpop.f32.mrf.mxu0
      %v1307 = vadd.f32 0.0, %v1306
      %1308 = vmatmul.f32.gmra.mxu0 %v1187
      %v1309 = vpop.f32.mrf.mxu0
      %v1310 = vadd.f32 0.0, %v1309
      %1311 = vmatmul.f32.gmra.mxu0 %v1188
      %v1312 = vpop.f32.mrf.mxu0
      %v1313 = vadd.f32 0.0, %v1312
      %1314 = vmatmul.f32.gmra.mxu0 %v1189
      %v1315 = vpop.f32.mrf.mxu0
      %v1316 = vadd.f32 0.0, %v1315
      %1317 = vmatmul.f32.gmra.mxu0 %v1190
      %v1318 = vpop.f32.mrf.mxu0
      %v1319 = vadd.f32 0.0, %v1318
      %1320 = vdwg.mxu0
      %v1321 = vadd.f32 %v1127, %v1226
      %v1322 = vadd.f32 %v1128, %v1229
      %v1323 = vadd.f32 %v1129, %v1232
      %v1324 = vadd.f32 %v1130, %v1235
      %v1325 = vadd.f32 %v1131, %v1238
      %v1326 = vadd.f32 %v1132, %v1241
      %v1327 = vadd.f32 %v1133, %v1244
      %v1328 = vadd.f32 %v1134, %v1247
      %v1329 = vadd.f32 %v1135, %v1250
      %v1330 = vadd.f32 %v1136, %v1253
      %v1331 = vadd.f32 %v1137, %v1256
      %v1332 = vadd.f32 %v1138, %v1259
      %v1333 = vadd.f32 %v1139, %v1262
      %v1334 = vadd.f32 %v1140, %v1265
      %v1335 = vadd.f32 %v1141, %v1268
      %v1336 = vadd.f32 %v1142, %v1271
      %v1337 = vadd.f32 %v1143, %v1274
      %v1338 = vadd.f32 %v1144, %v1277
      %v1339 = vadd.f32 %v1145, %v1280
      %v1340 = vadd.f32 %v1146, %v1283
      %v1341 = vadd.f32 %v1147, %v1286
      %v1342 = vadd.f32 %v1148, %v1289
      %v1343 = vadd.f32 %v1149, %v1292
      %v1344 = vadd.f32 %v1150, %v1295
      %v1345 = vadd.f32 %v1151, %v1298
      %v1346 = vadd.f32 %v1152, %v1301
      %v1347 = vadd.f32 %v1153, %v1304
      %v1348 = vadd.f32 %v1154, %v1307
      %v1349 = vadd.f32 %v1155, %v1310
      %v1350 = vadd.f32 %v1156, %v1313
      %v1351 = vadd.f32 %v1157, %v1316
      %v1352 = vadd.f32 %v1158, %v1319
      %v1353 = vld [vmem:[%s964 + $0x2] sm:$0xff]
      %v1354 = vld [vmem:[%s964 + $0x12] sm:$0xff]
      %v1355 = vld [vmem:[%s964 + $0x22] sm:$0xff]
      %v1356 = vld [vmem:[%s964 + $0x32] sm:$0xff]
      %v1357 = vld [vmem:[%s964 + $0x42] sm:$0xff]
      %v1358 = vld [vmem:[%s964 + $0x52] sm:$0xff]
      %v1359 = vld [vmem:[%s964 + $0x62] sm:$0xff]
      %v1360 = vld [vmem:[%s964 + $0x72] sm:$0xff]
      %v1361 = vld [vmem:[%s964 + $0xa2] sm:$0xff]
      %v1362 = vld [vmem:[%s964 + $0xb2] sm:$0xff]
      %v1363 = vld [vmem:[%s964 + $0xc2] sm:$0xff]
      %v1364 = vld [vmem:[%s964 + $0xd2] sm:$0xff]
      %v1365 = vld [vmem:[%s964 + $0xe2] sm:$0xff]
      %v1366 = vld [vmem:[%s964 + $0xf2] sm:$0xff]
      %v1367 = vld [vmem:[%s964 + $0x102] sm:$0xff]
      %v1368 = vld [vmem:[%s964 + $0x112] sm:$0xff]
      %v1369 = vld [vmem:[%s964 + $0x142] sm:$0xff]
      %v1370 = vld [vmem:[%s964 + $0x152] sm:$0xff]
      %v1371 = vld [vmem:[%s964 + $0x162] sm:$0xff]
      %v1372 = vld [vmem:[%s964 + $0x172] sm:$0xff]
      %v1373 = vld [vmem:[%s964 + $0x182] sm:$0xff]
      %v1374 = vld [vmem:[%s964 + $0x192] sm:$0xff]
      %v1375 = vld [vmem:[%s964 + $0x1a2] sm:$0xff]
      %v1376 = vld [vmem:[%s964 + $0x1b2] sm:$0xff]
      %v1377 = vld [vmem:[%s964 + $0x1e2] sm:$0xff]
      %v1378 = vld [vmem:[%s964 + $0x1f2] sm:$0xff]
      %v1379 = vld [vmem:[%s964 + $0x202] sm:$0xff]
      %v1380 = vld [vmem:[%s964 + $0x212] sm:$0xff]
      %v1381 = vld [vmem:[%s964 + $0x222] sm:$0xff]
      %v1382 = vld [vmem:[%s964 + $0x232] sm:$0xff]
      %v1383 = vld [vmem:[%s964 + $0x242] sm:$0xff]
      %v1384 = vld [vmem:[%s964 + $0x252] sm:$0xff]
      %s1385 = scalar_lea.vmem %s1, 640
      %v1386 = vld [vmem:[%s1385] sm:$0xff]
      %v1387 = vld [vmem:[%s1385 + $0x8] sm:$0xff]
      %v1388 = vld [vmem:[%s1385 + $0x10] sm:$0xff]
      %v1389 = vld [vmem:[%s1385 + $0x18] sm:$0xff]
      %v1390 = vld [vmem:[%s1385 + $0x20] sm:$0xff]
      %v1391 = vld [vmem:[%s1385 + $0x28] sm:$0xff]
      %v1392 = vld [vmem:[%s1385 + $0x30] sm:$0xff]
      %v1393 = vld [vmem:[%s1385 + $0x38] sm:$0xff]
      %v1394 = vld [vmem:[%s1385 + $0x40] sm:$0xff]
      %v1395 = vld [vmem:[%s1385 + $0x48] sm:$0xff]
      %v1396 = vld [vmem:[%s1385 + $0x50] sm:$0xff]
      %v1397 = vld [vmem:[%s1385 + $0x58] sm:$0xff]
      %v1398 = vld [vmem:[%s1385 + $0x60] sm:$0xff]
      %v1399 = vld [vmem:[%s1385 + $0x68] sm:$0xff]
      %v1400 = vld [vmem:[%s1385 + $0x70] sm:$0xff]
      %v1401 = vld [vmem:[%s1385 + $0x78] sm:$0xff]
      %1402 = vmatpush.msra.mxu0 %v1401
      %1403 = vmatpush.msra.mxu0 %v1400
      %1404 = vmatpush.msra.mxu0 %v1399
      %1405 = vmatpush.msra.mxu0 %v1398
      %1406 = vmatpush.msra.mxu0 %v1397
      %1407 = vmatpush.msra.mxu0 %v1396
      %1408 = vmatpush.msra.mxu0 %v1395
      %1409 = vmatpush.msra.mxu0 %v1394
      %1410 = vmatpush.msra.mxu0 %v1393
      %1411 = vmatpush.msra.mxu0 %v1392
      %1412 = vmatpush.msra.mxu0 %v1391
      %1413 = vmatpush.msra.mxu0 %v1390
      %1414 = vmatpush.msra.mxu0 %v1389
      %1415 = vmatpush.msra.mxu0 %v1388
      %1416 = vmatpush.msra.mxu0 %v1387
      %1417 = vmatpush.msra.mxu0 %v1386
      %1418 = vmatmul.f32.gmra.mxu0 %v1353
      %v1419 = vpop.f32.mrf.mxu0
      %v1420 = vadd.f32 0.0, %v1419
      %1421 = vmatmul.f32.gmra.mxu0 %v1354
      %v1422 = vpop.f32.mrf.mxu0
      %v1423 = vadd.f32 0.0, %v1422
      %1424 = vmatmul.f32.gmra.mxu0 %v1355
      %v1425 = vpop.f32.mrf.mxu0
      %v1426 = vadd.f32 0.0, %v1425
      %1427 = vmatmul.f32.gmra.mxu0 %v1356
      %v1428 = vpop.f32.mrf.mxu0
      %v1429 = vadd.f32 0.0, %v1428
      %1430 = vmatmul.f32.gmra.mxu0 %v1357
      %v1431 = vpop.f32.mrf.mxu0
      %v1432 = vadd.f32 0.0, %v1431
      %1433 = vmatmul.f32.gmra.mxu0 %v1358
      %v1434 = vpop.f32.mrf.mxu0
      %v1435 = vadd.f32 0.0, %v1434
      %1436 = vmatmul.f32.gmra.mxu0 %v1359
      %v1437 = vpop.f32.mrf.mxu0
      %v1438 = vadd.f32 0.0, %v1437
      %1439 = vmatmul.f32.gmra.mxu0 %v1360
      %v1440 = vpop.f32.mrf.mxu0
      %v1441 = vadd.f32 0.0, %v1440
      %1442 = vmatmul.f32.gmra.mxu0 %v1361
      %v1443 = vpop.f32.mrf.mxu0
      %v1444 = vadd.f32 0.0, %v1443
      %1445 = vmatmul.f32.gmra.mxu0 %v1362
      %v1446 = vpop.f32.mrf.mxu0
      %v1447 = vadd.f32 0.0, %v1446
      %1448 = vmatmul.f32.gmra.mxu0 %v1363
      %v1449 = vpop.f32.mrf.mxu0
      %v1450 = vadd.f32 0.0, %v1449
      %1451 = vmatmul.f32.gmra.mxu0 %v1364
      %v1452 = vpop.f32.mrf.mxu0
      %v1453 = vadd.f32 0.0, %v1452
      %1454 = vmatmul.f32.gmra.mxu0 %v1365
      %v1455 = vpop.f32.mrf.mxu0
      %v1456 = vadd.f32 0.0, %v1455
      %1457 = vmatmul.f32.gmra.mxu0 %v1366
      %v1458 = vpop.f32.mrf.mxu0
      %v1459 = vadd.f32 0.0, %v1458
      %1460 = vmatmul.f32.gmra.mxu0 %v1367
      %v1461 = vpop.f32.mrf.mxu0
      %v1462 = vadd.f32 0.0, %v1461
      %1463 = vmatmul.f32.gmra.mxu0 %v1368
      %v1464 = vpop.f32.mrf.mxu0
      %v1465 = vadd.f32 0.0, %v1464
      %1466 = vmatmul.f32.gmra.mxu0 %v1369
      %v1467 = vpop.f32.mrf.mxu0
      %v1468 = vadd.f32 0.0, %v1467
      %1469 = vmatmul.f32.gmra.mxu0 %v1370
      %v1470 = vpop.f32.mrf.mxu0
      %v1471 = vadd.f32 0.0, %v1470
      %1472 = vmatmul.f32.gmra.mxu0 %v1371
      %v1473 = vpop.f32.mrf.mxu0
      %v1474 = vadd.f32 0.0, %v1473
      %1475 = vmatmul.f32.gmra.mxu0 %v1372
      %v1476 = vpop.f32.mrf.mxu0
      %v1477 = vadd.f32 0.0, %v1476
      %1478 = vmatmul.f32.gmra.mxu0 %v1373
      %v1479 = vpop.f32.mrf.mxu0
      %v1480 = vadd.f32 0.0, %v1479
      %1481 = vmatmul.f32.gmra.mxu0 %v1374
      %v1482 = vpop.f32.mrf.mxu0
      %v1483 = vadd.f32 0.0, %v1482
      %1484 = vmatmul.f32.gmra.mxu0 %v1375
      %v1485 = vpop.f32.mrf.mxu0
      %v1486 = vadd.f32 0.0, %v1485
      %1487 = vmatmul.f32.gmra.mxu0 %v1376
      %v1488 = vpop.f32.mrf.mxu0
      %v1489 = vadd.f32 0.0, %v1488
      %1490 = vmatmul.f32.gmra.mxu0 %v1377
      %v1491 = vpop.f32.mrf.mxu0
      %v1492 = vadd.f32 0.0, %v1491
      %1493 = vmatmul.f32.gmra.mxu0 %v1378
      %v1494 = vpop.f32.mrf.mxu0
      %v1495 = vadd.f32 0.0, %v1494
      %1496 = vmatmul.f32.gmra.mxu0 %v1379
      %v1497 = vpop.f32.mrf.mxu0
      %v1498 = vadd.f32 0.0, %v1497
      %1499 = vmatmul.f32.gmra.mxu0 %v1380
      %v1500 = vpop.f32.mrf.mxu0
      %v1501 = vadd.f32 0.0, %v1500
      %1502 = vmatmul.f32.gmra.mxu0 %v1381
      %v1503 = vpop.f32.mrf.mxu0
      %v1504 = vadd.f32 0.0, %v1503
      %1505 = vmatmul.f32.gmra.mxu0 %v1382
      %v1506 = vpop.f32.mrf.mxu0
      %v1507 = vadd.f32 0.0, %v1506
      %1508 = vmatmul.f32.gmra.mxu0 %v1383
      %v1509 = vpop.f32.mrf.mxu0
      %v1510 = vadd.f32 0.0, %v1509
      %1511 = vmatmul.f32.gmra.mxu0 %v1384
      %v1512 = vpop.f32.mrf.mxu0
      %v1513 = vadd.f32 0.0, %v1512
      %1514 = vdwg.mxu0
      %v1515 = vadd.f32 %v1321, %v1420
      %v1516 = vadd.f32 %v1322, %v1423
      %v1517 = vadd.f32 %v1323, %v1426
      %v1518 = vadd.f32 %v1324, %v1429
      %v1519 = vadd.f32 %v1325, %v1432
      %v1520 = vadd.f32 %v1326, %v1435
      %v1521 = vadd.f32 %v1327, %v1438
      %v1522 = vadd.f32 %v1328, %v1441
      %v1523 = vadd.f32 %v1329, %v1444
      %v1524 = vadd.f32 %v1330, %v1447
      %v1525 = vadd.f32 %v1331, %v1450
      %v1526 = vadd.f32 %v1332, %v1453
      %v1527 = vadd.f32 %v1333, %v1456
      %v1528 = vadd.f32 %v1334, %v1459
      %v1529 = vadd.f32 %v1335, %v1462
      %v1530 = vadd.f32 %v1336, %v1465
      %v1531 = vadd.f32 %v1337, %v1468
      %v1532 = vadd.f32 %v1338, %v1471
      %v1533 = vadd.f32 %v1339, %v1474
      %v1534 = vadd.f32 %v1340, %v1477
      %v1535 = vadd.f32 %v1341, %v1480
      %v1536 = vadd.f32 %v1342, %v1483
      %v1537 = vadd.f32 %v1343, %v1486
      %v1538 = vadd.f32 %v1344, %v1489
      %v1539 = vadd.f32 %v1345, %v1492
      %v1540 = vadd.f32 %v1346, %v1495
      %v1541 = vadd.f32 %v1347, %v1498
      %v1542 = vadd.f32 %v1348, %v1501
      %v1543 = vadd.f32 %v1349, %v1504
      %v1544 = vadd.f32 %v1350, %v1507
      %v1545 = vadd.f32 %v1351, %v1510
      %v1546 = vadd.f32 %v1352, %v1513
      %s1547 = scalar_lea.vmem [#allocation2], 32
      %v1548 = vld [vmem:[%s1547] sm:$0xff]
      %v1549 = vld [vmem:[%s1547 + $0x10] sm:$0xff]
      %v1550 = vld [vmem:[%s1547 + $0x20] sm:$0xff]
      %v1551 = vld [vmem:[%s1547 + $0x30] sm:$0xff]
      %v1552 = vld [vmem:[%s1547 + $0x40] sm:$0xff]
      %v1553 = vld [vmem:[%s1547 + $0x50] sm:$0xff]
      %v1554 = vld [vmem:[%s1547 + $0x60] sm:$0xff]
      %v1555 = vld [vmem:[%s1547 + $0x70] sm:$0xff]
      %v1556 = vld [vmem:[%s1547 + $0xa0] sm:$0xff]
      %v1557 = vld [vmem:[%s1547 + $0xb0] sm:$0xff]
      %v1558 = vld [vmem:[%s1547 + $0xc0] sm:$0xff]
      %v1559 = vld [vmem:[%s1547 + $0xd0] sm:$0xff]
      %v1560 = vld [vmem:[%s1547 + $0xe0] sm:$0xff]
      %v1561 = vld [vmem:[%s1547 + $0xf0] sm:$0xff]
      %v1562 = vld [vmem:[%s1547 + $0x100] sm:$0xff]
      %v1563 = vld [vmem:[%s1547 + $0x110] sm:$0xff]
      %v1564 = vld [vmem:[%s1547 + $0x140] sm:$0xff]
      %v1565 = vld [vmem:[%s1547 + $0x150] sm:$0xff]
      %v1566 = vld [vmem:[%s1547 + $0x160] sm:$0xff]
      %v1567 = vld [vmem:[%s1547 + $0x170] sm:$0xff]
      %v1568 = vld [vmem:[%s1547 + $0x180] sm:$0xff]
      %v1569 = vld [vmem:[%s1547 + $0x190] sm:$0xff]
      %v1570 = vld [vmem:[%s1547 + $0x1a0] sm:$0xff]
      %v1571 = vld [vmem:[%s1547 + $0x1b0] sm:$0xff]
      %v1572 = vld [vmem:[%s1547 + $0x1e0] sm:$0xff]
      %v1573 = vld [vmem:[%s1547 + $0x1f0] sm:$0xff]
      %v1574 = vld [vmem:[%s1547 + $0x200] sm:$0xff]
      %v1575 = vld [vmem:[%s1547 + $0x210] sm:$0xff]
      %v1576 = vld [vmem:[%s1547 + $0x220] sm:$0xff]
      %v1577 = vld [vmem:[%s1547 + $0x230] sm:$0xff]
      %v1578 = vld [vmem:[%s1547 + $0x240] sm:$0xff]
      %v1579 = vld [vmem:[%s1547 + $0x250] sm:$0xff]
      %s1580 = scalar_lea.vmem %s1, 768
      %v1581 = vld [vmem:[%s1580] sm:$0xff]
      %v1582 = vld [vmem:[%s1580 + $0x8] sm:$0xff]
      %v1583 = vld [vmem:[%s1580 + $0x10] sm:$0xff]
      %v1584 = vld [vmem:[%s1580 + $0x18] sm:$0xff]
      %v1585 = vld [vmem:[%s1580 + $0x20] sm:$0xff]
      %v1586 = vld [vmem:[%s1580 + $0x28] sm:$0xff]
      %v1587 = vld [vmem:[%s1580 + $0x30] sm:$0xff]
      %v1588 = vld [vmem:[%s1580 + $0x38] sm:$0xff]
      %v1589 = vld [vmem:[%s1580 + $0x40] sm:$0xff]
      %v1590 = vld [vmem:[%s1580 + $0x48] sm:$0xff]
      %v1591 = vld [vmem:[%s1580 + $0x50] sm:$0xff]
      %v1592 = vld [vmem:[%s1580 + $0x58] sm:$0xff]
      %v1593 = vld [vmem:[%s1580 + $0x60] sm:$0xff]
      %v1594 = vld [vmem:[%s1580 + $0x68] sm:$0xff]
      %v1595 = vld [vmem:[%s1580 + $0x70] sm:$0xff]
      %v1596 = vld [vmem:[%s1580 + $0x78] sm:$0xff]
      %1597 = vmatpush.msra.mxu0 %v1596
      %1598 = vmatpush.msra.mxu0 %v1595
      %1599 = vmatpush.msra.mxu0 %v1594
      %1600 = vmatpush.msra.mxu0 %v1593
      %1601 = vmatpush.msra.mxu0 %v1592
      %1602 = vmatpush.msra.mxu0 %v1591
      %1603 = vmatpush.msra.mxu0 %v1590
      %1604 = vmatpush.msra.mxu0 %v1589
      %1605 = vmatpush.msra.mxu0 %v1588
      %1606 = vmatpush.msra.mxu0 %v1587
      %1607 = vmatpush.msra.mxu0 %v1586
      %1608 = vmatpush.msra.mxu0 %v1585
      %1609 = vmatpush.msra.mxu0 %v1584
      %1610 = vmatpush.msra.mxu0 %v1583
      %1611 = vmatpush.msra.mxu0 %v1582
      %1612 = vmatpush.msra.mxu0 %v1581
      %1613 = vmatmul.f32.gmra.mxu0 %v1548
      %v1614 = vpop.f32.mrf.mxu0
      %v1615 = vadd.f32 0.0, %v1614
      %1616 = vmatmul.f32.gmra.mxu0 %v1549
      %v1617 = vpop.f32.mrf.mxu0
      %v1618 = vadd.f32 0.0, %v1617
      %1619 = vmatmul.f32.gmra.mxu0 %v1550
      %v1620 = vpop.f32.mrf.mxu0
      %v1621 = vadd.f32 0.0, %v1620
      %1622 = vmatmul.f32.gmra.mxu0 %v1551
      %v1623 = vpop.f32.mrf.mxu0
      %v1624 = vadd.f32 0.0, %v1623
      %1625 = vmatmul.f32.gmra.mxu0 %v1552
      %v1626 = vpop.f32.mrf.mxu0
      %v1627 = vadd.f32 0.0, %v1626
      %1628 = vmatmul.f32.gmra.mxu0 %v1553
      %v1629 = vpop.f32.mrf.mxu0
      %v1630 = vadd.f32 0.0, %v1629
      %1631 = vmatmul.f32.gmra.mxu0 %v1554
      %v1632 = vpop.f32.mrf.mxu0
      %v1633 = vadd.f32 0.0, %v1632
      %1634 = vmatmul.f32.gmra.mxu0 %v1555
      %v1635 = vpop.f32.mrf.mxu0
      %v1636 = vadd.f32 0.0, %v1635
      %1637 = vmatmul.f32.gmra.mxu0 %v1556
      %v1638 = vpop.f32.mrf.mxu0
      %v1639 = vadd.f32 0.0, %v1638
      %1640 = vmatmul.f32.gmra.mxu0 %v1557
      %v1641 = vpop.f32.mrf.mxu0
      %v1642 = vadd.f32 0.0, %v1641
      %1643 = vmatmul.f32.gmra.mxu0 %v1558
      %v1644 = vpop.f32.mrf.mxu0
      %v1645 = vadd.f32 0.0, %v1644
      %1646 = vmatmul.f32.gmra.mxu0 %v1559
      %v1647 = vpop.f32.mrf.mxu0
      %v1648 = vadd.f32 0.0, %v1647
      %1649 = vmatmul.f32.gmra.mxu0 %v1560
      %v1650 = vpop.f32.mrf.mxu0
      %v1651 = vadd.f32 0.0, %v1650
      %1652 = vmatmul.f32.gmra.mxu0 %v1561
      %v1653 = vpop.f32.mrf.mxu0
      %v1654 = vadd.f32 0.0, %v1653
      %1655 = vmatmul.f32.gmra.mxu0 %v1562
      %v1656 = vpop.f32.mrf.mxu0
      %v1657 = vadd.f32 0.0, %v1656
      %1658 = vmatmul.f32.gmra.mxu0 %v1563
      %v1659 = vpop.f32.mrf.mxu0
      %v1660 = vadd.f32 0.0, %v1659
      %1661 = vmatmul.f32.gmra.mxu0 %v1564
      %v1662 = vpop.f32.mrf.mxu0
      %v1663 = vadd.f32 0.0, %v1662
      %1664 = vmatmul.f32.gmra.mxu0 %v1565
      %v1665 = vpop.f32.mrf.mxu0
      %v1666 = vadd.f32 0.0, %v1665
      %1667 = vmatmul.f32.gmra.mxu0 %v1566
      %v1668 = vpop.f32.mrf.mxu0
      %v1669 = vadd.f32 0.0, %v1668
      %1670 = vmatmul.f32.gmra.mxu0 %v1567
      %v1671 = vpop.f32.mrf.mxu0
      %v1672 = vadd.f32 0.0, %v1671
      %1673 = vmatmul.f32.gmra.mxu0 %v1568
      %v1674 = vpop.f32.mrf.mxu0
      %v1675 = vadd.f32 0.0, %v1674
      %1676 = vmatmul.f32.gmra.mxu0 %v1569
      %v1677 = vpop.f32.mrf.mxu0
      %v1678 = vadd.f32 0.0, %v1677
      %1679 = vmatmul.f32.gmra.mxu0 %v1570
      %v1680 = vpop.f32.mrf.mxu0
      %v1681 = vadd.f32 0.0, %v1680
      %1682 = vmatmul.f32.gmra.mxu0 %v1571
      %v1683 = vpop.f32.mrf.mxu0
      %v1684 = vadd.f32 0.0, %v1683
      %1685 = vmatmul.f32.gmra.mxu0 %v1572
      %v1686 = vpop.f32.mrf.mxu0
      %v1687 = vadd.f32 0.0, %v1686
      %1688 = vmatmul.f32.gmra.mxu0 %v1573
      %v1689 = vpop.f32.mrf.mxu0
      %v1690 = vadd.f32 0.0, %v1689
      %1691 = vmatmul.f32.gmra.mxu0 %v1574
      %v1692 = vpop.f32.mrf.mxu0
      %v1693 = vadd.f32 0.0, %v1692
      %1694 = vmatmul.f32.gmra.mxu0 %v1575
      %v1695 = vpop.f32.mrf.mxu0
      %v1696 = vadd.f32 0.0, %v1695
      %1697 = vmatmul.f32.gmra.mxu0 %v1576
      %v1698 = vpop.f32.mrf.mxu0
      %v1699 = vadd.f32 0.0, %v1698
      %1700 = vmatmul.f32.gmra.mxu0 %v1577
      %v1701 = vpop.f32.mrf.mxu0
      %v1702 = vadd.f32 0.0, %v1701
      %1703 = vmatmul.f32.gmra.mxu0 %v1578
      %v1704 = vpop.f32.mrf.mxu0
      %v1705 = vadd.f32 0.0, %v1704
      %1706 = vmatmul.f32.gmra.mxu0 %v1579
      %v1707 = vpop.f32.mrf.mxu0
      %v1708 = vadd.f32 0.0, %v1707
      %1709 = vdwg.mxu0
      %v1710 = vadd.f32 %v1515, %v1615
      %v1711 = vadd.f32 %v1516, %v1618
      %v1712 = vadd.f32 %v1517, %v1621
      %v1713 = vadd.f32 %v1518, %v1624
      %v1714 = vadd.f32 %v1519, %v1627
      %v1715 = vadd.f32 %v1520, %v1630
      %v1716 = vadd.f32 %v1521, %v1633
      %v1717 = vadd.f32 %v1522, %v1636
      %v1718 = vadd.f32 %v1523, %v1639
      %v1719 = vadd.f32 %v1524, %v1642
      %v1720 = vadd.f32 %v1525, %v1645
      %v1721 = vadd.f32 %v1526, %v1648
      %v1722 = vadd.f32 %v1527, %v1651
      %v1723 = vadd.f32 %v1528, %v1654
      %v1724 = vadd.f32 %v1529, %v1657
      %v1725 = vadd.f32 %v1530, %v1660
      %v1726 = vadd.f32 %v1531, %v1663
      %v1727 = vadd.f32 %v1532, %v1666
      %v1728 = vadd.f32 %v1533, %v1669
      %v1729 = vadd.f32 %v1534, %v1672
      %v1730 = vadd.f32 %v1535, %v1675
      %v1731 = vadd.f32 %v1536, %v1678
      %v1732 = vadd.f32 %v1537, %v1681
      %v1733 = vadd.f32 %v1538, %v1684
      %v1734 = vadd.f32 %v1539, %v1687
      %v1735 = vadd.f32 %v1540, %v1690
      %v1736 = vadd.f32 %v1541, %v1693
      %v1737 = vadd.f32 %v1542, %v1696
      %v1738 = vadd.f32 %v1543, %v1699
      %v1739 = vadd.f32 %v1544, %v1702
      %v1740 = vadd.f32 %v1545, %v1705
      %v1741 = vadd.f32 %v1546, %v1708
      %v1742 = vld [vmem:[%s1547 + $0x1] sm:$0xff]
      %v1743 = vld [vmem:[%s1547 + $0x11] sm:$0xff]
      %v1744 = vld [vmem:[%s1547 + $0x21] sm:$0xff]
      %v1745 = vld [vmem:[%s1547 + $0x31] sm:$0xff]
      %v1746 = vld [vmem:[%s1547 + $0x41] sm:$0xff]
      %v1747 = vld [vmem:[%s1547 + $0x51] sm:$0xff]
      %v1748 = vld [vmem:[%s1547 + $0x61] sm:$0xff]
      %v1749 = vld [vmem:[%s1547 + $0x71] sm:$0xff]
      %v1750 = vld [vmem:[%s1547 + $0xa1] sm:$0xff]
      %v1751 = vld [vmem:[%s1547 + $0xb1] sm:$0xff]
      %v1752 = vld [vmem:[%s1547 + $0xc1] sm:$0xff]
      %v1753 = vld [vmem:[%s1547 + $0xd1] sm:$0xff]
      %v1754 = vld [vmem:[%s1547 + $0xe1] sm:$0xff]
      %v1755 = vld [vmem:[%s1547 + $0xf1] sm:$0xff]
      %v1756 = vld [vmem:[%s1547 + $0x101] sm:$0xff]
      %v1757 = vld [vmem:[%s1547 + $0x111] sm:$0xff]
      %v1758 = vld [vmem:[%s1547 + $0x141] sm:$0xff]
      %v1759 = vld [vmem:[%s1547 + $0x151] sm:$0xff]
      %v1760 = vld [vmem:[%s1547 + $0x161] sm:$0xff]
      %v1761 = vld [vmem:[%s1547 + $0x171] sm:$0xff]
      %v1762 = vld [vmem:[%s1547 + $0x181] sm:$0xff]
      %v1763 = vld [vmem:[%s1547 + $0x191] sm:$0xff]
      %v1764 = vld [vmem:[%s1547 + $0x1a1] sm:$0xff]
      %v1765 = vld [vmem:[%s1547 + $0x1b1] sm:$0xff]
      %v1766 = vld [vmem:[%s1547 + $0x1e1] sm:$0xff]
      %v1767 = vld [vmem:[%s1547 + $0x1f1] sm:$0xff]
      %v1768 = vld [vmem:[%s1547 + $0x201] sm:$0xff]
      %v1769 = vld [vmem:[%s1547 + $0x211] sm:$0xff]
      %v1770 = vld [vmem:[%s1547 + $0x221] sm:$0xff]
      %v1771 = vld [vmem:[%s1547 + $0x231] sm:$0xff]
      %v1772 = vld [vmem:[%s1547 + $0x241] sm:$0xff]
      %v1773 = vld [vmem:[%s1547 + $0x251] sm:$0xff]
      %s1774 = scalar_lea.vmem %s1, 896
      %v1775 = vld [vmem:[%s1774] sm:$0xff]
      %v1776 = vld [vmem:[%s1774 + $0x8] sm:$0xff]
      %v1777 = vld [vmem:[%s1774 + $0x10] sm:$0xff]
      %v1778 = vld [vmem:[%s1774 + $0x18] sm:$0xff]
      %v1779 = vld [vmem:[%s1774 + $0x20] sm:$0xff]
      %v1780 = vld [vmem:[%s1774 + $0x28] sm:$0xff]
      %v1781 = vld [vmem:[%s1774 + $0x30] sm:$0xff]
      %v1782 = vld [vmem:[%s1774 + $0x38] sm:$0xff]
      %v1783 = vld [vmem:[%s1774 + $0x40] sm:$0xff]
      %v1784 = vld [vmem:[%s1774 + $0x48] sm:$0xff]
      %v1785 = vld [vmem:[%s1774 + $0x50] sm:$0xff]
      %v1786 = vld [vmem:[%s1774 + $0x58] sm:$0xff]
      %v1787 = vld [vmem:[%s1774 + $0x60] sm:$0xff]
      %v1788 = vld [vmem:[%s1774 + $0x68] sm:$0xff]
      %v1789 = vld [vmem:[%s1774 + $0x70] sm:$0xff]
      %v1790 = vld [vmem:[%s1774 + $0x78] sm:$0xff]
      %1791 = vmatpush.msra.mxu0 %v1790
      %1792 = vmatpush.msra.mxu0 %v1789
      %1793 = vmatpush.msra.mxu0 %v1788
      %1794 = vmatpush.msra.mxu0 %v1787
      %1795 = vmatpush.msra.mxu0 %v1786
      %1796 = vmatpush.msra.mxu0 %v1785
      %1797 = vmatpush.msra.mxu0 %v1784
      %1798 = vmatpush.msra.mxu0 %v1783
      %1799 = vmatpush.msra.mxu0 %v1782
      %1800 = vmatpush.msra.mxu0 %v1781
      %1801 = vmatpush.msra.mxu0 %v1780
      %1802 = vmatpush.msra.mxu0 %v1779
      %1803 = vmatpush.msra.mxu0 %v1778
      %1804 = vmatpush.msra.mxu0 %v1777
      %1805 = vmatpush.msra.mxu0 %v1776
      %1806 = vmatpush.msra.mxu0 %v1775
      %1807 = vmatmul.f32.gmra.mxu0 %v1742
      %v1808 = vpop.f32.mrf.mxu0
      %v1809 = vadd.f32 0.0, %v1808
      %1810 = vmatmul.f32.gmra.mxu0 %v1743
      %v1811 = vpop.f32.mrf.mxu0
      %v1812 = vadd.f32 0.0, %v1811
      %1813 = vmatmul.f32.gmra.mxu0 %v1744
      %v1814 = vpop.f32.mrf.mxu0
      %v1815 = vadd.f32 0.0, %v1814
      %1816 = vmatmul.f32.gmra.mxu0 %v1745
      %v1817 = vpop.f32.mrf.mxu0
      %v1818 = vadd.f32 0.0, %v1817
      %1819 = vmatmul.f32.gmra.mxu0 %v1746
      %v1820 = vpop.f32.mrf.mxu0
      %v1821 = vadd.f32 0.0, %v1820
      %1822 = vmatmul.f32.gmra.mxu0 %v1747
      %v1823 = vpop.f32.mrf.mxu0
      %v1824 = vadd.f32 0.0, %v1823
      %1825 = vmatmul.f32.gmra.mxu0 %v1748
      %v1826 = vpop.f32.mrf.mxu0
      %v1827 = vadd.f32 0.0, %v1826
      %1828 = vmatmul.f32.gmra.mxu0 %v1749
      %v1829 = vpop.f32.mrf.mxu0
      %v1830 = vadd.f32 0.0, %v1829
      %1831 = vmatmul.f32.gmra.mxu0 %v1750
      %v1832 = vpop.f32.mrf.mxu0
      %v1833 = vadd.f32 0.0, %v1832
      %1834 = vmatmul.f32.gmra.mxu0 %v1751
      %v1835 = vpop.f32.mrf.mxu0
      %v1836 = vadd.f32 0.0, %v1835
      %1837 = vmatmul.f32.gmra.mxu0 %v1752
      %v1838 = vpop.f32.mrf.mxu0
      %v1839 = vadd.f32 0.0, %v1838
      %1840 = vmatmul.f32.gmra.mxu0 %v1753
      %v1841 = vpop.f32.mrf.mxu0
      %v1842 = vadd.f32 0.0, %v1841
      %1843 = vmatmul.f32.gmra.mxu0 %v1754
      %v1844 = vpop.f32.mrf.mxu0
      %v1845 = vadd.f32 0.0, %v1844
      %1846 = vmatmul.f32.gmra.mxu0 %v1755
      %v1847 = vpop.f32.mrf.mxu0
      %v1848 = vadd.f32 0.0, %v1847
      %1849 = vmatmul.f32.gmra.mxu0 %v1756
      %v1850 = vpop.f32.mrf.mxu0
      %v1851 = vadd.f32 0.0, %v1850
      %1852 = vmatmul.f32.gmra.mxu0 %v1757
      %v1853 = vpop.f32.mrf.mxu0
      %v1854 = vadd.f32 0.0, %v1853
      %1855 = vmatmul.f32.gmra.mxu0 %v1758
      %v1856 = vpop.f32.mrf.mxu0
      %v1857 = vadd.f32 0.0, %v1856
      %1858 = vmatmul.f32.gmra.mxu0 %v1759
      %v1859 = vpop.f32.mrf.mxu0
      %v1860 = vadd.f32 0.0, %v1859
      %1861 = vmatmul.f32.gmra.mxu0 %v1760
      %v1862 = vpop.f32.mrf.mxu0
      %v1863 = vadd.f32 0.0, %v1862
      %1864 = vmatmul.f32.gmra.mxu0 %v1761
      %v1865 = vpop.f32.mrf.mxu0
      %v1866 = vadd.f32 0.0, %v1865
      %1867 = vmatmul.f32.gmra.mxu0 %v1762
      %v1868 = vpop.f32.mrf.mxu0
      %v1869 = vadd.f32 0.0, %v1868
      %1870 = vmatmul.f32.gmra.mxu0 %v1763
      %v1871 = vpop.f32.mrf.mxu0
      %v1872 = vadd.f32 0.0, %v1871
      %1873 = vmatmul.f32.gmra.mxu0 %v1764
      %v1874 = vpop.f32.mrf.mxu0
      %v1875 = vadd.f32 0.0, %v1874
      %1876 = vmatmul.f32.gmra.mxu0 %v1765
      %v1877 = vpop.f32.mrf.mxu0
      %v1878 = vadd.f32 0.0, %v1877
      %1879 = vmatmul.f32.gmra.mxu0 %v1766
      %v1880 = vpop.f32.mrf.mxu0
      %v1881 = vadd.f32 0.0, %v1880
      %1882 = vmatmul.f32.gmra.mxu0 %v1767
      %v1883 = vpop.f32.mrf.mxu0
      %v1884 = vadd.f32 0.0, %v1883
      %1885 = vmatmul.f32.gmra.mxu0 %v1768
      %v1886 = vpop.f32.mrf.mxu0
      %v1887 = vadd.f32 0.0, %v1886
      %1888 = vmatmul.f32.gmra.mxu0 %v1769
      %v1889 = vpop.f32.mrf.mxu0
      %v1890 = vadd.f32 0.0, %v1889
      %1891 = vmatmul.f32.gmra.mxu0 %v1770
      %v1892 = vpop.f32.mrf.mxu0
      %v1893 = vadd.f32 0.0, %v1892
      %1894 = vmatmul.f32.gmra.mxu0 %v1771
      %v1895 = vpop.f32.mrf.mxu0
      %v1896 = vadd.f32 0.0, %v1895
      %1897 = vmatmul.f32.gmra.mxu0 %v1772
      %v1898 = vpop.f32.mrf.mxu0
      %v1899 = vadd.f32 0.0, %v1898
      %1900 = vmatmul.f32.gmra.mxu0 %v1773
      %v1901 = vpop.f32.mrf.mxu0
      %v1902 = vadd.f32 0.0, %v1901
      %1903 = vdwg.mxu0
      %v1904 = vadd.f32 %v1710, %v1809
      %v1905 = vadd.f32 %v1711, %v1812
      %v1906 = vadd.f32 %v1712, %v1815
      %v1907 = vadd.f32 %v1713, %v1818
      %v1908 = vadd.f32 %v1714, %v1821
      %v1909 = vadd.f32 %v1715, %v1824
      %v1910 = vadd.f32 %v1716, %v1827
      %v1911 = vadd.f32 %v1717, %v1830
      %v1912 = vadd.f32 %v1718, %v1833
      %v1913 = vadd.f32 %v1719, %v1836
      %v1914 = vadd.f32 %v1720, %v1839
      %v1915 = vadd.f32 %v1721, %v1842
      %v1916 = vadd.f32 %v1722, %v1845
      %v1917 = vadd.f32 %v1723, %v1848
      %v1918 = vadd.f32 %v1724, %v1851
      %v1919 = vadd.f32 %v1725, %v1854
      %v1920 = vadd.f32 %v1726, %v1857
      %v1921 = vadd.f32 %v1727, %v1860
      %v1922 = vadd.f32 %v1728, %v1863
      %v1923 = vadd.f32 %v1729, %v1866
      %v1924 = vadd.f32 %v1730, %v1869
      %v1925 = vadd.f32 %v1731, %v1872
      %v1926 = vadd.f32 %v1732, %v1875
      %v1927 = vadd.f32 %v1733, %v1878
      %v1928 = vadd.f32 %v1734, %v1881
      %v1929 = vadd.f32 %v1735, %v1884
      %v1930 = vadd.f32 %v1736, %v1887
      %v1931 = vadd.f32 %v1737, %v1890
      %v1932 = vadd.f32 %v1738, %v1893
      %v1933 = vadd.f32 %v1739, %v1896
      %v1934 = vadd.f32 %v1740, %v1899
      %v1935 = vadd.f32 %v1741, %v1902
      %v1936 = vld [vmem:[%s1547 + $0x2] sm:$0xff]
      %v1937 = vld [vmem:[%s1547 + $0x12] sm:$0xff]
      %v1938 = vld [vmem:[%s1547 + $0x22] sm:$0xff]
      %v1939 = vld [vmem:[%s1547 + $0x32] sm:$0xff]
      %v1940 = vld [vmem:[%s1547 + $0x42] sm:$0xff]
      %v1941 = vld [vmem:[%s1547 + $0x52] sm:$0xff]
      %v1942 = vld [vmem:[%s1547 + $0x62] sm:$0xff]
      %v1943 = vld [vmem:[%s1547 + $0x72] sm:$0xff]
      %v1944 = vld [vmem:[%s1547 + $0xa2] sm:$0xff]
      %v1945 = vld [vmem:[%s1547 + $0xb2] sm:$0xff]
      %v1946 = vld [vmem:[%s1547 + $0xc2] sm:$0xff]
      %v1947 = vld [vmem:[%s1547 + $0xd2] sm:$0xff]
      %v1948 = vld [vmem:[%s1547 + $0xe2] sm:$0xff]
      %v1949 = vld [vmem:[%s1547 + $0xf2] sm:$0xff]
      %v1950 = vld [vmem:[%s1547 + $0x102] sm:$0xff]
      %v1951 = vld [vmem:[%s1547 + $0x112] sm:$0xff]
      %v1952 = vld [vmem:[%s1547 + $0x142] sm:$0xff]
      %v1953 = vld [vmem:[%s1547 + $0x152] sm:$0xff]
      %v1954 = vld [vmem:[%s1547 + $0x162] sm:$0xff]
      %v1955 = vld [vmem:[%s1547 + $0x172] sm:$0xff]
      %v1956 = vld [vmem:[%s1547 + $0x182] sm:$0xff]
      %v1957 = vld [vmem:[%s1547 + $0x192] sm:$0xff]
      %v1958 = vld [vmem:[%s1547 + $0x1a2] sm:$0xff]
      %v1959 = vld [vmem:[%s1547 + $0x1b2] sm:$0xff]
      %v1960 = vld [vmem:[%s1547 + $0x1e2] sm:$0xff]
      %v1961 = vld [vmem:[%s1547 + $0x1f2] sm:$0xff]
      %v1962 = vld [vmem:[%s1547 + $0x202] sm:$0xff]
      %v1963 = vld [vmem:[%s1547 + $0x212] sm:$0xff]
      %v1964 = vld [vmem:[%s1547 + $0x222] sm:$0xff]
      %v1965 = vld [vmem:[%s1547 + $0x232] sm:$0xff]
      %v1966 = vld [vmem:[%s1547 + $0x242] sm:$0xff]
      %v1967 = vld [vmem:[%s1547 + $0x252] sm:$0xff]
      %s1968 = scalar_lea.vmem %s1, 1024
      %v1969 = vld [vmem:[%s1968] sm:$0xff]
      %v1970 = vld [vmem:[%s1968 + $0x8] sm:$0xff]
      %v1971 = vld [vmem:[%s1968 + $0x10] sm:$0xff]
      %v1972 = vld [vmem:[%s1968 + $0x18] sm:$0xff]
      %v1973 = vld [vmem:[%s1968 + $0x20] sm:$0xff]
      %v1974 = vld [vmem:[%s1968 + $0x28] sm:$0xff]
      %v1975 = vld [vmem:[%s1968 + $0x30] sm:$0xff]
      %v1976 = vld [vmem:[%s1968 + $0x38] sm:$0xff]
      %v1977 = vld [vmem:[%s1968 + $0x40] sm:$0xff]
      %v1978 = vld [vmem:[%s1968 + $0x48] sm:$0xff]
      %v1979 = vld [vmem:[%s1968 + $0x50] sm:$0xff]
      %v1980 = vld [vmem:[%s1968 + $0x58] sm:$0xff]
      %v1981 = vld [vmem:[%s1968 + $0x60] sm:$0xff]
      %v1982 = vld [vmem:[%s1968 + $0x68] sm:$0xff]
      %v1983 = vld [vmem:[%s1968 + $0x70] sm:$0xff]
      %v1984 = vld [vmem:[%s1968 + $0x78] sm:$0xff]
      %1985 = vmatpush.msra.mxu0 %v1984
      %1986 = vmatpush.msra.mxu0 %v1983
      %1987 = vmatpush.msra.mxu0 %v1982
      %1988 = vmatpush.msra.mxu0 %v1981
      %1989 = vmatpush.msra.mxu0 %v1980
      %1990 = vmatpush.msra.mxu0 %v1979
      %1991 = vmatpush.msra.mxu0 %v1978
      %1992 = vmatpush.msra.mxu0 %v1977
      %1993 = vmatpush.msra.mxu0 %v1976
      %1994 = vmatpush.msra.mxu0 %v1975
      %1995 = vmatpush.msra.mxu0 %v1974
      %1996 = vmatpush.msra.mxu0 %v1973
      %1997 = vmatpush.msra.mxu0 %v1972
      %1998 = vmatpush.msra.mxu0 %v1971
      %1999 = vmatpush.msra.mxu0 %v1970
      %2000 = vmatpush.msra.mxu0 %v1969
      %2001 = vmatmul.f32.gmra.mxu0 %v1936
      %v2002 = vpop.f32.mrf.mxu0
      %v2003 = vadd.f32 0.0, %v2002
      %2004 = vmatmul.f32.gmra.mxu0 %v1937
      %v2005 = vpop.f32.mrf.mxu0
      %v2006 = vadd.f32 0.0, %v2005
      %2007 = vmatmul.f32.gmra.mxu0 %v1938
      %v2008 = vpop.f32.mrf.mxu0
      %v2009 = vadd.f32 0.0, %v2008
      %2010 = vmatmul.f32.gmra.mxu0 %v1939
      %v2011 = vpop.f32.mrf.mxu0
      %v2012 = vadd.f32 0.0, %v2011
      %2013 = vmatmul.f32.gmra.mxu0 %v1940
      %v2014 = vpop.f32.mrf.mxu0
      %v2015 = vadd.f32 0.0, %v2014
      %2016 = vmatmul.f32.gmra.mxu0 %v1941
      %v2017 = vpop.f32.mrf.mxu0
      %v2018 = vadd.f32 0.0, %v2017
      %2019 = vmatmul.f32.gmra.mxu0 %v1942
      %v2020 = vpop.f32.mrf.mxu0
      %v2021 = vadd.f32 0.0, %v2020
      %2022 = vmatmul.f32.gmra.mxu0 %v1943
      %v2023 = vpop.f32.mrf.mxu0
      %v2024 = vadd.f32 0.0, %v2023
      %2025 = vmatmul.f32.gmra.mxu0 %v1944
      %v2026 = vpop.f32.mrf.mxu0
      %v2027 = vadd.f32 0.0, %v2026
      %2028 = vmatmul.f32.gmra.mxu0 %v1945
      %v2029 = vpop.f32.mrf.mxu0
      %v2030 = vadd.f32 0.0, %v2029
      %2031 = vmatmul.f32.gmra.mxu0 %v1946
      %v2032 = vpop.f32.mrf.mxu0
      %v2033 = vadd.f32 0.0, %v2032
      %2034 = vmatmul.f32.gmra.mxu0 %v1947
      %v2035 = vpop.f32.mrf.mxu0
      %v2036 = vadd.f32 0.0, %v2035
      %2037 = vmatmul.f32.gmra.mxu0 %v1948
      %v2038 = vpop.f32.mrf.mxu0
      %v2039 = vadd.f32 0.0, %v2038
      %2040 = vmatmul.f32.gmra.mxu0 %v1949
      %v2041 = vpop.f32.mrf.mxu0
      %v2042 = vadd.f32 0.0, %v2041
      %2043 = vmatmul.f32.gmra.mxu0 %v1950
      %v2044 = vpop.f32.mrf.mxu0
      %v2045 = vadd.f32 0.0, %v2044
      %2046 = vmatmul.f32.gmra.mxu0 %v1951
      %v2047 = vpop.f32.mrf.mxu0
      %v2048 = vadd.f32 0.0, %v2047
      %2049 = vmatmul.f32.gmra.mxu0 %v1952
      %v2050 = vpop.f32.mrf.mxu0
      %v2051 = vadd.f32 0.0, %v2050
      %2052 = vmatmul.f32.gmra.mxu0 %v1953
      %v2053 = vpop.f32.mrf.mxu0
      %v2054 = vadd.f32 0.0, %v2053
      %2055 = vmatmul.f32.gmra.mxu0 %v1954
      %v2056 = vpop.f32.mrf.mxu0
      %v2057 = vadd.f32 0.0, %v2056
      %2058 = vmatmul.f32.gmra.mxu0 %v1955
      %v2059 = vpop.f32.mrf.mxu0
      %v2060 = vadd.f32 0.0, %v2059
      %2061 = vmatmul.f32.gmra.mxu0 %v1956
      %v2062 = vpop.f32.mrf.mxu0
      %v2063 = vadd.f32 0.0, %v2062
      %2064 = vmatmul.f32.gmra.mxu0 %v1957
      %v2065 = vpop.f32.mrf.mxu0
      %v2066 = vadd.f32 0.0, %v2065
      %2067 = vmatmul.f32.gmra.mxu0 %v1958
      %v2068 = vpop.f32.mrf.mxu0
      %v2069 = vadd.f32 0.0, %v2068
      %2070 = vmatmul.f32.gmra.mxu0 %v1959
      %v2071 = vpop.f32.mrf.mxu0
      %v2072 = vadd.f32 0.0, %v2071
      %2073 = vmatmul.f32.gmra.mxu0 %v1960
      %v2074 = vpop.f32.mrf.mxu0
      %v2075 = vadd.f32 0.0, %v2074
      %2076 = vmatmul.f32.gmra.mxu0 %v1961
      %v2077 = vpop.f32.mrf.mxu0
      %v2078 = vadd.f32 0.0, %v2077
      %2079 = vmatmul.f32.gmra.mxu0 %v1962
      %v2080 = vpop.f32.mrf.mxu0
      %v2081 = vadd.f32 0.0, %v2080
      %2082 = vmatmul.f32.gmra.mxu0 %v1963
      %v2083 = vpop.f32.mrf.mxu0
      %v2084 = vadd.f32 0.0, %v2083
      %2085 = vmatmul.f32.gmra.mxu0 %v1964
      %v2086 = vpop.f32.mrf.mxu0
      %v2087 = vadd.f32 0.0, %v2086
      %2088 = vmatmul.f32.gmra.mxu0 %v1965
      %v2089 = vpop.f32.mrf.mxu0
      %v2090 = vadd.f32 0.0, %v2089
      %2091 = vmatmul.f32.gmra.mxu0 %v1966
      %v2092 = vpop.f32.mrf.mxu0
      %v2093 = vadd.f32 0.0, %v2092
      %2094 = vmatmul.f32.gmra.mxu0 %v1967
      %v2095 = vpop.f32.mrf.mxu0
      %v2096 = vadd.f32 0.0, %v2095
      %2097 = vdwg.mxu0
      %v2098 = vadd.f32 %v1904, %v2003
      %v2099 = vadd.f32 %v1905, %v2006
      %v2100 = vadd.f32 %v1906, %v2009
      %v2101 = vadd.f32 %v1907, %v2012
      %v2102 = vadd.f32 %v1908, %v2015
      %v2103 = vadd.f32 %v1909, %v2018
      %v2104 = vadd.f32 %v1910, %v2021
      %v2105 = vadd.f32 %v1911, %v2024
      %v2106 = vadd.f32 %v1912, %v2027
      %v2107 = vadd.f32 %v1913, %v2030
      %v2108 = vadd.f32 %v1914, %v2033
      %v2109 = vadd.f32 %v1915, %v2036
      %v2110 = vadd.f32 %v1916, %v2039
      %v2111 = vadd.f32 %v1917, %v2042
      %v2112 = vadd.f32 %v1918, %v2045
      %v2113 = vadd.f32 %v1919, %v2048
      %v2114 = vadd.f32 %v1920, %v2051
      %v2115 = vadd.f32 %v1921, %v2054
      %v2116 = vadd.f32 %v1922, %v2057
      %v2117 = vadd.f32 %v1923, %v2060
      %v2118 = vadd.f32 %v1924, %v2063
      %v2119 = vadd.f32 %v1925, %v2066
      %v2120 = vadd.f32 %v1926, %v2069
      %v2121 = vadd.f32 %v1927, %v2072
      %v2122 = vadd.f32 %v1928, %v2075
      %v2123 = vadd.f32 %v1929, %v2078
      %v2124 = vadd.f32 %v1930, %v2081
      %v2125 = vadd.f32 %v1931, %v2084
      %v2126 = vadd.f32 %v1932, %v2087
      %v2127 = vadd.f32 %v1933, %v2090
      %v2128 = vadd.f32 %v1934, %v2093
      %v2129 = vadd.f32 %v1935, %v2096
      %s2130 = scalar_lea.vmem [#allocation2], 160
      %v2131 = vld [vmem:[%s2130] sm:$0xff]
      %v2132 = vld [vmem:[%s2130 + $0x10] sm:$0xff]
      %v2133 = vld [vmem:[%s2130 + $0x20] sm:$0xff]
      %v2134 = vld [vmem:[%s2130 + $0x30] sm:$0xff]
      %v2135 = vld [vmem:[%s2130 + $0x40] sm:$0xff]
      %v2136 = vld [vmem:[%s2130 + $0x50] sm:$0xff]
      %v2137 = vld [vmem:[%s2130 + $0x60] sm:$0xff]
      %v2138 = vld [vmem:[%s2130 + $0x70] sm:$0xff]
      %v2139 = vld [vmem:[%s2130 + $0xa0] sm:$0xff]
      %v2140 = vld [vmem:[%s2130 + $0xb0] sm:$0xff]
      %v2141 = vld [vmem:[%s2130 + $0xc0] sm:$0xff]
      %v2142 = vld [vmem:[%s2130 + $0xd0] sm:$0xff]
      %v2143 = vld [vmem:[%s2130 + $0xe0] sm:$0xff]
      %v2144 = vld [vmem:[%s2130 + $0xf0] sm:$0xff]
      %v2145 = vld [vmem:[%s2130 + $0x100] sm:$0xff]
      %v2146 = vld [vmem:[%s2130 + $0x110] sm:$0xff]
      %v2147 = vld [vmem:[%s2130 + $0x140] sm:$0xff]
      %v2148 = vld [vmem:[%s2130 + $0x150] sm:$0xff]
      %v2149 = vld [vmem:[%s2130 + $0x160] sm:$0xff]
      %v2150 = vld [vmem:[%s2130 + $0x170] sm:$0xff]
      %v2151 = vld [vmem:[%s2130 + $0x180] sm:$0xff]
      %v2152 = vld [vmem:[%s2130 + $0x190] sm:$0xff]
      %v2153 = vld [vmem:[%s2130 + $0x1a0] sm:$0xff]
      %v2154 = vld [vmem:[%s2130 + $0x1b0] sm:$0xff]
      %v2155 = vld [vmem:[%s2130 + $0x1e0] sm:$0xff]
      %v2156 = vld [vmem:[%s2130 + $0x1f0] sm:$0xff]
      %v2157 = vld [vmem:[%s2130 + $0x200] sm:$0xff]
      %v2158 = vld [vmem:[%s2130 + $0x210] sm:$0xff]
      %v2159 = vld [vmem:[%s2130 + $0x220] sm:$0xff]
      %v2160 = vld [vmem:[%s2130 + $0x230] sm:$0xff]
      %v2161 = vld [vmem:[%s2130 + $0x240] sm:$0xff]
      %v2162 = vld [vmem:[%s2130 + $0x250] sm:$0xff]
      %s2163 = scalar_lea.vmem %s1, 1152
      %v2164 = vld [vmem:[%s2163] sm:$0xff]
      %v2165 = vld [vmem:[%s2163 + $0x8] sm:$0xff]
      %v2166 = vld [vmem:[%s2163 + $0x10] sm:$0xff]
      %v2167 = vld [vmem:[%s2163 + $0x18] sm:$0xff]
      %v2168 = vld [vmem:[%s2163 + $0x20] sm:$0xff]
      %v2169 = vld [vmem:[%s2163 + $0x28] sm:$0xff]
      %v2170 = vld [vmem:[%s2163 + $0x30] sm:$0xff]
      %v2171 = vld [vmem:[%s2163 + $0x38] sm:$0xff]
      %v2172 = vld [vmem:[%s2163 + $0x40] sm:$0xff]
      %v2173 = vld [vmem:[%s2163 + $0x48] sm:$0xff]
      %v2174 = vld [vmem:[%s2163 + $0x50] sm:$0xff]
      %v2175 = vld [vmem:[%s2163 + $0x58] sm:$0xff]
      %v2176 = vld [vmem:[%s2163 + $0x60] sm:$0xff]
      %v2177 = vld [vmem:[%s2163 + $0x68] sm:$0xff]
      %v2178 = vld [vmem:[%s2163 + $0x70] sm:$0xff]
      %v2179 = vld [vmem:[%s2163 + $0x78] sm:$0xff]
      %2180 = vmatpush.msra.mxu0 %v2179
      %2181 = vmatpush.msra.mxu0 %v2178
      %2182 = vmatpush.msra.mxu0 %v2177
      %2183 = vmatpush.msra.mxu0 %v2176
      %2184 = vmatpush.msra.mxu0 %v2175
      %2185 = vmatpush.msra.mxu0 %v2174
      %2186 = vmatpush.msra.mxu0 %v2173
      %2187 = vmatpush.msra.mxu0 %v2172
      %2188 = vmatpush.msra.mxu0 %v2171
      %2189 = vmatpush.msra.mxu0 %v2170
      %2190 = vmatpush.msra.mxu0 %v2169
      %2191 = vmatpush.msra.mxu0 %v2168
      %2192 = vmatpush.msra.mxu0 %v2167
      %2193 = vmatpush.msra.mxu0 %v2166
      %2194 = vmatpush.msra.mxu0 %v2165
      %2195 = vmatpush.msra.mxu0 %v2164
      %2196 = vmatmul.f32.gmra.mxu0 %v2131
      %v2197 = vpop.f32.mrf.mxu0
      %v2198 = vadd.f32 0.0, %v2197
      %2199 = vmatmul.f32.gmra.mxu0 %v2132
      %v2200 = vpop.f32.mrf.mxu0
      %v2201 = vadd.f32 0.0, %v2200
      %2202 = vmatmul.f32.gmra.mxu0 %v2133
      %v2203 = vpop.f32.mrf.mxu0
      %v2204 = vadd.f32 0.0, %v2203
      %2205 = vmatmul.f32.gmra.mxu0 %v2134
      %v2206 = vpop.f32.mrf.mxu0
      %v2207 = vadd.f32 0.0, %v2206
      %2208 = vmatmul.f32.gmra.mxu0 %v2135
      %v2209 = vpop.f32.mrf.mxu0
      %v2210 = vadd.f32 0.0, %v2209
      %2211 = vmatmul.f32.gmra.mxu0 %v2136
      %v2212 = vpop.f32.mrf.mxu0
      %v2213 = vadd.f32 0.0, %v2212
      %2214 = vmatmul.f32.gmra.mxu0 %v2137
      %v2215 = vpop.f32.mrf.mxu0
      %v2216 = vadd.f32 0.0, %v2215
      %2217 = vmatmul.f32.gmra.mxu0 %v2138
      %v2218 = vpop.f32.mrf.mxu0
      %v2219 = vadd.f32 0.0, %v2218
      %2220 = vmatmul.f32.gmra.mxu0 %v2139
      %v2221 = vpop.f32.mrf.mxu0
      %v2222 = vadd.f32 0.0, %v2221
      %2223 = vmatmul.f32.gmra.mxu0 %v2140
      %v2224 = vpop.f32.mrf.mxu0
      %v2225 = vadd.f32 0.0, %v2224
      %2226 = vmatmul.f32.gmra.mxu0 %v2141
      %v2227 = vpop.f32.mrf.mxu0
      %v2228 = vadd.f32 0.0, %v2227
      %2229 = vmatmul.f32.gmra.mxu0 %v2142
      %v2230 = vpop.f32.mrf.mxu0
      %v2231 = vadd.f32 0.0, %v2230
      %2232 = vmatmul.f32.gmra.mxu0 %v2143
      %v2233 = vpop.f32.mrf.mxu0
      %v2234 = vadd.f32 0.0, %v2233
      %2235 = vmatmul.f32.gmra.mxu0 %v2144
      %v2236 = vpop.f32.mrf.mxu0
      %v2237 = vadd.f32 0.0, %v2236
      %2238 = vmatmul.f32.gmra.mxu0 %v2145
      %v2239 = vpop.f32.mrf.mxu0
      %v2240 = vadd.f32 0.0, %v2239
      %2241 = vmatmul.f32.gmra.mxu0 %v2146
      %v2242 = vpop.f32.mrf.mxu0
      %v2243 = vadd.f32 0.0, %v2242
      %2244 = vmatmul.f32.gmra.mxu0 %v2147
      %v2245 = vpop.f32.mrf.mxu0
      %v2246 = vadd.f32 0.0, %v2245
      %2247 = vmatmul.f32.gmra.mxu0 %v2148
      %v2248 = vpop.f32.mrf.mxu0
      %v2249 = vadd.f32 0.0, %v2248
      %2250 = vmatmul.f32.gmra.mxu0 %v2149
      %v2251 = vpop.f32.mrf.mxu0
      %v2252 = vadd.f32 0.0, %v2251
      %2253 = vmatmul.f32.gmra.mxu0 %v2150
      %v2254 = vpop.f32.mrf.mxu0
      %v2255 = vadd.f32 0.0, %v2254
      %2256 = vmatmul.f32.gmra.mxu0 %v2151
      %v2257 = vpop.f32.mrf.mxu0
      %v2258 = vadd.f32 0.0, %v2257
      %2259 = vmatmul.f32.gmra.mxu0 %v2152
      %v2260 = vpop.f32.mrf.mxu0
      %v2261 = vadd.f32 0.0, %v2260
      %2262 = vmatmul.f32.gmra.mxu0 %v2153
      %v2263 = vpop.f32.mrf.mxu0
      %v2264 = vadd.f32 0.0, %v2263
      %2265 = vmatmul.f32.gmra.mxu0 %v2154
      %v2266 = vpop.f32.mrf.mxu0
      %v2267 = vadd.f32 0.0, %v2266
      %2268 = vmatmul.f32.gmra.mxu0 %v2155
      %v2269 = vpop.f32.mrf.mxu0
      %v2270 = vadd.f32 0.0, %v2269
      %2271 = vmatmul.f32.gmra.mxu0 %v2156
      %v2272 = vpop.f32.mrf.mxu0
      %v2273 = vadd.f32 0.0, %v2272
      %2274 = vmatmul.f32.gmra.mxu0 %v2157
      %v2275 = vpop.f32.mrf.mxu0
      %v2276 = vadd.f32 0.0, %v2275
      %2277 = vmatmul.f32.gmra.mxu0 %v2158
      %v2278 = vpop.f32.mrf.mxu0
      %v2279 = vadd.f32 0.0, %v2278
      %2280 = vmatmul.f32.gmra.mxu0 %v2159
      %v2281 = vpop.f32.mrf.mxu0
      %v2282 = vadd.f32 0.0, %v2281
      %2283 = vmatmul.f32.gmra.mxu0 %v2160
      %v2284 = vpop.f32.mrf.mxu0
      %v2285 = vadd.f32 0.0, %v2284
      %2286 = vmatmul.f32.gmra.mxu0 %v2161
      %v2287 = vpop.f32.mrf.mxu0
      %v2288 = vadd.f32 0.0, %v2287
      %2289 = vmatmul.f32.gmra.mxu0 %v2162
      %v2290 = vpop.f32.mrf.mxu0
      %v2291 = vadd.f32 0.0, %v2290
      %2292 = vdwg.mxu0
      %v2293 = vadd.f32 %v2098, %v2198
      %v2294 = vadd.f32 %v2099, %v2201
      %v2295 = vadd.f32 %v2100, %v2204
      %v2296 = vadd.f32 %v2101, %v2207
      %v2297 = vadd.f32 %v2102, %v2210
      %v2298 = vadd.f32 %v2103, %v2213
      %v2299 = vadd.f32 %v2104, %v2216
      %v2300 = vadd.f32 %v2105, %v2219
      %v2301 = vadd.f32 %v2106, %v2222
      %v2302 = vadd.f32 %v2107, %v2225
      %v2303 = vadd.f32 %v2108, %v2228
      %v2304 = vadd.f32 %v2109, %v2231
      %v2305 = vadd.f32 %v2110, %v2234
      %v2306 = vadd.f32 %v2111, %v2237
      %v2307 = vadd.f32 %v2112, %v2240
      %v2308 = vadd.f32 %v2113, %v2243
      %v2309 = vadd.f32 %v2114, %v2246
      %v2310 = vadd.f32 %v2115, %v2249
      %v2311 = vadd.f32 %v2116, %v2252
      %v2312 = vadd.f32 %v2117, %v2255
      %v2313 = vadd.f32 %v2118, %v2258
      %v2314 = vadd.f32 %v2119, %v2261
      %v2315 = vadd.f32 %v2120, %v2264
      %v2316 = vadd.f32 %v2121, %v2267
      %v2317 = vadd.f32 %v2122, %v2270
      %v2318 = vadd.f32 %v2123, %v2273
      %v2319 = vadd.f32 %v2124, %v2276
      %v2320 = vadd.f32 %v2125, %v2279
      %v2321 = vadd.f32 %v2126, %v2282
      %v2322 = vadd.f32 %v2127, %v2285
      %v2323 = vadd.f32 %v2128, %v2288
      %v2324 = vadd.f32 %v2129, %v2291
      %v2325 = vld [vmem:[%s2130 + $0x1] sm:$0xff]
      %v2326 = vld [vmem:[%s2130 + $0x11] sm:$0xff]
      %v2327 = vld [vmem:[%s2130 + $0x21] sm:$0xff]
      %v2328 = vld [vmem:[%s2130 + $0x31] sm:$0xff]
      %v2329 = vld [vmem:[%s2130 + $0x41] sm:$0xff]
      %v2330 = vld [vmem:[%s2130 + $0x51] sm:$0xff]
      %v2331 = vld [vmem:[%s2130 + $0x61] sm:$0xff]
      %v2332 = vld [vmem:[%s2130 + $0x71] sm:$0xff]
      %v2333 = vld [vmem:[%s2130 + $0xa1] sm:$0xff]
      %v2334 = vld [vmem:[%s2130 + $0xb1] sm:$0xff]
      %v2335 = vld [vmem:[%s2130 + $0xc1] sm:$0xff]
      %v2336 = vld [vmem:[%s2130 + $0xd1] sm:$0xff]
      %v2337 = vld [vmem:[%s2130 + $0xe1] sm:$0xff]
      %v2338 = vld [vmem:[%s2130 + $0xf1] sm:$0xff]
      %v2339 = vld [vmem:[%s2130 + $0x101] sm:$0xff]
      %v2340 = vld [vmem:[%s2130 + $0x111] sm:$0xff]
      %v2341 = vld [vmem:[%s2130 + $0x141] sm:$0xff]
      %v2342 = vld [vmem:[%s2130 + $0x151] sm:$0xff]
      %v2343 = vld [vmem:[%s2130 + $0x161] sm:$0xff]
      %v2344 = vld [vmem:[%s2130 + $0x171] sm:$0xff]
      %v2345 = vld [vmem:[%s2130 + $0x181] sm:$0xff]
      %v2346 = vld [vmem:[%s2130 + $0x191] sm:$0xff]
      %v2347 = vld [vmem:[%s2130 + $0x1a1] sm:$0xff]
      %v2348 = vld [vmem:[%s2130 + $0x1b1] sm:$0xff]
      %v2349 = vld [vmem:[%s2130 + $0x1e1] sm:$0xff]
      %v2350 = vld [vmem:[%s2130 + $0x1f1] sm:$0xff]
      %v2351 = vld [vmem:[%s2130 + $0x201] sm:$0xff]
      %v2352 = vld [vmem:[%s2130 + $0x211] sm:$0xff]
      %v2353 = vld [vmem:[%s2130 + $0x221] sm:$0xff]
      %v2354 = vld [vmem:[%s2130 + $0x231] sm:$0xff]
      %v2355 = vld [vmem:[%s2130 + $0x241] sm:$0xff]
      %v2356 = vld [vmem:[%s2130 + $0x251] sm:$0xff]
      %s2357 = scalar_lea.vmem %s1, 1280
      %v2358 = vld [vmem:[%s2357] sm:$0xff]
      %v2359 = vld [vmem:[%s2357 + $0x8] sm:$0xff]
      %v2360 = vld [vmem:[%s2357 + $0x10] sm:$0xff]
      %v2361 = vld [vmem:[%s2357 + $0x18] sm:$0xff]
      %v2362 = vld [vmem:[%s2357 + $0x20] sm:$0xff]
      %v2363 = vld [vmem:[%s2357 + $0x28] sm:$0xff]
      %v2364 = vld [vmem:[%s2357 + $0x30] sm:$0xff]
      %v2365 = vld [vmem:[%s2357 + $0x38] sm:$0xff]
      %v2366 = vld [vmem:[%s2357 + $0x40] sm:$0xff]
      %v2367 = vld [vmem:[%s2357 + $0x48] sm:$0xff]
      %v2368 = vld [vmem:[%s2357 + $0x50] sm:$0xff]
      %v2369 = vld [vmem:[%s2357 + $0x58] sm:$0xff]
      %v2370 = vld [vmem:[%s2357 + $0x60] sm:$0xff]
      %v2371 = vld [vmem:[%s2357 + $0x68] sm:$0xff]
      %v2372 = vld [vmem:[%s2357 + $0x70] sm:$0xff]
      %v2373 = vld [vmem:[%s2357 + $0x78] sm:$0xff]
      %2374 = vmatpush.msra.mxu0 %v2373
      %2375 = vmatpush.msra.mxu0 %v2372
      %2376 = vmatpush.msra.mxu0 %v2371
      %2377 = vmatpush.msra.mxu0 %v2370
      %2378 = vmatpush.msra.mxu0 %v2369
      %2379 = vmatpush.msra.mxu0 %v2368
      %2380 = vmatpush.msra.mxu0 %v2367
      %2381 = vmatpush.msra.mxu0 %v2366
      %2382 = vmatpush.msra.mxu0 %v2365
      %2383 = vmatpush.msra.mxu0 %v2364
      %2384 = vmatpush.msra.mxu0 %v2363
      %2385 = vmatpush.msra.mxu0 %v2362
      %2386 = vmatpush.msra.mxu0 %v2361
      %2387 = vmatpush.msra.mxu0 %v2360
      %2388 = vmatpush.msra.mxu0 %v2359
      %2389 = vmatpush.msra.mxu0 %v2358
      %2390 = vmatmul.f32.gmra.mxu0 %v2325
      %v2391 = vpop.f32.mrf.mxu0
      %v2392 = vadd.f32 0.0, %v2391
      %2393 = vmatmul.f32.gmra.mxu0 %v2326
      %v2394 = vpop.f32.mrf.mxu0
      %v2395 = vadd.f32 0.0, %v2394
      %2396 = vmatmul.f32.gmra.mxu0 %v2327
      %v2397 = vpop.f32.mrf.mxu0
      %v2398 = vadd.f32 0.0, %v2397
      %2399 = vmatmul.f32.gmra.mxu0 %v2328
      %v2400 = vpop.f32.mrf.mxu0
      %v2401 = vadd.f32 0.0, %v2400
      %2402 = vmatmul.f32.gmra.mxu0 %v2329
      %v2403 = vpop.f32.mrf.mxu0
      %v2404 = vadd.f32 0.0, %v2403
      %2405 = vmatmul.f32.gmra.mxu0 %v2330
      %v2406 = vpop.f32.mrf.mxu0
      %v2407 = vadd.f32 0.0, %v2406
      %2408 = vmatmul.f32.gmra.mxu0 %v2331
      %v2409 = vpop.f32.mrf.mxu0
      %v2410 = vadd.f32 0.0, %v2409
      %2411 = vmatmul.f32.gmra.mxu0 %v2332
      %v2412 = vpop.f32.mrf.mxu0
      %v2413 = vadd.f32 0.0, %v2412
      %2414 = vmatmul.f32.gmra.mxu0 %v2333
      %v2415 = vpop.f32.mrf.mxu0
      %v2416 = vadd.f32 0.0, %v2415
      %2417 = vmatmul.f32.gmra.mxu0 %v2334
      %v2418 = vpop.f32.mrf.mxu0
      %v2419 = vadd.f32 0.0, %v2418
      %2420 = vmatmul.f32.gmra.mxu0 %v2335
      %v2421 = vpop.f32.mrf.mxu0
      %v2422 = vadd.f32 0.0, %v2421
      %2423 = vmatmul.f32.gmra.mxu0 %v2336
      %v2424 = vpop.f32.mrf.mxu0
      %v2425 = vadd.f32 0.0, %v2424
      %2426 = vmatmul.f32.gmra.mxu0 %v2337
      %v2427 = vpop.f32.mrf.mxu0
      %v2428 = vadd.f32 0.0, %v2427
      %2429 = vmatmul.f32.gmra.mxu0 %v2338
      %v2430 = vpop.f32.mrf.mxu0
      %v2431 = vadd.f32 0.0, %v2430
      %2432 = vmatmul.f32.gmra.mxu0 %v2339
      %v2433 = vpop.f32.mrf.mxu0
      %v2434 = vadd.f32 0.0, %v2433
      %2435 = vmatmul.f32.gmra.mxu0 %v2340
      %v2436 = vpop.f32.mrf.mxu0
      %v2437 = vadd.f32 0.0, %v2436
      %2438 = vmatmul.f32.gmra.mxu0 %v2341
      %v2439 = vpop.f32.mrf.mxu0
      %v2440 = vadd.f32 0.0, %v2439
      %2441 = vmatmul.f32.gmra.mxu0 %v2342
      %v2442 = vpop.f32.mrf.mxu0
      %v2443 = vadd.f32 0.0, %v2442
      %2444 = vmatmul.f32.gmra.mxu0 %v2343
      %v2445 = vpop.f32.mrf.mxu0
      %v2446 = vadd.f32 0.0, %v2445
      %2447 = vmatmul.f32.gmra.mxu0 %v2344
      %v2448 = vpop.f32.mrf.mxu0
      %v2449 = vadd.f32 0.0, %v2448
      %2450 = vmatmul.f32.gmra.mxu0 %v2345
      %v2451 = vpop.f32.mrf.mxu0
      %v2452 = vadd.f32 0.0, %v2451
      %2453 = vmatmul.f32.gmra.mxu0 %v2346
      %v2454 = vpop.f32.mrf.mxu0
      %v2455 = vadd.f32 0.0, %v2454
      %2456 = vmatmul.f32.gmra.mxu0 %v2347
      %v2457 = vpop.f32.mrf.mxu0
      %v2458 = vadd.f32 0.0, %v2457
      %2459 = vmatmul.f32.gmra.mxu0 %v2348
      %v2460 = vpop.f32.mrf.mxu0
      %v2461 = vadd.f32 0.0, %v2460
      %2462 = vmatmul.f32.gmra.mxu0 %v2349
      %v2463 = vpop.f32.mrf.mxu0
      %v2464 = vadd.f32 0.0, %v2463
      %2465 = vmatmul.f32.gmra.mxu0 %v2350
      %v2466 = vpop.f32.mrf.mxu0
      %v2467 = vadd.f32 0.0, %v2466
      %2468 = vmatmul.f32.gmra.mxu0 %v2351
      %v2469 = vpop.f32.mrf.mxu0
      %v2470 = vadd.f32 0.0, %v2469
      %2471 = vmatmul.f32.gmra.mxu0 %v2352
      %v2472 = vpop.f32.mrf.mxu0
      %v2473 = vadd.f32 0.0, %v2472
      %2474 = vmatmul.f32.gmra.mxu0 %v2353
      %v2475 = vpop.f32.mrf.mxu0
      %v2476 = vadd.f32 0.0, %v2475
      %2477 = vmatmul.f32.gmra.mxu0 %v2354
      %v2478 = vpop.f32.mrf.mxu0
      %v2479 = vadd.f32 0.0, %v2478
      %2480 = vmatmul.f32.gmra.mxu0 %v2355
      %v2481 = vpop.f32.mrf.mxu0
      %v2482 = vadd.f32 0.0, %v2481
      %2483 = vmatmul.f32.gmra.mxu0 %v2356
      %v2484 = vpop.f32.mrf.mxu0
      %v2485 = vadd.f32 0.0, %v2484
      %2486 = vdwg.mxu0
      %v2487 = vadd.f32 %v2293, %v2392
      %v2488 = vadd.f32 %v2294, %v2395
      %v2489 = vadd.f32 %v2295, %v2398
      %v2490 = vadd.f32 %v2296, %v2401
      %v2491 = vadd.f32 %v2297, %v2404
      %v2492 = vadd.f32 %v2298, %v2407
      %v2493 = vadd.f32 %v2299, %v2410
      %v2494 = vadd.f32 %v2300, %v2413
      %v2495 = vadd.f32 %v2301, %v2416
      %v2496 = vadd.f32 %v2302, %v2419
      %v2497 = vadd.f32 %v2303, %v2422
      %v2498 = vadd.f32 %v2304, %v2425
      %v2499 = vadd.f32 %v2305, %v2428
      %v2500 = vadd.f32 %v2306, %v2431
      %v2501 = vadd.f32 %v2307, %v2434
      %v2502 = vadd.f32 %v2308, %v2437
      %v2503 = vadd.f32 %v2309, %v2440
      %v2504 = vadd.f32 %v2310, %v2443
      %v2505 = vadd.f32 %v2311, %v2446
      %v2506 = vadd.f32 %v2312, %v2449
      %v2507 = vadd.f32 %v2313, %v2452
      %v2508 = vadd.f32 %v2314, %v2455
      %v2509 = vadd.f32 %v2315, %v2458
      %v2510 = vadd.f32 %v2316, %v2461
      %v2511 = vadd.f32 %v2317, %v2464
      %v2512 = vadd.f32 %v2318, %v2467
      %v2513 = vadd.f32 %v2319, %v2470
      %v2514 = vadd.f32 %v2320, %v2473
      %v2515 = vadd.f32 %v2321, %v2476
      %v2516 = vadd.f32 %v2322, %v2479
      %v2517 = vadd.f32 %v2323, %v2482
      %v2518 = vadd.f32 %v2324, %v2485
      %v2519 = vld [vmem:[%s2130 + $0x2] sm:$0xff]
      %v2520 = vld [vmem:[%s2130 + $0x12] sm:$0xff]
      %v2521 = vld [vmem:[%s2130 + $0x22] sm:$0xff]
      %v2522 = vld [vmem:[%s2130 + $0x32] sm:$0xff]
      %v2523 = vld [vmem:[%s2130 + $0x42] sm:$0xff]
      %v2524 = vld [vmem:[%s2130 + $0x52] sm:$0xff]
      %v2525 = vld [vmem:[%s2130 + $0x62] sm:$0xff]
      %v2526 = vld [vmem:[%s2130 + $0x72] sm:$0xff]
      %v2527 = vld [vmem:[%s2130 + $0xa2] sm:$0xff]
      %v2528 = vld [vmem:[%s2130 + $0xb2] sm:$0xff]
      %v2529 = vld [vmem:[%s2130 + $0xc2] sm:$0xff]
      %v2530 = vld [vmem:[%s2130 + $0xd2] sm:$0xff]
      %v2531 = vld [vmem:[%s2130 + $0xe2] sm:$0xff]
      %v2532 = vld [vmem:[%s2130 + $0xf2] sm:$0xff]
      %v2533 = vld [vmem:[%s2130 + $0x102] sm:$0xff]
      %v2534 = vld [vmem:[%s2130 + $0x112] sm:$0xff]
      %v2535 = vld [vmem:[%s2130 + $0x142] sm:$0xff]
      %v2536 = vld [vmem:[%s2130 + $0x152] sm:$0xff]
      %v2537 = vld [vmem:[%s2130 + $0x162] sm:$0xff]
      %v2538 = vld [vmem:[%s2130 + $0x172] sm:$0xff]
      %v2539 = vld [vmem:[%s2130 + $0x182] sm:$0xff]
      %v2540 = vld [vmem:[%s2130 + $0x192] sm:$0xff]
      %v2541 = vld [vmem:[%s2130 + $0x1a2] sm:$0xff]
      %v2542 = vld [vmem:[%s2130 + $0x1b2] sm:$0xff]
      %v2543 = vld [vmem:[%s2130 + $0x1e2] sm:$0xff]
      %v2544 = vld [vmem:[%s2130 + $0x1f2] sm:$0xff]
      %v2545 = vld [vmem:[%s2130 + $0x202] sm:$0xff]
      %v2546 = vld [vmem:[%s2130 + $0x212] sm:$0xff]
      %v2547 = vld [vmem:[%s2130 + $0x222] sm:$0xff]
      %v2548 = vld [vmem:[%s2130 + $0x232] sm:$0xff]
      %v2549 = vld [vmem:[%s2130 + $0x242] sm:$0xff]
      %v2550 = vld [vmem:[%s2130 + $0x252] sm:$0xff]
      %s2551 = scalar_lea.vmem %s1, 1408
      %v2552 = vld [vmem:[%s2551] sm:$0xff]
      %v2553 = vld [vmem:[%s2551 + $0x8] sm:$0xff]
      %v2554 = vld [vmem:[%s2551 + $0x10] sm:$0xff]
      %v2555 = vld [vmem:[%s2551 + $0x18] sm:$0xff]
      %v2556 = vld [vmem:[%s2551 + $0x20] sm:$0xff]
      %v2557 = vld [vmem:[%s2551 + $0x28] sm:$0xff]
      %v2558 = vld [vmem:[%s2551 + $0x30] sm:$0xff]
      %v2559 = vld [vmem:[%s2551 + $0x38] sm:$0xff]
      %v2560 = vld [vmem:[%s2551 + $0x40] sm:$0xff]
      %v2561 = vld [vmem:[%s2551 + $0x48] sm:$0xff]
      %v2562 = vld [vmem:[%s2551 + $0x50] sm:$0xff]
      %v2563 = vld [vmem:[%s2551 + $0x58] sm:$0xff]
      %v2564 = vld [vmem:[%s2551 + $0x60] sm:$0xff]
      %v2565 = vld [vmem:[%s2551 + $0x68] sm:$0xff]
      %v2566 = vld [vmem:[%s2551 + $0x70] sm:$0xff]
      %v2567 = vld [vmem:[%s2551 + $0x78] sm:$0xff]
      %2568 = vmatpush.msra.mxu0 %v2567
      %2569 = vmatpush.msra.mxu0 %v2566
      %2570 = vmatpush.msra.mxu0 %v2565
      %2571 = vmatpush.msra.mxu0 %v2564
      %2572 = vmatpush.msra.mxu0 %v2563
      %2573 = vmatpush.msra.mxu0 %v2562
      %2574 = vmatpush.msra.mxu0 %v2561
      %2575 = vmatpush.msra.mxu0 %v2560
      %2576 = vmatpush.msra.mxu0 %v2559
      %2577 = vmatpush.msra.mxu0 %v2558
      %2578 = vmatpush.msra.mxu0 %v2557
      %2579 = vmatpush.msra.mxu0 %v2556
      %2580 = vmatpush.msra.mxu0 %v2555
      %2581 = vmatpush.msra.mxu0 %v2554
      %2582 = vmatpush.msra.mxu0 %v2553
      %2583 = vmatpush.msra.mxu0 %v2552
      %2584 = vmatmul.f32.gmra.mxu0 %v2519
      %v2585 = vpop.f32.mrf.mxu0
      %v2586 = vadd.f32 0.0, %v2585
      %2587 = vmatmul.f32.gmra.mxu0 %v2520
      %v2588 = vpop.f32.mrf.mxu0
      %v2589 = vadd.f32 0.0, %v2588
      %2590 = vmatmul.f32.gmra.mxu0 %v2521
      %v2591 = vpop.f32.mrf.mxu0
      %v2592 = vadd.f32 0.0, %v2591
      %2593 = vmatmul.f32.gmra.mxu0 %v2522
      %v2594 = vpop.f32.mrf.mxu0
      %v2595 = vadd.f32 0.0, %v2594
      %2596 = vmatmul.f32.gmra.mxu0 %v2523
      %v2597 = vpop.f32.mrf.mxu0
      %v2598 = vadd.f32 0.0, %v2597
      %2599 = vmatmul.f32.gmra.mxu0 %v2524
      %v2600 = vpop.f32.mrf.mxu0
      %v2601 = vadd.f32 0.0, %v2600
      %2602 = vmatmul.f32.gmra.mxu0 %v2525
      %v2603 = vpop.f32.mrf.mxu0
      %v2604 = vadd.f32 0.0, %v2603
      %2605 = vmatmul.f32.gmra.mxu0 %v2526
      %v2606 = vpop.f32.mrf.mxu0
      %v2607 = vadd.f32 0.0, %v2606
      %2608 = vmatmul.f32.gmra.mxu0 %v2527
      %v2609 = vpop.f32.mrf.mxu0
      %v2610 = vadd.f32 0.0, %v2609
      %2611 = vmatmul.f32.gmra.mxu0 %v2528
      %v2612 = vpop.f32.mrf.mxu0
      %v2613 = vadd.f32 0.0, %v2612
      %2614 = vmatmul.f32.gmra.mxu0 %v2529
      %v2615 = vpop.f32.mrf.mxu0
      %v2616 = vadd.f32 0.0, %v2615
      %2617 = vmatmul.f32.gmra.mxu0 %v2530
      %v2618 = vpop.f32.mrf.mxu0
      %v2619 = vadd.f32 0.0, %v2618
      %2620 = vmatmul.f32.gmra.mxu0 %v2531
      %v2621 = vpop.f32.mrf.mxu0
      %v2622 = vadd.f32 0.0, %v2621
      %2623 = vmatmul.f32.gmra.mxu0 %v2532
      %v2624 = vpop.f32.mrf.mxu0
      %v2625 = vadd.f32 0.0, %v2624
      %2626 = vmatmul.f32.gmra.mxu0 %v2533
      %v2627 = vpop.f32.mrf.mxu0
      %v2628 = vadd.f32 0.0, %v2627
      %2629 = vmatmul.f32.gmra.mxu0 %v2534
      %v2630 = vpop.f32.mrf.mxu0
      %v2631 = vadd.f32 0.0, %v2630
      %2632 = vmatmul.f32.gmra.mxu0 %v2535
      %v2633 = vpop.f32.mrf.mxu0
      %v2634 = vadd.f32 0.0, %v2633
      %2635 = vmatmul.f32.gmra.mxu0 %v2536
      %v2636 = vpop.f32.mrf.mxu0
      %v2637 = vadd.f32 0.0, %v2636
      %2638 = vmatmul.f32.gmra.mxu0 %v2537
      %v2639 = vpop.f32.mrf.mxu0
      %v2640 = vadd.f32 0.0, %v2639
      %2641 = vmatmul.f32.gmra.mxu0 %v2538
      %v2642 = vpop.f32.mrf.mxu0
      %v2643 = vadd.f32 0.0, %v2642
      %2644 = vmatmul.f32.gmra.mxu0 %v2539
      %v2645 = vpop.f32.mrf.mxu0
      %v2646 = vadd.f32 0.0, %v2645
      %2647 = vmatmul.f32.gmra.mxu0 %v2540
      %v2648 = vpop.f32.mrf.mxu0
      %v2649 = vadd.f32 0.0, %v2648
      %2650 = vmatmul.f32.gmra.mxu0 %v2541
      %v2651 = vpop.f32.mrf.mxu0
      %v2652 = vadd.f32 0.0, %v2651
      %2653 = vmatmul.f32.gmra.mxu0 %v2542
      %v2654 = vpop.f32.mrf.mxu0
      %v2655 = vadd.f32 0.0, %v2654
      %2656 = vmatmul.f32.gmra.mxu0 %v2543
      %v2657 = vpop.f32.mrf.mxu0
      %v2658 = vadd.f32 0.0, %v2657
      %2659 = vmatmul.f32.gmra.mxu0 %v2544
      %v2660 = vpop.f32.mrf.mxu0
      %v2661 = vadd.f32 0.0, %v2660
      %2662 = vmatmul.f32.gmra.mxu0 %v2545
      %v2663 = vpop.f32.mrf.mxu0
      %v2664 = vadd.f32 0.0, %v2663
      %2665 = vmatmul.f32.gmra.mxu0 %v2546
      %v2666 = vpop.f32.mrf.mxu0
      %v2667 = vadd.f32 0.0, %v2666
      %2668 = vmatmul.f32.gmra.mxu0 %v2547
      %v2669 = vpop.f32.mrf.mxu0
      %v2670 = vadd.f32 0.0, %v2669
      %2671 = vmatmul.f32.gmra.mxu0 %v2548
      %v2672 = vpop.f32.mrf.mxu0
      %v2673 = vadd.f32 0.0, %v2672
      %2674 = vmatmul.f32.gmra.mxu0 %v2549
      %v2675 = vpop.f32.mrf.mxu0
      %v2676 = vadd.f32 0.0, %v2675
      %2677 = vmatmul.f32.gmra.mxu0 %v2550
      %v2678 = vpop.f32.mrf.mxu0
      %v2679 = vadd.f32 0.0, %v2678
      %2680 = vdwg.mxu0
      %v2681 = vadd.f32 %v2487, %v2586
      %v2682 = vadd.f32 %v2488, %v2589
      %v2683 = vadd.f32 %v2489, %v2592
      %v2684 = vadd.f32 %v2490, %v2595
      %v2685 = vadd.f32 %v2491, %v2598
      %v2686 = vadd.f32 %v2492, %v2601
      %v2687 = vadd.f32 %v2493, %v2604
      %v2688 = vadd.f32 %v2494, %v2607
      %v2689 = vadd.f32 %v2495, %v2610
      %v2690 = vadd.f32 %v2496, %v2613
      %v2691 = vadd.f32 %v2497, %v2616
      %v2692 = vadd.f32 %v2498, %v2619
      %v2693 = vadd.f32 %v2499, %v2622
      %v2694 = vadd.f32 %v2500, %v2625
      %v2695 = vadd.f32 %v2501, %v2628
      %v2696 = vadd.f32 %v2502, %v2631
      %v2697 = vadd.f32 %v2503, %v2634
      %v2698 = vadd.f32 %v2504, %v2637
      %v2699 = vadd.f32 %v2505, %v2640
      %v2700 = vadd.f32 %v2506, %v2643
      %v2701 = vadd.f32 %v2507, %v2646
      %v2702 = vadd.f32 %v2508, %v2649
      %v2703 = vadd.f32 %v2509, %v2652
      %v2704 = vadd.f32 %v2510, %v2655
      %v2705 = vadd.f32 %v2511, %v2658
      %v2706 = vadd.f32 %v2512, %v2661
      %v2707 = vadd.f32 %v2513, %v2664
      %v2708 = vadd.f32 %v2514, %v2667
      %v2709 = vadd.f32 %v2515, %v2670
      %v2710 = vadd.f32 %v2516, %v2673
      %v2711 = vadd.f32 %v2517, %v2676
      %v2712 = vadd.f32 %v2518, %v2679
      %s2713 = scalar_lea.vmem [#allocation2], 176
      %v2714 = vld [vmem:[%s2713] sm:$0xff]
      %v2715 = vld [vmem:[%s2713 + $0x10] sm:$0xff]
      %v2716 = vld [vmem:[%s2713 + $0x20] sm:$0xff]
      %v2717 = vld [vmem:[%s2713 + $0x30] sm:$0xff]
      %v2718 = vld [vmem:[%s2713 + $0x40] sm:$0xff]
      %v2719 = vld [vmem:[%s2713 + $0x50] sm:$0xff]
      %v2720 = vld [vmem:[%s2713 + $0x60] sm:$0xff]
      %v2721 = vld [vmem:[%s2713 + $0x70] sm:$0xff]
      %v2722 = vld [vmem:[%s2713 + $0xa0] sm:$0xff]
      %v2723 = vld [vmem:[%s2713 + $0xb0] sm:$0xff]
      %v2724 = vld [vmem:[%s2713 + $0xc0] sm:$0xff]
      %v2725 = vld [vmem:[%s2713 + $0xd0] sm:$0xff]
      %v2726 = vld [vmem:[%s2713 + $0xe0] sm:$0xff]
      %v2727 = vld [vmem:[%s2713 + $0xf0] sm:$0xff]
      %v2728 = vld [vmem:[%s2713 + $0x100] sm:$0xff]
      %v2729 = vld [vmem:[%s2713 + $0x110] sm:$0xff]
      %v2730 = vld [vmem:[%s2713 + $0x140] sm:$0xff]
      %v2731 = vld [vmem:[%s2713 + $0x150] sm:$0xff]
      %v2732 = vld [vmem:[%s2713 + $0x160] sm:$0xff]
      %v2733 = vld [vmem:[%s2713 + $0x170] sm:$0xff]
      %v2734 = vld [vmem:[%s2713 + $0x180] sm:$0xff]
      %v2735 = vld [vmem:[%s2713 + $0x190] sm:$0xff]
      %v2736 = vld [vmem:[%s2713 + $0x1a0] sm:$0xff]
      %v2737 = vld [vmem:[%s2713 + $0x1b0] sm:$0xff]
      %v2738 = vld [vmem:[%s2713 + $0x1e0] sm:$0xff]
      %v2739 = vld [vmem:[%s2713 + $0x1f0] sm:$0xff]
      %v2740 = vld [vmem:[%s2713 + $0x200] sm:$0xff]
      %v2741 = vld [vmem:[%s2713 + $0x210] sm:$0xff]
      %v2742 = vld [vmem:[%s2713 + $0x220] sm:$0xff]
      %v2743 = vld [vmem:[%s2713 + $0x230] sm:$0xff]
      %v2744 = vld [vmem:[%s2713 + $0x240] sm:$0xff]
      %v2745 = vld [vmem:[%s2713 + $0x250] sm:$0xff]
      %s2746 = scalar_lea.vmem %s1, 1536
      %v2747 = vld [vmem:[%s2746] sm:$0xff]
      %v2748 = vld [vmem:[%s2746 + $0x8] sm:$0xff]
      %v2749 = vld [vmem:[%s2746 + $0x10] sm:$0xff]
      %v2750 = vld [vmem:[%s2746 + $0x18] sm:$0xff]
      %v2751 = vld [vmem:[%s2746 + $0x20] sm:$0xff]
      %v2752 = vld [vmem:[%s2746 + $0x28] sm:$0xff]
      %v2753 = vld [vmem:[%s2746 + $0x30] sm:$0xff]
      %v2754 = vld [vmem:[%s2746 + $0x38] sm:$0xff]
      %v2755 = vld [vmem:[%s2746 + $0x40] sm:$0xff]
      %v2756 = vld [vmem:[%s2746 + $0x48] sm:$0xff]
      %v2757 = vld [vmem:[%s2746 + $0x50] sm:$0xff]
      %v2758 = vld [vmem:[%s2746 + $0x58] sm:$0xff]
      %v2759 = vld [vmem:[%s2746 + $0x60] sm:$0xff]
      %v2760 = vld [vmem:[%s2746 + $0x68] sm:$0xff]
      %v2761 = vld [vmem:[%s2746 + $0x70] sm:$0xff]
      %v2762 = vld [vmem:[%s2746 + $0x78] sm:$0xff]
      %2763 = vmatpush.msra.mxu0 %v2762
      %2764 = vmatpush.msra.mxu0 %v2761
      %2765 = vmatpush.msra.mxu0 %v2760
      %2766 = vmatpush.msra.mxu0 %v2759
      %2767 = vmatpush.msra.mxu0 %v2758
      %2768 = vmatpush.msra.mxu0 %v2757
      %2769 = vmatpush.msra.mxu0 %v2756
      %2770 = vmatpush.msra.mxu0 %v2755
      %2771 = vmatpush.msra.mxu0 %v2754
      %2772 = vmatpush.msra.mxu0 %v2753
      %2773 = vmatpush.msra.mxu0 %v2752
      %2774 = vmatpush.msra.mxu0 %v2751
      %2775 = vmatpush.msra.mxu0 %v2750
      %2776 = vmatpush.msra.mxu0 %v2749
      %2777 = vmatpush.msra.mxu0 %v2748
      %2778 = vmatpush.msra.mxu0 %v2747
      %2779 = vmatmul.f32.gmra.mxu0 %v2714
      %v2780 = vpop.f32.mrf.mxu0
      %v2781 = vadd.f32 0.0, %v2780
      %2782 = vmatmul.f32.gmra.mxu0 %v2715
      %v2783 = vpop.f32.mrf.mxu0
      %v2784 = vadd.f32 0.0, %v2783
      %2785 = vmatmul.f32.gmra.mxu0 %v2716
      %v2786 = vpop.f32.mrf.mxu0
      %v2787 = vadd.f32 0.0, %v2786
      %2788 = vmatmul.f32.gmra.mxu0 %v2717
      %v2789 = vpop.f32.mrf.mxu0
      %v2790 = vadd.f32 0.0, %v2789
      %2791 = vmatmul.f32.gmra.mxu0 %v2718
      %v2792 = vpop.f32.mrf.mxu0
      %v2793 = vadd.f32 0.0, %v2792
      %2794 = vmatmul.f32.gmra.mxu0 %v2719
      %v2795 = vpop.f32.mrf.mxu0
      %v2796 = vadd.f32 0.0, %v2795
      %2797 = vmatmul.f32.gmra.mxu0 %v2720
      %v2798 = vpop.f32.mrf.mxu0
      %v2799 = vadd.f32 0.0, %v2798
      %2800 = vmatmul.f32.gmra.mxu0 %v2721
      %v2801 = vpop.f32.mrf.mxu0
      %v2802 = vadd.f32 0.0, %v2801
      %2803 = vmatmul.f32.gmra.mxu0 %v2722
      %v2804 = vpop.f32.mrf.mxu0
      %v2805 = vadd.f32 0.0, %v2804
      %2806 = vmatmul.f32.gmra.mxu0 %v2723
      %v2807 = vpop.f32.mrf.mxu0
      %v2808 = vadd.f32 0.0, %v2807
      %2809 = vmatmul.f32.gmra.mxu0 %v2724
      %v2810 = vpop.f32.mrf.mxu0
      %v2811 = vadd.f32 0.0, %v2810
      %2812 = vmatmul.f32.gmra.mxu0 %v2725
      %v2813 = vpop.f32.mrf.mxu0
      %v2814 = vadd.f32 0.0, %v2813
      %2815 = vmatmul.f32.gmra.mxu0 %v2726
      %v2816 = vpop.f32.mrf.mxu0
      %v2817 = vadd.f32 0.0, %v2816
      %2818 = vmatmul.f32.gmra.mxu0 %v2727
      %v2819 = vpop.f32.mrf.mxu0
      %v2820 = vadd.f32 0.0, %v2819
      %2821 = vmatmul.f32.gmra.mxu0 %v2728
      %v2822 = vpop.f32.mrf.mxu0
      %v2823 = vadd.f32 0.0, %v2822
      %2824 = vmatmul.f32.gmra.mxu0 %v2729
      %v2825 = vpop.f32.mrf.mxu0
      %v2826 = vadd.f32 0.0, %v2825
      %2827 = vmatmul.f32.gmra.mxu0 %v2730
      %v2828 = vpop.f32.mrf.mxu0
      %v2829 = vadd.f32 0.0, %v2828
      %2830 = vmatmul.f32.gmra.mxu0 %v2731
      %v2831 = vpop.f32.mrf.mxu0
      %v2832 = vadd.f32 0.0, %v2831
      %2833 = vmatmul.f32.gmra.mxu0 %v2732
      %v2834 = vpop.f32.mrf.mxu0
      %v2835 = vadd.f32 0.0, %v2834
      %2836 = vmatmul.f32.gmra.mxu0 %v2733
      %v2837 = vpop.f32.mrf.mxu0
      %v2838 = vadd.f32 0.0, %v2837
      %2839 = vmatmul.f32.gmra.mxu0 %v2734
      %v2840 = vpop.f32.mrf.mxu0
      %v2841 = vadd.f32 0.0, %v2840
      %2842 = vmatmul.f32.gmra.mxu0 %v2735
      %v2843 = vpop.f32.mrf.mxu0
      %v2844 = vadd.f32 0.0, %v2843
      %2845 = vmatmul.f32.gmra.mxu0 %v2736
      %v2846 = vpop.f32.mrf.mxu0
      %v2847 = vadd.f32 0.0, %v2846
      %2848 = vmatmul.f32.gmra.mxu0 %v2737
      %v2849 = vpop.f32.mrf.mxu0
      %v2850 = vadd.f32 0.0, %v2849
      %2851 = vmatmul.f32.gmra.mxu0 %v2738
      %v2852 = vpop.f32.mrf.mxu0
      %v2853 = vadd.f32 0.0, %v2852
      %2854 = vmatmul.f32.gmra.mxu0 %v2739
      %v2855 = vpop.f32.mrf.mxu0
      %v2856 = vadd.f32 0.0, %v2855
      %2857 = vmatmul.f32.gmra.mxu0 %v2740
      %v2858 = vpop.f32.mrf.mxu0
      %v2859 = vadd.f32 0.0, %v2858
      %2860 = vmatmul.f32.gmra.mxu0 %v2741
      %v2861 = vpop.f32.mrf.mxu0
      %v2862 = vadd.f32 0.0, %v2861
      %2863 = vmatmul.f32.gmra.mxu0 %v2742
      %v2864 = vpop.f32.mrf.mxu0
      %v2865 = vadd.f32 0.0, %v2864
      %2866 = vmatmul.f32.gmra.mxu0 %v2743
      %v2867 = vpop.f32.mrf.mxu0
      %v2868 = vadd.f32 0.0, %v2867
      %2869 = vmatmul.f32.gmra.mxu0 %v2744
      %v2870 = vpop.f32.mrf.mxu0
      %v2871 = vadd.f32 0.0, %v2870
      %2872 = vmatmul.f32.gmra.mxu0 %v2745
      %v2873 = vpop.f32.mrf.mxu0
      %v2874 = vadd.f32 0.0, %v2873
      %2875 = vdwg.mxu0
      %v2876 = vadd.f32 %v2681, %v2781
      %v2877 = vadd.f32 %v2682, %v2784
      %v2878 = vadd.f32 %v2683, %v2787
      %v2879 = vadd.f32 %v2684, %v2790
      %v2880 = vadd.f32 %v2685, %v2793
      %v2881 = vadd.f32 %v2686, %v2796
      %v2882 = vadd.f32 %v2687, %v2799
      %v2883 = vadd.f32 %v2688, %v2802
      %v2884 = vadd.f32 %v2689, %v2805
      %v2885 = vadd.f32 %v2690, %v2808
      %v2886 = vadd.f32 %v2691, %v2811
      %v2887 = vadd.f32 %v2692, %v2814
      %v2888 = vadd.f32 %v2693, %v2817
      %v2889 = vadd.f32 %v2694, %v2820
      %v2890 = vadd.f32 %v2695, %v2823
      %v2891 = vadd.f32 %v2696, %v2826
      %v2892 = vadd.f32 %v2697, %v2829
      %v2893 = vadd.f32 %v2698, %v2832
      %v2894 = vadd.f32 %v2699, %v2835
      %v2895 = vadd.f32 %v2700, %v2838
      %v2896 = vadd.f32 %v2701, %v2841
      %v2897 = vadd.f32 %v2702, %v2844
      %v2898 = vadd.f32 %v2703, %v2847
      %v2899 = vadd.f32 %v2704, %v2850
      %v2900 = vadd.f32 %v2705, %v2853
      %v2901 = vadd.f32 %v2706, %v2856
      %v2902 = vadd.f32 %v2707, %v2859
      %v2903 = vadd.f32 %v2708, %v2862
      %v2904 = vadd.f32 %v2709, %v2865
      %v2905 = vadd.f32 %v2710, %v2868
      %v2906 = vadd.f32 %v2711, %v2871
      %v2907 = vadd.f32 %v2712, %v2874
      %v2908 = vld [vmem:[%s2713 + $0x1] sm:$0xff]
      %v2909 = vld [vmem:[%s2713 + $0x11] sm:$0xff]
      %v2910 = vld [vmem:[%s2713 + $0x21] sm:$0xff]
      %v2911 = vld [vmem:[%s2713 + $0x31] sm:$0xff]
      %v2912 = vld [vmem:[%s2713 + $0x41] sm:$0xff]
      %v2913 = vld [vmem:[%s2713 + $0x51] sm:$0xff]
      %v2914 = vld [vmem:[%s2713 + $0x61] sm:$0xff]
      %v2915 = vld [vmem:[%s2713 + $0x71] sm:$0xff]
      %v2916 = vld [vmem:[%s2713 + $0xa1] sm:$0xff]
      %v2917 = vld [vmem:[%s2713 + $0xb1] sm:$0xff]
      %v2918 = vld [vmem:[%s2713 + $0xc1] sm:$0xff]
      %v2919 = vld [vmem:[%s2713 + $0xd1] sm:$0xff]
      %v2920 = vld [vmem:[%s2713 + $0xe1] sm:$0xff]
      %v2921 = vld [vmem:[%s2713 + $0xf1] sm:$0xff]
      %v2922 = vld [vmem:[%s2713 + $0x101] sm:$0xff]
      %v2923 = vld [vmem:[%s2713 + $0x111] sm:$0xff]
      %v2924 = vld [vmem:[%s2713 + $0x141] sm:$0xff]
      %v2925 = vld [vmem:[%s2713 + $0x151] sm:$0xff]
      %v2926 = vld [vmem:[%s2713 + $0x161] sm:$0xff]
      %v2927 = vld [vmem:[%s2713 + $0x171] sm:$0xff]
      %v2928 = vld [vmem:[%s2713 + $0x181] sm:$0xff]
      %v2929 = vld [vmem:[%s2713 + $0x191] sm:$0xff]
      %v2930 = vld [vmem:[%s2713 + $0x1a1] sm:$0xff]
      %v2931 = vld [vmem:[%s2713 + $0x1b1] sm:$0xff]
      %v2932 = vld [vmem:[%s2713 + $0x1e1] sm:$0xff]
      %v2933 = vld [vmem:[%s2713 + $0x1f1] sm:$0xff]
      %v2934 = vld [vmem:[%s2713 + $0x201] sm:$0xff]
      %v2935 = vld [vmem:[%s2713 + $0x211] sm:$0xff]
      %v2936 = vld [vmem:[%s2713 + $0x221] sm:$0xff]
      %v2937 = vld [vmem:[%s2713 + $0x231] sm:$0xff]
      %v2938 = vld [vmem:[%s2713 + $0x241] sm:$0xff]
      %v2939 = vld [vmem:[%s2713 + $0x251] sm:$0xff]
      %s2940 = scalar_lea.vmem %s1, 1664
      %v2941 = vld [vmem:[%s2940] sm:$0xff]
      %v2942 = vld [vmem:[%s2940 + $0x8] sm:$0xff]
      %v2943 = vld [vmem:[%s2940 + $0x10] sm:$0xff]
      %v2944 = vld [vmem:[%s2940 + $0x18] sm:$0xff]
      %v2945 = vld [vmem:[%s2940 + $0x20] sm:$0xff]
      %v2946 = vld [vmem:[%s2940 + $0x28] sm:$0xff]
      %v2947 = vld [vmem:[%s2940 + $0x30] sm:$0xff]
      %v2948 = vld [vmem:[%s2940 + $0x38] sm:$0xff]
      %v2949 = vld [vmem:[%s2940 + $0x40] sm:$0xff]
      %v2950 = vld [vmem:[%s2940 + $0x48] sm:$0xff]
      %v2951 = vld [vmem:[%s2940 + $0x50] sm:$0xff]
      %v2952 = vld [vmem:[%s2940 + $0x58] sm:$0xff]
      %v2953 = vld [vmem:[%s2940 + $0x60] sm:$0xff]
      %v2954 = vld [vmem:[%s2940 + $0x68] sm:$0xff]
      %v2955 = vld [vmem:[%s2940 + $0x70] sm:$0xff]
      %v2956 = vld [vmem:[%s2940 + $0x78] sm:$0xff]
      %2957 = vmatpush.msra.mxu0 %v2956
      %2958 = vmatpush.msra.mxu0 %v2955
      %2959 = vmatpush.msra.mxu0 %v2954
      %2960 = vmatpush.msra.mxu0 %v2953
      %2961 = vmatpush.msra.mxu0 %v2952
      %2962 = vmatpush.msra.mxu0 %v2951
      %2963 = vmatpush.msra.mxu0 %v2950
      %2964 = vmatpush.msra.mxu0 %v2949
      %2965 = vmatpush.msra.mxu0 %v2948
      %2966 = vmatpush.msra.mxu0 %v2947
      %2967 = vmatpush.msra.mxu0 %v2946
      %2968 = vmatpush.msra.mxu0 %v2945
      %2969 = vmatpush.msra.mxu0 %v2944
      %2970 = vmatpush.msra.mxu0 %v2943
      %2971 = vmatpush.msra.mxu0 %v2942
      %2972 = vmatpush.msra.mxu0 %v2941
      %2973 = vmatmul.f32.gmra.mxu0 %v2908
      %v2974 = vpop.f32.mrf.mxu0
      %v2975 = vadd.f32 0.0, %v2974
      %2976 = vmatmul.f32.gmra.mxu0 %v2909
      %v2977 = vpop.f32.mrf.mxu0
      %v2978 = vadd.f32 0.0, %v2977
      %2979 = vmatmul.f32.gmra.mxu0 %v2910
      %v2980 = vpop.f32.mrf.mxu0
      %v2981 = vadd.f32 0.0, %v2980
      %2982 = vmatmul.f32.gmra.mxu0 %v2911
      %v2983 = vpop.f32.mrf.mxu0
      %v2984 = vadd.f32 0.0, %v2983
      %2985 = vmatmul.f32.gmra.mxu0 %v2912
      %v2986 = vpop.f32.mrf.mxu0
      %v2987 = vadd.f32 0.0, %v2986
      %2988 = vmatmul.f32.gmra.mxu0 %v2913
      %v2989 = vpop.f32.mrf.mxu0
      %v2990 = vadd.f32 0.0, %v2989
      %2991 = vmatmul.f32.gmra.mxu0 %v2914
      %v2992 = vpop.f32.mrf.mxu0
      %v2993 = vadd.f32 0.0, %v2992
      %2994 = vmatmul.f32.gmra.mxu0 %v2915
      %v2995 = vpop.f32.mrf.mxu0
      %v2996 = vadd.f32 0.0, %v2995
      %2997 = vmatmul.f32.gmra.mxu0 %v2916
      %v2998 = vpop.f32.mrf.mxu0
      %v2999 = vadd.f32 0.0, %v2998
      %3000 = vmatmul.f32.gmra.mxu0 %v2917
      %v3001 = vpop.f32.mrf.mxu0
      %v3002 = vadd.f32 0.0, %v3001
      %3003 = vmatmul.f32.gmra.mxu0 %v2918
      %v3004 = vpop.f32.mrf.mxu0
      %v3005 = vadd.f32 0.0, %v3004
      %3006 = vmatmul.f32.gmra.mxu0 %v2919
      %v3007 = vpop.f32.mrf.mxu0
      %v3008 = vadd.f32 0.0, %v3007
      %3009 = vmatmul.f32.gmra.mxu0 %v2920
      %v3010 = vpop.f32.mrf.mxu0
      %v3011 = vadd.f32 0.0, %v3010
      %3012 = vmatmul.f32.gmra.mxu0 %v2921
      %v3013 = vpop.f32.mrf.mxu0
      %v3014 = vadd.f32 0.0, %v3013
      %3015 = vmatmul.f32.gmra.mxu0 %v2922
      %v3016 = vpop.f32.mrf.mxu0
      %v3017 = vadd.f32 0.0, %v3016
      %3018 = vmatmul.f32.gmra.mxu0 %v2923
      %v3019 = vpop.f32.mrf.mxu0
      %v3020 = vadd.f32 0.0, %v3019
      %3021 = vmatmul.f32.gmra.mxu0 %v2924
      %v3022 = vpop.f32.mrf.mxu0
      %v3023 = vadd.f32 0.0, %v3022
      %3024 = vmatmul.f32.gmra.mxu0 %v2925
      %v3025 = vpop.f32.mrf.mxu0
      %v3026 = vadd.f32 0.0, %v3025
      %3027 = vmatmul.f32.gmra.mxu0 %v2926
      %v3028 = vpop.f32.mrf.mxu0
      %v3029 = vadd.f32 0.0, %v3028
      %3030 = vmatmul.f32.gmra.mxu0 %v2927
      %v3031 = vpop.f32.mrf.mxu0
      %v3032 = vadd.f32 0.0, %v3031
      %3033 = vmatmul.f32.gmra.mxu0 %v2928
      %v3034 = vpop.f32.mrf.mxu0
      %v3035 = vadd.f32 0.0, %v3034
      %3036 = vmatmul.f32.gmra.mxu0 %v2929
      %v3037 = vpop.f32.mrf.mxu0
      %v3038 = vadd.f32 0.0, %v3037
      %3039 = vmatmul.f32.gmra.mxu0 %v2930
      %v3040 = vpop.f32.mrf.mxu0
      %v3041 = vadd.f32 0.0, %v3040
      %3042 = vmatmul.f32.gmra.mxu0 %v2931
      %v3043 = vpop.f32.mrf.mxu0
      %v3044 = vadd.f32 0.0, %v3043
      %3045 = vmatmul.f32.gmra.mxu0 %v2932
      %v3046 = vpop.f32.mrf.mxu0
      %v3047 = vadd.f32 0.0, %v3046
      %3048 = vmatmul.f32.gmra.mxu0 %v2933
      %v3049 = vpop.f32.mrf.mxu0
      %v3050 = vadd.f32 0.0, %v3049
      %3051 = vmatmul.f32.gmra.mxu0 %v2934
      %v3052 = vpop.f32.mrf.mxu0
      %v3053 = vadd.f32 0.0, %v3052
      %3054 = vmatmul.f32.gmra.mxu0 %v2935
      %v3055 = vpop.f32.mrf.mxu0
      %v3056 = vadd.f32 0.0, %v3055
      %3057 = vmatmul.f32.gmra.mxu0 %v2936
      %v3058 = vpop.f32.mrf.mxu0
      %v3059 = vadd.f32 0.0, %v3058
      %3060 = vmatmul.f32.gmra.mxu0 %v2937
      %v3061 = vpop.f32.mrf.mxu0
      %v3062 = vadd.f32 0.0, %v3061
      %3063 = vmatmul.f32.gmra.mxu0 %v2938
      %v3064 = vpop.f32.mrf.mxu0
      %v3065 = vadd.f32 0.0, %v3064
      %3066 = vmatmul.f32.gmra.mxu0 %v2939
      %v3067 = vpop.f32.mrf.mxu0
      %v3068 = vadd.f32 0.0, %v3067
      %3069 = vdwg.mxu0
      %v3070 = vadd.f32 %v2876, %v2975
      %v3071 = vadd.f32 %v2877, %v2978
      %v3072 = vadd.f32 %v2878, %v2981
      %v3073 = vadd.f32 %v2879, %v2984
      %v3074 = vadd.f32 %v2880, %v2987
      %v3075 = vadd.f32 %v2881, %v2990
      %v3076 = vadd.f32 %v2882, %v2993
      %v3077 = vadd.f32 %v2883, %v2996
      %v3078 = vadd.f32 %v2884, %v2999
      %v3079 = vadd.f32 %v2885, %v3002
      %v3080 = vadd.f32 %v2886, %v3005
      %v3081 = vadd.f32 %v2887, %v3008
      %v3082 = vadd.f32 %v2888, %v3011
      %v3083 = vadd.f32 %v2889, %v3014
      %v3084 = vadd.f32 %v2890, %v3017
      %v3085 = vadd.f32 %v2891, %v3020
      %v3086 = vadd.f32 %v2892, %v3023
      %v3087 = vadd.f32 %v2893, %v3026
      %v3088 = vadd.f32 %v2894, %v3029
      %v3089 = vadd.f32 %v2895, %v3032
      %v3090 = vadd.f32 %v2896, %v3035
      %v3091 = vadd.f32 %v2897, %v3038
      %v3092 = vadd.f32 %v2898, %v3041
      %v3093 = vadd.f32 %v2899, %v3044
      %v3094 = vadd.f32 %v2900, %v3047
      %v3095 = vadd.f32 %v2901, %v3050
      %v3096 = vadd.f32 %v2902, %v3053
      %v3097 = vadd.f32 %v2903, %v3056
      %v3098 = vadd.f32 %v2904, %v3059
      %v3099 = vadd.f32 %v2905, %v3062
      %v3100 = vadd.f32 %v2906, %v3065
      %v3101 = vadd.f32 %v2907, %v3068
      %v3102 = vld [vmem:[%s2713 + $0x2] sm:$0xff]
      %v3103 = vld [vmem:[%s2713 + $0x12] sm:$0xff]
      %v3104 = vld [vmem:[%s2713 + $0x22] sm:$0xff]
      %v3105 = vld [vmem:[%s2713 + $0x32] sm:$0xff]
      %v3106 = vld [vmem:[%s2713 + $0x42] sm:$0xff]
      %v3107 = vld [vmem:[%s2713 + $0x52] sm:$0xff]
      %v3108 = vld [vmem:[%s2713 + $0x62] sm:$0xff]
      %v3109 = vld [vmem:[%s2713 + $0x72] sm:$0xff]
      %v3110 = vld [vmem:[%s2713 + $0xa2] sm:$0xff]
      %v3111 = vld [vmem:[%s2713 + $0xb2] sm:$0xff]
      %v3112 = vld [vmem:[%s2713 + $0xc2] sm:$0xff]
      %v3113 = vld [vmem:[%s2713 + $0xd2] sm:$0xff]
      %v3114 = vld [vmem:[%s2713 + $0xe2] sm:$0xff]
      %v3115 = vld [vmem:[%s2713 + $0xf2] sm:$0xff]
      %v3116 = vld [vmem:[%s2713 + $0x102] sm:$0xff]
      %v3117 = vld [vmem:[%s2713 + $0x112] sm:$0xff]
      %v3118 = vld [vmem:[%s2713 + $0x142] sm:$0xff]
      %v3119 = vld [vmem:[%s2713 + $0x152] sm:$0xff]
      %v3120 = vld [vmem:[%s2713 + $0x162] sm:$0xff]
      %v3121 = vld [vmem:[%s2713 + $0x172] sm:$0xff]
      %v3122 = vld [vmem:[%s2713 + $0x182] sm:$0xff]
      %v3123 = vld [vmem:[%s2713 + $0x192] sm:$0xff]
      %v3124 = vld [vmem:[%s2713 + $0x1a2] sm:$0xff]
      %v3125 = vld [vmem:[%s2713 + $0x1b2] sm:$0xff]
      %v3126 = vld [vmem:[%s2713 + $0x1e2] sm:$0xff]
      %v3127 = vld [vmem:[%s2713 + $0x1f2] sm:$0xff]
      %v3128 = vld [vmem:[%s2713 + $0x202] sm:$0xff]
      %v3129 = vld [vmem:[%s2713 + $0x212] sm:$0xff]
      %v3130 = vld [vmem:[%s2713 + $0x222] sm:$0xff]
      %v3131 = vld [vmem:[%s2713 + $0x232] sm:$0xff]
      %v3132 = vld [vmem:[%s2713 + $0x242] sm:$0xff]
      %v3133 = vld [vmem:[%s2713 + $0x252] sm:$0xff]
      %s3134 = scalar_lea.vmem %s1, 1792
      %v3135 = vld [vmem:[%s3134] sm:$0xff]
      %v3136 = vld [vmem:[%s3134 + $0x8] sm:$0xff]
      %v3137 = vld [vmem:[%s3134 + $0x10] sm:$0xff]
      %v3138 = vld [vmem:[%s3134 + $0x18] sm:$0xff]
      %v3139 = vld [vmem:[%s3134 + $0x20] sm:$0xff]
      %v3140 = vld [vmem:[%s3134 + $0x28] sm:$0xff]
      %v3141 = vld [vmem:[%s3134 + $0x30] sm:$0xff]
      %v3142 = vld [vmem:[%s3134 + $0x38] sm:$0xff]
      %v3143 = vld [vmem:[%s3134 + $0x40] sm:$0xff]
      %v3144 = vld [vmem:[%s3134 + $0x48] sm:$0xff]
      %v3145 = vld [vmem:[%s3134 + $0x50] sm:$0xff]
      %v3146 = vld [vmem:[%s3134 + $0x58] sm:$0xff]
      %v3147 = vld [vmem:[%s3134 + $0x60] sm:$0xff]
      %v3148 = vld [vmem:[%s3134 + $0x68] sm:$0xff]
      %v3149 = vld [vmem:[%s3134 + $0x70] sm:$0xff]
      %v3150 = vld [vmem:[%s3134 + $0x78] sm:$0xff]
      %3151 = vmatpush.msra.mxu0 %v3150
      %3152 = vmatpush.msra.mxu0 %v3149
      %3153 = vmatpush.msra.mxu0 %v3148
      %3154 = vmatpush.msra.mxu0 %v3147
      %3155 = vmatpush.msra.mxu0 %v3146
      %3156 = vmatpush.msra.mxu0 %v3145
      %3157 = vmatpush.msra.mxu0 %v3144
      %3158 = vmatpush.msra.mxu0 %v3143
      %3159 = vmatpush.msra.mxu0 %v3142
      %3160 = vmatpush.msra.mxu0 %v3141
      %3161 = vmatpush.msra.mxu0 %v3140
      %3162 = vmatpush.msra.mxu0 %v3139
      %3163 = vmatpush.msra.mxu0 %v3138
      %3164 = vmatpush.msra.mxu0 %v3137
      %3165 = vmatpush.msra.mxu0 %v3136
      %3166 = vmatpush.msra.mxu0 %v3135
      %3167 = vmatmul.f32.gmra.mxu0 %v3102
      %v3168 = vpop.f32.mrf.mxu0
      %v3169 = vadd.f32 0.0, %v3168
      %3170 = vmatmul.f32.gmra.mxu0 %v3103
      %v3171 = vpop.f32.mrf.mxu0
      %v3172 = vadd.f32 0.0, %v3171
      %3173 = vmatmul.f32.gmra.mxu0 %v3104
      %v3174 = vpop.f32.mrf.mxu0
      %v3175 = vadd.f32 0.0, %v3174
      %3176 = vmatmul.f32.gmra.mxu0 %v3105
      %v3177 = vpop.f32.mrf.mxu0
      %v3178 = vadd.f32 0.0, %v3177
      %3179 = vmatmul.f32.gmra.mxu0 %v3106
      %v3180 = vpop.f32.mrf.mxu0
      %v3181 = vadd.f32 0.0, %v3180
      %3182 = vmatmul.f32.gmra.mxu0 %v3107
      %v3183 = vpop.f32.mrf.mxu0
      %v3184 = vadd.f32 0.0, %v3183
      %3185 = vmatmul.f32.gmra.mxu0 %v3108
      %v3186 = vpop.f32.mrf.mxu0
      %v3187 = vadd.f32 0.0, %v3186
      %3188 = vmatmul.f32.gmra.mxu0 %v3109
      %v3189 = vpop.f32.mrf.mxu0
      %v3190 = vadd.f32 0.0, %v3189
      %3191 = vmatmul.f32.gmra.mxu0 %v3110
      %v3192 = vpop.f32.mrf.mxu0
      %v3193 = vadd.f32 0.0, %v3192
      %3194 = vmatmul.f32.gmra.mxu0 %v3111
      %v3195 = vpop.f32.mrf.mxu0
      %v3196 = vadd.f32 0.0, %v3195
      %3197 = vmatmul.f32.gmra.mxu0 %v3112
      %v3198 = vpop.f32.mrf.mxu0
      %v3199 = vadd.f32 0.0, %v3198
      %3200 = vmatmul.f32.gmra.mxu0 %v3113
      %v3201 = vpop.f32.mrf.mxu0
      %v3202 = vadd.f32 0.0, %v3201
      %3203 = vmatmul.f32.gmra.mxu0 %v3114
      %v3204 = vpop.f32.mrf.mxu0
      %v3205 = vadd.f32 0.0, %v3204
      %3206 = vmatmul.f32.gmra.mxu0 %v3115
      %v3207 = vpop.f32.mrf.mxu0
      %v3208 = vadd.f32 0.0, %v3207
      %3209 = vmatmul.f32.gmra.mxu0 %v3116
      %v3210 = vpop.f32.mrf.mxu0
      %v3211 = vadd.f32 0.0, %v3210
      %3212 = vmatmul.f32.gmra.mxu0 %v3117
      %v3213 = vpop.f32.mrf.mxu0
      %v3214 = vadd.f32 0.0, %v3213
      %3215 = vmatmul.f32.gmra.mxu0 %v3118
      %v3216 = vpop.f32.mrf.mxu0
      %v3217 = vadd.f32 0.0, %v3216
      %3218 = vmatmul.f32.gmra.mxu0 %v3119
      %v3219 = vpop.f32.mrf.mxu0
      %v3220 = vadd.f32 0.0, %v3219
      %3221 = vmatmul.f32.gmra.mxu0 %v3120
      %v3222 = vpop.f32.mrf.mxu0
      %v3223 = vadd.f32 0.0, %v3222
      %3224 = vmatmul.f32.gmra.mxu0 %v3121
      %v3225 = vpop.f32.mrf.mxu0
      %v3226 = vadd.f32 0.0, %v3225
      %3227 = vmatmul.f32.gmra.mxu0 %v3122
      %v3228 = vpop.f32.mrf.mxu0
      %v3229 = vadd.f32 0.0, %v3228
      %3230 = vmatmul.f32.gmra.mxu0 %v3123
      %v3231 = vpop.f32.mrf.mxu0
      %v3232 = vadd.f32 0.0, %v3231
      %3233 = vmatmul.f32.gmra.mxu0 %v3124
      %v3234 = vpop.f32.mrf.mxu0
      %v3235 = vadd.f32 0.0, %v3234
      %3236 = vmatmul.f32.gmra.mxu0 %v3125
      %v3237 = vpop.f32.mrf.mxu0
      %v3238 = vadd.f32 0.0, %v3237
      %3239 = vmatmul.f32.gmra.mxu0 %v3126
      %v3240 = vpop.f32.mrf.mxu0
      %v3241 = vadd.f32 0.0, %v3240
      %3242 = vmatmul.f32.gmra.mxu0 %v3127
      %v3243 = vpop.f32.mrf.mxu0
      %v3244 = vadd.f32 0.0, %v3243
      %3245 = vmatmul.f32.gmra.mxu0 %v3128
      %v3246 = vpop.f32.mrf.mxu0
      %v3247 = vadd.f32 0.0, %v3246
      %3248 = vmatmul.f32.gmra.mxu0 %v3129
      %v3249 = vpop.f32.mrf.mxu0
      %v3250 = vadd.f32 0.0, %v3249
      %3251 = vmatmul.f32.gmra.mxu0 %v3130
      %v3252 = vpop.f32.mrf.mxu0
      %v3253 = vadd.f32 0.0, %v3252
      %3254 = vmatmul.f32.gmra.mxu0 %v3131
      %v3255 = vpop.f32.mrf.mxu0
      %v3256 = vadd.f32 0.0, %v3255
      %3257 = vmatmul.f32.gmra.mxu0 %v3132
      %v3258 = vpop.f32.mrf.mxu0
      %v3259 = vadd.f32 0.0, %v3258
      %3260 = vmatmul.f32.gmra.mxu0 %v3133
      %v3261 = vpop.f32.mrf.mxu0
      %v3262 = vadd.f32 0.0, %v3261
      %3263 = vdwg.mxu0
      %v3264 = vadd.f32 %v3070, %v3169
      %v3265 = vadd.f32 %v3071, %v3172
      %v3266 = vadd.f32 %v3072, %v3175
      %v3267 = vadd.f32 %v3073, %v3178
      %v3268 = vadd.f32 %v3074, %v3181
      %v3269 = vadd.f32 %v3075, %v3184
      %v3270 = vadd.f32 %v3076, %v3187
      %v3271 = vadd.f32 %v3077, %v3190
      %v3272 = vadd.f32 %v3078, %v3193
      %v3273 = vadd.f32 %v3079, %v3196
      %v3274 = vadd.f32 %v3080, %v3199
      %v3275 = vadd.f32 %v3081, %v3202
      %v3276 = vadd.f32 %v3082, %v3205
      %v3277 = vadd.f32 %v3083, %v3208
      %v3278 = vadd.f32 %v3084, %v3211
      %v3279 = vadd.f32 %v3085, %v3214
      %v3280 = vadd.f32 %v3086, %v3217
      %v3281 = vadd.f32 %v3087, %v3220
      %v3282 = vadd.f32 %v3088, %v3223
      %v3283 = vadd.f32 %v3089, %v3226
      %v3284 = vadd.f32 %v3090, %v3229
      %v3285 = vadd.f32 %v3091, %v3232
      %v3286 = vadd.f32 %v3092, %v3235
      %v3287 = vadd.f32 %v3093, %v3238
      %v3288 = vadd.f32 %v3094, %v3241
      %v3289 = vadd.f32 %v3095, %v3244
      %v3290 = vadd.f32 %v3096, %v3247
      %v3291 = vadd.f32 %v3097, %v3250
      %v3292 = vadd.f32 %v3098, %v3253
      %v3293 = vadd.f32 %v3099, %v3256
      %v3294 = vadd.f32 %v3100, %v3259
      %v3295 = vadd.f32 %v3101, %v3262
      %s3296 = scalar_lea.vmem [#allocation2], 192
      %v3297 = vld [vmem:[%s3296] sm:$0xff]
      %v3298 = vld [vmem:[%s3296 + $0x10] sm:$0xff]
      %v3299 = vld [vmem:[%s3296 + $0x20] sm:$0xff]
      %v3300 = vld [vmem:[%s3296 + $0x30] sm:$0xff]
      %v3301 = vld [vmem:[%s3296 + $0x40] sm:$0xff]
      %v3302 = vld [vmem:[%s3296 + $0x50] sm:$0xff]
      %v3303 = vld [vmem:[%s3296 + $0x60] sm:$0xff]
      %v3304 = vld [vmem:[%s3296 + $0x70] sm:$0xff]
      %v3305 = vld [vmem:[%s3296 + $0xa0] sm:$0xff]
      %v3306 = vld [vmem:[%s3296 + $0xb0] sm:$0xff]
      %v3307 = vld [vmem:[%s3296 + $0xc0] sm:$0xff]
      %v3308 = vld [vmem:[%s3296 + $0xd0] sm:$0xff]
      %v3309 = vld [vmem:[%s3296 + $0xe0] sm:$0xff]
      %v3310 = vld [vmem:[%s3296 + $0xf0] sm:$0xff]
      %v3311 = vld [vmem:[%s3296 + $0x100] sm:$0xff]
      %v3312 = vld [vmem:[%s3296 + $0x110] sm:$0xff]
      %v3313 = vld [vmem:[%s3296 + $0x140] sm:$0xff]
      %v3314 = vld [vmem:[%s3296 + $0x150] sm:$0xff]
      %v3315 = vld [vmem:[%s3296 + $0x160] sm:$0xff]
      %v3316 = vld [vmem:[%s3296 + $0x170] sm:$0xff]
      %v3317 = vld [vmem:[%s3296 + $0x180] sm:$0xff]
      %v3318 = vld [vmem:[%s3296 + $0x190] sm:$0xff]
      %v3319 = vld [vmem:[%s3296 + $0x1a0] sm:$0xff]
      %v3320 = vld [vmem:[%s3296 + $0x1b0] sm:$0xff]
      %v3321 = vld [vmem:[%s3296 + $0x1e0] sm:$0xff]
      %v3322 = vld [vmem:[%s3296 + $0x1f0] sm:$0xff]
      %v3323 = vld [vmem:[%s3296 + $0x200] sm:$0xff]
      %v3324 = vld [vmem:[%s3296 + $0x210] sm:$0xff]
      %v3325 = vld [vmem:[%s3296 + $0x220] sm:$0xff]
      %v3326 = vld [vmem:[%s3296 + $0x230] sm:$0xff]
      %v3327 = vld [vmem:[%s3296 + $0x240] sm:$0xff]
      %v3328 = vld [vmem:[%s3296 + $0x250] sm:$0xff]
      %s3329 = scalar_lea.vmem %s1, 1920
      %v3330 = vld [vmem:[%s3329] sm:$0xff]
      %v3331 = vld [vmem:[%s3329 + $0x8] sm:$0xff]
      %v3332 = vld [vmem:[%s3329 + $0x10] sm:$0xff]
      %v3333 = vld [vmem:[%s3329 + $0x18] sm:$0xff]
      %v3334 = vld [vmem:[%s3329 + $0x20] sm:$0xff]
      %v3335 = vld [vmem:[%s3329 + $0x28] sm:$0xff]
      %v3336 = vld [vmem:[%s3329 + $0x30] sm:$0xff]
      %v3337 = vld [vmem:[%s3329 + $0x38] sm:$0xff]
      %v3338 = vld [vmem:[%s3329 + $0x40] sm:$0xff]
      %v3339 = vld [vmem:[%s3329 + $0x48] sm:$0xff]
      %v3340 = vld [vmem:[%s3329 + $0x50] sm:$0xff]
      %v3341 = vld [vmem:[%s3329 + $0x58] sm:$0xff]
      %v3342 = vld [vmem:[%s3329 + $0x60] sm:$0xff]
      %v3343 = vld [vmem:[%s3329 + $0x68] sm:$0xff]
      %v3344 = vld [vmem:[%s3329 + $0x70] sm:$0xff]
      %v3345 = vld [vmem:[%s3329 + $0x78] sm:$0xff]
      %3346 = vmatpush.msra.mxu0 %v3345
      %3347 = vmatpush.msra.mxu0 %v3344
      %3348 = vmatpush.msra.mxu0 %v3343
      %3349 = vmatpush.msra.mxu0 %v3342
      %3350 = vmatpush.msra.mxu0 %v3341
      %3351 = vmatpush.msra.mxu0 %v3340
      %3352 = vmatpush.msra.mxu0 %v3339
      %3353 = vmatpush.msra.mxu0 %v3338
      %3354 = vmatpush.msra.mxu0 %v3337
      %3355 = vmatpush.msra.mxu0 %v3336
      %3356 = vmatpush.msra.mxu0 %v3335
      %3357 = vmatpush.msra.mxu0 %v3334
      %3358 = vmatpush.msra.mxu0 %v3333
      %3359 = vmatpush.msra.mxu0 %v3332
      %3360 = vmatpush.msra.mxu0 %v3331
      %3361 = vmatpush.msra.mxu0 %v3330
      %3362 = vmatmul.f32.gmra.mxu0 %v3297
      %v3363 = vpop.f32.mrf.mxu0
      %v3364 = vadd.f32 0.0, %v3363
      %3365 = vmatmul.f32.gmra.mxu0 %v3298
      %v3366 = vpop.f32.mrf.mxu0
      %v3367 = vadd.f32 0.0, %v3366
      %3368 = vmatmul.f32.gmra.mxu0 %v3299
      %v3369 = vpop.f32.mrf.mxu0
      %v3370 = vadd.f32 0.0, %v3369
      %3371 = vmatmul.f32.gmra.mxu0 %v3300
      %v3372 = vpop.f32.mrf.mxu0
      %v3373 = vadd.f32 0.0, %v3372
      %3374 = vmatmul.f32.gmra.mxu0 %v3301
      %v3375 = vpop.f32.mrf.mxu0
      %v3376 = vadd.f32 0.0, %v3375
      %3377 = vmatmul.f32.gmra.mxu0 %v3302
      %v3378 = vpop.f32.mrf.mxu0
      %v3379 = vadd.f32 0.0, %v3378
      %3380 = vmatmul.f32.gmra.mxu0 %v3303
      %v3381 = vpop.f32.mrf.mxu0
      %v3382 = vadd.f32 0.0, %v3381
      %3383 = vmatmul.f32.gmra.mxu0 %v3304
      %v3384 = vpop.f32.mrf.mxu0
      %v3385 = vadd.f32 0.0, %v3384
      %3386 = vmatmul.f32.gmra.mxu0 %v3305
      %v3387 = vpop.f32.mrf.mxu0
      %v3388 = vadd.f32 0.0, %v3387
      %3389 = vmatmul.f32.gmra.mxu0 %v3306
      %v3390 = vpop.f32.mrf.mxu0
      %v3391 = vadd.f32 0.0, %v3390
      %3392 = vmatmul.f32.gmra.mxu0 %v3307
      %v3393 = vpop.f32.mrf.mxu0
      %v3394 = vadd.f32 0.0, %v3393
      %3395 = vmatmul.f32.gmra.mxu0 %v3308
      %v3396 = vpop.f32.mrf.mxu0
      %v3397 = vadd.f32 0.0, %v3396
      %3398 = vmatmul.f32.gmra.mxu0 %v3309
      %v3399 = vpop.f32.mrf.mxu0
      %v3400 = vadd.f32 0.0, %v3399
      %3401 = vmatmul.f32.gmra.mxu0 %v3310
      %v3402 = vpop.f32.mrf.mxu0
      %v3403 = vadd.f32 0.0, %v3402
      %3404 = vmatmul.f32.gmra.mxu0 %v3311
      %v3405 = vpop.f32.mrf.mxu0
      %v3406 = vadd.f32 0.0, %v3405
      %3407 = vmatmul.f32.gmra.mxu0 %v3312
      %v3408 = vpop.f32.mrf.mxu0
      %v3409 = vadd.f32 0.0, %v3408
      %3410 = vmatmul.f32.gmra.mxu0 %v3313
      %v3411 = vpop.f32.mrf.mxu0
      %v3412 = vadd.f32 0.0, %v3411
      %3413 = vmatmul.f32.gmra.mxu0 %v3314
      %v3414 = vpop.f32.mrf.mxu0
      %v3415 = vadd.f32 0.0, %v3414
      %3416 = vmatmul.f32.gmra.mxu0 %v3315
      %v3417 = vpop.f32.mrf.mxu0
      %v3418 = vadd.f32 0.0, %v3417
      %3419 = vmatmul.f32.gmra.mxu0 %v3316
      %v3420 = vpop.f32.mrf.mxu0
      %v3421 = vadd.f32 0.0, %v3420
      %3422 = vmatmul.f32.gmra.mxu0 %v3317
      %v3423 = vpop.f32.mrf.mxu0
      %v3424 = vadd.f32 0.0, %v3423
      %3425 = vmatmul.f32.gmra.mxu0 %v3318
      %v3426 = vpop.f32.mrf.mxu0
      %v3427 = vadd.f32 0.0, %v3426
      %3428 = vmatmul.f32.gmra.mxu0 %v3319
      %v3429 = vpop.f32.mrf.mxu0
      %v3430 = vadd.f32 0.0, %v3429
      %3431 = vmatmul.f32.gmra.mxu0 %v3320
      %v3432 = vpop.f32.mrf.mxu0
      %v3433 = vadd.f32 0.0, %v3432
      %3434 = vmatmul.f32.gmra.mxu0 %v3321
      %v3435 = vpop.f32.mrf.mxu0
      %v3436 = vadd.f32 0.0, %v3435
      %3437 = vmatmul.f32.gmra.mxu0 %v3322
      %v3438 = vpop.f32.mrf.mxu0
      %v3439 = vadd.f32 0.0, %v3438
      %3440 = vmatmul.f32.gmra.mxu0 %v3323
      %v3441 = vpop.f32.mrf.mxu0
      %v3442 = vadd.f32 0.0, %v3441
      %3443 = vmatmul.f32.gmra.mxu0 %v3324
      %v3444 = vpop.f32.mrf.mxu0
      %v3445 = vadd.f32 0.0, %v3444
      %3446 = vmatmul.f32.gmra.mxu0 %v3325
      %v3447 = vpop.f32.mrf.mxu0
      %v3448 = vadd.f32 0.0, %v3447
      %3449 = vmatmul.f32.gmra.mxu0 %v3326
      %v3450 = vpop.f32.mrf.mxu0
      %v3451 = vadd.f32 0.0, %v3450
      %3452 = vmatmul.f32.gmra.mxu0 %v3327
      %v3453 = vpop.f32.mrf.mxu0
      %v3454 = vadd.f32 0.0, %v3453
      %3455 = vmatmul.f32.gmra.mxu0 %v3328
      %v3456 = vpop.f32.mrf.mxu0
      %v3457 = vadd.f32 0.0, %v3456
      %3458 = vdwg.mxu0
      %v3459 = vadd.f32 %v3264, %v3364
      %v3460 = vadd.f32 %v3265, %v3367
      %v3461 = vadd.f32 %v3266, %v3370
      %v3462 = vadd.f32 %v3267, %v3373
      %v3463 = vadd.f32 %v3268, %v3376
      %v3464 = vadd.f32 %v3269, %v3379
      %v3465 = vadd.f32 %v3270, %v3382
      %v3466 = vadd.f32 %v3271, %v3385
      %v3467 = vadd.f32 %v3272, %v3388
      %v3468 = vadd.f32 %v3273, %v3391
      %v3469 = vadd.f32 %v3274, %v3394
      %v3470 = vadd.f32 %v3275, %v3397
      %v3471 = vadd.f32 %v3276, %v3400
      %v3472 = vadd.f32 %v3277, %v3403
      %v3473 = vadd.f32 %v3278, %v3406
      %v3474 = vadd.f32 %v3279, %v3409
      %v3475 = vadd.f32 %v3280, %v3412
      %v3476 = vadd.f32 %v3281, %v3415
      %v3477 = vadd.f32 %v3282, %v3418
      %v3478 = vadd.f32 %v3283, %v3421
      %v3479 = vadd.f32 %v3284, %v3424
      %v3480 = vadd.f32 %v3285, %v3427
      %v3481 = vadd.f32 %v3286, %v3430
      %v3482 = vadd.f32 %v3287, %v3433
      %v3483 = vadd.f32 %v3288, %v3436
      %v3484 = vadd.f32 %v3289, %v3439
      %v3485 = vadd.f32 %v3290, %v3442
      %v3486 = vadd.f32 %v3291, %v3445
      %v3487 = vadd.f32 %v3292, %v3448
      %v3488 = vadd.f32 %v3293, %v3451
      %v3489 = vadd.f32 %v3294, %v3454
      %v3490 = vadd.f32 %v3295, %v3457
      %v3491 = vld [vmem:[%s3296 + $0x1] sm:$0xff]
      %v3492 = vld [vmem:[%s3296 + $0x11] sm:$0xff]
      %v3493 = vld [vmem:[%s3296 + $0x21] sm:$0xff]
      %v3494 = vld [vmem:[%s3296 + $0x31] sm:$0xff]
      %v3495 = vld [vmem:[%s3296 + $0x41] sm:$0xff]
      %v3496 = vld [vmem:[%s3296 + $0x51] sm:$0xff]
      %v3497 = vld [vmem:[%s3296 + $0x61] sm:$0xff]
      %v3498 = vld [vmem:[%s3296 + $0x71] sm:$0xff]
      %v3499 = vld [vmem:[%s3296 + $0xa1] sm:$0xff]
      %v3500 = vld [vmem:[%s3296 + $0xb1] sm:$0xff]
      %v3501 = vld [vmem:[%s3296 + $0xc1] sm:$0xff]
      %v3502 = vld [vmem:[%s3296 + $0xd1] sm:$0xff]
      %v3503 = vld [vmem:[%s3296 + $0xe1] sm:$0xff]
      %v3504 = vld [vmem:[%s3296 + $0xf1] sm:$0xff]
      %v3505 = vld [vmem:[%s3296 + $0x101] sm:$0xff]
      %v3506 = vld [vmem:[%s3296 + $0x111] sm:$0xff]
      %v3507 = vld [vmem:[%s3296 + $0x141] sm:$0xff]
      %v3508 = vld [vmem:[%s3296 + $0x151] sm:$0xff]
      %v3509 = vld [vmem:[%s3296 + $0x161] sm:$0xff]
      %v3510 = vld [vmem:[%s3296 + $0x171] sm:$0xff]
      %v3511 = vld [vmem:[%s3296 + $0x181] sm:$0xff]
      %v3512 = vld [vmem:[%s3296 + $0x191] sm:$0xff]
      %v3513 = vld [vmem:[%s3296 + $0x1a1] sm:$0xff]
      %v3514 = vld [vmem:[%s3296 + $0x1b1] sm:$0xff]
      %v3515 = vld [vmem:[%s3296 + $0x1e1] sm:$0xff]
      %v3516 = vld [vmem:[%s3296 + $0x1f1] sm:$0xff]
      %v3517 = vld [vmem:[%s3296 + $0x201] sm:$0xff]
      %v3518 = vld [vmem:[%s3296 + $0x211] sm:$0xff]
      %v3519 = vld [vmem:[%s3296 + $0x221] sm:$0xff]
      %v3520 = vld [vmem:[%s3296 + $0x231] sm:$0xff]
      %v3521 = vld [vmem:[%s3296 + $0x241] sm:$0xff]
      %v3522 = vld [vmem:[%s3296 + $0x251] sm:$0xff]
      %s3523 = scalar_lea.vmem %s1, 2048
      %v3524 = vld [vmem:[%s3523] sm:$0xff]
      %v3525 = vld [vmem:[%s3523 + $0x8] sm:$0xff]
      %v3526 = vld [vmem:[%s3523 + $0x10] sm:$0xff]
      %v3527 = vld [vmem:[%s3523 + $0x18] sm:$0xff]
      %v3528 = vld [vmem:[%s3523 + $0x20] sm:$0xff]
      %v3529 = vld [vmem:[%s3523 + $0x28] sm:$0xff]
      %v3530 = vld [vmem:[%s3523 + $0x30] sm:$0xff]
      %v3531 = vld [vmem:[%s3523 + $0x38] sm:$0xff]
      %v3532 = vld [vmem:[%s3523 + $0x40] sm:$0xff]
      %v3533 = vld [vmem:[%s3523 + $0x48] sm:$0xff]
      %v3534 = vld [vmem:[%s3523 + $0x50] sm:$0xff]
      %v3535 = vld [vmem:[%s3523 + $0x58] sm:$0xff]
      %v3536 = vld [vmem:[%s3523 + $0x60] sm:$0xff]
      %v3537 = vld [vmem:[%s3523 + $0x68] sm:$0xff]
      %v3538 = vld [vmem:[%s3523 + $0x70] sm:$0xff]
      %v3539 = vld [vmem:[%s3523 + $0x78] sm:$0xff]
      %3540 = vmatpush.msra.mxu0 %v3539
      %3541 = vmatpush.msra.mxu0 %v3538
      %3542 = vmatpush.msra.mxu0 %v3537
      %3543 = vmatpush.msra.mxu0 %v3536
      %3544 = vmatpush.msra.mxu0 %v3535
      %3545 = vmatpush.msra.mxu0 %v3534
      %3546 = vmatpush.msra.mxu0 %v3533
      %3547 = vmatpush.msra.mxu0 %v3532
      %3548 = vmatpush.msra.mxu0 %v3531
      %3549 = vmatpush.msra.mxu0 %v3530
      %3550 = vmatpush.msra.mxu0 %v3529
      %3551 = vmatpush.msra.mxu0 %v3528
      %3552 = vmatpush.msra.mxu0 %v3527
      %3553 = vmatpush.msra.mxu0 %v3526
      %3554 = vmatpush.msra.mxu0 %v3525
      %3555 = vmatpush.msra.mxu0 %v3524
      %3556 = vmatmul.f32.gmra.mxu0 %v3491
      %v3557 = vpop.f32.mrf.mxu0
      %v3558 = vadd.f32 0.0, %v3557
      %3559 = vmatmul.f32.gmra.mxu0 %v3492
      %v3560 = vpop.f32.mrf.mxu0
      %v3561 = vadd.f32 0.0, %v3560
      %3562 = vmatmul.f32.gmra.mxu0 %v3493
      %v3563 = vpop.f32.mrf.mxu0
      %v3564 = vadd.f32 0.0, %v3563
      %3565 = vmatmul.f32.gmra.mxu0 %v3494
      %v3566 = vpop.f32.mrf.mxu0
      %v3567 = vadd.f32 0.0, %v3566
      %3568 = vmatmul.f32.gmra.mxu0 %v3495
      %v3569 = vpop.f32.mrf.mxu0
      %v3570 = vadd.f32 0.0, %v3569
      %3571 = vmatmul.f32.gmra.mxu0 %v3496
      %v3572 = vpop.f32.mrf.mxu0
      %v3573 = vadd.f32 0.0, %v3572
      %3574 = vmatmul.f32.gmra.mxu0 %v3497
      %v3575 = vpop.f32.mrf.mxu0
      %v3576 = vadd.f32 0.0, %v3575
      %3577 = vmatmul.f32.gmra.mxu0 %v3498
      %v3578 = vpop.f32.mrf.mxu0
      %v3579 = vadd.f32 0.0, %v3578
      %3580 = vmatmul.f32.gmra.mxu0 %v3499
      %v3581 = vpop.f32.mrf.mxu0
      %v3582 = vadd.f32 0.0, %v3581
      %3583 = vmatmul.f32.gmra.mxu0 %v3500
      %v3584 = vpop.f32.mrf.mxu0
      %v3585 = vadd.f32 0.0, %v3584
      %3586 = vmatmul.f32.gmra.mxu0 %v3501
      %v3587 = vpop.f32.mrf.mxu0
      %v3588 = vadd.f32 0.0, %v3587
      %3589 = vmatmul.f32.gmra.mxu0 %v3502
      %v3590 = vpop.f32.mrf.mxu0
      %v3591 = vadd.f32 0.0, %v3590
      %3592 = vmatmul.f32.gmra.mxu0 %v3503
      %v3593 = vpop.f32.mrf.mxu0
      %v3594 = vadd.f32 0.0, %v3593
      %3595 = vmatmul.f32.gmra.mxu0 %v3504
      %v3596 = vpop.f32.mrf.mxu0
      %v3597 = vadd.f32 0.0, %v3596
      %3598 = vmatmul.f32.gmra.mxu0 %v3505
      %v3599 = vpop.f32.mrf.mxu0
      %v3600 = vadd.f32 0.0, %v3599
      %3601 = vmatmul.f32.gmra.mxu0 %v3506
      %v3602 = vpop.f32.mrf.mxu0
      %v3603 = vadd.f32 0.0, %v3602
      %3604 = vmatmul.f32.gmra.mxu0 %v3507
      %v3605 = vpop.f32.mrf.mxu0
      %v3606 = vadd.f32 0.0, %v3605
      %3607 = vmatmul.f32.gmra.mxu0 %v3508
      %v3608 = vpop.f32.mrf.mxu0
      %v3609 = vadd.f32 0.0, %v3608
      %3610 = vmatmul.f32.gmra.mxu0 %v3509
      %v3611 = vpop.f32.mrf.mxu0
      %v3612 = vadd.f32 0.0, %v3611
      %3613 = vmatmul.f32.gmra.mxu0 %v3510
      %v3614 = vpop.f32.mrf.mxu0
      %v3615 = vadd.f32 0.0, %v3614
      %3616 = vmatmul.f32.gmra.mxu0 %v3511
      %v3617 = vpop.f32.mrf.mxu0
      %v3618 = vadd.f32 0.0, %v3617
      %3619 = vmatmul.f32.gmra.mxu0 %v3512
      %v3620 = vpop.f32.mrf.mxu0
      %v3621 = vadd.f32 0.0, %v3620
      %3622 = vmatmul.f32.gmra.mxu0 %v3513
      %v3623 = vpop.f32.mrf.mxu0
      %v3624 = vadd.f32 0.0, %v3623
      %3625 = vmatmul.f32.gmra.mxu0 %v3514
      %v3626 = vpop.f32.mrf.mxu0
      %v3627 = vadd.f32 0.0, %v3626
      %3628 = vmatmul.f32.gmra.mxu0 %v3515
      %v3629 = vpop.f32.mrf.mxu0
      %v3630 = vadd.f32 0.0, %v3629
      %3631 = vmatmul.f32.gmra.mxu0 %v3516
      %v3632 = vpop.f32.mrf.mxu0
      %v3633 = vadd.f32 0.0, %v3632
      %3634 = vmatmul.f32.gmra.mxu0 %v3517
      %v3635 = vpop.f32.mrf.mxu0
      %v3636 = vadd.f32 0.0, %v3635
      %3637 = vmatmul.f32.gmra.mxu0 %v3518
      %v3638 = vpop.f32.mrf.mxu0
      %v3639 = vadd.f32 0.0, %v3638
      %3640 = vmatmul.f32.gmra.mxu0 %v3519
      %v3641 = vpop.f32.mrf.mxu0
      %v3642 = vadd.f32 0.0, %v3641
      %3643 = vmatmul.f32.gmra.mxu0 %v3520
      %v3644 = vpop.f32.mrf.mxu0
      %v3645 = vadd.f32 0.0, %v3644
      %3646 = vmatmul.f32.gmra.mxu0 %v3521
      %v3647 = vpop.f32.mrf.mxu0
      %v3648 = vadd.f32 0.0, %v3647
      %3649 = vmatmul.f32.gmra.mxu0 %v3522
      %v3650 = vpop.f32.mrf.mxu0
      %v3651 = vadd.f32 0.0, %v3650
      %3652 = vdwg.mxu0
      %v3653 = vadd.f32 %v3459, %v3558
      %v3654 = vadd.f32 %v3460, %v3561
      %v3655 = vadd.f32 %v3461, %v3564
      %v3656 = vadd.f32 %v3462, %v3567
      %v3657 = vadd.f32 %v3463, %v3570
      %v3658 = vadd.f32 %v3464, %v3573
      %v3659 = vadd.f32 %v3465, %v3576
      %v3660 = vadd.f32 %v3466, %v3579
      %v3661 = vadd.f32 %v3467, %v3582
      %v3662 = vadd.f32 %v3468, %v3585
      %v3663 = vadd.f32 %v3469, %v3588
      %v3664 = vadd.f32 %v3470, %v3591
      %v3665 = vadd.f32 %v3471, %v3594
      %v3666 = vadd.f32 %v3472, %v3597
      %v3667 = vadd.f32 %v3473, %v3600
      %v3668 = vadd.f32 %v3474, %v3603
      %v3669 = vadd.f32 %v3475, %v3606
      %v3670 = vadd.f32 %v3476, %v3609
      %v3671 = vadd.f32 %v3477, %v3612
      %v3672 = vadd.f32 %v3478, %v3615
      %v3673 = vadd.f32 %v3479, %v3618
      %v3674 = vadd.f32 %v3480, %v3621
      %v3675 = vadd.f32 %v3481, %v3624
      %v3676 = vadd.f32 %v3482, %v3627
      %v3677 = vadd.f32 %v3483, %v3630
      %v3678 = vadd.f32 %v3484, %v3633
      %v3679 = vadd.f32 %v3485, %v3636
      %v3680 = vadd.f32 %v3486, %v3639
      %v3681 = vadd.f32 %v3487, %v3642
      %v3682 = vadd.f32 %v3488, %v3645
      %v3683 = vadd.f32 %v3489, %v3648
      %v3684 = vadd.f32 %v3490, %v3651
      %v3685 = vld [vmem:[%s3296 + $0x2] sm:$0xff]
      %v3686 = vld [vmem:[%s3296 + $0x12] sm:$0xff]
      %v3687 = vld [vmem:[%s3296 + $0x22] sm:$0xff]
      %v3688 = vld [vmem:[%s3296 + $0x32] sm:$0xff]
      %v3689 = vld [vmem:[%s3296 + $0x42] sm:$0xff]
      %v3690 = vld [vmem:[%s3296 + $0x52] sm:$0xff]
      %v3691 = vld [vmem:[%s3296 + $0x62] sm:$0xff]
      %v3692 = vld [vmem:[%s3296 + $0x72] sm:$0xff]
      %v3693 = vld [vmem:[%s3296 + $0xa2] sm:$0xff]
      %v3694 = vld [vmem:[%s3296 + $0xb2] sm:$0xff]
      %v3695 = vld [vmem:[%s3296 + $0xc2] sm:$0xff]
      %v3696 = vld [vmem:[%s3296 + $0xd2] sm:$0xff]
      %v3697 = vld [vmem:[%s3296 + $0xe2] sm:$0xff]
      %v3698 = vld [vmem:[%s3296 + $0xf2] sm:$0xff]
      %v3699 = vld [vmem:[%s3296 + $0x102] sm:$0xff]
      %v3700 = vld [vmem:[%s3296 + $0x112] sm:$0xff]
      %v3701 = vld [vmem:[%s3296 + $0x142] sm:$0xff]
      %v3702 = vld [vmem:[%s3296 + $0x152] sm:$0xff]
      %v3703 = vld [vmem:[%s3296 + $0x162] sm:$0xff]
      %v3704 = vld [vmem:[%s3296 + $0x172] sm:$0xff]
      %v3705 = vld [vmem:[%s3296 + $0x182] sm:$0xff]
      %v3706 = vld [vmem:[%s3296 + $0x192] sm:$0xff]
      %v3707 = vld [vmem:[%s3296 + $0x1a2] sm:$0xff]
      %v3708 = vld [vmem:[%s3296 + $0x1b2] sm:$0xff]
      %v3709 = vld [vmem:[%s3296 + $0x1e2] sm:$0xff]
      %v3710 = vld [vmem:[%s3296 + $0x1f2] sm:$0xff]
      %v3711 = vld [vmem:[%s3296 + $0x202] sm:$0xff]
      %v3712 = vld [vmem:[%s3296 + $0x212] sm:$0xff]
      %v3713 = vld [vmem:[%s3296 + $0x222] sm:$0xff]
      %v3714 = vld [vmem:[%s3296 + $0x232] sm:$0xff]
      %v3715 = vld [vmem:[%s3296 + $0x242] sm:$0xff]
      %v3716 = vld [vmem:[%s3296 + $0x252] sm:$0xff]
      %s3717 = scalar_lea.vmem %s1, 2176
      %v3718 = vld [vmem:[%s3717] sm:$0xff]
      %v3719 = vld [vmem:[%s3717 + $0x8] sm:$0xff]
      %v3720 = vld [vmem:[%s3717 + $0x10] sm:$0xff]
      %v3721 = vld [vmem:[%s3717 + $0x18] sm:$0xff]
      %v3722 = vld [vmem:[%s3717 + $0x20] sm:$0xff]
      %v3723 = vld [vmem:[%s3717 + $0x28] sm:$0xff]
      %v3724 = vld [vmem:[%s3717 + $0x30] sm:$0xff]
      %v3725 = vld [vmem:[%s3717 + $0x38] sm:$0xff]
      %v3726 = vld [vmem:[%s3717 + $0x40] sm:$0xff]
      %v3727 = vld [vmem:[%s3717 + $0x48] sm:$0xff]
      %v3728 = vld [vmem:[%s3717 + $0x50] sm:$0xff]
      %v3729 = vld [vmem:[%s3717 + $0x58] sm:$0xff]
      %v3730 = vld [vmem:[%s3717 + $0x60] sm:$0xff]
      %v3731 = vld [vmem:[%s3717 + $0x68] sm:$0xff]
      %v3732 = vld [vmem:[%s3717 + $0x70] sm:$0xff]
      %v3733 = vld [vmem:[%s3717 + $0x78] sm:$0xff]
      %3734 = vmatpush.msra.mxu0 %v3733
      %3735 = vmatpush.msra.mxu0 %v3732
      %3736 = vmatpush.msra.mxu0 %v3731
      %3737 = vmatpush.msra.mxu0 %v3730
      %3738 = vmatpush.msra.mxu0 %v3729
      %3739 = vmatpush.msra.mxu0 %v3728
      %3740 = vmatpush.msra.mxu0 %v3727
      %3741 = vmatpush.msra.mxu0 %v3726
      %3742 = vmatpush.msra.mxu0 %v3725
      %3743 = vmatpush.msra.mxu0 %v3724
      %3744 = vmatpush.msra.mxu0 %v3723
      %3745 = vmatpush.msra.mxu0 %v3722
      %3746 = vmatpush.msra.mxu0 %v3721
      %3747 = vmatpush.msra.mxu0 %v3720
      %3748 = vmatpush.msra.mxu0 %v3719
      %3749 = vmatpush.msra.mxu0 %v3718
      %3750 = vmatmul.f32.gmra.mxu0 %v3685
      %v3751 = vpop.f32.mrf.mxu0
      %v3752 = vadd.f32 0.0, %v3751
      %3753 = vmatmul.f32.gmra.mxu0 %v3686
      %v3754 = vpop.f32.mrf.mxu0
      %v3755 = vadd.f32 0.0, %v3754
      %3756 = vmatmul.f32.gmra.mxu0 %v3687
      %v3757 = vpop.f32.mrf.mxu0
      %v3758 = vadd.f32 0.0, %v3757
      %3759 = vmatmul.f32.gmra.mxu0 %v3688
      %v3760 = vpop.f32.mrf.mxu0
      %v3761 = vadd.f32 0.0, %v3760
      %3762 = vmatmul.f32.gmra.mxu0 %v3689
      %v3763 = vpop.f32.mrf.mxu0
      %v3764 = vadd.f32 0.0, %v3763
      %3765 = vmatmul.f32.gmra.mxu0 %v3690
      %v3766 = vpop.f32.mrf.mxu0
      %v3767 = vadd.f32 0.0, %v3766
      %3768 = vmatmul.f32.gmra.mxu0 %v3691
      %v3769 = vpop.f32.mrf.mxu0
      %v3770 = vadd.f32 0.0, %v3769
      %3771 = vmatmul.f32.gmra.mxu0 %v3692
      %v3772 = vpop.f32.mrf.mxu0
      %v3773 = vadd.f32 0.0, %v3772
      %3774 = vmatmul.f32.gmra.mxu0 %v3693
      %v3775 = vpop.f32.mrf.mxu0
      %v3776 = vadd.f32 0.0, %v3775
      %3777 = vmatmul.f32.gmra.mxu0 %v3694
      %v3778 = vpop.f32.mrf.mxu0
      %v3779 = vadd.f32 0.0, %v3778
      %3780 = vmatmul.f32.gmra.mxu0 %v3695
      %v3781 = vpop.f32.mrf.mxu0
      %v3782 = vadd.f32 0.0, %v3781
      %3783 = vmatmul.f32.gmra.mxu0 %v3696
      %v3784 = vpop.f32.mrf.mxu0
      %v3785 = vadd.f32 0.0, %v3784
      %3786 = vmatmul.f32.gmra.mxu0 %v3697
      %v3787 = vpop.f32.mrf.mxu0
      %v3788 = vadd.f32 0.0, %v3787
      %3789 = vmatmul.f32.gmra.mxu0 %v3698
      %v3790 = vpop.f32.mrf.mxu0
      %v3791 = vadd.f32 0.0, %v3790
      %3792 = vmatmul.f32.gmra.mxu0 %v3699
      %v3793 = vpop.f32.mrf.mxu0
      %v3794 = vadd.f32 0.0, %v3793
      %3795 = vmatmul.f32.gmra.mxu0 %v3700
      %v3796 = vpop.f32.mrf.mxu0
      %v3797 = vadd.f32 0.0, %v3796
      %3798 = vmatmul.f32.gmra.mxu0 %v3701
      %v3799 = vpop.f32.mrf.mxu0
      %v3800 = vadd.f32 0.0, %v3799
      %3801 = vmatmul.f32.gmra.mxu0 %v3702
      %v3802 = vpop.f32.mrf.mxu0
      %v3803 = vadd.f32 0.0, %v3802
      %3804 = vmatmul.f32.gmra.mxu0 %v3703
      %v3805 = vpop.f32.mrf.mxu0
      %v3806 = vadd.f32 0.0, %v3805
      %3807 = vmatmul.f32.gmra.mxu0 %v3704
      %v3808 = vpop.f32.mrf.mxu0
      %v3809 = vadd.f32 0.0, %v3808
      %3810 = vmatmul.f32.gmra.mxu0 %v3705
      %v3811 = vpop.f32.mrf.mxu0
      %v3812 = vadd.f32 0.0, %v3811
      %3813 = vmatmul.f32.gmra.mxu0 %v3706
      %v3814 = vpop.f32.mrf.mxu0
      %v3815 = vadd.f32 0.0, %v3814
      %3816 = vmatmul.f32.gmra.mxu0 %v3707
      %v3817 = vpop.f32.mrf.mxu0
      %v3818 = vadd.f32 0.0, %v3817
      %3819 = vmatmul.f32.gmra.mxu0 %v3708
      %v3820 = vpop.f32.mrf.mxu0
      %v3821 = vadd.f32 0.0, %v3820
      %3822 = vmatmul.f32.gmra.mxu0 %v3709
      %v3823 = vpop.f32.mrf.mxu0
      %v3824 = vadd.f32 0.0, %v3823
      %3825 = vmatmul.f32.gmra.mxu0 %v3710
      %v3826 = vpop.f32.mrf.mxu0
      %v3827 = vadd.f32 0.0, %v3826
      %3828 = vmatmul.f32.gmra.mxu0 %v3711
      %v3829 = vpop.f32.mrf.mxu0
      %v3830 = vadd.f32 0.0, %v3829
      %3831 = vmatmul.f32.gmra.mxu0 %v3712
      %v3832 = vpop.f32.mrf.mxu0
      %v3833 = vadd.f32 0.0, %v3832
      %3834 = vmatmul.f32.gmra.mxu0 %v3713
      %v3835 = vpop.f32.mrf.mxu0
      %v3836 = vadd.f32 0.0, %v3835
      %3837 = vmatmul.f32.gmra.mxu0 %v3714
      %v3838 = vpop.f32.mrf.mxu0
      %v3839 = vadd.f32 0.0, %v3838
      %3840 = vmatmul.f32.gmra.mxu0 %v3715
      %v3841 = vpop.f32.mrf.mxu0
      %v3842 = vadd.f32 0.0, %v3841
      %3843 = vmatmul.f32.gmra.mxu0 %v3716
      %v3844 = vpop.f32.mrf.mxu0
      %v3845 = vadd.f32 0.0, %v3844
      %3846 = vdwg.mxu0
      %v3847 = vadd.f32 %v3653, %v3752
      %v3848 = vadd.f32 %v3654, %v3755
      %v3849 = vadd.f32 %v3655, %v3758
      %v3850 = vadd.f32 %v3656, %v3761
      %v3851 = vadd.f32 %v3657, %v3764
      %v3852 = vadd.f32 %v3658, %v3767
      %v3853 = vadd.f32 %v3659, %v3770
      %v3854 = vadd.f32 %v3660, %v3773
      %v3855 = vadd.f32 %v3661, %v3776
      %v3856 = vadd.f32 %v3662, %v3779
      %v3857 = vadd.f32 %v3663, %v3782
      %v3858 = vadd.f32 %v3664, %v3785
      %v3859 = vadd.f32 %v3665, %v3788
      %v3860 = vadd.f32 %v3666, %v3791
      %v3861 = vadd.f32 %v3667, %v3794
      %v3862 = vadd.f32 %v3668, %v3797
      %v3863 = vadd.f32 %v3669, %v3800
      %v3864 = vadd.f32 %v3670, %v3803
      %v3865 = vadd.f32 %v3671, %v3806
      %v3866 = vadd.f32 %v3672, %v3809
      %v3867 = vadd.f32 %v3673, %v3812
      %v3868 = vadd.f32 %v3674, %v3815
      %v3869 = vadd.f32 %v3675, %v3818
      %v3870 = vadd.f32 %v3676, %v3821
      %v3871 = vadd.f32 %v3677, %v3824
      %v3872 = vadd.f32 %v3678, %v3827
      %v3873 = vadd.f32 %v3679, %v3830
      %v3874 = vadd.f32 %v3680, %v3833
      %v3875 = vadd.f32 %v3681, %v3836
      %v3876 = vadd.f32 %v3682, %v3839
      %v3877 = vadd.f32 %v3683, %v3842
      %v3878 = vadd.f32 %v3684, %v3845
      %s3879 = scalar_lea.vmem [#allocation2], 320
      %v3880 = vld [vmem:[%s3879] sm:$0xff]
      %v3881 = vld [vmem:[%s3879 + $0x10] sm:$0xff]
      %v3882 = vld [vmem:[%s3879 + $0x20] sm:$0xff]
      %v3883 = vld [vmem:[%s3879 + $0x30] sm:$0xff]
      %v3884 = vld [vmem:[%s3879 + $0x40] sm:$0xff]
      %v3885 = vld [vmem:[%s3879 + $0x50] sm:$0xff]
      %v3886 = vld [vmem:[%s3879 + $0x60] sm:$0xff]
      %v3887 = vld [vmem:[%s3879 + $0x70] sm:$0xff]
      %v3888 = vld [vmem:[%s3879 + $0xa0] sm:$0xff]
      %v3889 = vld [vmem:[%s3879 + $0xb0] sm:$0xff]
      %v3890 = vld [vmem:[%s3879 + $0xc0] sm:$0xff]
      %v3891 = vld [vmem:[%s3879 + $0xd0] sm:$0xff]
      %v3892 = vld [vmem:[%s3879 + $0xe0] sm:$0xff]
      %v3893 = vld [vmem:[%s3879 + $0xf0] sm:$0xff]
      %v3894 = vld [vmem:[%s3879 + $0x100] sm:$0xff]
      %v3895 = vld [vmem:[%s3879 + $0x110] sm:$0xff]
      %v3896 = vld [vmem:[%s3879 + $0x140] sm:$0xff]
      %v3897 = vld [vmem:[%s3879 + $0x150] sm:$0xff]
      %v3898 = vld [vmem:[%s3879 + $0x160] sm:$0xff]
      %v3899 = vld [vmem:[%s3879 + $0x170] sm:$0xff]
      %v3900 = vld [vmem:[%s3879 + $0x180] sm:$0xff]
      %v3901 = vld [vmem:[%s3879 + $0x190] sm:$0xff]
      %v3902 = vld [vmem:[%s3879 + $0x1a0] sm:$0xff]
      %v3903 = vld [vmem:[%s3879 + $0x1b0] sm:$0xff]
      %v3904 = vld [vmem:[%s3879 + $0x1e0] sm:$0xff]
      %v3905 = vld [vmem:[%s3879 + $0x1f0] sm:$0xff]
      %v3906 = vld [vmem:[%s3879 + $0x200] sm:$0xff]
      %v3907 = vld [vmem:[%s3879 + $0x210] sm:$0xff]
      %v3908 = vld [vmem:[%s3879 + $0x220] sm:$0xff]
      %v3909 = vld [vmem:[%s3879 + $0x230] sm:$0xff]
      %v3910 = vld [vmem:[%s3879 + $0x240] sm:$0xff]
      %v3911 = vld [vmem:[%s3879 + $0x250] sm:$0xff]
      %s3912 = scalar_lea.vmem %s1, 2304
      %v3913 = vld [vmem:[%s3912] sm:$0xff]
      %v3914 = vld [vmem:[%s3912 + $0x8] sm:$0xff]
      %v3915 = vld [vmem:[%s3912 + $0x10] sm:$0xff]
      %v3916 = vld [vmem:[%s3912 + $0x18] sm:$0xff]
      %v3917 = vld [vmem:[%s3912 + $0x20] sm:$0xff]
      %v3918 = vld [vmem:[%s3912 + $0x28] sm:$0xff]
      %v3919 = vld [vmem:[%s3912 + $0x30] sm:$0xff]
      %v3920 = vld [vmem:[%s3912 + $0x38] sm:$0xff]
      %v3921 = vld [vmem:[%s3912 + $0x40] sm:$0xff]
      %v3922 = vld [vmem:[%s3912 + $0x48] sm:$0xff]
      %v3923 = vld [vmem:[%s3912 + $0x50] sm:$0xff]
      %v3924 = vld [vmem:[%s3912 + $0x58] sm:$0xff]
      %v3925 = vld [vmem:[%s3912 + $0x60] sm:$0xff]
      %v3926 = vld [vmem:[%s3912 + $0x68] sm:$0xff]
      %v3927 = vld [vmem:[%s3912 + $0x70] sm:$0xff]
      %v3928 = vld [vmem:[%s3912 + $0x78] sm:$0xff]
      %3929 = vmatpush.msra.mxu0 %v3928
      %3930 = vmatpush.msra.mxu0 %v3927
      %3931 = vmatpush.msra.mxu0 %v3926
      %3932 = vmatpush.msra.mxu0 %v3925
      %3933 = vmatpush.msra.mxu0 %v3924
      %3934 = vmatpush.msra.mxu0 %v3923
      %3935 = vmatpush.msra.mxu0 %v3922
      %3936 = vmatpush.msra.mxu0 %v3921
      %3937 = vmatpush.msra.mxu0 %v3920
      %3938 = vmatpush.msra.mxu0 %v3919
      %3939 = vmatpush.msra.mxu0 %v3918
      %3940 = vmatpush.msra.mxu0 %v3917
      %3941 = vmatpush.msra.mxu0 %v3916
      %3942 = vmatpush.msra.mxu0 %v3915
      %3943 = vmatpush.msra.mxu0 %v3914
      %3944 = vmatpush.msra.mxu0 %v3913
      %3945 = vmatmul.f32.gmra.mxu0 %v3880
      %v3946 = vpop.f32.mrf.mxu0
      %v3947 = vadd.f32 0.0, %v3946
      %3948 = vmatmul.f32.gmra.mxu0 %v3881
      %v3949 = vpop.f32.mrf.mxu0
      %v3950 = vadd.f32 0.0, %v3949
      %3951 = vmatmul.f32.gmra.mxu0 %v3882
      %v3952 = vpop.f32.mrf.mxu0
      %v3953 = vadd.f32 0.0, %v3952
      %3954 = vmatmul.f32.gmra.mxu0 %v3883
      %v3955 = vpop.f32.mrf.mxu0
      %v3956 = vadd.f32 0.0, %v3955
      %3957 = vmatmul.f32.gmra.mxu0 %v3884
      %v3958 = vpop.f32.mrf.mxu0
      %v3959 = vadd.f32 0.0, %v3958
      %3960 = vmatmul.f32.gmra.mxu0 %v3885
      %v3961 = vpop.f32.mrf.mxu0
      %v3962 = vadd.f32 0.0, %v3961
      %3963 = vmatmul.f32.gmra.mxu0 %v3886
      %v3964 = vpop.f32.mrf.mxu0
      %v3965 = vadd.f32 0.0, %v3964
      %3966 = vmatmul.f32.gmra.mxu0 %v3887
      %v3967 = vpop.f32.mrf.mxu0
      %v3968 = vadd.f32 0.0, %v3967
      %3969 = vmatmul.f32.gmra.mxu0 %v3888
      %v3970 = vpop.f32.mrf.mxu0
      %v3971 = vadd.f32 0.0, %v3970
      %3972 = vmatmul.f32.gmra.mxu0 %v3889
      %v3973 = vpop.f32.mrf.mxu0
      %v3974 = vadd.f32 0.0, %v3973
      %3975 = vmatmul.f32.gmra.mxu0 %v3890
      %v3976 = vpop.f32.mrf.mxu0
      %v3977 = vadd.f32 0.0, %v3976
      %3978 = vmatmul.f32.gmra.mxu0 %v3891
      %v3979 = vpop.f32.mrf.mxu0
      %v3980 = vadd.f32 0.0, %v3979
      %3981 = vmatmul.f32.gmra.mxu0 %v3892
      %v3982 = vpop.f32.mrf.mxu0
      %v3983 = vadd.f32 0.0, %v3982
      %3984 = vmatmul.f32.gmra.mxu0 %v3893
      %v3985 = vpop.f32.mrf.mxu0
      %v3986 = vadd.f32 0.0, %v3985
      %3987 = vmatmul.f32.gmra.mxu0 %v3894
      %v3988 = vpop.f32.mrf.mxu0
      %v3989 = vadd.f32 0.0, %v3988
      %3990 = vmatmul.f32.gmra.mxu0 %v3895
      %v3991 = vpop.f32.mrf.mxu0
      %v3992 = vadd.f32 0.0, %v3991
      %3993 = vmatmul.f32.gmra.mxu0 %v3896
      %v3994 = vpop.f32.mrf.mxu0
      %v3995 = vadd.f32 0.0, %v3994
      %3996 = vmatmul.f32.gmra.mxu0 %v3897
      %v3997 = vpop.f32.mrf.mxu0
      %v3998 = vadd.f32 0.0, %v3997
      %3999 = vmatmul.f32.gmra.mxu0 %v3898
      %v4000 = vpop.f32.mrf.mxu0
      %v4001 = vadd.f32 0.0, %v4000
      %4002 = vmatmul.f32.gmra.mxu0 %v3899
      %v4003 = vpop.f32.mrf.mxu0
      %v4004 = vadd.f32 0.0, %v4003
      %4005 = vmatmul.f32.gmra.mxu0 %v3900
      %v4006 = vpop.f32.mrf.mxu0
      %v4007 = vadd.f32 0.0, %v4006
      %4008 = vmatmul.f32.gmra.mxu0 %v3901
      %v4009 = vpop.f32.mrf.mxu0
      %v4010 = vadd.f32 0.0, %v4009
      %4011 = vmatmul.f32.gmra.mxu0 %v3902
      %v4012 = vpop.f32.mrf.mxu0
      %v4013 = vadd.f32 0.0, %v4012
      %4014 = vmatmul.f32.gmra.mxu0 %v3903
      %v4015 = vpop.f32.mrf.mxu0
      %v4016 = vadd.f32 0.0, %v4015
      %4017 = vmatmul.f32.gmra.mxu0 %v3904
      %v4018 = vpop.f32.mrf.mxu0
      %v4019 = vadd.f32 0.0, %v4018
      %4020 = vmatmul.f32.gmra.mxu0 %v3905
      %v4021 = vpop.f32.mrf.mxu0
      %v4022 = vadd.f32 0.0, %v4021
      %4023 = vmatmul.f32.gmra.mxu0 %v3906
      %v4024 = vpop.f32.mrf.mxu0
      %v4025 = vadd.f32 0.0, %v4024
      %4026 = vmatmul.f32.gmra.mxu0 %v3907
      %v4027 = vpop.f32.mrf.mxu0
      %v4028 = vadd.f32 0.0, %v4027
      %4029 = vmatmul.f32.gmra.mxu0 %v3908
      %v4030 = vpop.f32.mrf.mxu0
      %v4031 = vadd.f32 0.0, %v4030
      %4032 = vmatmul.f32.gmra.mxu0 %v3909
      %v4033 = vpop.f32.mrf.mxu0
      %v4034 = vadd.f32 0.0, %v4033
      %4035 = vmatmul.f32.gmra.mxu0 %v3910
      %v4036 = vpop.f32.mrf.mxu0
      %v4037 = vadd.f32 0.0, %v4036
      %4038 = vmatmul.f32.gmra.mxu0 %v3911
      %v4039 = vpop.f32.mrf.mxu0
      %v4040 = vadd.f32 0.0, %v4039
      %4041 = vdwg.mxu0
      %v4042 = vadd.f32 %v3847, %v3947
      %v4043 = vadd.f32 %v3848, %v3950
      %v4044 = vadd.f32 %v3849, %v3953
      %v4045 = vadd.f32 %v3850, %v3956
      %v4046 = vadd.f32 %v3851, %v3959
      %v4047 = vadd.f32 %v3852, %v3962
      %v4048 = vadd.f32 %v3853, %v3965
      %v4049 = vadd.f32 %v3854, %v3968
      %v4050 = vadd.f32 %v3855, %v3971
      %v4051 = vadd.f32 %v3856, %v3974
      %v4052 = vadd.f32 %v3857, %v3977
      %v4053 = vadd.f32 %v3858, %v3980
      %v4054 = vadd.f32 %v3859, %v3983
      %v4055 = vadd.f32 %v3860, %v3986
      %v4056 = vadd.f32 %v3861, %v3989
      %v4057 = vadd.f32 %v3862, %v3992
      %v4058 = vadd.f32 %v3863, %v3995
      %v4059 = vadd.f32 %v3864, %v3998
      %v4060 = vadd.f32 %v3865, %v4001
      %v4061 = vadd.f32 %v3866, %v4004
      %v4062 = vadd.f32 %v3867, %v4007
      %v4063 = vadd.f32 %v3868, %v4010
      %v4064 = vadd.f32 %v3869, %v4013
      %v4065 = vadd.f32 %v3870, %v4016
      %v4066 = vadd.f32 %v3871, %v4019
      %v4067 = vadd.f32 %v3872, %v4022
      %v4068 = vadd.f32 %v3873, %v4025
      %v4069 = vadd.f32 %v3874, %v4028
      %v4070 = vadd.f32 %v3875, %v4031
      %v4071 = vadd.f32 %v3876, %v4034
      %v4072 = vadd.f32 %v3877, %v4037
      %v4073 = vadd.f32 %v3878, %v4040
      %v4074 = vld [vmem:[%s3879 + $0x1] sm:$0xff]
      %v4075 = vld [vmem:[%s3879 + $0x11] sm:$0xff]
      %v4076 = vld [vmem:[%s3879 + $0x21] sm:$0xff]
      %v4077 = vld [vmem:[%s3879 + $0x31] sm:$0xff]
      %v4078 = vld [vmem:[%s3879 + $0x41] sm:$0xff]
      %v4079 = vld [vmem:[%s3879 + $0x51] sm:$0xff]
      %v4080 = vld [vmem:[%s3879 + $0x61] sm:$0xff]
      %v4081 = vld [vmem:[%s3879 + $0x71] sm:$0xff]
      %v4082 = vld [vmem:[%s3879 + $0xa1] sm:$0xff]
      %v4083 = vld [vmem:[%s3879 + $0xb1] sm:$0xff]
      %v4084 = vld [vmem:[%s3879 + $0xc1] sm:$0xff]
      %v4085 = vld [vmem:[%s3879 + $0xd1] sm:$0xff]
      %v4086 = vld [vmem:[%s3879 + $0xe1] sm:$0xff]
      %v4087 = vld [vmem:[%s3879 + $0xf1] sm:$0xff]
      %v4088 = vld [vmem:[%s3879 + $0x101] sm:$0xff]
      %v4089 = vld [vmem:[%s3879 + $0x111] sm:$0xff]
      %v4090 = vld [vmem:[%s3879 + $0x141] sm:$0xff]
      %v4091 = vld [vmem:[%s3879 + $0x151] sm:$0xff]
      %v4092 = vld [vmem:[%s3879 + $0x161] sm:$0xff]
      %v4093 = vld [vmem:[%s3879 + $0x171] sm:$0xff]
      %v4094 = vld [vmem:[%s3879 + $0x181] sm:$0xff]
      %v4095 = vld [vmem:[%s3879 + $0x191] sm:$0xff]
      %v4096 = vld [vmem:[%s3879 + $0x1a1] sm:$0xff]
      %v4097 = vld [vmem:[%s3879 + $0x1b1] sm:$0xff]
      %v4098 = vld [vmem:[%s3879 + $0x1e1] sm:$0xff]
      %v4099 = vld [vmem:[%s3879 + $0x1f1] sm:$0xff]
      %v4100 = vld [vmem:[%s3879 + $0x201] sm:$0xff]
      %v4101 = vld [vmem:[%s3879 + $0x211] sm:$0xff]
      %v4102 = vld [vmem:[%s3879 + $0x221] sm:$0xff]
      %v4103 = vld [vmem:[%s3879 + $0x231] sm:$0xff]
      %v4104 = vld [vmem:[%s3879 + $0x241] sm:$0xff]
      %v4105 = vld [vmem:[%s3879 + $0x251] sm:$0xff]
      %s4106 = scalar_lea.vmem %s1, 2432
      %v4107 = vld [vmem:[%s4106] sm:$0xff]
      %v4108 = vld [vmem:[%s4106 + $0x8] sm:$0xff]
      %v4109 = vld [vmem:[%s4106 + $0x10] sm:$0xff]
      %v4110 = vld [vmem:[%s4106 + $0x18] sm:$0xff]
      %v4111 = vld [vmem:[%s4106 + $0x20] sm:$0xff]
      %v4112 = vld [vmem:[%s4106 + $0x28] sm:$0xff]
      %v4113 = vld [vmem:[%s4106 + $0x30] sm:$0xff]
      %v4114 = vld [vmem:[%s4106 + $0x38] sm:$0xff]
      %v4115 = vld [vmem:[%s4106 + $0x40] sm:$0xff]
      %v4116 = vld [vmem:[%s4106 + $0x48] sm:$0xff]
      %v4117 = vld [vmem:[%s4106 + $0x50] sm:$0xff]
      %v4118 = vld [vmem:[%s4106 + $0x58] sm:$0xff]
      %v4119 = vld [vmem:[%s4106 + $0x60] sm:$0xff]
      %v4120 = vld [vmem:[%s4106 + $0x68] sm:$0xff]
      %v4121 = vld [vmem:[%s4106 + $0x70] sm:$0xff]
      %v4122 = vld [vmem:[%s4106 + $0x78] sm:$0xff]
      %4123 = vmatpush.msra.mxu0 %v4122
      %4124 = vmatpush.msra.mxu0 %v4121
      %4125 = vmatpush.msra.mxu0 %v4120
      %4126 = vmatpush.msra.mxu0 %v4119
      %4127 = vmatpush.msra.mxu0 %v4118
      %4128 = vmatpush.msra.mxu0 %v4117
      %4129 = vmatpush.msra.mxu0 %v4116
      %4130 = vmatpush.msra.mxu0 %v4115
      %4131 = vmatpush.msra.mxu0 %v4114
      %4132 = vmatpush.msra.mxu0 %v4113
      %4133 = vmatpush.msra.mxu0 %v4112
      %4134 = vmatpush.msra.mxu0 %v4111
      %4135 = vmatpush.msra.mxu0 %v4110
      %4136 = vmatpush.msra.mxu0 %v4109
      %4137 = vmatpush.msra.mxu0 %v4108
      %4138 = vmatpush.msra.mxu0 %v4107
      %4139 = vmatmul.f32.gmra.mxu0 %v4074
      %v4140 = vpop.f32.mrf.mxu0
      %v4141 = vadd.f32 0.0, %v4140
      %4142 = vmatmul.f32.gmra.mxu0 %v4075
      %v4143 = vpop.f32.mrf.mxu0
      %v4144 = vadd.f32 0.0, %v4143
      %4145 = vmatmul.f32.gmra.mxu0 %v4076
      %v4146 = vpop.f32.mrf.mxu0
      %v4147 = vadd.f32 0.0, %v4146
      %4148 = vmatmul.f32.gmra.mxu0 %v4077
      %v4149 = vpop.f32.mrf.mxu0
      %v4150 = vadd.f32 0.0, %v4149
      %4151 = vmatmul.f32.gmra.mxu0 %v4078
      %v4152 = vpop.f32.mrf.mxu0
      %v4153 = vadd.f32 0.0, %v4152
      %4154 = vmatmul.f32.gmra.mxu0 %v4079
      %v4155 = vpop.f32.mrf.mxu0
      %v4156 = vadd.f32 0.0, %v4155
      %4157 = vmatmul.f32.gmra.mxu0 %v4080
      %v4158 = vpop.f32.mrf.mxu0
      %v4159 = vadd.f32 0.0, %v4158
      %4160 = vmatmul.f32.gmra.mxu0 %v4081
      %v4161 = vpop.f32.mrf.mxu0
      %v4162 = vadd.f32 0.0, %v4161
      %4163 = vmatmul.f32.gmra.mxu0 %v4082
      %v4164 = vpop.f32.mrf.mxu0
      %v4165 = vadd.f32 0.0, %v4164
      %4166 = vmatmul.f32.gmra.mxu0 %v4083
      %v4167 = vpop.f32.mrf.mxu0
      %v4168 = vadd.f32 0.0, %v4167
      %4169 = vmatmul.f32.gmra.mxu0 %v4084
      %v4170 = vpop.f32.mrf.mxu0
      %v4171 = vadd.f32 0.0, %v4170
      %4172 = vmatmul.f32.gmra.mxu0 %v4085
      %v4173 = vpop.f32.mrf.mxu0
      %v4174 = vadd.f32 0.0, %v4173
      %4175 = vmatmul.f32.gmra.mxu0 %v4086
      %v4176 = vpop.f32.mrf.mxu0
      %v4177 = vadd.f32 0.0, %v4176
      %4178 = vmatmul.f32.gmra.mxu0 %v4087
      %v4179 = vpop.f32.mrf.mxu0
      %v4180 = vadd.f32 0.0, %v4179
      %4181 = vmatmul.f32.gmra.mxu0 %v4088
      %v4182 = vpop.f32.mrf.mxu0
      %v4183 = vadd.f32 0.0, %v4182
      %4184 = vmatmul.f32.gmra.mxu0 %v4089
      %v4185 = vpop.f32.mrf.mxu0
      %v4186 = vadd.f32 0.0, %v4185
      %4187 = vmatmul.f32.gmra.mxu0 %v4090
      %v4188 = vpop.f32.mrf.mxu0
      %v4189 = vadd.f32 0.0, %v4188
      %4190 = vmatmul.f32.gmra.mxu0 %v4091
      %v4191 = vpop.f32.mrf.mxu0
      %v4192 = vadd.f32 0.0, %v4191
      %4193 = vmatmul.f32.gmra.mxu0 %v4092
      %v4194 = vpop.f32.mrf.mxu0
      %v4195 = vadd.f32 0.0, %v4194
      %4196 = vmatmul.f32.gmra.mxu0 %v4093
      %v4197 = vpop.f32.mrf.mxu0
      %v4198 = vadd.f32 0.0, %v4197
      %4199 = vmatmul.f32.gmra.mxu0 %v4094
      %v4200 = vpop.f32.mrf.mxu0
      %v4201 = vadd.f32 0.0, %v4200
      %4202 = vmatmul.f32.gmra.mxu0 %v4095
      %v4203 = vpop.f32.mrf.mxu0
      %v4204 = vadd.f32 0.0, %v4203
      %4205 = vmatmul.f32.gmra.mxu0 %v4096
      %v4206 = vpop.f32.mrf.mxu0
      %v4207 = vadd.f32 0.0, %v4206
      %4208 = vmatmul.f32.gmra.mxu0 %v4097
      %v4209 = vpop.f32.mrf.mxu0
      %v4210 = vadd.f32 0.0, %v4209
      %4211 = vmatmul.f32.gmra.mxu0 %v4098
      %v4212 = vpop.f32.mrf.mxu0
      %v4213 = vadd.f32 0.0, %v4212
      %4214 = vmatmul.f32.gmra.mxu0 %v4099
      %v4215 = vpop.f32.mrf.mxu0
      %v4216 = vadd.f32 0.0, %v4215
      %4217 = vmatmul.f32.gmra.mxu0 %v4100
      %v4218 = vpop.f32.mrf.mxu0
      %v4219 = vadd.f32 0.0, %v4218
      %4220 = vmatmul.f32.gmra.mxu0 %v4101
      %v4221 = vpop.f32.mrf.mxu0
      %v4222 = vadd.f32 0.0, %v4221
      %4223 = vmatmul.f32.gmra.mxu0 %v4102
      %v4224 = vpop.f32.mrf.mxu0
      %v4225 = vadd.f32 0.0, %v4224
      %4226 = vmatmul.f32.gmra.mxu0 %v4103
      %v4227 = vpop.f32.mrf.mxu0
      %v4228 = vadd.f32 0.0, %v4227
      %4229 = vmatmul.f32.gmra.mxu0 %v4104
      %v4230 = vpop.f32.mrf.mxu0
      %v4231 = vadd.f32 0.0, %v4230
      %4232 = vmatmul.f32.gmra.mxu0 %v4105
      %v4233 = vpop.f32.mrf.mxu0
      %v4234 = vadd.f32 0.0, %v4233
      %4235 = vdwg.mxu0
      %v4236 = vadd.f32 %v4042, %v4141
      %v4237 = vadd.f32 %v4043, %v4144
      %v4238 = vadd.f32 %v4044, %v4147
      %v4239 = vadd.f32 %v4045, %v4150
      %v4240 = vadd.f32 %v4046, %v4153
      %v4241 = vadd.f32 %v4047, %v4156
      %v4242 = vadd.f32 %v4048, %v4159
      %v4243 = vadd.f32 %v4049, %v4162
      %v4244 = vadd.f32 %v4050, %v4165
      %v4245 = vadd.f32 %v4051, %v4168
      %v4246 = vadd.f32 %v4052, %v4171
      %v4247 = vadd.f32 %v4053, %v4174
      %v4248 = vadd.f32 %v4054, %v4177
      %v4249 = vadd.f32 %v4055, %v4180
      %v4250 = vadd.f32 %v4056, %v4183
      %v4251 = vadd.f32 %v4057, %v4186
      %v4252 = vadd.f32 %v4058, %v4189
      %v4253 = vadd.f32 %v4059, %v4192
      %v4254 = vadd.f32 %v4060, %v4195
      %v4255 = vadd.f32 %v4061, %v4198
      %v4256 = vadd.f32 %v4062, %v4201
      %v4257 = vadd.f32 %v4063, %v4204
      %v4258 = vadd.f32 %v4064, %v4207
      %v4259 = vadd.f32 %v4065, %v4210
      %v4260 = vadd.f32 %v4066, %v4213
      %v4261 = vadd.f32 %v4067, %v4216
      %v4262 = vadd.f32 %v4068, %v4219
      %v4263 = vadd.f32 %v4069, %v4222
      %v4264 = vadd.f32 %v4070, %v4225
      %v4265 = vadd.f32 %v4071, %v4228
      %v4266 = vadd.f32 %v4072, %v4231
      %v4267 = vadd.f32 %v4073, %v4234
      %v4268 = vld [vmem:[%s3879 + $0x2] sm:$0xff]
      %v4269 = vld [vmem:[%s3879 + $0x12] sm:$0xff]
      %v4270 = vld [vmem:[%s3879 + $0x22] sm:$0xff]
      %v4271 = vld [vmem:[%s3879 + $0x32] sm:$0xff]
      %v4272 = vld [vmem:[%s3879 + $0x42] sm:$0xff]
      %v4273 = vld [vmem:[%s3879 + $0x52] sm:$0xff]
      %v4274 = vld [vmem:[%s3879 + $0x62] sm:$0xff]
      %v4275 = vld [vmem:[%s3879 + $0x72] sm:$0xff]
      %v4276 = vld [vmem:[%s3879 + $0xa2] sm:$0xff]
      %v4277 = vld [vmem:[%s3879 + $0xb2] sm:$0xff]
      %v4278 = vld [vmem:[%s3879 + $0xc2] sm:$0xff]
      %v4279 = vld [vmem:[%s3879 + $0xd2] sm:$0xff]
      %v4280 = vld [vmem:[%s3879 + $0xe2] sm:$0xff]
      %v4281 = vld [vmem:[%s3879 + $0xf2] sm:$0xff]
      %v4282 = vld [vmem:[%s3879 + $0x102] sm:$0xff]
      %v4283 = vld [vmem:[%s3879 + $0x112] sm:$0xff]
      %v4284 = vld [vmem:[%s3879 + $0x142] sm:$0xff]
      %v4285 = vld [vmem:[%s3879 + $0x152] sm:$0xff]
      %v4286 = vld [vmem:[%s3879 + $0x162] sm:$0xff]
      %v4287 = vld [vmem:[%s3879 + $0x172] sm:$0xff]
      %v4288 = vld [vmem:[%s3879 + $0x182] sm:$0xff]
      %v4289 = vld [vmem:[%s3879 + $0x192] sm:$0xff]
      %v4290 = vld [vmem:[%s3879 + $0x1a2] sm:$0xff]
      %v4291 = vld [vmem:[%s3879 + $0x1b2] sm:$0xff]
      %v4292 = vld [vmem:[%s3879 + $0x1e2] sm:$0xff]
      %v4293 = vld [vmem:[%s3879 + $0x1f2] sm:$0xff]
      %v4294 = vld [vmem:[%s3879 + $0x202] sm:$0xff]
      %v4295 = vld [vmem:[%s3879 + $0x212] sm:$0xff]
      %v4296 = vld [vmem:[%s3879 + $0x222] sm:$0xff]
      %v4297 = vld [vmem:[%s3879 + $0x232] sm:$0xff]
      %v4298 = vld [vmem:[%s3879 + $0x242] sm:$0xff]
      %v4299 = vld [vmem:[%s3879 + $0x252] sm:$0xff]
      %s4300 = scalar_lea.vmem %s1, 2560
      %v4301 = vld [vmem:[%s4300] sm:$0xff]
      %v4302 = vld [vmem:[%s4300 + $0x8] sm:$0xff]
      %v4303 = vld [vmem:[%s4300 + $0x10] sm:$0xff]
      %v4304 = vld [vmem:[%s4300 + $0x18] sm:$0xff]
      %v4305 = vld [vmem:[%s4300 + $0x20] sm:$0xff]
      %v4306 = vld [vmem:[%s4300 + $0x28] sm:$0xff]
      %v4307 = vld [vmem:[%s4300 + $0x30] sm:$0xff]
      %v4308 = vld [vmem:[%s4300 + $0x38] sm:$0xff]
      %v4309 = vld [vmem:[%s4300 + $0x40] sm:$0xff]
      %v4310 = vld [vmem:[%s4300 + $0x48] sm:$0xff]
      %v4311 = vld [vmem:[%s4300 + $0x50] sm:$0xff]
      %v4312 = vld [vmem:[%s4300 + $0x58] sm:$0xff]
      %v4313 = vld [vmem:[%s4300 + $0x60] sm:$0xff]
      %v4314 = vld [vmem:[%s4300 + $0x68] sm:$0xff]
      %v4315 = vld [vmem:[%s4300 + $0x70] sm:$0xff]
      %v4316 = vld [vmem:[%s4300 + $0x78] sm:$0xff]
      %4317 = vmatpush.msra.mxu0 %v4316
      %4318 = vmatpush.msra.mxu0 %v4315
      %4319 = vmatpush.msra.mxu0 %v4314
      %4320 = vmatpush.msra.mxu0 %v4313
      %4321 = vmatpush.msra.mxu0 %v4312
      %4322 = vmatpush.msra.mxu0 %v4311
      %4323 = vmatpush.msra.mxu0 %v4310
      %4324 = vmatpush.msra.mxu0 %v4309
      %4325 = vmatpush.msra.mxu0 %v4308
      %4326 = vmatpush.msra.mxu0 %v4307
      %4327 = vmatpush.msra.mxu0 %v4306
      %4328 = vmatpush.msra.mxu0 %v4305
      %4329 = vmatpush.msra.mxu0 %v4304
      %4330 = vmatpush.msra.mxu0 %v4303
      %4331 = vmatpush.msra.mxu0 %v4302
      %4332 = vmatpush.msra.mxu0 %v4301
      %4333 = vmatmul.f32.gmra.mxu0 %v4268
      %v4334 = vpop.f32.mrf.mxu0
      %v4335 = vadd.f32 0.0, %v4334
      %4336 = vmatmul.f32.gmra.mxu0 %v4269
      %v4337 = vpop.f32.mrf.mxu0
      %v4338 = vadd.f32 0.0, %v4337
      %4339 = vmatmul.f32.gmra.mxu0 %v4270
      %v4340 = vpop.f32.mrf.mxu0
      %v4341 = vadd.f32 0.0, %v4340
      %4342 = vmatmul.f32.gmra.mxu0 %v4271
      %v4343 = vpop.f32.mrf.mxu0
      %v4344 = vadd.f32 0.0, %v4343
      %4345 = vmatmul.f32.gmra.mxu0 %v4272
      %v4346 = vpop.f32.mrf.mxu0
      %v4347 = vadd.f32 0.0, %v4346
      %4348 = vmatmul.f32.gmra.mxu0 %v4273
      %v4349 = vpop.f32.mrf.mxu0
      %v4350 = vadd.f32 0.0, %v4349
      %4351 = vmatmul.f32.gmra.mxu0 %v4274
      %v4352 = vpop.f32.mrf.mxu0
      %v4353 = vadd.f32 0.0, %v4352
      %4354 = vmatmul.f32.gmra.mxu0 %v4275
      %v4355 = vpop.f32.mrf.mxu0
      %v4356 = vadd.f32 0.0, %v4355
      %4357 = vmatmul.f32.gmra.mxu0 %v4276
      %v4358 = vpop.f32.mrf.mxu0
      %v4359 = vadd.f32 0.0, %v4358
      %4360 = vmatmul.f32.gmra.mxu0 %v4277
      %v4361 = vpop.f32.mrf.mxu0
      %v4362 = vadd.f32 0.0, %v4361
      %4363 = vmatmul.f32.gmra.mxu0 %v4278
      %v4364 = vpop.f32.mrf.mxu0
      %v4365 = vadd.f32 0.0, %v4364
      %4366 = vmatmul.f32.gmra.mxu0 %v4279
      %v4367 = vpop.f32.mrf.mxu0
      %v4368 = vadd.f32 0.0, %v4367
      %4369 = vmatmul.f32.gmra.mxu0 %v4280
      %v4370 = vpop.f32.mrf.mxu0
      %v4371 = vadd.f32 0.0, %v4370
      %4372 = vmatmul.f32.gmra.mxu0 %v4281
      %v4373 = vpop.f32.mrf.mxu0
      %v4374 = vadd.f32 0.0, %v4373
      %4375 = vmatmul.f32.gmra.mxu0 %v4282
      %v4376 = vpop.f32.mrf.mxu0
      %v4377 = vadd.f32 0.0, %v4376
      %4378 = vmatmul.f32.gmra.mxu0 %v4283
      %v4379 = vpop.f32.mrf.mxu0
      %v4380 = vadd.f32 0.0, %v4379
      %4381 = vmatmul.f32.gmra.mxu0 %v4284
      %v4382 = vpop.f32.mrf.mxu0
      %v4383 = vadd.f32 0.0, %v4382
      %4384 = vmatmul.f32.gmra.mxu0 %v4285
      %v4385 = vpop.f32.mrf.mxu0
      %v4386 = vadd.f32 0.0, %v4385
      %4387 = vmatmul.f32.gmra.mxu0 %v4286
      %v4388 = vpop.f32.mrf.mxu0
      %v4389 = vadd.f32 0.0, %v4388
      %4390 = vmatmul.f32.gmra.mxu0 %v4287
      %v4391 = vpop.f32.mrf.mxu0
      %v4392 = vadd.f32 0.0, %v4391
      %4393 = vmatmul.f32.gmra.mxu0 %v4288
      %v4394 = vpop.f32.mrf.mxu0
      %v4395 = vadd.f32 0.0, %v4394
      %4396 = vmatmul.f32.gmra.mxu0 %v4289
      %v4397 = vpop.f32.mrf.mxu0
      %v4398 = vadd.f32 0.0, %v4397
      %4399 = vmatmul.f32.gmra.mxu0 %v4290
      %v4400 = vpop.f32.mrf.mxu0
      %v4401 = vadd.f32 0.0, %v4400
      %4402 = vmatmul.f32.gmra.mxu0 %v4291
      %v4403 = vpop.f32.mrf.mxu0
      %v4404 = vadd.f32 0.0, %v4403
      %4405 = vmatmul.f32.gmra.mxu0 %v4292
      %v4406 = vpop.f32.mrf.mxu0
      %v4407 = vadd.f32 0.0, %v4406
      %4408 = vmatmul.f32.gmra.mxu0 %v4293
      %v4409 = vpop.f32.mrf.mxu0
      %v4410 = vadd.f32 0.0, %v4409
      %4411 = vmatmul.f32.gmra.mxu0 %v4294
      %v4412 = vpop.f32.mrf.mxu0
      %v4413 = vadd.f32 0.0, %v4412
      %4414 = vmatmul.f32.gmra.mxu0 %v4295
      %v4415 = vpop.f32.mrf.mxu0
      %v4416 = vadd.f32 0.0, %v4415
      %4417 = vmatmul.f32.gmra.mxu0 %v4296
      %v4418 = vpop.f32.mrf.mxu0
      %v4419 = vadd.f32 0.0, %v4418
      %4420 = vmatmul.f32.gmra.mxu0 %v4297
      %v4421 = vpop.f32.mrf.mxu0
      %v4422 = vadd.f32 0.0, %v4421
      %4423 = vmatmul.f32.gmra.mxu0 %v4298
      %v4424 = vpop.f32.mrf.mxu0
      %v4425 = vadd.f32 0.0, %v4424
      %4426 = vmatmul.f32.gmra.mxu0 %v4299
      %v4427 = vpop.f32.mrf.mxu0
      %v4428 = vadd.f32 0.0, %v4427
      %4429 = vdwg.mxu0
      %v4430 = vadd.f32 %v4236, %v4335
      %v4431 = vadd.f32 %v4237, %v4338
      %v4432 = vadd.f32 %v4238, %v4341
      %v4433 = vadd.f32 %v4239, %v4344
      %v4434 = vadd.f32 %v4240, %v4347
      %v4435 = vadd.f32 %v4241, %v4350
      %v4436 = vadd.f32 %v4242, %v4353
      %v4437 = vadd.f32 %v4243, %v4356
      %v4438 = vadd.f32 %v4244, %v4359
      %v4439 = vadd.f32 %v4245, %v4362
      %v4440 = vadd.f32 %v4246, %v4365
      %v4441 = vadd.f32 %v4247, %v4368
      %v4442 = vadd.f32 %v4248, %v4371
      %v4443 = vadd.f32 %v4249, %v4374
      %v4444 = vadd.f32 %v4250, %v4377
      %v4445 = vadd.f32 %v4251, %v4380
      %v4446 = vadd.f32 %v4252, %v4383
      %v4447 = vadd.f32 %v4253, %v4386
      %v4448 = vadd.f32 %v4254, %v4389
      %v4449 = vadd.f32 %v4255, %v4392
      %v4450 = vadd.f32 %v4256, %v4395
      %v4451 = vadd.f32 %v4257, %v4398
      %v4452 = vadd.f32 %v4258, %v4401
      %v4453 = vadd.f32 %v4259, %v4404
      %v4454 = vadd.f32 %v4260, %v4407
      %v4455 = vadd.f32 %v4261, %v4410
      %v4456 = vadd.f32 %v4262, %v4413
      %v4457 = vadd.f32 %v4263, %v4416
      %v4458 = vadd.f32 %v4264, %v4419
      %v4459 = vadd.f32 %v4265, %v4422
      %v4460 = vadd.f32 %v4266, %v4425
      %v4461 = vadd.f32 %v4267, %v4428
      %s4462 = scalar_lea.vmem [#allocation2], 336
      %v4463 = vld [vmem:[%s4462] sm:$0xff]
      %v4464 = vld [vmem:[%s4462 + $0x10] sm:$0xff]
      %v4465 = vld [vmem:[%s4462 + $0x20] sm:$0xff]
      %v4466 = vld [vmem:[%s4462 + $0x30] sm:$0xff]
      %v4467 = vld [vmem:[%s4462 + $0x40] sm:$0xff]
      %v4468 = vld [vmem:[%s4462 + $0x50] sm:$0xff]
      %v4469 = vld [vmem:[%s4462 + $0x60] sm:$0xff]
      %v4470 = vld [vmem:[%s4462 + $0x70] sm:$0xff]
      %v4471 = vld [vmem:[%s4462 + $0xa0] sm:$0xff]
      %v4472 = vld [vmem:[%s4462 + $0xb0] sm:$0xff]
      %v4473 = vld [vmem:[%s4462 + $0xc0] sm:$0xff]
      %v4474 = vld [vmem:[%s4462 + $0xd0] sm:$0xff]
      %v4475 = vld [vmem:[%s4462 + $0xe0] sm:$0xff]
      %v4476 = vld [vmem:[%s4462 + $0xf0] sm:$0xff]
      %v4477 = vld [vmem:[%s4462 + $0x100] sm:$0xff]
      %v4478 = vld [vmem:[%s4462 + $0x110] sm:$0xff]
      %v4479 = vld [vmem:[%s4462 + $0x140] sm:$0xff]
      %v4480 = vld [vmem:[%s4462 + $0x150] sm:$0xff]
      %v4481 = vld [vmem:[%s4462 + $0x160] sm:$0xff]
      %v4482 = vld [vmem:[%s4462 + $0x170] sm:$0xff]
      %v4483 = vld [vmem:[%s4462 + $0x180] sm:$0xff]
      %v4484 = vld [vmem:[%s4462 + $0x190] sm:$0xff]
      %v4485 = vld [vmem:[%s4462 + $0x1a0] sm:$0xff]
      %v4486 = vld [vmem:[%s4462 + $0x1b0] sm:$0xff]
      %v4487 = vld [vmem:[%s4462 + $0x1e0] sm:$0xff]
      %v4488 = vld [vmem:[%s4462 + $0x1f0] sm:$0xff]
      %v4489 = vld [vmem:[%s4462 + $0x200] sm:$0xff]
      %v4490 = vld [vmem:[%s4462 + $0x210] sm:$0xff]
      %v4491 = vld [vmem:[%s4462 + $0x220] sm:$0xff]
      %v4492 = vld [vmem:[%s4462 + $0x230] sm:$0xff]
      %v4493 = vld [vmem:[%s4462 + $0x240] sm:$0xff]
      %v4494 = vld [vmem:[%s4462 + $0x250] sm:$0xff]
      %s4495 = scalar_lea.vmem %s1, 2688
      %v4496 = vld [vmem:[%s4495] sm:$0xff]
      %v4497 = vld [vmem:[%s4495 + $0x8] sm:$0xff]
      %v4498 = vld [vmem:[%s4495 + $0x10] sm:$0xff]
      %v4499 = vld [vmem:[%s4495 + $0x18] sm:$0xff]
      %v4500 = vld [vmem:[%s4495 + $0x20] sm:$0xff]
      %v4501 = vld [vmem:[%s4495 + $0x28] sm:$0xff]
      %v4502 = vld [vmem:[%s4495 + $0x30] sm:$0xff]
      %v4503 = vld [vmem:[%s4495 + $0x38] sm:$0xff]
      %v4504 = vld [vmem:[%s4495 + $0x40] sm:$0xff]
      %v4505 = vld [vmem:[%s4495 + $0x48] sm:$0xff]
      %v4506 = vld [vmem:[%s4495 + $0x50] sm:$0xff]
      %v4507 = vld [vmem:[%s4495 + $0x58] sm:$0xff]
      %v4508 = vld [vmem:[%s4495 + $0x60] sm:$0xff]
      %v4509 = vld [vmem:[%s4495 + $0x68] sm:$0xff]
      %v4510 = vld [vmem:[%s4495 + $0x70] sm:$0xff]
      %v4511 = vld [vmem:[%s4495 + $0x78] sm:$0xff]
      %4512 = vmatpush.msra.mxu0 %v4511
      %4513 = vmatpush.msra.mxu0 %v4510
      %4514 = vmatpush.msra.mxu0 %v4509
      %4515 = vmatpush.msra.mxu0 %v4508
      %4516 = vmatpush.msra.mxu0 %v4507
      %4517 = vmatpush.msra.mxu0 %v4506
      %4518 = vmatpush.msra.mxu0 %v4505
      %4519 = vmatpush.msra.mxu0 %v4504
      %4520 = vmatpush.msra.mxu0 %v4503
      %4521 = vmatpush.msra.mxu0 %v4502
      %4522 = vmatpush.msra.mxu0 %v4501
      %4523 = vmatpush.msra.mxu0 %v4500
      %4524 = vmatpush.msra.mxu0 %v4499
      %4525 = vmatpush.msra.mxu0 %v4498
      %4526 = vmatpush.msra.mxu0 %v4497
      %4527 = vmatpush.msra.mxu0 %v4496
      %4528 = vmatmul.f32.gmra.mxu0 %v4463
      %v4529 = vpop.f32.mrf.mxu0
      %v4530 = vadd.f32 0.0, %v4529
      %4531 = vmatmul.f32.gmra.mxu0 %v4464
      %v4532 = vpop.f32.mrf.mxu0
      %v4533 = vadd.f32 0.0, %v4532
      %4534 = vmatmul.f32.gmra.mxu0 %v4465
      %v4535 = vpop.f32.mrf.mxu0
      %v4536 = vadd.f32 0.0, %v4535
      %4537 = vmatmul.f32.gmra.mxu0 %v4466
      %v4538 = vpop.f32.mrf.mxu0
      %v4539 = vadd.f32 0.0, %v4538
      %4540 = vmatmul.f32.gmra.mxu0 %v4467
      %v4541 = vpop.f32.mrf.mxu0
      %v4542 = vadd.f32 0.0, %v4541
      %4543 = vmatmul.f32.gmra.mxu0 %v4468
      %v4544 = vpop.f32.mrf.mxu0
      %v4545 = vadd.f32 0.0, %v4544
      %4546 = vmatmul.f32.gmra.mxu0 %v4469
      %v4547 = vpop.f32.mrf.mxu0
      %v4548 = vadd.f32 0.0, %v4547
      %4549 = vmatmul.f32.gmra.mxu0 %v4470
      %v4550 = vpop.f32.mrf.mxu0
      %v4551 = vadd.f32 0.0, %v4550
      %4552 = vmatmul.f32.gmra.mxu0 %v4471
      %v4553 = vpop.f32.mrf.mxu0
      %v4554 = vadd.f32 0.0, %v4553
      %4555 = vmatmul.f32.gmra.mxu0 %v4472
      %v4556 = vpop.f32.mrf.mxu0
      %v4557 = vadd.f32 0.0, %v4556
      %4558 = vmatmul.f32.gmra.mxu0 %v4473
      %v4559 = vpop.f32.mrf.mxu0
      %v4560 = vadd.f32 0.0, %v4559
      %4561 = vmatmul.f32.gmra.mxu0 %v4474
      %v4562 = vpop.f32.mrf.mxu0
      %v4563 = vadd.f32 0.0, %v4562
      %4564 = vmatmul.f32.gmra.mxu0 %v4475
      %v4565 = vpop.f32.mrf.mxu0
      %v4566 = vadd.f32 0.0, %v4565
      %4567 = vmatmul.f32.gmra.mxu0 %v4476
      %v4568 = vpop.f32.mrf.mxu0
      %v4569 = vadd.f32 0.0, %v4568
      %4570 = vmatmul.f32.gmra.mxu0 %v4477
      %v4571 = vpop.f32.mrf.mxu0
      %v4572 = vadd.f32 0.0, %v4571
      %4573 = vmatmul.f32.gmra.mxu0 %v4478
      %v4574 = vpop.f32.mrf.mxu0
      %v4575 = vadd.f32 0.0, %v4574
      %4576 = vmatmul.f32.gmra.mxu0 %v4479
      %v4577 = vpop.f32.mrf.mxu0
      %v4578 = vadd.f32 0.0, %v4577
      %4579 = vmatmul.f32.gmra.mxu0 %v4480
      %v4580 = vpop.f32.mrf.mxu0
      %v4581 = vadd.f32 0.0, %v4580
      %4582 = vmatmul.f32.gmra.mxu0 %v4481
      %v4583 = vpop.f32.mrf.mxu0
      %v4584 = vadd.f32 0.0, %v4583
      %4585 = vmatmul.f32.gmra.mxu0 %v4482
      %v4586 = vpop.f32.mrf.mxu0
      %v4587 = vadd.f32 0.0, %v4586
      %4588 = vmatmul.f32.gmra.mxu0 %v4483
      %v4589 = vpop.f32.mrf.mxu0
      %v4590 = vadd.f32 0.0, %v4589
      %4591 = vmatmul.f32.gmra.mxu0 %v4484
      %v4592 = vpop.f32.mrf.mxu0
      %v4593 = vadd.f32 0.0, %v4592
      %4594 = vmatmul.f32.gmra.mxu0 %v4485
      %v4595 = vpop.f32.mrf.mxu0
      %v4596 = vadd.f32 0.0, %v4595
      %4597 = vmatmul.f32.gmra.mxu0 %v4486
      %v4598 = vpop.f32.mrf.mxu0
      %v4599 = vadd.f32 0.0, %v4598
      %4600 = vmatmul.f32.gmra.mxu0 %v4487
      %v4601 = vpop.f32.mrf.mxu0
      %v4602 = vadd.f32 0.0, %v4601
      %4603 = vmatmul.f32.gmra.mxu0 %v4488
      %v4604 = vpop.f32.mrf.mxu0
      %v4605 = vadd.f32 0.0, %v4604
      %4606 = vmatmul.f32.gmra.mxu0 %v4489
      %v4607 = vpop.f32.mrf.mxu0
      %v4608 = vadd.f32 0.0, %v4607
      %4609 = vmatmul.f32.gmra.mxu0 %v4490
      %v4610 = vpop.f32.mrf.mxu0
      %v4611 = vadd.f32 0.0, %v4610
      %4612 = vmatmul.f32.gmra.mxu0 %v4491
      %v4613 = vpop.f32.mrf.mxu0
      %v4614 = vadd.f32 0.0, %v4613
      %4615 = vmatmul.f32.gmra.mxu0 %v4492
      %v4616 = vpop.f32.mrf.mxu0
      %v4617 = vadd.f32 0.0, %v4616
      %4618 = vmatmul.f32.gmra.mxu0 %v4493
      %v4619 = vpop.f32.mrf.mxu0
      %v4620 = vadd.f32 0.0, %v4619
      %4621 = vmatmul.f32.gmra.mxu0 %v4494
      %v4622 = vpop.f32.mrf.mxu0
      %v4623 = vadd.f32 0.0, %v4622
      %4624 = vdwg.mxu0
      %v4625 = vadd.f32 %v4430, %v4530
      %v4626 = vadd.f32 %v4431, %v4533
      %v4627 = vadd.f32 %v4432, %v4536
      %v4628 = vadd.f32 %v4433, %v4539
      %v4629 = vadd.f32 %v4434, %v4542
      %v4630 = vadd.f32 %v4435, %v4545
      %v4631 = vadd.f32 %v4436, %v4548
      %v4632 = vadd.f32 %v4437, %v4551
      %v4633 = vadd.f32 %v4438, %v4554
      %v4634 = vadd.f32 %v4439, %v4557
      %v4635 = vadd.f32 %v4440, %v4560
      %v4636 = vadd.f32 %v4441, %v4563
      %v4637 = vadd.f32 %v4442, %v4566
      %v4638 = vadd.f32 %v4443, %v4569
      %v4639 = vadd.f32 %v4444, %v4572
      %v4640 = vadd.f32 %v4445, %v4575
      %v4641 = vadd.f32 %v4446, %v4578
      %v4642 = vadd.f32 %v4447, %v4581
      %v4643 = vadd.f32 %v4448, %v4584
      %v4644 = vadd.f32 %v4449, %v4587
      %v4645 = vadd.f32 %v4450, %v4590
      %v4646 = vadd.f32 %v4451, %v4593
      %v4647 = vadd.f32 %v4452, %v4596
      %v4648 = vadd.f32 %v4453, %v4599
      %v4649 = vadd.f32 %v4454, %v4602
      %v4650 = vadd.f32 %v4455, %v4605
      %v4651 = vadd.f32 %v4456, %v4608
      %v4652 = vadd.f32 %v4457, %v4611
      %v4653 = vadd.f32 %v4458, %v4614
      %v4654 = vadd.f32 %v4459, %v4617
      %v4655 = vadd.f32 %v4460, %v4620
      %v4656 = vadd.f32 %v4461, %v4623
      %v4657 = vld [vmem:[%s4462 + $0x1] sm:$0xff]
      %v4658 = vld [vmem:[%s4462 + $0x11] sm:$0xff]
      %v4659 = vld [vmem:[%s4462 + $0x21] sm:$0xff]
      %v4660 = vld [vmem:[%s4462 + $0x31] sm:$0xff]
      %v4661 = vld [vmem:[%s4462 + $0x41] sm:$0xff]
      %v4662 = vld [vmem:[%s4462 + $0x51] sm:$0xff]
      %v4663 = vld [vmem:[%s4462 + $0x61] sm:$0xff]
      %v4664 = vld [vmem:[%s4462 + $0x71] sm:$0xff]
      %v4665 = vld [vmem:[%s4462 + $0xa1] sm:$0xff]
      %v4666 = vld [vmem:[%s4462 + $0xb1] sm:$0xff]
      %v4667 = vld [vmem:[%s4462 + $0xc1] sm:$0xff]
      %v4668 = vld [vmem:[%s4462 + $0xd1] sm:$0xff]
      %v4669 = vld [vmem:[%s4462 + $0xe1] sm:$0xff]
      %v4670 = vld [vmem:[%s4462 + $0xf1] sm:$0xff]
      %v4671 = vld [vmem:[%s4462 + $0x101] sm:$0xff]
      %v4672 = vld [vmem:[%s4462 + $0x111] sm:$0xff]
      %v4673 = vld [vmem:[%s4462 + $0x141] sm:$0xff]
      %v4674 = vld [vmem:[%s4462 + $0x151] sm:$0xff]
      %v4675 = vld [vmem:[%s4462 + $0x161] sm:$0xff]
      %v4676 = vld [vmem:[%s4462 + $0x171] sm:$0xff]
      %v4677 = vld [vmem:[%s4462 + $0x181] sm:$0xff]
      %v4678 = vld [vmem:[%s4462 + $0x191] sm:$0xff]
      %v4679 = vld [vmem:[%s4462 + $0x1a1] sm:$0xff]
      %v4680 = vld [vmem:[%s4462 + $0x1b1] sm:$0xff]
      %v4681 = vld [vmem:[%s4462 + $0x1e1] sm:$0xff]
      %v4682 = vld [vmem:[%s4462 + $0x1f1] sm:$0xff]
      %v4683 = vld [vmem:[%s4462 + $0x201] sm:$0xff]
      %v4684 = vld [vmem:[%s4462 + $0x211] sm:$0xff]
      %v4685 = vld [vmem:[%s4462 + $0x221] sm:$0xff]
      %v4686 = vld [vmem:[%s4462 + $0x231] sm:$0xff]
      %v4687 = vld [vmem:[%s4462 + $0x241] sm:$0xff]
      %v4688 = vld [vmem:[%s4462 + $0x251] sm:$0xff]
      %s4689 = scalar_lea.vmem %s1, 2816
      %v4690 = vld [vmem:[%s4689] sm:$0xff]
      %v4691 = vld [vmem:[%s4689 + $0x8] sm:$0xff]
      %v4692 = vld [vmem:[%s4689 + $0x10] sm:$0xff]
      %v4693 = vld [vmem:[%s4689 + $0x18] sm:$0xff]
      %v4694 = vld [vmem:[%s4689 + $0x20] sm:$0xff]
      %v4695 = vld [vmem:[%s4689 + $0x28] sm:$0xff]
      %v4696 = vld [vmem:[%s4689 + $0x30] sm:$0xff]
      %v4697 = vld [vmem:[%s4689 + $0x38] sm:$0xff]
      %v4698 = vld [vmem:[%s4689 + $0x40] sm:$0xff]
      %v4699 = vld [vmem:[%s4689 + $0x48] sm:$0xff]
      %v4700 = vld [vmem:[%s4689 + $0x50] sm:$0xff]
      %v4701 = vld [vmem:[%s4689 + $0x58] sm:$0xff]
      %v4702 = vld [vmem:[%s4689 + $0x60] sm:$0xff]
      %v4703 = vld [vmem:[%s4689 + $0x68] sm:$0xff]
      %v4704 = vld [vmem:[%s4689 + $0x70] sm:$0xff]
      %v4705 = vld [vmem:[%s4689 + $0x78] sm:$0xff]
      %4706 = vmatpush.msra.mxu0 %v4705
      %4707 = vmatpush.msra.mxu0 %v4704
      %4708 = vmatpush.msra.mxu0 %v4703
      %4709 = vmatpush.msra.mxu0 %v4702
      %4710 = vmatpush.msra.mxu0 %v4701
      %4711 = vmatpush.msra.mxu0 %v4700
      %4712 = vmatpush.msra.mxu0 %v4699
      %4713 = vmatpush.msra.mxu0 %v4698
      %4714 = vmatpush.msra.mxu0 %v4697
      %4715 = vmatpush.msra.mxu0 %v4696
      %4716 = vmatpush.msra.mxu0 %v4695
      %4717 = vmatpush.msra.mxu0 %v4694
      %4718 = vmatpush.msra.mxu0 %v4693
      %4719 = vmatpush.msra.mxu0 %v4692
      %4720 = vmatpush.msra.mxu0 %v4691
      %4721 = vmatpush.msra.mxu0 %v4690
      %4722 = vmatmul.f32.gmra.mxu0 %v4657
      %v4723 = vpop.f32.mrf.mxu0
      %v4724 = vadd.f32 0.0, %v4723
      %4725 = vmatmul.f32.gmra.mxu0 %v4658
      %v4726 = vpop.f32.mrf.mxu0
      %v4727 = vadd.f32 0.0, %v4726
      %4728 = vmatmul.f32.gmra.mxu0 %v4659
      %v4729 = vpop.f32.mrf.mxu0
      %v4730 = vadd.f32 0.0, %v4729
      %4731 = vmatmul.f32.gmra.mxu0 %v4660
      %v4732 = vpop.f32.mrf.mxu0
      %v4733 = vadd.f32 0.0, %v4732
      %4734 = vmatmul.f32.gmra.mxu0 %v4661
      %v4735 = vpop.f32.mrf.mxu0
      %v4736 = vadd.f32 0.0, %v4735
      %4737 = vmatmul.f32.gmra.mxu0 %v4662
      %v4738 = vpop.f32.mrf.mxu0
      %v4739 = vadd.f32 0.0, %v4738
      %4740 = vmatmul.f32.gmra.mxu0 %v4663
      %v4741 = vpop.f32.mrf.mxu0
      %v4742 = vadd.f32 0.0, %v4741
      %4743 = vmatmul.f32.gmra.mxu0 %v4664
      %v4744 = vpop.f32.mrf.mxu0
      %v4745 = vadd.f32 0.0, %v4744
      %4746 = vmatmul.f32.gmra.mxu0 %v4665
      %v4747 = vpop.f32.mrf.mxu0
      %v4748 = vadd.f32 0.0, %v4747
      %4749 = vmatmul.f32.gmra.mxu0 %v4666
      %v4750 = vpop.f32.mrf.mxu0
      %v4751 = vadd.f32 0.0, %v4750
      %4752 = vmatmul.f32.gmra.mxu0 %v4667
      %v4753 = vpop.f32.mrf.mxu0
      %v4754 = vadd.f32 0.0, %v4753
      %4755 = vmatmul.f32.gmra.mxu0 %v4668
      %v4756 = vpop.f32.mrf.mxu0
      %v4757 = vadd.f32 0.0, %v4756
      %4758 = vmatmul.f32.gmra.mxu0 %v4669
      %v4759 = vpop.f32.mrf.mxu0
      %v4760 = vadd.f32 0.0, %v4759
      %4761 = vmatmul.f32.gmra.mxu0 %v4670
      %v4762 = vpop.f32.mrf.mxu0
      %v4763 = vadd.f32 0.0, %v4762
      %4764 = vmatmul.f32.gmra.mxu0 %v4671
      %v4765 = vpop.f32.mrf.mxu0
      %v4766 = vadd.f32 0.0, %v4765
      %4767 = vmatmul.f32.gmra.mxu0 %v4672
      %v4768 = vpop.f32.mrf.mxu0
      %v4769 = vadd.f32 0.0, %v4768
      %4770 = vmatmul.f32.gmra.mxu0 %v4673
      %v4771 = vpop.f32.mrf.mxu0
      %v4772 = vadd.f32 0.0, %v4771
      %4773 = vmatmul.f32.gmra.mxu0 %v4674
      %v4774 = vpop.f32.mrf.mxu0
      %v4775 = vadd.f32 0.0, %v4774
      %4776 = vmatmul.f32.gmra.mxu0 %v4675
      %v4777 = vpop.f32.mrf.mxu0
      %v4778 = vadd.f32 0.0, %v4777
      %4779 = vmatmul.f32.gmra.mxu0 %v4676
      %v4780 = vpop.f32.mrf.mxu0
      %v4781 = vadd.f32 0.0, %v4780
      %4782 = vmatmul.f32.gmra.mxu0 %v4677
      %v4783 = vpop.f32.mrf.mxu0
      %v4784 = vadd.f32 0.0, %v4783
      %4785 = vmatmul.f32.gmra.mxu0 %v4678
      %v4786 = vpop.f32.mrf.mxu0
      %v4787 = vadd.f32 0.0, %v4786
      %4788 = vmatmul.f32.gmra.mxu0 %v4679
      %v4789 = vpop.f32.mrf.mxu0
      %v4790 = vadd.f32 0.0, %v4789
      %4791 = vmatmul.f32.gmra.mxu0 %v4680
      %v4792 = vpop.f32.mrf.mxu0
      %v4793 = vadd.f32 0.0, %v4792
      %4794 = vmatmul.f32.gmra.mxu0 %v4681
      %v4795 = vpop.f32.mrf.mxu0
      %v4796 = vadd.f32 0.0, %v4795
      %4797 = vmatmul.f32.gmra.mxu0 %v4682
      %v4798 = vpop.f32.mrf.mxu0
      %v4799 = vadd.f32 0.0, %v4798
      %4800 = vmatmul.f32.gmra.mxu0 %v4683
      %v4801 = vpop.f32.mrf.mxu0
      %v4802 = vadd.f32 0.0, %v4801
      %4803 = vmatmul.f32.gmra.mxu0 %v4684
      %v4804 = vpop.f32.mrf.mxu0
      %v4805 = vadd.f32 0.0, %v4804
      %4806 = vmatmul.f32.gmra.mxu0 %v4685
      %v4807 = vpop.f32.mrf.mxu0
      %v4808 = vadd.f32 0.0, %v4807
      %4809 = vmatmul.f32.gmra.mxu0 %v4686
      %v4810 = vpop.f32.mrf.mxu0
      %v4811 = vadd.f32 0.0, %v4810
      %4812 = vmatmul.f32.gmra.mxu0 %v4687
      %v4813 = vpop.f32.mrf.mxu0
      %v4814 = vadd.f32 0.0, %v4813
      %4815 = vmatmul.f32.gmra.mxu0 %v4688
      %v4816 = vpop.f32.mrf.mxu0
      %v4817 = vadd.f32 0.0, %v4816
      %4818 = vdwg.mxu0
      %v4819 = vadd.f32 %v4625, %v4724
      %v4820 = vadd.f32 %v4626, %v4727
      %v4821 = vadd.f32 %v4627, %v4730
      %v4822 = vadd.f32 %v4628, %v4733
      %v4823 = vadd.f32 %v4629, %v4736
      %v4824 = vadd.f32 %v4630, %v4739
      %v4825 = vadd.f32 %v4631, %v4742
      %v4826 = vadd.f32 %v4632, %v4745
      %v4827 = vadd.f32 %v4633, %v4748
      %v4828 = vadd.f32 %v4634, %v4751
      %v4829 = vadd.f32 %v4635, %v4754
      %v4830 = vadd.f32 %v4636, %v4757
      %v4831 = vadd.f32 %v4637, %v4760
      %v4832 = vadd.f32 %v4638, %v4763
      %v4833 = vadd.f32 %v4639, %v4766
      %v4834 = vadd.f32 %v4640, %v4769
      %v4835 = vadd.f32 %v4641, %v4772
      %v4836 = vadd.f32 %v4642, %v4775
      %v4837 = vadd.f32 %v4643, %v4778
      %v4838 = vadd.f32 %v4644, %v4781
      %v4839 = vadd.f32 %v4645, %v4784
      %v4840 = vadd.f32 %v4646, %v4787
      %v4841 = vadd.f32 %v4647, %v4790
      %v4842 = vadd.f32 %v4648, %v4793
      %v4843 = vadd.f32 %v4649, %v4796
      %v4844 = vadd.f32 %v4650, %v4799
      %v4845 = vadd.f32 %v4651, %v4802
      %v4846 = vadd.f32 %v4652, %v4805
      %v4847 = vadd.f32 %v4653, %v4808
      %v4848 = vadd.f32 %v4654, %v4811
      %v4849 = vadd.f32 %v4655, %v4814
      %v4850 = vadd.f32 %v4656, %v4817
      %v4851 = vld [vmem:[%s4462 + $0x2] sm:$0xff]
      %v4852 = vld [vmem:[%s4462 + $0x12] sm:$0xff]
      %v4853 = vld [vmem:[%s4462 + $0x22] sm:$0xff]
      %v4854 = vld [vmem:[%s4462 + $0x32] sm:$0xff]
      %v4855 = vld [vmem:[%s4462 + $0x42] sm:$0xff]
      %v4856 = vld [vmem:[%s4462 + $0x52] sm:$0xff]
      %v4857 = vld [vmem:[%s4462 + $0x62] sm:$0xff]
      %v4858 = vld [vmem:[%s4462 + $0x72] sm:$0xff]
      %v4859 = vld [vmem:[%s4462 + $0xa2] sm:$0xff]
      %v4860 = vld [vmem:[%s4462 + $0xb2] sm:$0xff]
      %v4861 = vld [vmem:[%s4462 + $0xc2] sm:$0xff]
      %v4862 = vld [vmem:[%s4462 + $0xd2] sm:$0xff]
      %v4863 = vld [vmem:[%s4462 + $0xe2] sm:$0xff]
      %v4864 = vld [vmem:[%s4462 + $0xf2] sm:$0xff]
      %v4865 = vld [vmem:[%s4462 + $0x102] sm:$0xff]
      %v4866 = vld [vmem:[%s4462 + $0x112] sm:$0xff]
      %v4867 = vld [vmem:[%s4462 + $0x142] sm:$0xff]
      %v4868 = vld [vmem:[%s4462 + $0x152] sm:$0xff]
      %v4869 = vld [vmem:[%s4462 + $0x162] sm:$0xff]
      %v4870 = vld [vmem:[%s4462 + $0x172] sm:$0xff]
      %v4871 = vld [vmem:[%s4462 + $0x182] sm:$0xff]
      %v4872 = vld [vmem:[%s4462 + $0x192] sm:$0xff]
      %v4873 = vld [vmem:[%s4462 + $0x1a2] sm:$0xff]
      %v4874 = vld [vmem:[%s4462 + $0x1b2] sm:$0xff]
      %v4875 = vld [vmem:[%s4462 + $0x1e2] sm:$0xff]
      %v4876 = vld [vmem:[%s4462 + $0x1f2] sm:$0xff]
      %v4877 = vld [vmem:[%s4462 + $0x202] sm:$0xff]
      %v4878 = vld [vmem:[%s4462 + $0x212] sm:$0xff]
      %v4879 = vld [vmem:[%s4462 + $0x222] sm:$0xff]
      %v4880 = vld [vmem:[%s4462 + $0x232] sm:$0xff]
      %v4881 = vld [vmem:[%s4462 + $0x242] sm:$0xff]
      %v4882 = vld [vmem:[%s4462 + $0x252] sm:$0xff]
      %s4883 = scalar_lea.vmem %s1, 2944
      %v4884 = vld [vmem:[%s4883] sm:$0xff]
      %v4885 = vld [vmem:[%s4883 + $0x8] sm:$0xff]
      %v4886 = vld [vmem:[%s4883 + $0x10] sm:$0xff]
      %v4887 = vld [vmem:[%s4883 + $0x18] sm:$0xff]
      %v4888 = vld [vmem:[%s4883 + $0x20] sm:$0xff]
      %v4889 = vld [vmem:[%s4883 + $0x28] sm:$0xff]
      %v4890 = vld [vmem:[%s4883 + $0x30] sm:$0xff]
      %v4891 = vld [vmem:[%s4883 + $0x38] sm:$0xff]
      %v4892 = vld [vmem:[%s4883 + $0x40] sm:$0xff]
      %v4893 = vld [vmem:[%s4883 + $0x48] sm:$0xff]
      %v4894 = vld [vmem:[%s4883 + $0x50] sm:$0xff]
      %v4895 = vld [vmem:[%s4883 + $0x58] sm:$0xff]
      %v4896 = vld [vmem:[%s4883 + $0x60] sm:$0xff]
      %v4897 = vld [vmem:[%s4883 + $0x68] sm:$0xff]
      %v4898 = vld [vmem:[%s4883 + $0x70] sm:$0xff]
      %v4899 = vld [vmem:[%s4883 + $0x78] sm:$0xff]
      %4900 = vmatpush.msra.mxu0 %v4899
      %4901 = vmatpush.msra.mxu0 %v4898
      %4902 = vmatpush.msra.mxu0 %v4897
      %4903 = vmatpush.msra.mxu0 %v4896
      %4904 = vmatpush.msra.mxu0 %v4895
      %4905 = vmatpush.msra.mxu0 %v4894
      %4906 = vmatpush.msra.mxu0 %v4893
      %4907 = vmatpush.msra.mxu0 %v4892
      %4908 = vmatpush.msra.mxu0 %v4891
      %4909 = vmatpush.msra.mxu0 %v4890
      %4910 = vmatpush.msra.mxu0 %v4889
      %4911 = vmatpush.msra.mxu0 %v4888
      %4912 = vmatpush.msra.mxu0 %v4887
      %4913 = vmatpush.msra.mxu0 %v4886
      %4914 = vmatpush.msra.mxu0 %v4885
      %4915 = vmatpush.msra.mxu0 %v4884
      %4916 = vmatmul.f32.gmra.mxu0 %v4851
      %v4917 = vpop.f32.mrf.mxu0
      %v4918 = vadd.f32 0.0, %v4917
      %4919 = vmatmul.f32.gmra.mxu0 %v4852
      %v4920 = vpop.f32.mrf.mxu0
      %v4921 = vadd.f32 0.0, %v4920
      %4922 = vmatmul.f32.gmra.mxu0 %v4853
      %v4923 = vpop.f32.mrf.mxu0
      %v4924 = vadd.f32 0.0, %v4923
      %4925 = vmatmul.f32.gmra.mxu0 %v4854
      %v4926 = vpop.f32.mrf.mxu0
      %v4927 = vadd.f32 0.0, %v4926
      %4928 = vmatmul.f32.gmra.mxu0 %v4855
      %v4929 = vpop.f32.mrf.mxu0
      %v4930 = vadd.f32 0.0, %v4929
      %4931 = vmatmul.f32.gmra.mxu0 %v4856
      %v4932 = vpop.f32.mrf.mxu0
      %v4933 = vadd.f32 0.0, %v4932
      %4934 = vmatmul.f32.gmra.mxu0 %v4857
      %v4935 = vpop.f32.mrf.mxu0
      %v4936 = vadd.f32 0.0, %v4935
      %4937 = vmatmul.f32.gmra.mxu0 %v4858
      %v4938 = vpop.f32.mrf.mxu0
      %v4939 = vadd.f32 0.0, %v4938
      %4940 = vmatmul.f32.gmra.mxu0 %v4859
      %v4941 = vpop.f32.mrf.mxu0
      %v4942 = vadd.f32 0.0, %v4941
      %4943 = vmatmul.f32.gmra.mxu0 %v4860
      %v4944 = vpop.f32.mrf.mxu0
      %v4945 = vadd.f32 0.0, %v4944
      %4946 = vmatmul.f32.gmra.mxu0 %v4861
      %v4947 = vpop.f32.mrf.mxu0
      %v4948 = vadd.f32 0.0, %v4947
      %4949 = vmatmul.f32.gmra.mxu0 %v4862
      %v4950 = vpop.f32.mrf.mxu0
      %v4951 = vadd.f32 0.0, %v4950
      %4952 = vmatmul.f32.gmra.mxu0 %v4863
      %v4953 = vpop.f32.mrf.mxu0
      %v4954 = vadd.f32 0.0, %v4953
      %4955 = vmatmul.f32.gmra.mxu0 %v4864
      %v4956 = vpop.f32.mrf.mxu0
      %v4957 = vadd.f32 0.0, %v4956
      %4958 = vmatmul.f32.gmra.mxu0 %v4865
      %v4959 = vpop.f32.mrf.mxu0
      %v4960 = vadd.f32 0.0, %v4959
      %4961 = vmatmul.f32.gmra.mxu0 %v4866
      %v4962 = vpop.f32.mrf.mxu0
      %v4963 = vadd.f32 0.0, %v4962
      %4964 = vmatmul.f32.gmra.mxu0 %v4867
      %v4965 = vpop.f32.mrf.mxu0
      %v4966 = vadd.f32 0.0, %v4965
      %4967 = vmatmul.f32.gmra.mxu0 %v4868
      %v4968 = vpop.f32.mrf.mxu0
      %v4969 = vadd.f32 0.0, %v4968
      %4970 = vmatmul.f32.gmra.mxu0 %v4869
      %v4971 = vpop.f32.mrf.mxu0
      %v4972 = vadd.f32 0.0, %v4971
      %4973 = vmatmul.f32.gmra.mxu0 %v4870
      %v4974 = vpop.f32.mrf.mxu0
      %v4975 = vadd.f32 0.0, %v4974
      %4976 = vmatmul.f32.gmra.mxu0 %v4871
      %v4977 = vpop.f32.mrf.mxu0
      %v4978 = vadd.f32 0.0, %v4977
      %4979 = vmatmul.f32.gmra.mxu0 %v4872
      %v4980 = vpop.f32.mrf.mxu0
      %v4981 = vadd.f32 0.0, %v4980
      %4982 = vmatmul.f32.gmra.mxu0 %v4873
      %v4983 = vpop.f32.mrf.mxu0
      %v4984 = vadd.f32 0.0, %v4983
      %4985 = vmatmul.f32.gmra.mxu0 %v4874
      %v4986 = vpop.f32.mrf.mxu0
      %v4987 = vadd.f32 0.0, %v4986
      %4988 = vmatmul.f32.gmra.mxu0 %v4875
      %v4989 = vpop.f32.mrf.mxu0
      %v4990 = vadd.f32 0.0, %v4989
      %4991 = vmatmul.f32.gmra.mxu0 %v4876
      %v4992 = vpop.f32.mrf.mxu0
      %v4993 = vadd.f32 0.0, %v4992
      %4994 = vmatmul.f32.gmra.mxu0 %v4877
      %v4995 = vpop.f32.mrf.mxu0
      %v4996 = vadd.f32 0.0, %v4995
      %4997 = vmatmul.f32.gmra.mxu0 %v4878
      %v4998 = vpop.f32.mrf.mxu0
      %v4999 = vadd.f32 0.0, %v4998
      %5000 = vmatmul.f32.gmra.mxu0 %v4879
      %v5001 = vpop.f32.mrf.mxu0
      %v5002 = vadd.f32 0.0, %v5001
      %5003 = vmatmul.f32.gmra.mxu0 %v4880
      %v5004 = vpop.f32.mrf.mxu0
      %v5005 = vadd.f32 0.0, %v5004
      %5006 = vmatmul.f32.gmra.mxu0 %v4881
      %v5007 = vpop.f32.mrf.mxu0
      %v5008 = vadd.f32 0.0, %v5007
      %5009 = vmatmul.f32.gmra.mxu0 %v4882
      %v5010 = vpop.f32.mrf.mxu0
      %v5011 = vadd.f32 0.0, %v5010
      %5012 = vdwg.mxu0
      %v5013 = vadd.f32 %v4819, %v4918
      %v5014 = vadd.f32 %v4820, %v4921
      %v5015 = vadd.f32 %v4821, %v4924
      %v5016 = vadd.f32 %v4822, %v4927
      %v5017 = vadd.f32 %v4823, %v4930
      %v5018 = vadd.f32 %v4824, %v4933
      %v5019 = vadd.f32 %v4825, %v4936
      %v5020 = vadd.f32 %v4826, %v4939
      %v5021 = vadd.f32 %v4827, %v4942
      %v5022 = vadd.f32 %v4828, %v4945
      %v5023 = vadd.f32 %v4829, %v4948
      %v5024 = vadd.f32 %v4830, %v4951
      %v5025 = vadd.f32 %v4831, %v4954
      %v5026 = vadd.f32 %v4832, %v4957
      %v5027 = vadd.f32 %v4833, %v4960
      %v5028 = vadd.f32 %v4834, %v4963
      %v5029 = vadd.f32 %v4835, %v4966
      %v5030 = vadd.f32 %v4836, %v4969
      %v5031 = vadd.f32 %v4837, %v4972
      %v5032 = vadd.f32 %v4838, %v4975
      %v5033 = vadd.f32 %v4839, %v4978
      %v5034 = vadd.f32 %v4840, %v4981
      %v5035 = vadd.f32 %v4841, %v4984
      %v5036 = vadd.f32 %v4842, %v4987
      %v5037 = vadd.f32 %v4843, %v4990
      %v5038 = vadd.f32 %v4844, %v4993
      %v5039 = vadd.f32 %v4845, %v4996
      %v5040 = vadd.f32 %v4846, %v4999
      %v5041 = vadd.f32 %v4847, %v5002
      %v5042 = vadd.f32 %v4848, %v5005
      %v5043 = vadd.f32 %v4849, %v5008
      %v5044 = vadd.f32 %v4850, %v5011
      %s5045 = scalar_lea.vmem [#allocation2], 352
      %v5046 = vld [vmem:[%s5045] sm:$0xff]
      %v5047 = vld [vmem:[%s5045 + $0x10] sm:$0xff]
      %v5048 = vld [vmem:[%s5045 + $0x20] sm:$0xff]
      %v5049 = vld [vmem:[%s5045 + $0x30] sm:$0xff]
      %v5050 = vld [vmem:[%s5045 + $0x40] sm:$0xff]
      %v5051 = vld [vmem:[%s5045 + $0x50] sm:$0xff]
      %v5052 = vld [vmem:[%s5045 + $0x60] sm:$0xff]
      %v5053 = vld [vmem:[%s5045 + $0x70] sm:$0xff]
      %v5054 = vld [vmem:[%s5045 + $0xa0] sm:$0xff]
      %v5055 = vld [vmem:[%s5045 + $0xb0] sm:$0xff]
      %v5056 = vld [vmem:[%s5045 + $0xc0] sm:$0xff]
      %v5057 = vld [vmem:[%s5045 + $0xd0] sm:$0xff]
      %v5058 = vld [vmem:[%s5045 + $0xe0] sm:$0xff]
      %v5059 = vld [vmem:[%s5045 + $0xf0] sm:$0xff]
      %v5060 = vld [vmem:[%s5045 + $0x100] sm:$0xff]
      %v5061 = vld [vmem:[%s5045 + $0x110] sm:$0xff]
      %v5062 = vld [vmem:[%s5045 + $0x140] sm:$0xff]
      %v5063 = vld [vmem:[%s5045 + $0x150] sm:$0xff]
      %v5064 = vld [vmem:[%s5045 + $0x160] sm:$0xff]
      %v5065 = vld [vmem:[%s5045 + $0x170] sm:$0xff]
      %v5066 = vld [vmem:[%s5045 + $0x180] sm:$0xff]
      %v5067 = vld [vmem:[%s5045 + $0x190] sm:$0xff]
      %v5068 = vld [vmem:[%s5045 + $0x1a0] sm:$0xff]
      %v5069 = vld [vmem:[%s5045 + $0x1b0] sm:$0xff]
      %v5070 = vld [vmem:[%s5045 + $0x1e0] sm:$0xff]
      %v5071 = vld [vmem:[%s5045 + $0x1f0] sm:$0xff]
      %v5072 = vld [vmem:[%s5045 + $0x200] sm:$0xff]
      %v5073 = vld [vmem:[%s5045 + $0x210] sm:$0xff]
      %v5074 = vld [vmem:[%s5045 + $0x220] sm:$0xff]
      %v5075 = vld [vmem:[%s5045 + $0x230] sm:$0xff]
      %v5076 = vld [vmem:[%s5045 + $0x240] sm:$0xff]
      %v5077 = vld [vmem:[%s5045 + $0x250] sm:$0xff]
      %s5078 = scalar_lea.vmem %s1, 3072
      %v5079 = vld [vmem:[%s5078] sm:$0xff]
      %v5080 = vld [vmem:[%s5078 + $0x8] sm:$0xff]
      %v5081 = vld [vmem:[%s5078 + $0x10] sm:$0xff]
      %v5082 = vld [vmem:[%s5078 + $0x18] sm:$0xff]
      %v5083 = vld [vmem:[%s5078 + $0x20] sm:$0xff]
      %v5084 = vld [vmem:[%s5078 + $0x28] sm:$0xff]
      %v5085 = vld [vmem:[%s5078 + $0x30] sm:$0xff]
      %v5086 = vld [vmem:[%s5078 + $0x38] sm:$0xff]
      %v5087 = vld [vmem:[%s5078 + $0x40] sm:$0xff]
      %v5088 = vld [vmem:[%s5078 + $0x48] sm:$0xff]
      %v5089 = vld [vmem:[%s5078 + $0x50] sm:$0xff]
      %v5090 = vld [vmem:[%s5078 + $0x58] sm:$0xff]
      %v5091 = vld [vmem:[%s5078 + $0x60] sm:$0xff]
      %v5092 = vld [vmem:[%s5078 + $0x68] sm:$0xff]
      %v5093 = vld [vmem:[%s5078 + $0x70] sm:$0xff]
      %v5094 = vld [vmem:[%s5078 + $0x78] sm:$0xff]
      %5095 = vmatpush.msra.mxu0 %v5094
      %5096 = vmatpush.msra.mxu0 %v5093
      %5097 = vmatpush.msra.mxu0 %v5092
      %5098 = vmatpush.msra.mxu0 %v5091
      %5099 = vmatpush.msra.mxu0 %v5090
      %5100 = vmatpush.msra.mxu0 %v5089
      %5101 = vmatpush.msra.mxu0 %v5088
      %5102 = vmatpush.msra.mxu0 %v5087
      %5103 = vmatpush.msra.mxu0 %v5086
      %5104 = vmatpush.msra.mxu0 %v5085
      %5105 = vmatpush.msra.mxu0 %v5084
      %5106 = vmatpush.msra.mxu0 %v5083
      %5107 = vmatpush.msra.mxu0 %v5082
      %5108 = vmatpush.msra.mxu0 %v5081
      %5109 = vmatpush.msra.mxu0 %v5080
      %5110 = vmatpush.msra.mxu0 %v5079
      %5111 = vmatmul.f32.gmra.mxu0 %v5046
      %v5112 = vpop.f32.mrf.mxu0
      %v5113 = vadd.f32 0.0, %v5112
      %5114 = vmatmul.f32.gmra.mxu0 %v5047
      %v5115 = vpop.f32.mrf.mxu0
      %v5116 = vadd.f32 0.0, %v5115
      %5117 = vmatmul.f32.gmra.mxu0 %v5048
      %v5118 = vpop.f32.mrf.mxu0
      %v5119 = vadd.f32 0.0, %v5118
      %5120 = vmatmul.f32.gmra.mxu0 %v5049
      %v5121 = vpop.f32.mrf.mxu0
      %v5122 = vadd.f32 0.0, %v5121
      %5123 = vmatmul.f32.gmra.mxu0 %v5050
      %v5124 = vpop.f32.mrf.mxu0
      %v5125 = vadd.f32 0.0, %v5124
      %5126 = vmatmul.f32.gmra.mxu0 %v5051
      %v5127 = vpop.f32.mrf.mxu0
      %v5128 = vadd.f32 0.0, %v5127
      %5129 = vmatmul.f32.gmra.mxu0 %v5052
      %v5130 = vpop.f32.mrf.mxu0
      %v5131 = vadd.f32 0.0, %v5130
      %5132 = vmatmul.f32.gmra.mxu0 %v5053
      %v5133 = vpop.f32.mrf.mxu0
      %v5134 = vadd.f32 0.0, %v5133
      %5135 = vmatmul.f32.gmra.mxu0 %v5054
      %v5136 = vpop.f32.mrf.mxu0
      %v5137 = vadd.f32 0.0, %v5136
      %5138 = vmatmul.f32.gmra.mxu0 %v5055
      %v5139 = vpop.f32.mrf.mxu0
      %v5140 = vadd.f32 0.0, %v5139
      %5141 = vmatmul.f32.gmra.mxu0 %v5056
      %v5142 = vpop.f32.mrf.mxu0
      %v5143 = vadd.f32 0.0, %v5142
      %5144 = vmatmul.f32.gmra.mxu0 %v5057
      %v5145 = vpop.f32.mrf.mxu0
      %v5146 = vadd.f32 0.0, %v5145
      %5147 = vmatmul.f32.gmra.mxu0 %v5058
      %v5148 = vpop.f32.mrf.mxu0
      %v5149 = vadd.f32 0.0, %v5148
      %5150 = vmatmul.f32.gmra.mxu0 %v5059
      %v5151 = vpop.f32.mrf.mxu0
      %v5152 = vadd.f32 0.0, %v5151
      %5153 = vmatmul.f32.gmra.mxu0 %v5060
      %v5154 = vpop.f32.mrf.mxu0
      %v5155 = vadd.f32 0.0, %v5154
      %5156 = vmatmul.f32.gmra.mxu0 %v5061
      %v5157 = vpop.f32.mrf.mxu0
      %v5158 = vadd.f32 0.0, %v5157
      %5159 = vmatmul.f32.gmra.mxu0 %v5062
      %v5160 = vpop.f32.mrf.mxu0
      %v5161 = vadd.f32 0.0, %v5160
      %5162 = vmatmul.f32.gmra.mxu0 %v5063
      %v5163 = vpop.f32.mrf.mxu0
      %v5164 = vadd.f32 0.0, %v5163
      %5165 = vmatmul.f32.gmra.mxu0 %v5064
      %v5166 = vpop.f32.mrf.mxu0
      %v5167 = vadd.f32 0.0, %v5166
      %5168 = vmatmul.f32.gmra.mxu0 %v5065
      %v5169 = vpop.f32.mrf.mxu0
      %v5170 = vadd.f32 0.0, %v5169
      %5171 = vmatmul.f32.gmra.mxu0 %v5066
      %v5172 = vpop.f32.mrf.mxu0
      %v5173 = vadd.f32 0.0, %v5172
      %5174 = vmatmul.f32.gmra.mxu0 %v5067
      %v5175 = vpop.f32.mrf.mxu0
      %v5176 = vadd.f32 0.0, %v5175
      %5177 = vmatmul.f32.gmra.mxu0 %v5068
      %v5178 = vpop.f32.mrf.mxu0
      %v5179 = vadd.f32 0.0, %v5178
      %5180 = vmatmul.f32.gmra.mxu0 %v5069
      %v5181 = vpop.f32.mrf.mxu0
      %v5182 = vadd.f32 0.0, %v5181
      %5183 = vmatmul.f32.gmra.mxu0 %v5070
      %v5184 = vpop.f32.mrf.mxu0
      %v5185 = vadd.f32 0.0, %v5184
      %5186 = vmatmul.f32.gmra.mxu0 %v5071
      %v5187 = vpop.f32.mrf.mxu0
      %v5188 = vadd.f32 0.0, %v5187
      %5189 = vmatmul.f32.gmra.mxu0 %v5072
      %v5190 = vpop.f32.mrf.mxu0
      %v5191 = vadd.f32 0.0, %v5190
      %5192 = vmatmul.f32.gmra.mxu0 %v5073
      %v5193 = vpop.f32.mrf.mxu0
      %v5194 = vadd.f32 0.0, %v5193
      %5195 = vmatmul.f32.gmra.mxu0 %v5074
      %v5196 = vpop.f32.mrf.mxu0
      %v5197 = vadd.f32 0.0, %v5196
      %5198 = vmatmul.f32.gmra.mxu0 %v5075
      %v5199 = vpop.f32.mrf.mxu0
      %v5200 = vadd.f32 0.0, %v5199
      %5201 = vmatmul.f32.gmra.mxu0 %v5076
      %v5202 = vpop.f32.mrf.mxu0
      %v5203 = vadd.f32 0.0, %v5202
      %5204 = vmatmul.f32.gmra.mxu0 %v5077
      %v5205 = vpop.f32.mrf.mxu0
      %v5206 = vadd.f32 0.0, %v5205
      %5207 = vdwg.mxu0
      %v5208 = vadd.f32 %v5013, %v5113
      %v5209 = vadd.f32 %v5014, %v5116
      %v5210 = vadd.f32 %v5015, %v5119
      %v5211 = vadd.f32 %v5016, %v5122
      %v5212 = vadd.f32 %v5017, %v5125
      %v5213 = vadd.f32 %v5018, %v5128
      %v5214 = vadd.f32 %v5019, %v5131
      %v5215 = vadd.f32 %v5020, %v5134
      %v5216 = vadd.f32 %v5021, %v5137
      %v5217 = vadd.f32 %v5022, %v5140
      %v5218 = vadd.f32 %v5023, %v5143
      %v5219 = vadd.f32 %v5024, %v5146
      %v5220 = vadd.f32 %v5025, %v5149
      %v5221 = vadd.f32 %v5026, %v5152
      %v5222 = vadd.f32 %v5027, %v5155
      %v5223 = vadd.f32 %v5028, %v5158
      %v5224 = vadd.f32 %v5029, %v5161
      %v5225 = vadd.f32 %v5030, %v5164
      %v5226 = vadd.f32 %v5031, %v5167
      %v5227 = vadd.f32 %v5032, %v5170
      %v5228 = vadd.f32 %v5033, %v5173
      %v5229 = vadd.f32 %v5034, %v5176
      %v5230 = vadd.f32 %v5035, %v5179
      %v5231 = vadd.f32 %v5036, %v5182
      %v5232 = vadd.f32 %v5037, %v5185
      %v5233 = vadd.f32 %v5038, %v5188
      %v5234 = vadd.f32 %v5039, %v5191
      %v5235 = vadd.f32 %v5040, %v5194
      %v5236 = vadd.f32 %v5041, %v5197
      %v5237 = vadd.f32 %v5042, %v5200
      %v5238 = vadd.f32 %v5043, %v5203
      %v5239 = vadd.f32 %v5044, %v5206
      %v5240 = vld [vmem:[%s5045 + $0x1] sm:$0xff]
      %v5241 = vld [vmem:[%s5045 + $0x11] sm:$0xff]
      %v5242 = vld [vmem:[%s5045 + $0x21] sm:$0xff]
      %v5243 = vld [vmem:[%s5045 + $0x31] sm:$0xff]
      %v5244 = vld [vmem:[%s5045 + $0x41] sm:$0xff]
      %v5245 = vld [vmem:[%s5045 + $0x51] sm:$0xff]
      %v5246 = vld [vmem:[%s5045 + $0x61] sm:$0xff]
      %v5247 = vld [vmem:[%s5045 + $0x71] sm:$0xff]
      %v5248 = vld [vmem:[%s5045 + $0xa1] sm:$0xff]
      %v5249 = vld [vmem:[%s5045 + $0xb1] sm:$0xff]
      %v5250 = vld [vmem:[%s5045 + $0xc1] sm:$0xff]
      %v5251 = vld [vmem:[%s5045 + $0xd1] sm:$0xff]
      %v5252 = vld [vmem:[%s5045 + $0xe1] sm:$0xff]
      %v5253 = vld [vmem:[%s5045 + $0xf1] sm:$0xff]
      %v5254 = vld [vmem:[%s5045 + $0x101] sm:$0xff]
      %v5255 = vld [vmem:[%s5045 + $0x111] sm:$0xff]
      %v5256 = vld [vmem:[%s5045 + $0x141] sm:$0xff]
      %v5257 = vld [vmem:[%s5045 + $0x151] sm:$0xff]
      %v5258 = vld [vmem:[%s5045 + $0x161] sm:$0xff]
      %v5259 = vld [vmem:[%s5045 + $0x171] sm:$0xff]
      %v5260 = vld [vmem:[%s5045 + $0x181] sm:$0xff]
      %v5261 = vld [vmem:[%s5045 + $0x191] sm:$0xff]
      %v5262 = vld [vmem:[%s5045 + $0x1a1] sm:$0xff]
      %v5263 = vld [vmem:[%s5045 + $0x1b1] sm:$0xff]
      %v5264 = vld [vmem:[%s5045 + $0x1e1] sm:$0xff]
      %v5265 = vld [vmem:[%s5045 + $0x1f1] sm:$0xff]
      %v5266 = vld [vmem:[%s5045 + $0x201] sm:$0xff]
      %v5267 = vld [vmem:[%s5045 + $0x211] sm:$0xff]
      %v5268 = vld [vmem:[%s5045 + $0x221] sm:$0xff]
      %v5269 = vld [vmem:[%s5045 + $0x231] sm:$0xff]
      %v5270 = vld [vmem:[%s5045 + $0x241] sm:$0xff]
      %v5271 = vld [vmem:[%s5045 + $0x251] sm:$0xff]
      %s5272 = scalar_lea.vmem %s1, 3200
      %v5273 = vld [vmem:[%s5272] sm:$0xff]
      %v5274 = vld [vmem:[%s5272 + $0x8] sm:$0xff]
      %v5275 = vld [vmem:[%s5272 + $0x10] sm:$0xff]
      %v5276 = vld [vmem:[%s5272 + $0x18] sm:$0xff]
      %v5277 = vld [vmem:[%s5272 + $0x20] sm:$0xff]
      %v5278 = vld [vmem:[%s5272 + $0x28] sm:$0xff]
      %v5279 = vld [vmem:[%s5272 + $0x30] sm:$0xff]
      %v5280 = vld [vmem:[%s5272 + $0x38] sm:$0xff]
      %v5281 = vld [vmem:[%s5272 + $0x40] sm:$0xff]
      %v5282 = vld [vmem:[%s5272 + $0x48] sm:$0xff]
      %v5283 = vld [vmem:[%s5272 + $0x50] sm:$0xff]
      %v5284 = vld [vmem:[%s5272 + $0x58] sm:$0xff]
      %v5285 = vld [vmem:[%s5272 + $0x60] sm:$0xff]
      %v5286 = vld [vmem:[%s5272 + $0x68] sm:$0xff]
      %v5287 = vld [vmem:[%s5272 + $0x70] sm:$0xff]
      %v5288 = vld [vmem:[%s5272 + $0x78] sm:$0xff]
      %5289 = vmatpush.msra.mxu0 %v5288
      %5290 = vmatpush.msra.mxu0 %v5287
      %5291 = vmatpush.msra.mxu0 %v5286
      %5292 = vmatpush.msra.mxu0 %v5285
      %5293 = vmatpush.msra.mxu0 %v5284
      %5294 = vmatpush.msra.mxu0 %v5283
      %5295 = vmatpush.msra.mxu0 %v5282
      %5296 = vmatpush.msra.mxu0 %v5281
      %5297 = vmatpush.msra.mxu0 %v5280
      %5298 = vmatpush.msra.mxu0 %v5279
      %5299 = vmatpush.msra.mxu0 %v5278
      %5300 = vmatpush.msra.mxu0 %v5277
      %5301 = vmatpush.msra.mxu0 %v5276
      %5302 = vmatpush.msra.mxu0 %v5275
      %5303 = vmatpush.msra.mxu0 %v5274
      %5304 = vmatpush.msra.mxu0 %v5273
      %5305 = vmatmul.f32.gmra.mxu0 %v5240
      %v5306 = vpop.f32.mrf.mxu0
      %v5307 = vadd.f32 0.0, %v5306
      %5308 = vmatmul.f32.gmra.mxu0 %v5241
      %v5309 = vpop.f32.mrf.mxu0
      %v5310 = vadd.f32 0.0, %v5309
      %5311 = vmatmul.f32.gmra.mxu0 %v5242
      %v5312 = vpop.f32.mrf.mxu0
      %v5313 = vadd.f32 0.0, %v5312
      %5314 = vmatmul.f32.gmra.mxu0 %v5243
      %v5315 = vpop.f32.mrf.mxu0
      %v5316 = vadd.f32 0.0, %v5315
      %5317 = vmatmul.f32.gmra.mxu0 %v5244
      %v5318 = vpop.f32.mrf.mxu0
      %v5319 = vadd.f32 0.0, %v5318
      %5320 = vmatmul.f32.gmra.mxu0 %v5245
      %v5321 = vpop.f32.mrf.mxu0
      %v5322 = vadd.f32 0.0, %v5321
      %5323 = vmatmul.f32.gmra.mxu0 %v5246
      %v5324 = vpop.f32.mrf.mxu0
      %v5325 = vadd.f32 0.0, %v5324
      %5326 = vmatmul.f32.gmra.mxu0 %v5247
      %v5327 = vpop.f32.mrf.mxu0
      %v5328 = vadd.f32 0.0, %v5327
      %5329 = vmatmul.f32.gmra.mxu0 %v5248
      %v5330 = vpop.f32.mrf.mxu0
      %v5331 = vadd.f32 0.0, %v5330
      %5332 = vmatmul.f32.gmra.mxu0 %v5249
      %v5333 = vpop.f32.mrf.mxu0
      %v5334 = vadd.f32 0.0, %v5333
      %5335 = vmatmul.f32.gmra.mxu0 %v5250
      %v5336 = vpop.f32.mrf.mxu0
      %v5337 = vadd.f32 0.0, %v5336
      %5338 = vmatmul.f32.gmra.mxu0 %v5251
      %v5339 = vpop.f32.mrf.mxu0
      %v5340 = vadd.f32 0.0, %v5339
      %5341 = vmatmul.f32.gmra.mxu0 %v5252
      %v5342 = vpop.f32.mrf.mxu0
      %v5343 = vadd.f32 0.0, %v5342
      %5344 = vmatmul.f32.gmra.mxu0 %v5253
      %v5345 = vpop.f32.mrf.mxu0
      %v5346 = vadd.f32 0.0, %v5345
      %5347 = vmatmul.f32.gmra.mxu0 %v5254
      %v5348 = vpop.f32.mrf.mxu0
      %v5349 = vadd.f32 0.0, %v5348
      %5350 = vmatmul.f32.gmra.mxu0 %v5255
      %v5351 = vpop.f32.mrf.mxu0
      %v5352 = vadd.f32 0.0, %v5351
      %5353 = vmatmul.f32.gmra.mxu0 %v5256
      %v5354 = vpop.f32.mrf.mxu0
      %v5355 = vadd.f32 0.0, %v5354
      %5356 = vmatmul.f32.gmra.mxu0 %v5257
      %v5357 = vpop.f32.mrf.mxu0
      %v5358 = vadd.f32 0.0, %v5357
      %5359 = vmatmul.f32.gmra.mxu0 %v5258
      %v5360 = vpop.f32.mrf.mxu0
      %v5361 = vadd.f32 0.0, %v5360
      %5362 = vmatmul.f32.gmra.mxu0 %v5259
      %v5363 = vpop.f32.mrf.mxu0
      %v5364 = vadd.f32 0.0, %v5363
      %5365 = vmatmul.f32.gmra.mxu0 %v5260
      %v5366 = vpop.f32.mrf.mxu0
      %v5367 = vadd.f32 0.0, %v5366
      %5368 = vmatmul.f32.gmra.mxu0 %v5261
      %v5369 = vpop.f32.mrf.mxu0
      %v5370 = vadd.f32 0.0, %v5369
      %5371 = vmatmul.f32.gmra.mxu0 %v5262
      %v5372 = vpop.f32.mrf.mxu0
      %v5373 = vadd.f32 0.0, %v5372
      %5374 = vmatmul.f32.gmra.mxu0 %v5263
      %v5375 = vpop.f32.mrf.mxu0
      %v5376 = vadd.f32 0.0, %v5375
      %5377 = vmatmul.f32.gmra.mxu0 %v5264
      %v5378 = vpop.f32.mrf.mxu0
      %v5379 = vadd.f32 0.0, %v5378
      %5380 = vmatmul.f32.gmra.mxu0 %v5265
      %v5381 = vpop.f32.mrf.mxu0
      %v5382 = vadd.f32 0.0, %v5381
      %5383 = vmatmul.f32.gmra.mxu0 %v5266
      %v5384 = vpop.f32.mrf.mxu0
      %v5385 = vadd.f32 0.0, %v5384
      %5386 = vmatmul.f32.gmra.mxu0 %v5267
      %v5387 = vpop.f32.mrf.mxu0
      %v5388 = vadd.f32 0.0, %v5387
      %5389 = vmatmul.f32.gmra.mxu0 %v5268
      %v5390 = vpop.f32.mrf.mxu0
      %v5391 = vadd.f32 0.0, %v5390
      %5392 = vmatmul.f32.gmra.mxu0 %v5269
      %v5393 = vpop.f32.mrf.mxu0
      %v5394 = vadd.f32 0.0, %v5393
      %5395 = vmatmul.f32.gmra.mxu0 %v5270
      %v5396 = vpop.f32.mrf.mxu0
      %v5397 = vadd.f32 0.0, %v5396
      %5398 = vmatmul.f32.gmra.mxu0 %v5271
      %v5399 = vpop.f32.mrf.mxu0
      %v5400 = vadd.f32 0.0, %v5399
      %5401 = vdwg.mxu0
      %v5402 = vadd.f32 %v5208, %v5307
      %v5403 = vadd.f32 %v5209, %v5310
      %v5404 = vadd.f32 %v5210, %v5313
      %v5405 = vadd.f32 %v5211, %v5316
      %v5406 = vadd.f32 %v5212, %v5319
      %v5407 = vadd.f32 %v5213, %v5322
      %v5408 = vadd.f32 %v5214, %v5325
      %v5409 = vadd.f32 %v5215, %v5328
      %v5410 = vadd.f32 %v5216, %v5331
      %v5411 = vadd.f32 %v5217, %v5334
      %v5412 = vadd.f32 %v5218, %v5337
      %v5413 = vadd.f32 %v5219, %v5340
      %v5414 = vadd.f32 %v5220, %v5343
      %v5415 = vadd.f32 %v5221, %v5346
      %v5416 = vadd.f32 %v5222, %v5349
      %v5417 = vadd.f32 %v5223, %v5352
      %v5418 = vadd.f32 %v5224, %v5355
      %v5419 = vadd.f32 %v5225, %v5358
      %v5420 = vadd.f32 %v5226, %v5361
      %v5421 = vadd.f32 %v5227, %v5364
      %v5422 = vadd.f32 %v5228, %v5367
      %v5423 = vadd.f32 %v5229, %v5370
      %v5424 = vadd.f32 %v5230, %v5373
      %v5425 = vadd.f32 %v5231, %v5376
      %v5426 = vadd.f32 %v5232, %v5379
      %v5427 = vadd.f32 %v5233, %v5382
      %v5428 = vadd.f32 %v5234, %v5385
      %v5429 = vadd.f32 %v5235, %v5388
      %v5430 = vadd.f32 %v5236, %v5391
      %v5431 = vadd.f32 %v5237, %v5394
      %v5432 = vadd.f32 %v5238, %v5397
      %v5433 = vadd.f32 %v5239, %v5400
      %v5434 = vld [vmem:[%s5045 + $0x2] sm:$0xff]
      %v5435 = vld [vmem:[%s5045 + $0x12] sm:$0xff]
      %v5436 = vld [vmem:[%s5045 + $0x22] sm:$0xff]
      %v5437 = vld [vmem:[%s5045 + $0x32] sm:$0xff]
      %v5438 = vld [vmem:[%s5045 + $0x42] sm:$0xff]
      %v5439 = vld [vmem:[%s5045 + $0x52] sm:$0xff]
      %v5440 = vld [vmem:[%s5045 + $0x62] sm:$0xff]
      %v5441 = vld [vmem:[%s5045 + $0x72] sm:$0xff]
      %v5442 = vld [vmem:[%s5045 + $0xa2] sm:$0xff]
      %v5443 = vld [vmem:[%s5045 + $0xb2] sm:$0xff]
      %v5444 = vld [vmem:[%s5045 + $0xc2] sm:$0xff]
      %v5445 = vld [vmem:[%s5045 + $0xd2] sm:$0xff]
      %v5446 = vld [vmem:[%s5045 + $0xe2] sm:$0xff]
      %v5447 = vld [vmem:[%s5045 + $0xf2] sm:$0xff]
      %v5448 = vld [vmem:[%s5045 + $0x102] sm:$0xff]
      %v5449 = vld [vmem:[%s5045 + $0x112] sm:$0xff]
      %v5450 = vld [vmem:[%s5045 + $0x142] sm:$0xff]
      %v5451 = vld [vmem:[%s5045 + $0x152] sm:$0xff]
      %v5452 = vld [vmem:[%s5045 + $0x162] sm:$0xff]
      %v5453 = vld [vmem:[%s5045 + $0x172] sm:$0xff]
      %v5454 = vld [vmem:[%s5045 + $0x182] sm:$0xff]
      %v5455 = vld [vmem:[%s5045 + $0x192] sm:$0xff]
      %v5456 = vld [vmem:[%s5045 + $0x1a2] sm:$0xff]
      %v5457 = vld [vmem:[%s5045 + $0x1b2] sm:$0xff]
      %v5458 = vld [vmem:[%s5045 + $0x1e2] sm:$0xff]
      %v5459 = vld [vmem:[%s5045 + $0x1f2] sm:$0xff]
      %v5460 = vld [vmem:[%s5045 + $0x202] sm:$0xff]
      %v5461 = vld [vmem:[%s5045 + $0x212] sm:$0xff]
      %v5462 = vld [vmem:[%s5045 + $0x222] sm:$0xff]
      %v5463 = vld [vmem:[%s5045 + $0x232] sm:$0xff]
      %v5464 = vld [vmem:[%s5045 + $0x242] sm:$0xff]
      %v5465 = vld [vmem:[%s5045 + $0x252] sm:$0xff]
      %s5466 = scalar_lea.vmem %s1, 3328
      %v5467 = vld [vmem:[%s5466] sm:$0xff]
      %v5468 = vld [vmem:[%s5466 + $0x8] sm:$0xff]
      %v5469 = vld [vmem:[%s5466 + $0x10] sm:$0xff]
      %v5470 = vld [vmem:[%s5466 + $0x18] sm:$0xff]
      %v5471 = vld [vmem:[%s5466 + $0x20] sm:$0xff]
      %v5472 = vld [vmem:[%s5466 + $0x28] sm:$0xff]
      %v5473 = vld [vmem:[%s5466 + $0x30] sm:$0xff]
      %v5474 = vld [vmem:[%s5466 + $0x38] sm:$0xff]
      %v5475 = vld [vmem:[%s5466 + $0x40] sm:$0xff]
      %v5476 = vld [vmem:[%s5466 + $0x48] sm:$0xff]
      %v5477 = vld [vmem:[%s5466 + $0x50] sm:$0xff]
      %v5478 = vld [vmem:[%s5466 + $0x58] sm:$0xff]
      %v5479 = vld [vmem:[%s5466 + $0x60] sm:$0xff]
      %v5480 = vld [vmem:[%s5466 + $0x68] sm:$0xff]
      %v5481 = vld [vmem:[%s5466 + $0x70] sm:$0xff]
      %v5482 = vld [vmem:[%s5466 + $0x78] sm:$0xff]
      %5483 = vmatpush.msra.mxu0 %v5482
      %5484 = vmatpush.msra.mxu0 %v5481
      %5485 = vmatpush.msra.mxu0 %v5480
      %5486 = vmatpush.msra.mxu0 %v5479
      %5487 = vmatpush.msra.mxu0 %v5478
      %5488 = vmatpush.msra.mxu0 %v5477
      %5489 = vmatpush.msra.mxu0 %v5476
      %5490 = vmatpush.msra.mxu0 %v5475
      %5491 = vmatpush.msra.mxu0 %v5474
      %5492 = vmatpush.msra.mxu0 %v5473
      %5493 = vmatpush.msra.mxu0 %v5472
      %5494 = vmatpush.msra.mxu0 %v5471
      %5495 = vmatpush.msra.mxu0 %v5470
      %5496 = vmatpush.msra.mxu0 %v5469
      %5497 = vmatpush.msra.mxu0 %v5468
      %5498 = vmatpush.msra.mxu0 %v5467
      %5499 = vmatmul.f32.gmra.mxu0 %v5434
      %v5500 = vpop.f32.mrf.mxu0
      %v5501 = vadd.f32 0.0, %v5500
      %5502 = vmatmul.f32.gmra.mxu0 %v5435
      %v5503 = vpop.f32.mrf.mxu0
      %v5504 = vadd.f32 0.0, %v5503
      %5505 = vmatmul.f32.gmra.mxu0 %v5436
      %v5506 = vpop.f32.mrf.mxu0
      %v5507 = vadd.f32 0.0, %v5506
      %5508 = vmatmul.f32.gmra.mxu0 %v5437
      %v5509 = vpop.f32.mrf.mxu0
      %v5510 = vadd.f32 0.0, %v5509
      %5511 = vmatmul.f32.gmra.mxu0 %v5438
      %v5512 = vpop.f32.mrf.mxu0
      %v5513 = vadd.f32 0.0, %v5512
      %5514 = vmatmul.f32.gmra.mxu0 %v5439
      %v5515 = vpop.f32.mrf.mxu0
      %v5516 = vadd.f32 0.0, %v5515
      %5517 = vmatmul.f32.gmra.mxu0 %v5440
      %v5518 = vpop.f32.mrf.mxu0
      %v5519 = vadd.f32 0.0, %v5518
      %5520 = vmatmul.f32.gmra.mxu0 %v5441
      %v5521 = vpop.f32.mrf.mxu0
      %v5522 = vadd.f32 0.0, %v5521
      %5523 = vmatmul.f32.gmra.mxu0 %v5442
      %v5524 = vpop.f32.mrf.mxu0
      %v5525 = vadd.f32 0.0, %v5524
      %5526 = vmatmul.f32.gmra.mxu0 %v5443
      %v5527 = vpop.f32.mrf.mxu0
      %v5528 = vadd.f32 0.0, %v5527
      %5529 = vmatmul.f32.gmra.mxu0 %v5444
      %v5530 = vpop.f32.mrf.mxu0
      %v5531 = vadd.f32 0.0, %v5530
      %5532 = vmatmul.f32.gmra.mxu0 %v5445
      %v5533 = vpop.f32.mrf.mxu0
      %v5534 = vadd.f32 0.0, %v5533
      %5535 = vmatmul.f32.gmra.mxu0 %v5446
      %v5536 = vpop.f32.mrf.mxu0
      %v5537 = vadd.f32 0.0, %v5536
      %5538 = vmatmul.f32.gmra.mxu0 %v5447
      %v5539 = vpop.f32.mrf.mxu0
      %v5540 = vadd.f32 0.0, %v5539
      %5541 = vmatmul.f32.gmra.mxu0 %v5448
      %v5542 = vpop.f32.mrf.mxu0
      %v5543 = vadd.f32 0.0, %v5542
      %5544 = vmatmul.f32.gmra.mxu0 %v5449
      %v5545 = vpop.f32.mrf.mxu0
      %v5546 = vadd.f32 0.0, %v5545
      %5547 = vmatmul.f32.gmra.mxu0 %v5450
      %v5548 = vpop.f32.mrf.mxu0
      %v5549 = vadd.f32 0.0, %v5548
      %5550 = vmatmul.f32.gmra.mxu0 %v5451
      %v5551 = vpop.f32.mrf.mxu0
      %v5552 = vadd.f32 0.0, %v5551
      %5553 = vmatmul.f32.gmra.mxu0 %v5452
      %v5554 = vpop.f32.mrf.mxu0
      %v5555 = vadd.f32 0.0, %v5554
      %5556 = vmatmul.f32.gmra.mxu0 %v5453
      %v5557 = vpop.f32.mrf.mxu0
      %v5558 = vadd.f32 0.0, %v5557
      %5559 = vmatmul.f32.gmra.mxu0 %v5454
      %v5560 = vpop.f32.mrf.mxu0
      %v5561 = vadd.f32 0.0, %v5560
      %5562 = vmatmul.f32.gmra.mxu0 %v5455
      %v5563 = vpop.f32.mrf.mxu0
      %v5564 = vadd.f32 0.0, %v5563
      %5565 = vmatmul.f32.gmra.mxu0 %v5456
      %v5566 = vpop.f32.mrf.mxu0
      %v5567 = vadd.f32 0.0, %v5566
      %5568 = vmatmul.f32.gmra.mxu0 %v5457
      %v5569 = vpop.f32.mrf.mxu0
      %v5570 = vadd.f32 0.0, %v5569
      %5571 = vmatmul.f32.gmra.mxu0 %v5458
      %v5572 = vpop.f32.mrf.mxu0
      %v5573 = vadd.f32 0.0, %v5572
      %5574 = vmatmul.f32.gmra.mxu0 %v5459
      %v5575 = vpop.f32.mrf.mxu0
      %v5576 = vadd.f32 0.0, %v5575
      %5577 = vmatmul.f32.gmra.mxu0 %v5460
      %v5578 = vpop.f32.mrf.mxu0
      %v5579 = vadd.f32 0.0, %v5578
      %5580 = vmatmul.f32.gmra.mxu0 %v5461
      %v5581 = vpop.f32.mrf.mxu0
      %v5582 = vadd.f32 0.0, %v5581
      %5583 = vmatmul.f32.gmra.mxu0 %v5462
      %v5584 = vpop.f32.mrf.mxu0
      %v5585 = vadd.f32 0.0, %v5584
      %5586 = vmatmul.f32.gmra.mxu0 %v5463
      %v5587 = vpop.f32.mrf.mxu0
      %v5588 = vadd.f32 0.0, %v5587
      %5589 = vmatmul.f32.gmra.mxu0 %v5464
      %v5590 = vpop.f32.mrf.mxu0
      %v5591 = vadd.f32 0.0, %v5590
      %5592 = vmatmul.f32.gmra.mxu0 %v5465
      %v5593 = vpop.f32.mrf.mxu0
      %v5594 = vadd.f32 0.0, %v5593
      %5595 = vdwg.mxu0
      %v5596 = vadd.f32 %v5402, %v5501
      %v5597 = vadd.f32 %v5403, %v5504
      %v5598 = vadd.f32 %v5404, %v5507
      %v5599 = vadd.f32 %v5405, %v5510
      %v5600 = vadd.f32 %v5406, %v5513
      %v5601 = vadd.f32 %v5407, %v5516
      %v5602 = vadd.f32 %v5408, %v5519
      %v5603 = vadd.f32 %v5409, %v5522
      %v5604 = vadd.f32 %v5410, %v5525
      %v5605 = vadd.f32 %v5411, %v5528
      %v5606 = vadd.f32 %v5412, %v5531
      %v5607 = vadd.f32 %v5413, %v5534
      %v5608 = vadd.f32 %v5414, %v5537
      %v5609 = vadd.f32 %v5415, %v5540
      %v5610 = vadd.f32 %v5416, %v5543
      %v5611 = vadd.f32 %v5417, %v5546
      %v5612 = vadd.f32 %v5418, %v5549
      %v5613 = vadd.f32 %v5419, %v5552
      %v5614 = vadd.f32 %v5420, %v5555
      %v5615 = vadd.f32 %v5421, %v5558
      %v5616 = vadd.f32 %v5422, %v5561
      %v5617 = vadd.f32 %v5423, %v5564
      %v5618 = vadd.f32 %v5424, %v5567
      %v5619 = vadd.f32 %v5425, %v5570
      %v5620 = vadd.f32 %v5426, %v5573
      %v5621 = vadd.f32 %v5427, %v5576
      %v5622 = vadd.f32 %v5428, %v5579
      %v5623 = vadd.f32 %v5429, %v5582
      %v5624 = vadd.f32 %v5430, %v5585
      %v5625 = vadd.f32 %v5431, %v5588
      %v5626 = vadd.f32 %v5432, %v5591
      %v5627 = vadd.f32 %v5433, %v5594
      %5628 = vst [vmem:[%s159] sm:$0xff] %v5596
      %5629 = vst [vmem:[%s159 + $0x8] sm:$0xff] %v5597
      %5630 = vst [vmem:[%s159 + $0x10] sm:$0xff] %v5598
      %5631 = vst [vmem:[%s159 + $0x18] sm:$0xff] %v5599
      %5632 = vst [vmem:[%s159 + $0x20] sm:$0xff] %v5600
      %5633 = vst [vmem:[%s159 + $0x28] sm:$0xff] %v5601
      %5634 = vst [vmem:[%s159 + $0x30] sm:$0xff] %v5602
      %5635 = vst [vmem:[%s159 + $0x38] sm:$0xff] %v5603
      %5636 = vst [vmem:[%s159 + $0x40] sm:$0xff] %v5604
      %5637 = vst [vmem:[%s159 + $0x48] sm:$0xff] %v5605
      %5638 = vst [vmem:[%s159 + $0x50] sm:$0xff] %v5606
      %5639 = vst [vmem:[%s159 + $0x58] sm:$0xff] %v5607
      %5640 = vst [vmem:[%s159 + $0x60] sm:$0xff] %v5608
      %5641 = vst [vmem:[%s159 + $0x68] sm:$0xff] %v5609
      %5642 = vst [vmem:[%s159 + $0x70] sm:$0xff] %v5610
      %5643 = vst [vmem:[%s159 + $0x78] sm:$0xff] %v5611
      %5644 = vst [vmem:[%s159 + $0x80] sm:$0xff] %v5612
      %5645 = vst [vmem:[%s159 + $0x88] sm:$0xff] %v5613
      %5646 = vst [vmem:[%s159 + $0x90] sm:$0xff] %v5614
      %5647 = vst [vmem:[%s159 + $0x98] sm:$0xff] %v5615
      %5648 = vst [vmem:[%s159 + $0xa0] sm:$0xff] %v5616
      %5649 = vst [vmem:[%s159 + $0xa8] sm:$0xff] %v5617
      %5650 = vst [vmem:[%s159 + $0xb0] sm:$0xff] %v5618
      %5651 = vst [vmem:[%s159 + $0xb8] sm:$0xff] %v5619
      %5652 = vst [vmem:[%s159 + $0xc0] sm:$0xff] %v5620
      %5653 = vst [vmem:[%s159 + $0xc8] sm:$0xff] %v5621
      %5654 = vst [vmem:[%s159 + $0xd0] sm:$0xff] %v5622
      %5655 = vst [vmem:[%s159 + $0xd8] sm:$0xff] %v5623
      %5656 = vst [vmem:[%s159 + $0xe0] sm:$0xff] %v5624
      %5657 = vst [vmem:[%s159 + $0xe8] sm:$0xff] %v5625
      %5658 = vst [vmem:[%s159 + $0xf0] sm:$0xff] %v5626
      %5659 = vst [vmem:[%s159 + $0xf8] sm:$0xff] %v5627
      %v5660 = vadd.f32 %v5596, %v5597
      %v5661 = vadd.f32 %v5660, %v5598
      %v5662 = vadd.f32 %v5661, %v5599
      %v5663 = vadd.f32 %v5662, %v5600
      %v5664 = vadd.f32 %v5663, %v5601
      %v5665 = vadd.f32 %v5664, %v5602
      %v5666 = vadd.f32 %v5665, %v5603
      %v5667 = vadd.f32 %v5666, %v5604
      %v5668 = vadd.f32 %v5667, %v5605
      %v5669 = vadd.f32 %v5668, %v5606
      %v5670 = vadd.f32 %v5669, %v5607
      %v5671 = vadd.f32 %v5670, %v5608
      %v5672 = vadd.f32 %v5671, %v5609
      %v5673 = vadd.f32 %v5672, %v5610
      %v5674 = vadd.f32 %v5673, %v5611
      %v5675 = vadd.f32 %v5674, %v5612
      %v5676 = vadd.f32 %v5675, %v5613
      %v5677 = vadd.f32 %v5676, %v5614
      %v5678 = vadd.f32 %v5677, %v5615
      %v5679 = vadd.f32 %v5678, %v5616
      %v5680 = vadd.f32 %v5679, %v5617
      %v5681 = vadd.f32 %v5680, %v5618
      %v5682 = vadd.f32 %v5681, %v5619
      %v5683 = vadd.f32 %v5682, %v5620
      %v5684 = vadd.f32 %v5683, %v5621
      %v5685 = vadd.f32 %v5684, %v5622
      %v5686 = vadd.f32 %v5685, %v5623
      %v5687 = vadd.f32 %v5686, %v5624
      %v5688 = vadd.f32 %v5687, %v5625
      %v5689 = vadd.f32 %v5688, %v5626
      %v5690 = vadd.f32 %v5689, %v5627
      %v5691 = vrot.slane %v5690, 4
      %v5692 = vadd.f32 %v5690, %v5691
      %v5693 = vrot.slane %v5692, 2
      %v5694 = vadd.f32 %v5692, %v5693
      %v5695 = vrot.slane %v5694, 1
      %v5696 = vadd.f32 %v5694, %v5695
      %v5697 = vmul.f32 %v5596, %v5596
      %v5698 = vmul.f32 %v5597, %v5597
      %v5699 = vmul.f32 %v5598, %v5598
      %v5700 = vmul.f32 %v5599, %v5599
      %v5701 = vmul.f32 %v5600, %v5600
      %v5702 = vmul.f32 %v5601, %v5601
      %v5703 = vmul.f32 %v5602, %v5602
      %v5704 = vmul.f32 %v5603, %v5603
      %v5705 = vmul.f32 %v5604, %v5604
      %v5706 = vmul.f32 %v5605, %v5605
      %v5707 = vmul.f32 %v5606, %v5606
      %v5708 = vmul.f32 %v5607, %v5607
      %v5709 = vmul.f32 %v5608, %v5608
      %v5710 = vmul.f32 %v5609, %v5609
      %v5711 = vmul.f32 %v5610, %v5610
      %v5712 = vmul.f32 %v5611, %v5611
      %v5713 = vmul.f32 %v5612, %v5612
      %v5714 = vmul.f32 %v5613, %v5613
      %v5715 = vmul.f32 %v5614, %v5614
      %v5716 = vmul.f32 %v5615, %v5615
      %v5717 = vmul.f32 %v5616, %v5616
      %v5718 = vmul.f32 %v5617, %v5617
      %v5719 = vmul.f32 %v5618, %v5618
      %v5720 = vmul.f32 %v5619, %v5619
      %v5721 = vmul.f32 %v5620, %v5620
      %v5722 = vmul.f32 %v5621, %v5621
      %v5723 = vmul.f32 %v5622, %v5622
      %v5724 = vmul.f32 %v5623, %v5623
      %v5725 = vmul.f32 %v5624, %v5624
      %v5726 = vmul.f32 %v5625, %v5625
      %v5727 = vmul.f32 %v5626, %v5626
      %v5728 = vmul.f32 %v5627, %v5627
      %v5729 = vadd.f32 %v5697, %v5698
      %v5730 = vadd.f32 %v5729, %v5699
      %v5731 = vadd.f32 %v5730, %v5700
      %v5732 = vadd.f32 %v5731, %v5701
      %v5733 = vadd.f32 %v5732, %v5702
      %v5734 = vadd.f32 %v5733, %v5703
      %v5735 = vadd.f32 %v5734, %v5704
      %v5736 = vadd.f32 %v5735, %v5705
      %v5737 = vadd.f32 %v5736, %v5706
      %v5738 = vadd.f32 %v5737, %v5707
      %v5739 = vadd.f32 %v5738, %v5708
      %v5740 = vadd.f32 %v5739, %v5709
      %v5741 = vadd.f32 %v5740, %v5710
      %v5742 = vadd.f32 %v5741, %v5711
      %v5743 = vadd.f32 %v5742, %v5712
      %v5744 = vadd.f32 %v5743, %v5713
      %v5745 = vadd.f32 %v5744, %v5714
      %v5746 = vadd.f32 %v5745, %v5715
      %v5747 = vadd.f32 %v5746, %v5716
      %v5748 = vadd.f32 %v5747, %v5717
      %v5749 = vadd.f32 %v5748, %v5718
      %v5750 = vadd.f32 %v5749, %v5719
      %v5751 = vadd.f32 %v5750, %v5720
      %v5752 = vadd.f32 %v5751, %v5721
      %v5753 = vadd.f32 %v5752, %v5722
      %v5754 = vadd.f32 %v5753, %v5723
      %v5755 = vadd.f32 %v5754, %v5724
      %v5756 = vadd.f32 %v5755, %v5725
      %v5757 = vadd.f32 %v5756, %v5726
      %v5758 = vadd.f32 %v5757, %v5727
      %v5759 = vadd.f32 %v5758, %v5728
      %v5760 = vrot.slane %v5759, 4
      %v5761 = vadd.f32 %v5759, %v5760
      %v5762 = vrot.slane %v5761, 2
      %v5763 = vadd.f32 %v5761, %v5762
      %v5764 = vrot.slane %v5763, 1
      %v5765 = vadd.f32 %v5763, %v5764
      %vm5766 = vcmask 1040384
      %v5767 = vsel %vm5766, %v5696, %v5765
      %5768 = vst [vmem:[%s168] sm:$0x3] %v5767
      %s5769 = smul.u32 %s19, 2
      %s5770 = sadd.s32 %s5769, %s20
      %s5771 = smul.u32 4, %s5770
      %p5772 = scmp.lt.s32.totalorder %s5771, 15
      %s5773 = scalar_select %p5772, %s5771, 15
      %s5774 = smul.addr %s5773, 8
      %s5775 = smul.addr %s5774, 8
      %s5776 = scalar_lea.vmem %s2, %s5775
      %s5777 = smul.u32 %s19, 2
      %s5778 = sadd.s32 %s5777, %s20
      %p5779 = scmp.lt.s32.totalorder %s5778, 3
      %s5780 = scalar_select %p5779, %s5778, 3
      %s5781 = smul.addr %s5780, 2
      %s5782 = scalar_lea.vmem %s3, %s5781
      // Predicated region
      $region47: #{bottleneck_forward.8} parent=23 // pred_check
        %p5783 = pneg %p70
      $region48: #{bottleneck_forward.8} parent=23 // pred_check_branch
        %5785 = sbr.rel (%p5783) target = $region50
      $region49: #{bottleneck_forward.8} parent=23 // pred_region
        %s5786 = smul.u32 %s19, 2
        %s5787 = sadd.s32 %s5786, %s20
        %s5788 = smul.u32 4, %s5787
      $region50: #{bottleneck_forward.8} parent=23 // pred_fallthru
        _
      // Predicated region
      $region51: #{bottleneck_forward.8} parent=23 // pred_check
        %p5789 = pneg %p100
      $region52: #{bottleneck_forward.8} parent=23 // pred_check_branch
        %5791 = sbr.rel (%p5789) target = $region54
      $region53: #{bottleneck_forward.8} parent=23 // pred_region
        %s5792 = smul.u32 %s19, 2
        %s5793 = sadd.s32 %s5792, %s20
      $region54: #{bottleneck_forward.8} parent=23 // pred_fallthru
        _
    $region24: #{bottleneck_forward.8} parent=5 // pred_fallthru
      _
    %p5794 = scmp.le.s32.totalorder 2, %s10
    // Predicated region
    $region55: #{bottleneck_forward.8} parent=5 // pred_check
      %p5795 = pneg %p5794
    $region56: #{bottleneck_forward.8} parent=5 // pred_check_branch
      %5797 = sbr.rel (%p5795) target = $region58
    $region57: #{bottleneck_forward.8} parent=5 // pred_region
      %s5798 = ssub.s32 %s10, 2
      // Predicated region
      $region59: #{bottleneck_forward.8} parent=57 // pred_check
        %p5799 = pneg %p76
      $region60: #{bottleneck_forward.8} parent=57 // pred_check_branch
        %5801 = sbr.rel (%p5799) target = $region62
      $region61: #{bottleneck_forward.8} parent=57 // pred_region
        %s5802 = smul.u32 %s21, 2
        %s5803 = sadd.s32 %s5802, %s22
        %s5804 = smul.u32 4, %s5803
        %p5805 = scmp.lt.s32.totalorder %s5804, 15
        %s5806 = scalar_select %p5805, %s5804, 15
        %s5807 = smul.addr %s5806, 8
        %s5808 = smul.addr %s5807, 8
        %s5809 = scalar_lea.vmem %s2, %s5808
      $region62: #{bottleneck_forward.8} parent=57 // pred_fallthru
        _
      // Predicated region
      $region63: #{bottleneck_forward.8} parent=57 // pred_check
        %p5810 = pneg %p106
      $region64: #{bottleneck_forward.8} parent=57 // pred_check_branch
        %5812 = sbr.rel (%p5810) target = $region66
      $region65: #{bottleneck_forward.8} parent=57 // pred_region
        %s5813 = smul.u32 %s21, 2
        %s5814 = sadd.s32 %s5813, %s22
        %p5815 = scmp.lt.s32.totalorder %s5814, 3
        %s5816 = scalar_select %p5815, %s5814, 3
        %s5817 = smul.addr %s5816, 2
        %s5818 = scalar_lea.vmem %s3, %s5817
      $region66: #{bottleneck_forward.8} parent=57 // pred_fallthru
        _
    $region58: #{bottleneck_forward.8} parent=5 // pred_fallthru
      _
  $region6: #{bottleneck_forward.8} parent=0 // loop_footer
    %s14 = sadd.s32 1, %s10
  $region7: #{bottleneck_forward.8} parent=0 // loop_footer_branch
    %9 = sbr.rel target = $region3
  $region8: #{bottleneck_forward.8} parent=0 // loop_exit
    _
  %5819 = vsyncmov [#allocation3]
  %s5820 = vpop.sfrf %5819
  %p5821 = scmp.eq.s32.totalorder %s5820, 0
  %p5822 = pneg %p5821
  %5824 = shalt.err (%p5822)

</llo_original>
